<compile_context>
chip_gen: v7x
topology: tpu7x:2x2x1
jax: 0.10.0
libtpu: 0.0.40
codegen_flags: <defaults>
</compile_context>

<pallas_src>
import functools

import jax
import jax.numpy as jnp
from jax.experimental import pallas as pl
from jax.experimental.pallas import tpu as pltpu

_ALPHA = 0.25      # PReLU default init (single shared parameter per block)
_BN_EPS = 1e-5
_H_IN = 88         # spatial size implied by final_l in_features=1024
# spatial chain: 88 ->86 ->84 |mp| 42 ->40 ->38 |mp| 19 ->17 ->15 |mp| 8


# ----------------------------------------------------------------------------
# Fused kernel (runs once per image)
# ----------------------------------------------------------------------------
def _hnet_kernel(x_ref,
                 w0_ref, b0_ref,
                 w1_ref, b1_ref,
                 w2_ref, b2_ref,
                 w3_ref, b3_ref,
                 w4_ref, b4_ref,
                 w5_ref, b5_ref,
                 wl_ref, bl_ref,
                 wf_ref, bf_ref,
                 out_ref,
                 c0, c1p, p1, c2, c3p, p2, c4, c5p, p3, rowbuf):
    f32 = jnp.float32

    # ---- 3x3 valid conv (channels-last) + folded-BN bias + PReLU -----------
    def conv3x3(in_ref, wcat_ref, bias_ref, dst_ref, h_out, w_out, cout, pad):
        # wcat_ref[dw] is (3*Cin, Cout): the three dh taps are pre-concatenated
        # along K, so each output row needs only 3 MXU dots instead of 9.
        off = 1 if pad else 0
        bias = bias_ref[...]                       # (1, Cout) hoisted out of loop

        @pl.loop(0, h_out)
        def _(h):
            acc = jnp.zeros((w_out, cout), f32)
            for dw in range(3):
                lhs = jnp.concatenate(
                    [in_ref[h + dh, pl.ds(dw, w_out), :] for dh in range(3)],
                    axis=-1)                       # (W_out, 3*Cin)
                acc = acc + jnp.dot(lhs, wcat_ref[dw],
                                    preferred_element_type=f32)
            y = acc + bias
            y = jnp.where(y > 0, y, _ALPHA * y)    # PReLU
            dst_ref[h + off, pl.ds(off, w_out), :] = y

    # ---- MaxPool2d(3, stride=2, padding=1), strided, from -inf padded buf --
    def maxpool3x3s2(in_ref, dst_ref, p, c, sp, flat):
        @pl.loop(0, p)
        def _(i):
            r = 2 * i
            # vertical 3-max computed once per output row
            v = jnp.maximum(jnp.maximum(in_ref[r], in_ref[r + 1]),
                            in_ref[r + 2])                     # (S+2, C)
            rowbuf[pl.ds(0, sp), pl.ds(0, c)] = v
            # stride-2 column taps -> pooled width directly (no dense map)
            m = rowbuf[pl.ds(0, p, stride=2), pl.ds(0, c)]
            m = jnp.maximum(m, rowbuf[pl.ds(1, p, stride=2), pl.ds(0, c)])
            m = jnp.maximum(m, rowbuf[pl.ds(2, p, stride=2), pl.ds(0, c)])
            if flat:    # final pool: store (8,8,C) flattened to (64, C) rows
                dst_ref[pl.ds(pl.multiple_of(i * p, 8), p), :] = m
            else:
                dst_ref[i] = m

    # ---- -inf borders for the pool inputs (re-done every grid step so each
    # TensorCore initialises its own scratch under "parallel" semantics) -----
    c1p[...] = jnp.full(c1p.shape, -jnp.inf, f32)
    c3p[...] = jnp.full(c3p.shape, -jnp.inf, f32)
    c5p[...] = jnp.full(c5p.shape, -jnp.inf, f32)

    # ---- cbr0 (Cin=1): 9 VPU outer-product taps, weights hoisted ------------
    w0_taps = [[w0_ref[dh, dw] for dw in range(3)] for dh in range(3)]  # (1,16)
    bias0 = b0_ref[...]

    @pl.loop(0, 86)
    def _(h):
        acc = jnp.zeros((86, 16), f32)
        for dh in range(3):
            for dw in range(3):
                xs = x_ref[h + dh, pl.ds(dw, 86), :]            # (86, 1)
                acc = acc + xs * w0_taps[dh][dw]                # -> (86, 16)
        y = acc + bias0
        c0[h] = jnp.where(y > 0, y, _ALPHA * y)

    # ---- conv / pool stages -------------------------------------------------
    conv3x3(c0, w1_ref, b1_ref, c1p, 84, 84, 16, pad=True)      # cbr1
    maxpool3x3s2(c1p, p1, 42, 16, 86, flat=False)               # mp1
    conv3x3(p1, w2_ref, b2_ref, c2, 40, 40, 32, pad=False)      # cbr2
    conv3x3(c2, w3_ref, b3_ref, c3p, 38, 38, 32, pad=True)      # cbr3
    maxpool3x3s2(c3p, p2, 19, 32, 40, flat=False)               # mp2
    conv3x3(p2, w4_ref, b4_ref, c4, 17, 17, 64, pad=False)      # cbr4
    conv3x3(c4, w5_ref, b5_ref, c5p, 15, 15, 64, pad=True)      # cbr5
    maxpool3x3s2(c5p, p3, 8, 64, 17, flat=True)                 # mp3 -> (64,64)

    # ---- lbr1: per-position Linear(64,16) + folded BN + PReLU ---------------
    z = jnp.dot(p3[...], wl_ref[...], preferred_element_type=f32) + bl_ref[...]
    z = jnp.where(z > 0, z, _ALPHA * z)                         # (64, 16)

    # ---- final_l: Linear(1024, 6); NCHW flatten folded into wf_ref[o] ------
    parts = [jnp.sum(z * wf_ref[o]).reshape(1, 1) for o in range(6)]
    out_ref[...] = jnp.concatenate(parts, axis=1) + bf_ref[...]


# ----------------------------------------------------------------------------
# Parameter construction (deterministic, in-script) + kernel-layout prep
# ----------------------------------------------------------------------------
def _make_conv_block(key, cin, cout):
    k_w, k_g, k_b = jax.random.split(key, 3)
    w = jax.random.normal(k_w, (3, 3, cin, cout), jnp.float32) / jnp.sqrt(9.0 * cin)
    gamma = 1.0 + 0.1 * jax.random.normal(k_g, (1, cout), jnp.float32)
    beta = 0.1 * jax.random.normal(k_b, (1, cout), jnp.float32)
    scale = gamma / jnp.sqrt(1.0 + _BN_EPS)   # inference BN (mean=0, var=1)
    return dict(w=w, scale=scale, bias=beta)


def init_params(key):
    ks = jax.random.split(key, 8)
    params = {
        "cbr0": _make_conv_block(ks[0], 1, 16),
        "cbr1": _make_conv_block(ks[1], 16, 16),
        "cbr2": _make_conv_block(ks[2], 16, 32),
        "cbr3": _make_conv_block(ks[3], 32, 32),
        "cbr4": _make_conv_block(ks[4], 32, 64),
        "cbr5": _make_conv_block(ks[5], 64, 64),
    }
    k_w, k_b, k_g, k_bb = jax.random.split(ks[6], 4)
    lw = jax.random.normal(k_w, (64, 16), jnp.float32) / jnp.sqrt(64.0)
    lb = 0.1 * jax.random.normal(k_b, (1, 16), jnp.float32)
    gamma = 1.0 + 0.1 * jax.random.normal(k_g, (1, 16), jnp.float32)
    beta = 0.1 * jax.random.normal(k_bb, (1, 16), jnp.float32)
    params["lbr1"] = dict(w=lw, b=lb, scale=gamma / jnp.sqrt(1.0 + _BN_EPS),
                          bias=beta)
    k_w2, k_b2 = jax.random.split(ks[7], 2)
    params["final_l"] = dict(
        w=jax.random.normal(k_w2, (1024, 6), jnp.float32) / jnp.sqrt(1024.0),
        b=0.1 * jax.random.normal(k_b2, (1, 6), jnp.float32),
    )
    return params


def _prepare_kernel_params(params):
    """Fold BN affines into weights and pre-arrange tap / flatten layouts."""
    def conv_cat(p):
        w = p["w"] * p["scale"]                     # (3,3,Cin,Cout), BN folded
        cin, cout = w.shape[2], w.shape[3]
        # wcat[dw, dh*Cin + ci, co] = w[dh, dw, ci, co]
        wcat = jnp.transpose(w, (1, 0, 2, 3)).reshape(3, 3 * cin, cout)
        return wcat, p["bias"]

    kp = {}
    kp["w0"] = params["cbr0"]["w"] * params["cbr0"]["scale"]    # (3,3,1,16)
    kp["b0"] = params["cbr0"]["bias"]
    for i, name in enumerate(("cbr1", "cbr2", "cbr3", "cbr4", "cbr5"), start=1):
        kp[f"w{i}"], kp[f"b{i}"] = conv_cat(params[name])
    l = params["lbr1"]
    kp["wl"] = l["w"] * l["scale"]                              # (64, 16)
    kp["bl"] = l["b"] * l["scale"] + l["bias"]                  # (1, 16)
    f = params["final_l"]
    # Fold the PyTorch NCHW flatten (row index c*64 + h*8 + w) into the weight:
    # wf[o, p, c] with p = h*8 + w  (NHWC position order used in the kernel).
    kp["wf"] = jnp.transpose(f["w"].reshape(16, 64, 6), (2, 1, 0))
    kp["bf"] = f["b"]                                           # (1, 6)
    return kp


# ----------------------------------------------------------------------------
# Forward pass
# ----------------------------------------------------------------------------
def _bcast_spec(shape):
    nd = len(shape)
    return pl.BlockSpec(shape, lambda n, _nd=nd: (0,) * _nd)


def hnet_forward(x_nchw, params):
    x = jnp.transpose(x_nchw, (0, 2, 3, 1)).astype(jnp.float32)  # NCHW -> NHWC
    n = x.shape[0]
    kp = _prepare_kernel_params(params)

    in_specs = [
        pl.BlockSpec((None, _H_IN, _H_IN, 1), lambda i: (i, 0, 0, 0)),
        _bcast_spec((3, 3, 1, 16)), _bcast_spec((1, 16)),
        _bcast_spec((3, 48, 16)), _bcast_spec((1, 16)),
        _bcast_spec((3, 48, 32)), _bcast_spec((1, 32)),
        _bcast_spec((3, 96, 32)), _bcast_spec((1, 32)),
        _bcast_spec((3, 96, 64)), _bcast_spec((1, 64)),
        _bcast_spec((3, 192, 64)), _bcast_spec((1, 64)),
        _bcast_spec((64, 16)), _bcast_spec((1, 16)),
        _bcast_spec((6, 64, 16)), _bcast_spec((1, 6)),
    ]
    scratch_shapes = [
        pltpu.VMEM((86, 86, 16), jnp.float32),   # cbr0 out
        pltpu.VMEM((86, 86, 16), jnp.float32),   # cbr1 out (-inf padded)
        pltpu.VMEM((42, 42, 16), jnp.float32),   # mp1 out
        pltpu.VMEM((40, 40, 32), jnp.float32),   # cbr2 out
        pltpu.VMEM((40, 40, 32), jnp.float32),   # cbr3 out (-inf padded)
        pltpu.VMEM((19, 19, 32), jnp.float32),   # mp2 out
        pltpu.VMEM((17, 17, 64), jnp.float32),   # cbr4 out
        pltpu.VMEM((17, 17, 64), jnp.float32),   # cbr5 out (-inf padded)
        pltpu.VMEM((64, 64), jnp.float32),       # mp3 out, flattened (8*8, 64)
        pltpu.VMEM((88, 128), jnp.float32),      # shared pool row scratch
    ]

    out = pl.pallas_call(
        _hnet_kernel,
        out_shape=jax.ShapeDtypeStruct((n, 1, 6), jnp.float32),
        grid=(n,),
        in_specs=in_specs,
        out_specs=pl.BlockSpec((None, 1, 6), lambda i: (i, 0, 0)),
        scratch_shapes=scratch_shapes,
        compiler_params=pltpu.CompilerParams(
            dimension_semantics=("parallel",),
            vmem_limit_bytes=32 * 1024 * 1024),
    )(x,
      kp["w0"], kp["b0"],
      kp["w1"], kp["b1"],
      kp["w2"], kp["b2"],
      kp["w3"], kp["b3"],
      kp["w4"], kp["b4"],
      kp["w5"], kp["b5"],
      kp["wl"], kp["bl"],
      kp["wf"], kp["bf"])
    return out[:, 0, :]


if __name__ == "__main__":
    key = jax.random.PRNGKey(0)
    k_params, k_x = jax.random.split(key)
    params = init_params(k_params)

    # NCHW input, 1 channel, 88x88 spatial (implied by final_l in_features=1024).
    x = jax.random.normal(k_x, (2, 1, _H_IN, _H_IN), jnp.float32)

    fwd = jax.jit(functools.partial(hnet_forward, params=params))
    out = jax.block_until_ready(fwd(x))
    assert out.shape == (2, 6), out.shape
    assert bool(jnp.all(jnp.isfinite(out)))
    print("KERNEL_OK")
</pallas_src>

<mosaic_0001>
module attributes {stable_mosaic.version = 11 : i64} {
  func.func @_hnet_kernel(%arg0: i32, %arg1: memref<1x88x88x1xf32, #tpu.memory_space<vmem>>, %arg2: memref<3x3x1x16xf32, #tpu.memory_space<vmem>>, %arg3: memref<1x16xf32, #tpu.memory_space<vmem>>, %arg4: memref<3x48x16xf32, #tpu.memory_space<vmem>>, %arg5: memref<1x16xf32, #tpu.memory_space<vmem>>, %arg6: memref<3x48x32xf32, #tpu.memory_space<vmem>>, %arg7: memref<1x32xf32, #tpu.memory_space<vmem>>, %arg8: memref<3x96x32xf32, #tpu.memory_space<vmem>>, %arg9: memref<1x32xf32, #tpu.memory_space<vmem>>, %arg10: memref<3x96x64xf32, #tpu.memory_space<vmem>>, %arg11: memref<1x64xf32, #tpu.memory_space<vmem>>, %arg12: memref<3x192x64xf32, #tpu.memory_space<vmem>>, %arg13: memref<1x64xf32, #tpu.memory_space<vmem>>, %arg14: memref<64x16xf32, #tpu.memory_space<vmem>>, %arg15: memref<1x16xf32, #tpu.memory_space<vmem>>, %arg16: memref<6x64x16xf32, #tpu.memory_space<vmem>>, %arg17: memref<1x6xf32, #tpu.memory_space<vmem>>, %arg18: memref<1x1x6xf32, #tpu.memory_space<vmem>>, %arg19: memref<86x86x16xf32, #tpu.memory_space<vmem>>, %arg20: memref<86x86x16xf32, #tpu.memory_space<vmem>>, %arg21: memref<42x42x16xf32, #tpu.memory_space<vmem>>, %arg22: memref<40x40x32xf32, #tpu.memory_space<vmem>>, %arg23: memref<40x40x32xf32, #tpu.memory_space<vmem>>, %arg24: memref<19x19x32xf32, #tpu.memory_space<vmem>>, %arg25: memref<17x17x64xf32, #tpu.memory_space<vmem>>, %arg26: memref<17x17x64xf32, #tpu.memory_space<vmem>>, %arg27: memref<64x64xf32, #tpu.memory_space<vmem>>, %arg28: memref<88x128xf32, #tpu.memory_space<vmem>>) attributes {dimension_semantics = [#tpu.dimension_semantics<parallel>], iteration_bounds = array<i64: 2>, scalar_prefetch = 0 : i64, scratch_operands = 10 : i64, tpu.core_type = #tpu.core_type<tc>, window_params = [{transform_indices = @transform_0, window_bounds = array<i64: 1, 88, 88, 1>}, {pipeline_mode = #tpu.pipeline_mode<synchronous>, transform_indices = @transform_1, window_bounds = array<i64: 3, 3, 1, 16>}, {pipeline_mode = #tpu.pipeline_mode<synchronous>, transform_indices = @transform_2, window_bounds = array<i64: 1, 16>}, {pipeline_mode = #tpu.pipeline_mode<synchronous>, transform_indices = @transform_3, window_bounds = array<i64: 3, 48, 16>}, {pipeline_mode = #tpu.pipeline_mode<synchronous>, transform_indices = @transform_4, window_bounds = array<i64: 1, 16>}, {pipeline_mode = #tpu.pipeline_mode<synchronous>, transform_indices = @transform_5, window_bounds = array<i64: 3, 48, 32>}, {pipeline_mode = #tpu.pipeline_mode<synchronous>, transform_indices = @transform_6, window_bounds = array<i64: 1, 32>}, {pipeline_mode = #tpu.pipeline_mode<synchronous>, transform_indices = @transform_7, window_bounds = array<i64: 3, 96, 32>}, {pipeline_mode = #tpu.pipeline_mode<synchronous>, transform_indices = @transform_8, window_bounds = array<i64: 1, 32>}, {pipeline_mode = #tpu.pipeline_mode<synchronous>, transform_indices = @transform_9, window_bounds = array<i64: 3, 96, 64>}, {pipeline_mode = #tpu.pipeline_mode<synchronous>, transform_indices = @transform_10, window_bounds = array<i64: 1, 64>}, {pipeline_mode = #tpu.pipeline_mode<synchronous>, transform_indices = @transform_11, window_bounds = array<i64: 3, 192, 64>}, {pipeline_mode = #tpu.pipeline_mode<synchronous>, transform_indices = @transform_12, window_bounds = array<i64: 1, 64>}, {pipeline_mode = #tpu.pipeline_mode<synchronous>, transform_indices = @transform_13, window_bounds = array<i64: 64, 16>}, {pipeline_mode = #tpu.pipeline_mode<synchronous>, transform_indices = @transform_14, window_bounds = array<i64: 1, 16>}, {pipeline_mode = #tpu.pipeline_mode<synchronous>, transform_indices = @transform_15, window_bounds = array<i64: 6, 64, 16>}, {pipeline_mode = #tpu.pipeline_mode<synchronous>, transform_indices = @transform_16, window_bounds = array<i64: 1, 6>}, {transform_indices = @transform_17, window_bounds = array<i64: 1, 1, 6>}]} {
    %cst = arith.constant 0xFF800000 : f32
    %0 = vector.broadcast %cst : f32 to vector<86x86x16xf32>
    %c0 = arith.constant 0 : index
    %c0_0 = arith.constant 0 : index
    %c0_1 = arith.constant 0 : index
    %1 = vector.load %arg20[%c0, %c0_0, %c0_1] : memref<86x86x16xf32, #tpu.memory_space<vmem>>, vector<86x86x16xf32>
    tpu.vector_store %arg20[%c0, %c0_0, %c0_1], %0 {strides = array<i32>} : memref<86x86x16xf32, #tpu.memory_space<vmem>>, vector<86x86x16xf32>,
    %cst_2 = arith.constant 0xFF800000 : f32
    %2 = vector.broadcast %cst_2 : f32 to vector<40x40x32xf32>
    %c0_3 = arith.constant 0 : index
    %c0_4 = arith.constant 0 : index
    %c0_5 = arith.constant 0 : index
    %3 = vector.load %arg23[%c0_3, %c0_4, %c0_5] : memref<40x40x32xf32, #tpu.memory_space<vmem>>, vector<40x40x32xf32>
    tpu.vector_store %arg23[%c0_3, %c0_4, %c0_5], %2 {strides = array<i32>} : memref<40x40x32xf32, #tpu.memory_space<vmem>>, vector<40x40x32xf32>,
    %cst_6 = arith.constant 0xFF800000 : f32
    %4 = vector.broadcast %cst_6 : f32 to vector<17x17x64xf32>
    %c0_7 = arith.constant 0 : index
    %c0_8 = arith.constant 0 : index
    %c0_9 = arith.constant 0 : index
    %5 = vector.load %arg26[%c0_7, %c0_8, %c0_9] : memref<17x17x64xf32, #tpu.memory_space<vmem>>, vector<17x17x64xf32>
    tpu.vector_store %arg26[%c0_7, %c0_8, %c0_9], %4 {strides = array<i32>} : memref<17x17x64xf32, #tpu.memory_space<vmem>>, vector<17x17x64xf32>,
    %c0_10 = arith.constant 0 : index
    %c0_11 = arith.constant 0 : index
    %c0_12 = arith.constant 0 : index
    %c0_13 = arith.constant 0 : index
    %6 = vector.load %arg2[%c0_10, %c0_11, %c0_12, %c0_13] : memref<3x3x1x16xf32, #tpu.memory_space<vmem>>, vector<1x1x1x16xf32>
    %7 = vector.shape_cast %6 : vector<1x1x1x16xf32> to vector<1x16xf32>
    %c0_14 = arith.constant 0 : index
    %c1 = arith.constant 1 : index
    %c0_15 = arith.constant 0 : index
    %c0_16 = arith.constant 0 : index
    %8 = vector.load %arg2[%c0_14, %c1, %c0_15, %c0_16] : memref<3x3x1x16xf32, #tpu.memory_space<vmem>>, vector<1x1x1x16xf32>
    %9 = vector.shape_cast %8 : vector<1x1x1x16xf32> to vector<1x16xf32>
    %c0_17 = arith.constant 0 : index
    %c2 = arith.constant 2 : index
    %c0_18 = arith.constant 0 : index
    %c0_19 = arith.constant 0 : index
    %10 = vector.load %arg2[%c0_17, %c2, %c0_18, %c0_19] : memref<3x3x1x16xf32, #tpu.memory_space<vmem>>, vector<1x1x1x16xf32>
    %11 = vector.shape_cast %10 : vector<1x1x1x16xf32> to vector<1x16xf32>
    %c1_20 = arith.constant 1 : index
    %c0_21 = arith.constant 0 : index
    %c0_22 = arith.constant 0 : index
    %c0_23 = arith.constant 0 : index
    %12 = vector.load %arg2[%c1_20, %c0_21, %c0_22, %c0_23] : memref<3x3x1x16xf32, #tpu.memory_space<vmem>>, vector<1x1x1x16xf32>
    %13 = vector.shape_cast %12 : vector<1x1x1x16xf32> to vector<1x16xf32>
    %c1_24 = arith.constant 1 : index
    %c1_25 = arith.constant 1 : index
    %c0_26 = arith.constant 0 : index
    %c0_27 = arith.constant 0 : index
    %14 = vector.load %arg2[%c1_24, %c1_25, %c0_26, %c0_27] : memref<3x3x1x16xf32, #tpu.memory_space<vmem>>, vector<1x1x1x16xf32>
    %15 = vector.shape_cast %14 : vector<1x1x1x16xf32> to vector<1x16xf32>
    %c1_28 = arith.constant 1 : index
    %c2_29 = arith.constant 2 : index
    %c0_30 = arith.constant 0 : index
    %c0_31 = arith.constant 0 : index
    %16 = vector.load %arg2[%c1_28, %c2_29, %c0_30, %c0_31] : memref<3x3x1x16xf32, #tpu.memory_space<vmem>>, vector<1x1x1x16xf32>
    %17 = vector.shape_cast %16 : vector<1x1x1x16xf32> to vector<1x16xf32>
    %c2_32 = arith.constant 2 : index
    %c0_33 = arith.constant 0 : index
    %c0_34 = arith.constant 0 : index
    %c0_35 = arith.constant 0 : index
    %18 = vector.load %arg2[%c2_32, %c0_33, %c0_34, %c0_35] : memref<3x3x1x16xf32, #tpu.memory_space<vmem>>, vector<1x1x1x16xf32>
    %19 = vector.shape_cast %18 : vector<1x1x1x16xf32> to vector<1x16xf32>
    %c2_36 = arith.constant 2 : index
    %c1_37 = arith.constant 1 : index
    %c0_38 = arith.constant 0 : index
    %c0_39 = arith.constant 0 : index
    %20 = vector.load %arg2[%c2_36, %c1_37, %c0_38, %c0_39] : memref<3x3x1x16xf32, #tpu.memory_space<vmem>>, vector<1x1x1x16xf32>
    %21 = vector.shape_cast %20 : vector<1x1x1x16xf32> to vector<1x16xf32>
    %c2_40 = arith.constant 2 : index
    %c2_41 = arith.constant 2 : index
    %c0_42 = arith.constant 0 : index
    %c0_43 = arith.constant 0 : index
    %22 = vector.load %arg2[%c2_40, %c2_41, %c0_42, %c0_43] : memref<3x3x1x16xf32, #tpu.memory_space<vmem>>, vector<1x1x1x16xf32>
    %23 = vector.shape_cast %22 : vector<1x1x1x16xf32> to vector<1x16xf32>
    %c0_44 = arith.constant 0 : index
    %c0_45 = arith.constant 0 : index
    %24 = vector.load %arg3[%c0_44, %c0_45] : memref<1x16xf32, #tpu.memory_space<vmem>>, vector<1x16xf32>
    %c0_i32 = arith.constant 0 : i32
    %c86_i32 = arith.constant 86 : i32
    %25 = arith.addi %c0_i32, %c86_i32 : i32
    %c1_i32 = arith.constant 1 : i32
    scf.for %arg29 = %c0_i32 to %25 step %c1_i32  : i32 {
      %c1_i32_116 = arith.constant 1 : i32
      %104 = arith.muli %arg29, %c1_i32_116 : i32
      %c0_i32_117 = arith.constant 0 : i32
      %105 = arith.addi %c0_i32_117, %104 : i32
      %cst_118 = arith.constant 0.000000e+00 : f32
      %106 = vector.broadcast %cst_118 : f32 to vector<86x16xf32>
      %c0_i32_119 = arith.constant 0 : i32
      %107 = arith.addi %105, %c0_i32_119 : i32
      %c0_120 = arith.constant 0 : index
      %108 = arith.index_cast %107 : i32 to index
      %c0_121 = arith.constant 0 : index
      %c0_122 = arith.constant 0 : index
      %109 = vector.load %arg1[%c0_120, %108, %c0_121, %c0_122] : memref<1x88x88x1xf32, #tpu.memory_space<vmem>>, vector<1x1x86x1xf32>
      %110 = vector.shape_cast %109 : vector<1x1x86x1xf32> to vector<86x1xf32>
      %111 = vector.broadcast %110 : vector<86x1xf32> to vector<86x16xf32>
      %112 = vector.broadcast %7 : vector<1x16xf32> to vector<86x16xf32>
      %113 = arith.mulf %111, %112 : vector<86x16xf32>
      %114 = arith.addf %106, %113 : vector<86x16xf32>
      %c0_i32_123 = arith.constant 0 : i32
      %115 = arith.addi %105, %c0_i32_123 : i32
      %c0_124 = arith.constant 0 : index
      %116 = arith.index_cast %115 : i32 to index
      %c1_125 = arith.constant 1 : index
      %c0_126 = arith.constant 0 : index
      %117 = vector.load %arg1[%c0_124, %116, %c1_125, %c0_126] : memref<1x88x88x1xf32, #tpu.memory_space<vmem>>, vector<1x1x86x1xf32>
      %118 = vector.shape_cast %117 : vector<1x1x86x1xf32> to vector<86x1xf32>
      %119 = vector.broadcast %118 : vector<86x1xf32> to vector<86x16xf32>
      %120 = vector.broadcast %9 : vector<1x16xf32> to vector<86x16xf32>
      %121 = arith.mulf %119, %120 : vector<86x16xf32>
      %122 = arith.addf %114, %121 : vector<86x16xf32>
      %c0_i32_127 = arith.constant 0 : i32
      %123 = arith.addi %105, %c0_i32_127 : i32
      %c0_128 = arith.constant 0 : index
      %124 = arith.index_cast %123 : i32 to index
      %c2_129 = arith.constant 2 : index
      %c0_130 = arith.constant 0 : index
      %125 = vector.load %arg1[%c0_128, %124, %c2_129, %c0_130] : memref<1x88x88x1xf32, #tpu.memory_space<vmem>>, vector<1x1x86x1xf32>
      %126 = vector.shape_cast %125 : vector<1x1x86x1xf32> to vector<86x1xf32>
      %127 = vector.broadcast %126 : vector<86x1xf32> to vector<86x16xf32>
      %128 = vector.broadcast %11 : vector<1x16xf32> to vector<86x16xf32>
      %129 = arith.mulf %127, %128 : vector<86x16xf32>
      %130 = arith.addf %122, %129 : vector<86x16xf32>
      %c1_i32_131 = arith.constant 1 : i32
      %131 = arith.addi %105, %c1_i32_131 : i32
      %c0_132 = arith.constant 0 : index
      %132 = arith.index_cast %131 : i32 to index
      %c0_133 = arith.constant 0 : index
      %c0_134 = arith.constant 0 : index
      %133 = vector.load %arg1[%c0_132, %132, %c0_133, %c0_134] : memref<1x88x88x1xf32, #tpu.memory_space<vmem>>, vector<1x1x86x1xf32>
      %134 = vector.shape_cast %133 : vector<1x1x86x1xf32> to vector<86x1xf32>
      %135 = vector.broadcast %134 : vector<86x1xf32> to vector<86x16xf32>
      %136 = vector.broadcast %13 : vector<1x16xf32> to vector<86x16xf32>
      %137 = arith.mulf %135, %136 : vector<86x16xf32>
      %138 = arith.addf %130, %137 : vector<86x16xf32>
      %c1_i32_135 = arith.constant 1 : i32
      %139 = arith.addi %105, %c1_i32_135 : i32
      %c0_136 = arith.constant 0 : index
      %140 = arith.index_cast %139 : i32 to index
      %c1_137 = arith.constant 1 : index
      %c0_138 = arith.constant 0 : index
      %141 = vector.load %arg1[%c0_136, %140, %c1_137, %c0_138] : memref<1x88x88x1xf32, #tpu.memory_space<vmem>>, vector<1x1x86x1xf32>
      %142 = vector.shape_cast %141 : vector<1x1x86x1xf32> to vector<86x1xf32>
      %143 = vector.broadcast %142 : vector<86x1xf32> to vector<86x16xf32>
      %144 = vector.broadcast %15 : vector<1x16xf32> to vector<86x16xf32>
      %145 = arith.mulf %143, %144 : vector<86x16xf32>
      %146 = arith.addf %138, %145 : vector<86x16xf32>
      %c1_i32_139 = arith.constant 1 : i32
      %147 = arith.addi %105, %c1_i32_139 : i32
      %c0_140 = arith.constant 0 : index
      %148 = arith.index_cast %147 : i32 to index
      %c2_141 = arith.constant 2 : index
      %c0_142 = arith.constant 0 : index
      %149 = vector.load %arg1[%c0_140, %148, %c2_141, %c0_142] : memref<1x88x88x1xf32, #tpu.memory_space<vmem>>, vector<1x1x86x1xf32>
      %150 = vector.shape_cast %149 : vector<1x1x86x1xf32> to vector<86x1xf32>
      %151 = vector.broadcast %150 : vector<86x1xf32> to vector<86x16xf32>
      %152 = vector.broadcast %17 : vector<1x16xf32> to vector<86x16xf32>
      %153 = arith.mulf %151, %152 : vector<86x16xf32>
      %154 = arith.addf %146, %153 : vector<86x16xf32>
      %c2_i32 = arith.constant 2 : i32
      %155 = arith.addi %105, %c2_i32 : i32
      %c0_143 = arith.constant 0 : index
      %156 = arith.index_cast %155 : i32 to index
      %c0_144 = arith.constant 0 : index
      %c0_145 = arith.constant 0 : index
      %157 = vector.load %arg1[%c0_143, %156, %c0_144, %c0_145] : memref<1x88x88x1xf32, #tpu.memory_space<vmem>>, vector<1x1x86x1xf32>
      %158 = vector.shape_cast %157 : vector<1x1x86x1xf32> to vector<86x1xf32>
      %159 = vector.broadcast %158 : vector<86x1xf32> to vector<86x16xf32>
      %160 = vector.broadcast %19 : vector<1x16xf32> to vector<86x16xf32>
      %161 = arith.mulf %159, %160 : vector<86x16xf32>
      %162 = arith.addf %154, %161 : vector<86x16xf32>
      %c2_i32_146 = arith.constant 2 : i32
      %163 = arith.addi %105, %c2_i32_146 : i32
      %c0_147 = arith.constant 0 : index
      %164 = arith.index_cast %163 : i32 to index
      %c1_148 = arith.constant 1 : index
      %c0_149 = arith.constant 0 : index
      %165 = vector.load %arg1[%c0_147, %164, %c1_148, %c0_149] : memref<1x88x88x1xf32, #tpu.memory_space<vmem>>, vector<1x1x86x1xf32>
      %166 = vector.shape_cast %165 : vector<1x1x86x1xf32> to vector<86x1xf32>
      %167 = vector.broadcast %166 : vector<86x1xf32> to vector<86x16xf32>
      %168 = vector.broadcast %21 : vector<1x16xf32> to vector<86x16xf32>
      %169 = arith.mulf %167, %168 : vector<86x16xf32>
      %170 = arith.addf %162, %169 : vector<86x16xf32>
      %c2_i32_150 = arith.constant 2 : i32
      %171 = arith.addi %105, %c2_i32_150 : i32
      %c0_151 = arith.constant 0 : index
      %172 = arith.index_cast %171 : i32 to index
      %c2_152 = arith.constant 2 : index
      %c0_153 = arith.constant 0 : index
      %173 = vector.load %arg1[%c0_151, %172, %c2_152, %c0_153] : memref<1x88x88x1xf32, #tpu.memory_space<vmem>>, vector<1x1x86x1xf32>
      %174 = vector.shape_cast %173 : vector<1x1x86x1xf32> to vector<86x1xf32>
      %175 = vector.broadcast %174 : vector<86x1xf32> to vector<86x16xf32>
      %176 = vector.broadcast %23 : vector<1x16xf32> to vector<86x16xf32>
      %177 = arith.mulf %175, %176 : vector<86x16xf32>
      %178 = arith.addf %170, %177 : vector<86x16xf32>
      %179 = vector.broadcast %24 : vector<1x16xf32> to vector<86x16xf32>
      %180 = arith.addf %178, %179 : vector<86x16xf32>
      %cst_154 = arith.constant 0.000000e+00 : f32
      %181 = vector.broadcast %cst_154 : f32 to vector<86x16xf32>
      %182 = arith.cmpf ogt, %180, %181 : vector<86x16xf32>
      %cst_155 = arith.constant 2.500000e-01 : f32
      %183 = vector.broadcast %cst_155 : f32 to vector<86x16xf32>
      %184 = arith.mulf %183, %180 : vector<86x16xf32>
      %185 = arith.select %182, %180, %184 : vector<86x16xi1>, vector<86x16xf32>
      %186 = arith.index_cast %105 : i32 to index
      %c0_156 = arith.constant 0 : index
      %c0_157 = arith.constant 0 : index
      %187 = vector.load %arg19[%186, %c0_156, %c0_157] : memref<86x86x16xf32, #tpu.memory_space<vmem>>, vector<1x86x16xf32>
      %188 = vector.shape_cast %187 : vector<1x86x16xf32> to vector<86x16xf32>
      %189 = vector.shape_cast %185 : vector<86x16xf32> to vector<1x86x16xf32>
      tpu.vector_store %arg19[%186, %c0_156, %c0_157], %189 {strides = array<i32>} : memref<86x86x16xf32, #tpu.memory_space<vmem>>, vector<1x86x16xf32>,
    }
    %c86_i32_46 = arith.constant 86 : i32
    %c0_47 = arith.constant 0 : index
    %c0_48 = arith.constant 0 : index
    %26 = vector.load %arg5[%c0_47, %c0_48] : memref<1x16xf32, #tpu.memory_space<vmem>>, vector<1x16xf32>
    %c0_i32_49 = arith.constant 0 : i32
    %c84_i32 = arith.constant 84 : i32
    %27 = arith.addi %c0_i32_49, %c84_i32 : i32
    %c1_i32_50 = arith.constant 1 : i32
    scf.for %arg29 = %c0_i32_49 to %27 step %c1_i32_50  : i32 {
      %c1_i32_116 = arith.constant 1 : i32
      %104 = arith.muli %arg29, %c1_i32_116 : i32
      %c0_i32_117 = arith.constant 0 : i32
      %105 = arith.addi %c0_i32_117, %104 : i32
      %cst_118 = arith.constant 0.000000e+00 : f32
      %106 = vector.broadcast %cst_118 : f32 to vector<84x16xf32>
      %c0_i32_119 = arith.constant 0 : i32
      %107 = arith.addi %105, %c0_i32_119 : i32
      %108 = arith.index_cast %107 : i32 to index
      %c0_120 = arith.constant 0 : index
      %c0_121 = arith.constant 0 : index
      %109 = vector.load %arg19[%108, %c0_120, %c0_121] : memref<86x86x16xf32, #tpu.memory_space<vmem>>, vector<1x84x16xf32>
      %110 = vector.shape_cast %109 : vector<1x84x16xf32> to vector<84x16xf32>
      %c1_i32_122 = arith.constant 1 : i32
      %111 = arith.addi %105, %c1_i32_122 : i32
      %112 = arith.index_cast %111 : i32 to index
      %c0_123 = arith.constant 0 : index
      %c0_124 = arith.constant 0 : index
      %113 = vector.load %arg19[%112, %c0_123, %c0_124] : memref<86x86x16xf32, #tpu.memory_space<vmem>>, vector<1x84x16xf32>
      %114 = vector.shape_cast %113 : vector<1x84x16xf32> to vector<84x16xf32>
      %c2_i32 = arith.constant 2 : i32
      %115 = arith.addi %105, %c2_i32 : i32
      %116 = arith.index_cast %115 : i32 to index
      %c0_125 = arith.constant 0 : index
      %c0_126 = arith.constant 0 : index
      %117 = vector.load %arg19[%116, %c0_125, %c0_126] : memref<86x86x16xf32, #tpu.memory_space<vmem>>, vector<1x84x16xf32>
      %118 = vector.shape_cast %117 : vector<1x84x16xf32> to vector<84x16xf32>
      %119 = tpu.concatenate %110, %114, %118 in 1 : vector<84x16xf32>, vector<84x16xf32>, vector<84x16xf32> -> vector<84x48xf32>
      %c0_127 = arith.constant 0 : index
      %c0_128 = arith.constant 0 : index
      %c0_129 = arith.constant 0 : index
      %120 = vector.load %arg4[%c0_127, %c0_128, %c0_129] : memref<3x48x16xf32, #tpu.memory_space<vmem>>, vector<1x48x16xf32>
      %121 = vector.shape_cast %120 : vector<1x48x16xf32> to vector<48x16xf32>
      %cst_130 = arith.constant dense<0.000000e+00> : vector<84x16xf32>
      %122 = tpu.matmul %119, %121, %cst_130 {dimension_numbers = #tpu.dot_dimension_numbers<[1], [0], [0], [1], [0, 0, 1, 1], [], []>} : vector<84x48xf32>, vector<48x16xf32>, vector<84x16xf32> -> vector<84x16xf32>
      %123 = arith.addf %106, %122 : vector<84x16xf32>
      %c0_i32_131 = arith.constant 0 : i32
      %124 = arith.addi %105, %c0_i32_131 : i32
      %125 = arith.index_cast %124 : i32 to index
      %c1_132 = arith.constant 1 : index
      %c0_133 = arith.constant 0 : index
      %126 = vector.load %arg19[%125, %c1_132, %c0_133] : memref<86x86x16xf32, #tpu.memory_space<vmem>>, vector<1x84x16xf32>
      %127 = vector.shape_cast %126 : vector<1x84x16xf32> to vector<84x16xf32>
      %c1_i32_134 = arith.constant 1 : i32
      %128 = arith.addi %105, %c1_i32_134 : i32
      %129 = arith.index_cast %128 : i32 to index
      %c1_135 = arith.constant 1 : index
      %c0_136 = arith.constant 0 : index
      %130 = vector.load %arg19[%129, %c1_135, %c0_136] : memref<86x86x16xf32, #tpu.memory_space<vmem>>, vector<1x84x16xf32>
      %131 = vector.shape_cast %130 : vector<1x84x16xf32> to vector<84x16xf32>
      %c2_i32_137 = arith.constant 2 : i32
      %132 = arith.addi %105, %c2_i32_137 : i32
      %133 = arith.index_cast %132 : i32 to index
      %c1_138 = arith.constant 1 : index
      %c0_139 = arith.constant 0 : index
      %134 = vector.load %arg19[%133, %c1_138, %c0_139] : memref<86x86x16xf32, #tpu.memory_space<vmem>>, vector<1x84x16xf32>
      %135 = vector.shape_cast %134 : vector<1x84x16xf32> to vector<84x16xf32>
      %136 = tpu.concatenate %127, %131, %135 in 1 : vector<84x16xf32>, vector<84x16xf32>, vector<84x16xf32> -> vector<84x48xf32>
      %c1_140 = arith.constant 1 : index
      %c0_141 = arith.constant 0 : index
      %c0_142 = arith.constant 0 : index
      %137 = vector.load %arg4[%c1_140, %c0_141, %c0_142] : memref<3x48x16xf32, #tpu.memory_space<vmem>>, vector<1x48x16xf32>
      %138 = vector.shape_cast %137 : vector<1x48x16xf32> to vector<48x16xf32>
      %cst_143 = arith.constant dense<0.000000e+00> : vector<84x16xf32>
      %139 = tpu.matmul %136, %138, %cst_143 {dimension_numbers = #tpu.dot_dimension_numbers<[1], [0], [0], [1], [0, 0, 1, 1], [], []>} : vector<84x48xf32>, vector<48x16xf32>, vector<84x16xf32> -> vector<84x16xf32>
      %140 = arith.addf %123, %139 : vector<84x16xf32>
      %c0_i32_144 = arith.constant 0 : i32
      %141 = arith.addi %105, %c0_i32_144 : i32
      %142 = arith.index_cast %141 : i32 to index
      %c2_145 = arith.constant 2 : index
      %c0_146 = arith.constant 0 : index
      %143 = vector.load %arg19[%142, %c2_145, %c0_146] : memref<86x86x16xf32, #tpu.memory_space<vmem>>, vector<1x84x16xf32>
      %144 = vector.shape_cast %143 : vector<1x84x16xf32> to vector<84x16xf32>
      %c1_i32_147 = arith.constant 1 : i32
      %145 = arith.addi %105, %c1_i32_147 : i32
      %146 = arith.index_cast %145 : i32 to index
      %c2_148 = arith.constant 2 : index
      %c0_149 = arith.constant 0 : index
      %147 = vector.load %arg19[%146, %c2_148, %c0_149] : memref<86x86x16xf32, #tpu.memory_space<vmem>>, vector<1x84x16xf32>
      %148 = vector.shape_cast %147 : vector<1x84x16xf32> to vector<84x16xf32>
      %c2_i32_150 = arith.constant 2 : i32
      %149 = arith.addi %105, %c2_i32_150 : i32
      %150 = arith.index_cast %149 : i32 to index
      %c2_151 = arith.constant 2 : index
      %c0_152 = arith.constant 0 : index
      %151 = vector.load %arg19[%150, %c2_151, %c0_152] : memref<86x86x16xf32, #tpu.memory_space<vmem>>, vector<1x84x16xf32>
      %152 = vector.shape_cast %151 : vector<1x84x16xf32> to vector<84x16xf32>
      %153 = tpu.concatenate %144, %148, %152 in 1 : vector<84x16xf32>, vector<84x16xf32>, vector<84x16xf32> -> vector<84x48xf32>
      %c2_153 = arith.constant 2 : index
      %c0_154 = arith.constant 0 : index
      %c0_155 = arith.constant 0 : index
      %154 = vector.load %arg4[%c2_153, %c0_154, %c0_155] : memref<3x48x16xf32, #tpu.memory_space<vmem>>, vector<1x48x16xf32>
      %155 = vector.shape_cast %154 : vector<1x48x16xf32> to vector<48x16xf32>
      %cst_156 = arith.constant dense<0.000000e+00> : vector<84x16xf32>
      %156 = tpu.matmul %153, %155, %cst_156 {dimension_numbers = #tpu.dot_dimension_numbers<[1], [0], [0], [1], [0, 0, 1, 1], [], []>} : vector<84x48xf32>, vector<48x16xf32>, vector<84x16xf32> -> vector<84x16xf32>
      %157 = arith.addf %140, %156 : vector<84x16xf32>
      %158 = vector.broadcast %26 : vector<1x16xf32> to vector<84x16xf32>
      %159 = arith.addf %157, %158 : vector<84x16xf32>
      %cst_157 = arith.constant 0.000000e+00 : f32
      %160 = vector.broadcast %cst_157 : f32 to vector<84x16xf32>
      %161 = arith.cmpf ogt, %159, %160 : vector<84x16xf32>
      %cst_158 = arith.constant 2.500000e-01 : f32
      %162 = vector.broadcast %cst_158 : f32 to vector<84x16xf32>
      %163 = arith.mulf %162, %159 : vector<84x16xf32>
      %164 = arith.select %161, %159, %163 : vector<84x16xi1>, vector<84x16xf32>
      %c1_i32_159 = arith.constant 1 : i32
      %165 = arith.addi %105, %c1_i32_159 : i32
      %166 = arith.index_cast %165 : i32 to index
      %c1_160 = arith.constant 1 : index
      %c0_161 = arith.constant 0 : index
      %167 = vector.load %arg20[%166, %c1_160, %c0_161] : memref<86x86x16xf32, #tpu.memory_space<vmem>>, vector<1x84x16xf32>
      %168 = vector.shape_cast %167 : vector<1x84x16xf32> to vector<84x16xf32>
      %169 = vector.shape_cast %164 : vector<84x16xf32> to vector<1x84x16xf32>
      tpu.vector_store %arg20[%166, %c1_160, %c0_161], %169 {strides = array<i32>} : memref<86x86x16xf32, #tpu.memory_space<vmem>>, vector<1x84x16xf32>,
    }
    %c84_i32_51 = arith.constant 84 : i32
    %c0_i32_52 = arith.constant 0 : i32
    %c42_i32 = arith.constant 42 : i32
    %28 = arith.addi %c0_i32_52, %c42_i32 : i32
    %c1_i32_53 = arith.constant 1 : i32
    scf.for %arg29 = %c0_i32_52 to %28 step %c1_i32_53  : i32 {
      %c1_i32_116 = arith.constant 1 : i32
      %104 = arith.muli %arg29, %c1_i32_116 : i32
      %c0_i32_117 = arith.constant 0 : i32
      %105 = arith.addi %c0_i32_117, %104 : i32
      %c2_i32 = arith.constant 2 : i32
      %106 = arith.muli %c2_i32, %105 : i32
      %107 = arith.index_cast %106 : i32 to index
      %c0_118 = arith.constant 0 : index
      %c0_119 = arith.constant 0 : index
      %108 = vector.load %arg20[%107, %c0_118, %c0_119] : memref<86x86x16xf32, #tpu.memory_space<vmem>>, vector<1x86x16xf32>
      %109 = vector.shape_cast %108 : vector<1x86x16xf32> to vector<86x16xf32>
      %c1_i32_120 = arith.constant 1 : i32
      %110 = arith.addi %106, %c1_i32_120 : i32
      %111 = arith.index_cast %110 : i32 to index
      %c0_121 = arith.constant 0 : index
      %c0_122 = arith.constant 0 : index
      %112 = vector.load %arg20[%111, %c0_121, %c0_122] : memref<86x86x16xf32, #tpu.memory_space<vmem>>, vector<1x86x16xf32>
      %113 = vector.shape_cast %112 : vector<1x86x16xf32> to vector<86x16xf32>
      %114 = arith.maximumf %109, %113 : vector<86x16xf32>
      %c2_i32_123 = arith.constant 2 : i32
      %115 = arith.addi %106, %c2_i32_123 : i32
      %116 = arith.index_cast %115 : i32 to index
      %c0_124 = arith.constant 0 : index
      %c0_125 = arith.constant 0 : index
      %117 = vector.load %arg20[%116, %c0_124, %c0_125] : memref<86x86x16xf32, #tpu.memory_space<vmem>>, vector<1x86x16xf32>
      %118 = vector.shape_cast %117 : vector<1x86x16xf32> to vector<86x16xf32>
      %119 = arith.maximumf %114, %118 : vector<86x16xf32>
      %c0_126 = arith.constant 0 : index
      %c0_127 = arith.constant 0 : index
      %120 = vector.load %arg28[%c0_126, %c0_127] : memref<88x128xf32, #tpu.memory_space<vmem>>, vector<86x16xf32>
      tpu.vector_store %arg28[%c0_126, %c0_127], %119 {strides = array<i32>} : memref<88x128xf32, #tpu.memory_space<vmem>>, vector<86x16xf32>,
      %c0_128 = arith.constant 0 : index
      %c0_129 = arith.constant 0 : index
      %121 = tpu.strided_load %arg28[%c0_128, %c0_129] {strides = array<i32: 2, 1>} : memref<88x128xf32, #tpu.memory_space<vmem>>, vector<42x16xf32>
      %c1_130 = arith.constant 1 : index
      %c0_131 = arith.constant 0 : index
      %122 = tpu.strided_load %arg28[%c1_130, %c0_131] {strides = array<i32: 2, 1>} : memref<88x128xf32, #tpu.memory_space<vmem>>, vector<42x16xf32>
      %123 = arith.maximumf %121, %122 : vector<42x16xf32>
      %c2_132 = arith.constant 2 : index
      %c0_133 = arith.constant 0 : index
      %124 = tpu.strided_load %arg28[%c2_132, %c0_133] {strides = array<i32: 2, 1>} : memref<88x128xf32, #tpu.memory_space<vmem>>, vector<42x16xf32>
      %125 = arith.maximumf %123, %124 : vector<42x16xf32>
      %126 = arith.index_cast %105 : i32 to index
      %c0_134 = arith.constant 0 : index
      %c0_135 = arith.constant 0 : index
      %127 = vector.load %arg21[%126, %c0_134, %c0_135] : memref<42x42x16xf32, #tpu.memory_space<vmem>>, vector<1x42x16xf32>
      %128 = vector.shape_cast %127 : vector<1x42x16xf32> to vector<42x16xf32>
      %129 = vector.shape_cast %125 : vector<42x16xf32> to vector<1x42x16xf32>
      tpu.vector_store %arg21[%126, %c0_134, %c0_135], %129 {strides = array<i32>} : memref<42x42x16xf32, #tpu.memory_space<vmem>>, vector<1x42x16xf32>,
    }
    %c42_i32_54 = arith.constant 42 : i32
    %c0_55 = arith.constant 0 : index
    %c0_56 = arith.constant 0 : index
    %29 = vector.load %arg7[%c0_55, %c0_56] : memref<1x32xf32, #tpu.memory_space<vmem>>, vector<1x32xf32>
    %c0_i32_57 = arith.constant 0 : i32
    %c40_i32 = arith.constant 40 : i32
    %30 = arith.addi %c0_i32_57, %c40_i32 : i32
    %c1_i32_58 = arith.constant 1 : i32
    scf.for %arg29 = %c0_i32_57 to %30 step %c1_i32_58  : i32 {
      %c1_i32_116 = arith.constant 1 : i32
      %104 = arith.muli %arg29, %c1_i32_116 : i32
      %c0_i32_117 = arith.constant 0 : i32
      %105 = arith.addi %c0_i32_117, %104 : i32
      %cst_118 = arith.constant 0.000000e+00 : f32
      %106 = vector.broadcast %cst_118 : f32 to vector<40x32xf32>
      %c0_i32_119 = arith.constant 0 : i32
      %107 = arith.addi %105, %c0_i32_119 : i32
      %108 = arith.index_cast %107 : i32 to index
      %c0_120 = arith.constant 0 : index
      %c0_121 = arith.constant 0 : index
      %109 = vector.load %arg21[%108, %c0_120, %c0_121] : memref<42x42x16xf32, #tpu.memory_space<vmem>>, vector<1x40x16xf32>
      %110 = vector.shape_cast %109 : vector<1x40x16xf32> to vector<40x16xf32>
      %c1_i32_122 = arith.constant 1 : i32
      %111 = arith.addi %105, %c1_i32_122 : i32
      %112 = arith.index_cast %111 : i32 to index
      %c0_123 = arith.constant 0 : index
      %c0_124 = arith.constant 0 : index
      %113 = vector.load %arg21[%112, %c0_123, %c0_124] : memref<42x42x16xf32, #tpu.memory_space<vmem>>, vector<1x40x16xf32>
      %114 = vector.shape_cast %113 : vector<1x40x16xf32> to vector<40x16xf32>
      %c2_i32 = arith.constant 2 : i32
      %115 = arith.addi %105, %c2_i32 : i32
      %116 = arith.index_cast %115 : i32 to index
      %c0_125 = arith.constant 0 : index
      %c0_126 = arith.constant 0 : index
      %117 = vector.load %arg21[%116, %c0_125, %c0_126] : memref<42x42x16xf32, #tpu.memory_space<vmem>>, vector<1x40x16xf32>
      %118 = vector.shape_cast %117 : vector<1x40x16xf32> to vector<40x16xf32>
      %119 = tpu.concatenate %110, %114, %118 in 1 : vector<40x16xf32>, vector<40x16xf32>, vector<40x16xf32> -> vector<40x48xf32>
      %c0_127 = arith.constant 0 : index
      %c0_128 = arith.constant 0 : index
      %c0_129 = arith.constant 0 : index
      %120 = vector.load %arg6[%c0_127, %c0_128, %c0_129] : memref<3x48x32xf32, #tpu.memory_space<vmem>>, vector<1x48x32xf32>
      %121 = vector.shape_cast %120 : vector<1x48x32xf32> to vector<48x32xf32>
      %cst_130 = arith.constant dense<0.000000e+00> : vector<40x32xf32>
      %122 = tpu.matmul %119, %121, %cst_130 {dimension_numbers = #tpu.dot_dimension_numbers<[1], [0], [0], [1], [0, 0, 1, 1], [], []>} : vector<40x48xf32>, vector<48x32xf32>, vector<40x32xf32> -> vector<40x32xf32>
      %123 = arith.addf %106, %122 : vector<40x32xf32>
      %c0_i32_131 = arith.constant 0 : i32
      %124 = arith.addi %105, %c0_i32_131 : i32
      %125 = arith.index_cast %124 : i32 to index
      %c1_132 = arith.constant 1 : index
      %c0_133 = arith.constant 0 : index
      %126 = vector.load %arg21[%125, %c1_132, %c0_133] : memref<42x42x16xf32, #tpu.memory_space<vmem>>, vector<1x40x16xf32>
      %127 = vector.shape_cast %126 : vector<1x40x16xf32> to vector<40x16xf32>
      %c1_i32_134 = arith.constant 1 : i32
      %128 = arith.addi %105, %c1_i32_134 : i32
      %129 = arith.index_cast %128 : i32 to index
      %c1_135 = arith.constant 1 : index
      %c0_136 = arith.constant 0 : index
      %130 = vector.load %arg21[%129, %c1_135, %c0_136] : memref<42x42x16xf32, #tpu.memory_space<vmem>>, vector<1x40x16xf32>
      %131 = vector.shape_cast %130 : vector<1x40x16xf32> to vector<40x16xf32>
      %c2_i32_137 = arith.constant 2 : i32
      %132 = arith.addi %105, %c2_i32_137 : i32
      %133 = arith.index_cast %132 : i32 to index
      %c1_138 = arith.constant 1 : index
      %c0_139 = arith.constant 0 : index
      %134 = vector.load %arg21[%133, %c1_138, %c0_139] : memref<42x42x16xf32, #tpu.memory_space<vmem>>, vector<1x40x16xf32>
      %135 = vector.shape_cast %134 : vector<1x40x16xf32> to vector<40x16xf32>
      %136 = tpu.concatenate %127, %131, %135 in 1 : vector<40x16xf32>, vector<40x16xf32>, vector<40x16xf32> -> vector<40x48xf32>
      %c1_140 = arith.constant 1 : index
      %c0_141 = arith.constant 0 : index
      %c0_142 = arith.constant 0 : index
      %137 = vector.load %arg6[%c1_140, %c0_141, %c0_142] : memref<3x48x32xf32, #tpu.memory_space<vmem>>, vector<1x48x32xf32>
      %138 = vector.shape_cast %137 : vector<1x48x32xf32> to vector<48x32xf32>
      %cst_143 = arith.constant dense<0.000000e+00> : vector<40x32xf32>
      %139 = tpu.matmul %136, %138, %cst_143 {dimension_numbers = #tpu.dot_dimension_numbers<[1], [0], [0], [1], [0, 0, 1, 1], [], []>} : vector<40x48xf32>, vector<48x32xf32>, vector<40x32xf32> -> vector<40x32xf32>
      %140 = arith.addf %123, %139 : vector<40x32xf32>
      %c0_i32_144 = arith.constant 0 : i32
      %141 = arith.addi %105, %c0_i32_144 : i32
      %142 = arith.index_cast %141 : i32 to index
      %c2_145 = arith.constant 2 : index
      %c0_146 = arith.constant 0 : index
      %143 = vector.load %arg21[%142, %c2_145, %c0_146] : memref<42x42x16xf32, #tpu.memory_space<vmem>>, vector<1x40x16xf32>
      %144 = vector.shape_cast %143 : vector<1x40x16xf32> to vector<40x16xf32>
      %c1_i32_147 = arith.constant 1 : i32
      %145 = arith.addi %105, %c1_i32_147 : i32
      %146 = arith.index_cast %145 : i32 to index
      %c2_148 = arith.constant 2 : index
      %c0_149 = arith.constant 0 : index
      %147 = vector.load %arg21[%146, %c2_148, %c0_149] : memref<42x42x16xf32, #tpu.memory_space<vmem>>, vector<1x40x16xf32>
      %148 = vector.shape_cast %147 : vector<1x40x16xf32> to vector<40x16xf32>
      %c2_i32_150 = arith.constant 2 : i32
      %149 = arith.addi %105, %c2_i32_150 : i32
      %150 = arith.index_cast %149 : i32 to index
      %c2_151 = arith.constant 2 : index
      %c0_152 = arith.constant 0 : index
      %151 = vector.load %arg21[%150, %c2_151, %c0_152] : memref<42x42x16xf32, #tpu.memory_space<vmem>>, vector<1x40x16xf32>
      %152 = vector.shape_cast %151 : vector<1x40x16xf32> to vector<40x16xf32>
      %153 = tpu.concatenate %144, %148, %152 in 1 : vector<40x16xf32>, vector<40x16xf32>, vector<40x16xf32> -> vector<40x48xf32>
      %c2_153 = arith.constant 2 : index
      %c0_154 = arith.constant 0 : index
      %c0_155 = arith.constant 0 : index
      %154 = vector.load %arg6[%c2_153, %c0_154, %c0_155] : memref<3x48x32xf32, #tpu.memory_space<vmem>>, vector<1x48x32xf32>
      %155 = vector.shape_cast %154 : vector<1x48x32xf32> to vector<48x32xf32>
      %cst_156 = arith.constant dense<0.000000e+00> : vector<40x32xf32>
      %156 = tpu.matmul %153, %155, %cst_156 {dimension_numbers = #tpu.dot_dimension_numbers<[1], [0], [0], [1], [0, 0, 1, 1], [], []>} : vector<40x48xf32>, vector<48x32xf32>, vector<40x32xf32> -> vector<40x32xf32>
      %157 = arith.addf %140, %156 : vector<40x32xf32>
      %158 = vector.broadcast %29 : vector<1x32xf32> to vector<40x32xf32>
      %159 = arith.addf %157, %158 : vector<40x32xf32>
      %cst_157 = arith.constant 0.000000e+00 : f32
      %160 = vector.broadcast %cst_157 : f32 to vector<40x32xf32>
      %161 = arith.cmpf ogt, %159, %160 : vector<40x32xf32>
      %cst_158 = arith.constant 2.500000e-01 : f32
      %162 = vector.broadcast %cst_158 : f32 to vector<40x32xf32>
      %163 = arith.mulf %162, %159 : vector<40x32xf32>
      %164 = arith.select %161, %159, %163 : vector<40x32xi1>, vector<40x32xf32>
      %c0_i32_159 = arith.constant 0 : i32
      %165 = arith.addi %105, %c0_i32_159 : i32
      %166 = arith.index_cast %165 : i32 to index
      %c0_160 = arith.constant 0 : index
      %c0_161 = arith.constant 0 : index
      %167 = vector.load %arg22[%166, %c0_160, %c0_161] : memref<40x40x32xf32, #tpu.memory_space<vmem>>, vector<1x40x32xf32>
      %168 = vector.shape_cast %167 : vector<1x40x32xf32> to vector<40x32xf32>
      %169 = vector.shape_cast %164 : vector<40x32xf32> to vector<1x40x32xf32>
      tpu.vector_store %arg22[%166, %c0_160, %c0_161], %169 {strides = array<i32>} : memref<40x40x32xf32, #tpu.memory_space<vmem>>, vector<1x40x32xf32>,
    }
    %c40_i32_59 = arith.constant 40 : i32
    %c0_60 = arith.constant 0 : index
    %c0_61 = arith.constant 0 : index
    %31 = vector.load %arg9[%c0_60, %c0_61] : memref<1x32xf32, #tpu.memory_space<vmem>>, vector<1x32xf32>
    %c0_i32_62 = arith.constant 0 : i32
    %c38_i32 = arith.constant 38 : i32
    %32 = arith.addi %c0_i32_62, %c38_i32 : i32
    %c1_i32_63 = arith.constant 1 : i32
    scf.for %arg29 = %c0_i32_62 to %32 step %c1_i32_63  : i32 {
      %c1_i32_116 = arith.constant 1 : i32
      %104 = arith.muli %arg29, %c1_i32_116 : i32
      %c0_i32_117 = arith.constant 0 : i32
      %105 = arith.addi %c0_i32_117, %104 : i32
      %cst_118 = arith.constant 0.000000e+00 : f32
      %106 = vector.broadcast %cst_118 : f32 to vector<38x32xf32>
      %c0_i32_119 = arith.constant 0 : i32
      %107 = arith.addi %105, %c0_i32_119 : i32
      %108 = arith.index_cast %107 : i32 to index
      %c0_120 = arith.constant 0 : index
      %c0_121 = arith.constant 0 : index
      %109 = vector.load %arg22[%108, %c0_120, %c0_121] : memref<40x40x32xf32, #tpu.memory_space<vmem>>, vector<1x38x32xf32>
      %110 = vector.shape_cast %109 : vector<1x38x32xf32> to vector<38x32xf32>
      %c1_i32_122 = arith.constant 1 : i32
      %111 = arith.addi %105, %c1_i32_122 : i32
      %112 = arith.index_cast %111 : i32 to index
      %c0_123 = arith.constant 0 : index
      %c0_124 = arith.constant 0 : index
      %113 = vector.load %arg22[%112, %c0_123, %c0_124] : memref<40x40x32xf32, #tpu.memory_space<vmem>>, vector<1x38x32xf32>
      %114 = vector.shape_cast %113 : vector<1x38x32xf32> to vector<38x32xf32>
      %c2_i32 = arith.constant 2 : i32
      %115 = arith.addi %105, %c2_i32 : i32
      %116 = arith.index_cast %115 : i32 to index
      %c0_125 = arith.constant 0 : index
      %c0_126 = arith.constant 0 : index
      %117 = vector.load %arg22[%116, %c0_125, %c0_126] : memref<40x40x32xf32, #tpu.memory_space<vmem>>, vector<1x38x32xf32>
      %118 = vector.shape_cast %117 : vector<1x38x32xf32> to vector<38x32xf32>
      %119 = tpu.concatenate %110, %114, %118 in 1 : vector<38x32xf32>, vector<38x32xf32>, vector<38x32xf32> -> vector<38x96xf32>
      %c0_127 = arith.constant 0 : index
      %c0_128 = arith.constant 0 : index
      %c0_129 = arith.constant 0 : index
      %120 = vector.load %arg8[%c0_127, %c0_128, %c0_129] : memref<3x96x32xf32, #tpu.memory_space<vmem>>, vector<1x96x32xf32>
      %121 = vector.shape_cast %120 : vector<1x96x32xf32> to vector<96x32xf32>
      %cst_130 = arith.constant dense<0.000000e+00> : vector<38x32xf32>
      %122 = tpu.matmul %119, %121, %cst_130 {dimension_numbers = #tpu.dot_dimension_numbers<[1], [0], [0], [1], [0, 0, 1, 1], [], []>} : vector<38x96xf32>, vector<96x32xf32>, vector<38x32xf32> -> vector<38x32xf32>
      %123 = arith.addf %106, %122 : vector<38x32xf32>
      %c0_i32_131 = arith.constant 0 : i32
      %124 = arith.addi %105, %c0_i32_131 : i32
      %125 = arith.index_cast %124 : i32 to index
      %c1_132 = arith.constant 1 : index
      %c0_133 = arith.constant 0 : index
      %126 = vector.load %arg22[%125, %c1_132, %c0_133] : memref<40x40x32xf32, #tpu.memory_space<vmem>>, vector<1x38x32xf32>
      %127 = vector.shape_cast %126 : vector<1x38x32xf32> to vector<38x32xf32>
      %c1_i32_134 = arith.constant 1 : i32
      %128 = arith.addi %105, %c1_i32_134 : i32
      %129 = arith.index_cast %128 : i32 to index
      %c1_135 = arith.constant 1 : index
      %c0_136 = arith.constant 0 : index
      %130 = vector.load %arg22[%129, %c1_135, %c0_136] : memref<40x40x32xf32, #tpu.memory_space<vmem>>, vector<1x38x32xf32>
      %131 = vector.shape_cast %130 : vector<1x38x32xf32> to vector<38x32xf32>
      %c2_i32_137 = arith.constant 2 : i32
      %132 = arith.addi %105, %c2_i32_137 : i32
      %133 = arith.index_cast %132 : i32 to index
      %c1_138 = arith.constant 1 : index
      %c0_139 = arith.constant 0 : index
      %134 = vector.load %arg22[%133, %c1_138, %c0_139] : memref<40x40x32xf32, #tpu.memory_space<vmem>>, vector<1x38x32xf32>
      %135 = vector.shape_cast %134 : vector<1x38x32xf32> to vector<38x32xf32>
      %136 = tpu.concatenate %127, %131, %135 in 1 : vector<38x32xf32>, vector<38x32xf32>, vector<38x32xf32> -> vector<38x96xf32>
      %c1_140 = arith.constant 1 : index
      %c0_141 = arith.constant 0 : index
      %c0_142 = arith.constant 0 : index
      %137 = vector.load %arg8[%c1_140, %c0_141, %c0_142] : memref<3x96x32xf32, #tpu.memory_space<vmem>>, vector<1x96x32xf32>
      %138 = vector.shape_cast %137 : vector<1x96x32xf32> to vector<96x32xf32>
      %cst_143 = arith.constant dense<0.000000e+00> : vector<38x32xf32>
      %139 = tpu.matmul %136, %138, %cst_143 {dimension_numbers = #tpu.dot_dimension_numbers<[1], [0], [0], [1], [0, 0, 1, 1], [], []>} : vector<38x96xf32>, vector<96x32xf32>, vector<38x32xf32> -> vector<38x32xf32>
      %140 = arith.addf %123, %139 : vector<38x32xf32>
      %c0_i32_144 = arith.constant 0 : i32
      %141 = arith.addi %105, %c0_i32_144 : i32
      %142 = arith.index_cast %141 : i32 to index
      %c2_145 = arith.constant 2 : index
      %c0_146 = arith.constant 0 : index
      %143 = vector.load %arg22[%142, %c2_145, %c0_146] : memref<40x40x32xf32, #tpu.memory_space<vmem>>, vector<1x38x32xf32>
      %144 = vector.shape_cast %143 : vector<1x38x32xf32> to vector<38x32xf32>
      %c1_i32_147 = arith.constant 1 : i32
      %145 = arith.addi %105, %c1_i32_147 : i32
      %146 = arith.index_cast %145 : i32 to index
      %c2_148 = arith.constant 2 : index
      %c0_149 = arith.constant 0 : index
      %147 = vector.load %arg22[%146, %c2_148, %c0_149] : memref<40x40x32xf32, #tpu.memory_space<vmem>>, vector<1x38x32xf32>
      %148 = vector.shape_cast %147 : vector<1x38x32xf32> to vector<38x32xf32>
      %c2_i32_150 = arith.constant 2 : i32
      %149 = arith.addi %105, %c2_i32_150 : i32
      %150 = arith.index_cast %149 : i32 to index
      %c2_151 = arith.constant 2 : index
      %c0_152 = arith.constant 0 : index
      %151 = vector.load %arg22[%150, %c2_151, %c0_152] : memref<40x40x32xf32, #tpu.memory_space<vmem>>, vector<1x38x32xf32>
      %152 = vector.shape_cast %151 : vector<1x38x32xf32> to vector<38x32xf32>
      %153 = tpu.concatenate %144, %148, %152 in 1 : vector<38x32xf32>, vector<38x32xf32>, vector<38x32xf32> -> vector<38x96xf32>
      %c2_153 = arith.constant 2 : index
      %c0_154 = arith.constant 0 : index
      %c0_155 = arith.constant 0 : index
      %154 = vector.load %arg8[%c2_153, %c0_154, %c0_155] : memref<3x96x32xf32, #tpu.memory_space<vmem>>, vector<1x96x32xf32>
      %155 = vector.shape_cast %154 : vector<1x96x32xf32> to vector<96x32xf32>
      %cst_156 = arith.constant dense<0.000000e+00> : vector<38x32xf32>
      %156 = tpu.matmul %153, %155, %cst_156 {dimension_numbers = #tpu.dot_dimension_numbers<[1], [0], [0], [1], [0, 0, 1, 1], [], []>} : vector<38x96xf32>, vector<96x32xf32>, vector<38x32xf32> -> vector<38x32xf32>
      %157 = arith.addf %140, %156 : vector<38x32xf32>
      %158 = vector.broadcast %31 : vector<1x32xf32> to vector<38x32xf32>
      %159 = arith.addf %157, %158 : vector<38x32xf32>
      %cst_157 = arith.constant 0.000000e+00 : f32
      %160 = vector.broadcast %cst_157 : f32 to vector<38x32xf32>
      %161 = arith.cmpf ogt, %159, %160 : vector<38x32xf32>
      %cst_158 = arith.constant 2.500000e-01 : f32
      %162 = vector.broadcast %cst_158 : f32 to vector<38x32xf32>
      %163 = arith.mulf %162, %159 : vector<38x32xf32>
      %164 = arith.select %161, %159, %163 : vector<38x32xi1>, vector<38x32xf32>
      %c1_i32_159 = arith.constant 1 : i32
      %165 = arith.addi %105, %c1_i32_159 : i32
      %166 = arith.index_cast %165 : i32 to index
      %c1_160 = arith.constant 1 : index
      %c0_161 = arith.constant 0 : index
      %167 = vector.load %arg23[%166, %c1_160, %c0_161] : memref<40x40x32xf32, #tpu.memory_space<vmem>>, vector<1x38x32xf32>
      %168 = vector.shape_cast %167 : vector<1x38x32xf32> to vector<38x32xf32>
      %169 = vector.shape_cast %164 : vector<38x32xf32> to vector<1x38x32xf32>
      tpu.vector_store %arg23[%166, %c1_160, %c0_161], %169 {strides = array<i32>} : memref<40x40x32xf32, #tpu.memory_space<vmem>>, vector<1x38x32xf32>,
    }
    %c38_i32_64 = arith.constant 38 : i32
    %c0_i32_65 = arith.constant 0 : i32
    %c19_i32 = arith.constant 19 : i32
    %33 = arith.addi %c0_i32_65, %c19_i32 : i32
    %c1_i32_66 = arith.constant 1 : i32
    scf.for %arg29 = %c0_i32_65 to %33 step %c1_i32_66  : i32 {
      %c1_i32_116 = arith.constant 1 : i32
      %104 = arith.muli %arg29, %c1_i32_116 : i32
      %c0_i32_117 = arith.constant 0 : i32
      %105 = arith.addi %c0_i32_117, %104 : i32
      %c2_i32 = arith.constant 2 : i32
      %106 = arith.muli %c2_i32, %105 : i32
      %107 = arith.index_cast %106 : i32 to index
      %c0_118 = arith.constant 0 : index
      %c0_119 = arith.constant 0 : index
      %108 = vector.load %arg23[%107, %c0_118, %c0_119] : memref<40x40x32xf32, #tpu.memory_space<vmem>>, vector<1x40x32xf32>
      %109 = vector.shape_cast %108 : vector<1x40x32xf32> to vector<40x32xf32>
      %c1_i32_120 = arith.constant 1 : i32
      %110 = arith.addi %106, %c1_i32_120 : i32
      %111 = arith.index_cast %110 : i32 to index
      %c0_121 = arith.constant 0 : index
      %c0_122 = arith.constant 0 : index
      %112 = vector.load %arg23[%111, %c0_121, %c0_122] : memref<40x40x32xf32, #tpu.memory_space<vmem>>, vector<1x40x32xf32>
      %113 = vector.shape_cast %112 : vector<1x40x32xf32> to vector<40x32xf32>
      %114 = arith.maximumf %109, %113 : vector<40x32xf32>
      %c2_i32_123 = arith.constant 2 : i32
      %115 = arith.addi %106, %c2_i32_123 : i32
      %116 = arith.index_cast %115 : i32 to index
      %c0_124 = arith.constant 0 : index
      %c0_125 = arith.constant 0 : index
      %117 = vector.load %arg23[%116, %c0_124, %c0_125] : memref<40x40x32xf32, #tpu.memory_space<vmem>>, vector<1x40x32xf32>
      %118 = vector.shape_cast %117 : vector<1x40x32xf32> to vector<40x32xf32>
      %119 = arith.maximumf %114, %118 : vector<40x32xf32>
      %c0_126 = arith.constant 0 : index
      %c0_127 = arith.constant 0 : index
      %120 = vector.load %arg28[%c0_126, %c0_127] : memref<88x128xf32, #tpu.memory_space<vmem>>, vector<40x32xf32>
      tpu.vector_store %arg28[%c0_126, %c0_127], %119 {strides = array<i32>} : memref<88x128xf32, #tpu.memory_space<vmem>>, vector<40x32xf32>,
      %c0_128 = arith.constant 0 : index
      %c0_129 = arith.constant 0 : index
      %121 = tpu.strided_load %arg28[%c0_128, %c0_129] {strides = array<i32: 2, 1>} : memref<88x128xf32, #tpu.memory_space<vmem>>, vector<19x32xf32>
      %c1_130 = arith.constant 1 : index
      %c0_131 = arith.constant 0 : index
      %122 = tpu.strided_load %arg28[%c1_130, %c0_131] {strides = array<i32: 2, 1>} : memref<88x128xf32, #tpu.memory_space<vmem>>, vector<19x32xf32>
      %123 = arith.maximumf %121, %122 : vector<19x32xf32>
      %c2_132 = arith.constant 2 : index
      %c0_133 = arith.constant 0 : index
      %124 = tpu.strided_load %arg28[%c2_132, %c0_133] {strides = array<i32: 2, 1>} : memref<88x128xf32, #tpu.memory_space<vmem>>, vector<19x32xf32>
      %125 = arith.maximumf %123, %124 : vector<19x32xf32>
      %126 = arith.index_cast %105 : i32 to index
      %c0_134 = arith.constant 0 : index
      %c0_135 = arith.constant 0 : index
      %127 = vector.load %arg24[%126, %c0_134, %c0_135] : memref<19x19x32xf32, #tpu.memory_space<vmem>>, vector<1x19x32xf32>
      %128 = vector.shape_cast %127 : vector<1x19x32xf32> to vector<19x32xf32>
      %129 = vector.shape_cast %125 : vector<19x32xf32> to vector<1x19x32xf32>
      tpu.vector_store %arg24[%126, %c0_134, %c0_135], %129 {strides = array<i32>} : memref<19x19x32xf32, #tpu.memory_space<vmem>>, vector<1x19x32xf32>,
    }
    %c19_i32_67 = arith.constant 19 : i32
    %c0_68 = arith.constant 0 : index
    %c0_69 = arith.constant 0 : index
    %34 = vector.load %arg11[%c0_68, %c0_69] : memref<1x64xf32, #tpu.memory_space<vmem>>, vector<1x64xf32>
    %c0_i32_70 = arith.constant 0 : i32
    %c17_i32 = arith.constant 17 : i32
    %35 = arith.addi %c0_i32_70, %c17_i32 : i32
    %c1_i32_71 = arith.constant 1 : i32
    scf.for %arg29 = %c0_i32_70 to %35 step %c1_i32_71  : i32 {
      %c1_i32_116 = arith.constant 1 : i32
      %104 = arith.muli %arg29, %c1_i32_116 : i32
      %c0_i32_117 = arith.constant 0 : i32
      %105 = arith.addi %c0_i32_117, %104 : i32
      %cst_118 = arith.constant 0.000000e+00 : f32
      %106 = vector.broadcast %cst_118 : f32 to vector<17x64xf32>
      %c0_i32_119 = arith.constant 0 : i32
      %107 = arith.addi %105, %c0_i32_119 : i32
      %108 = arith.index_cast %107 : i32 to index
      %c0_120 = arith.constant 0 : index
      %c0_121 = arith.constant 0 : index
      %109 = vector.load %arg24[%108, %c0_120, %c0_121] : memref<19x19x32xf32, #tpu.memory_space<vmem>>, vector<1x17x32xf32>
      %110 = vector.shape_cast %109 : vector<1x17x32xf32> to vector<17x32xf32>
      %c1_i32_122 = arith.constant 1 : i32
      %111 = arith.addi %105, %c1_i32_122 : i32
      %112 = arith.index_cast %111 : i32 to index
      %c0_123 = arith.constant 0 : index
      %c0_124 = arith.constant 0 : index
      %113 = vector.load %arg24[%112, %c0_123, %c0_124] : memref<19x19x32xf32, #tpu.memory_space<vmem>>, vector<1x17x32xf32>
      %114 = vector.shape_cast %113 : vector<1x17x32xf32> to vector<17x32xf32>
      %c2_i32 = arith.constant 2 : i32
      %115 = arith.addi %105, %c2_i32 : i32
      %116 = arith.index_cast %115 : i32 to index
      %c0_125 = arith.constant 0 : index
      %c0_126 = arith.constant 0 : index
      %117 = vector.load %arg24[%116, %c0_125, %c0_126] : memref<19x19x32xf32, #tpu.memory_space<vmem>>, vector<1x17x32xf32>
      %118 = vector.shape_cast %117 : vector<1x17x32xf32> to vector<17x32xf32>
      %119 = tpu.concatenate %110, %114, %118 in 1 : vector<17x32xf32>, vector<17x32xf32>, vector<17x32xf32> -> vector<17x96xf32>
      %c0_127 = arith.constant 0 : index
      %c0_128 = arith.constant 0 : index
      %c0_129 = arith.constant 0 : index
      %120 = vector.load %arg10[%c0_127, %c0_128, %c0_129] : memref<3x96x64xf32, #tpu.memory_space<vmem>>, vector<1x96x64xf32>
      %121 = vector.shape_cast %120 : vector<1x96x64xf32> to vector<96x64xf32>
      %cst_130 = arith.constant dense<0.000000e+00> : vector<17x64xf32>
      %122 = tpu.matmul %119, %121, %cst_130 {dimension_numbers = #tpu.dot_dimension_numbers<[1], [0], [0], [1], [0, 0, 1, 1], [], []>} : vector<17x96xf32>, vector<96x64xf32>, vector<17x64xf32> -> vector<17x64xf32>
      %123 = arith.addf %106, %122 : vector<17x64xf32>
      %c0_i32_131 = arith.constant 0 : i32
      %124 = arith.addi %105, %c0_i32_131 : i32
      %125 = arith.index_cast %124 : i32 to index
      %c1_132 = arith.constant 1 : index
      %c0_133 = arith.constant 0 : index
      %126 = vector.load %arg24[%125, %c1_132, %c0_133] : memref<19x19x32xf32, #tpu.memory_space<vmem>>, vector<1x17x32xf32>
      %127 = vector.shape_cast %126 : vector<1x17x32xf32> to vector<17x32xf32>
      %c1_i32_134 = arith.constant 1 : i32
      %128 = arith.addi %105, %c1_i32_134 : i32
      %129 = arith.index_cast %128 : i32 to index
      %c1_135 = arith.constant 1 : index
      %c0_136 = arith.constant 0 : index
      %130 = vector.load %arg24[%129, %c1_135, %c0_136] : memref<19x19x32xf32, #tpu.memory_space<vmem>>, vector<1x17x32xf32>
      %131 = vector.shape_cast %130 : vector<1x17x32xf32> to vector<17x32xf32>
      %c2_i32_137 = arith.constant 2 : i32
      %132 = arith.addi %105, %c2_i32_137 : i32
      %133 = arith.index_cast %132 : i32 to index
      %c1_138 = arith.constant 1 : index
      %c0_139 = arith.constant 0 : index
      %134 = vector.load %arg24[%133, %c1_138, %c0_139] : memref<19x19x32xf32, #tpu.memory_space<vmem>>, vector<1x17x32xf32>
      %135 = vector.shape_cast %134 : vector<1x17x32xf32> to vector<17x32xf32>
      %136 = tpu.concatenate %127, %131, %135 in 1 : vector<17x32xf32>, vector<17x32xf32>, vector<17x32xf32> -> vector<17x96xf32>
      %c1_140 = arith.constant 1 : index
      %c0_141 = arith.constant 0 : index
      %c0_142 = arith.constant 0 : index
      %137 = vector.load %arg10[%c1_140, %c0_141, %c0_142] : memref<3x96x64xf32, #tpu.memory_space<vmem>>, vector<1x96x64xf32>
      %138 = vector.shape_cast %137 : vector<1x96x64xf32> to vector<96x64xf32>
      %cst_143 = arith.constant dense<0.000000e+00> : vector<17x64xf32>
      %139 = tpu.matmul %136, %138, %cst_143 {dimension_numbers = #tpu.dot_dimension_numbers<[1], [0], [0], [1], [0, 0, 1, 1], [], []>} : vector<17x96xf32>, vector<96x64xf32>, vector<17x64xf32> -> vector<17x64xf32>
      %140 = arith.addf %123, %139 : vector<17x64xf32>
      %c0_i32_144 = arith.constant 0 : i32
      %141 = arith.addi %105, %c0_i32_144 : i32
      %142 = arith.index_cast %141 : i32 to index
      %c2_145 = arith.constant 2 : index
      %c0_146 = arith.constant 0 : index
      %143 = vector.load %arg24[%142, %c2_145, %c0_146] : memref<19x19x32xf32, #tpu.memory_space<vmem>>, vector<1x17x32xf32>
      %144 = vector.shape_cast %143 : vector<1x17x32xf32> to vector<17x32xf32>
      %c1_i32_147 = arith.constant 1 : i32
      %145 = arith.addi %105, %c1_i32_147 : i32
      %146 = arith.index_cast %145 : i32 to index
      %c2_148 = arith.constant 2 : index
      %c0_149 = arith.constant 0 : index
      %147 = vector.load %arg24[%146, %c2_148, %c0_149] : memref<19x19x32xf32, #tpu.memory_space<vmem>>, vector<1x17x32xf32>
      %148 = vector.shape_cast %147 : vector<1x17x32xf32> to vector<17x32xf32>
      %c2_i32_150 = arith.constant 2 : i32
      %149 = arith.addi %105, %c2_i32_150 : i32
      %150 = arith.index_cast %149 : i32 to index
      %c2_151 = arith.constant 2 : index
      %c0_152 = arith.constant 0 : index
      %151 = vector.load %arg24[%150, %c2_151, %c0_152] : memref<19x19x32xf32, #tpu.memory_space<vmem>>, vector<1x17x32xf32>
      %152 = vector.shape_cast %151 : vector<1x17x32xf32> to vector<17x32xf32>
      %153 = tpu.concatenate %144, %148, %152 in 1 : vector<17x32xf32>, vector<17x32xf32>, vector<17x32xf32> -> vector<17x96xf32>
      %c2_153 = arith.constant 2 : index
      %c0_154 = arith.constant 0 : index
      %c0_155 = arith.constant 0 : index
      %154 = vector.load %arg10[%c2_153, %c0_154, %c0_155] : memref<3x96x64xf32, #tpu.memory_space<vmem>>, vector<1x96x64xf32>
      %155 = vector.shape_cast %154 : vector<1x96x64xf32> to vector<96x64xf32>
      %cst_156 = arith.constant dense<0.000000e+00> : vector<17x64xf32>
      %156 = tpu.matmul %153, %155, %cst_156 {dimension_numbers = #tpu.dot_dimension_numbers<[1], [0], [0], [1], [0, 0, 1, 1], [], []>} : vector<17x96xf32>, vector<96x64xf32>, vector<17x64xf32> -> vector<17x64xf32>
      %157 = arith.addf %140, %156 : vector<17x64xf32>
      %158 = vector.broadcast %34 : vector<1x64xf32> to vector<17x64xf32>
      %159 = arith.addf %157, %158 : vector<17x64xf32>
      %cst_157 = arith.constant 0.000000e+00 : f32
      %160 = vector.broadcast %cst_157 : f32 to vector<17x64xf32>
      %161 = arith.cmpf ogt, %159, %160 : vector<17x64xf32>
      %cst_158 = arith.constant 2.500000e-01 : f32
      %162 = vector.broadcast %cst_158 : f32 to vector<17x64xf32>
      %163 = arith.mulf %162, %159 : vector<17x64xf32>
      %164 = arith.select %161, %159, %163 : vector<17x64xi1>, vector<17x64xf32>
      %c0_i32_159 = arith.constant 0 : i32
      %165 = arith.addi %105, %c0_i32_159 : i32
      %166 = arith.index_cast %165 : i32 to index
      %c0_160 = arith.constant 0 : index
      %c0_161 = arith.constant 0 : index
      %167 = vector.load %arg25[%166, %c0_160, %c0_161] : memref<17x17x64xf32, #tpu.memory_space<vmem>>, vector<1x17x64xf32>
      %168 = vector.shape_cast %167 : vector<1x17x64xf32> to vector<17x64xf32>
      %169 = vector.shape_cast %164 : vector<17x64xf32> to vector<1x17x64xf32>
      tpu.vector_store %arg25[%166, %c0_160, %c0_161], %169 {strides = array<i32>} : memref<17x17x64xf32, #tpu.memory_space<vmem>>, vector<1x17x64xf32>,
    }
    %c17_i32_72 = arith.constant 17 : i32
    %c0_73 = arith.constant 0 : index
    %c0_74 = arith.constant 0 : index
    %36 = vector.load %arg13[%c0_73, %c0_74] : memref<1x64xf32, #tpu.memory_space<vmem>>, vector<1x64xf32>
    %c0_i32_75 = arith.constant 0 : i32
    %c15_i32 = arith.constant 15 : i32
    %37 = arith.addi %c0_i32_75, %c15_i32 : i32
    %c1_i32_76 = arith.constant 1 : i32
    scf.for %arg29 = %c0_i32_75 to %37 step %c1_i32_76  : i32 {
      %c1_i32_116 = arith.constant 1 : i32
      %104 = arith.muli %arg29, %c1_i32_116 : i32
      %c0_i32_117 = arith.constant 0 : i32
      %105 = arith.addi %c0_i32_117, %104 : i32
      %cst_118 = arith.constant 0.000000e+00 : f32
      %106 = vector.broadcast %cst_118 : f32 to vector<15x64xf32>
      %c0_i32_119 = arith.constant 0 : i32
      %107 = arith.addi %105, %c0_i32_119 : i32
      %108 = arith.index_cast %107 : i32 to index
      %c0_120 = arith.constant 0 : index
      %c0_121 = arith.constant 0 : index
      %109 = vector.load %arg25[%108, %c0_120, %c0_121] : memref<17x17x64xf32, #tpu.memory_space<vmem>>, vector<1x15x64xf32>
      %110 = vector.shape_cast %109 : vector<1x15x64xf32> to vector<15x64xf32>
      %c1_i32_122 = arith.constant 1 : i32
      %111 = arith.addi %105, %c1_i32_122 : i32
      %112 = arith.index_cast %111 : i32 to index
      %c0_123 = arith.constant 0 : index
      %c0_124 = arith.constant 0 : index
      %113 = vector.load %arg25[%112, %c0_123, %c0_124] : memref<17x17x64xf32, #tpu.memory_space<vmem>>, vector<1x15x64xf32>
      %114 = vector.shape_cast %113 : vector<1x15x64xf32> to vector<15x64xf32>
      %c2_i32 = arith.constant 2 : i32
      %115 = arith.addi %105, %c2_i32 : i32
      %116 = arith.index_cast %115 : i32 to index
      %c0_125 = arith.constant 0 : index
      %c0_126 = arith.constant 0 : index
      %117 = vector.load %arg25[%116, %c0_125, %c0_126] : memref<17x17x64xf32, #tpu.memory_space<vmem>>, vector<1x15x64xf32>
      %118 = vector.shape_cast %117 : vector<1x15x64xf32> to vector<15x64xf32>
      %119 = tpu.concatenate %110, %114, %118 in 1 : vector<15x64xf32>, vector<15x64xf32>, vector<15x64xf32> -> vector<15x192xf32>
      %c0_127 = arith.constant 0 : index
      %c0_128 = arith.constant 0 : index
      %c0_129 = arith.constant 0 : index
      %120 = vector.load %arg12[%c0_127, %c0_128, %c0_129] : memref<3x192x64xf32, #tpu.memory_space<vmem>>, vector<1x192x64xf32>
      %121 = vector.shape_cast %120 : vector<1x192x64xf32> to vector<192x64xf32>
      %cst_130 = arith.constant dense<0.000000e+00> : vector<15x64xf32>
      %122 = tpu.matmul %119, %121, %cst_130 {dimension_numbers = #tpu.dot_dimension_numbers<[1], [0], [0], [1], [0, 0, 1, 1], [], []>} : vector<15x192xf32>, vector<192x64xf32>, vector<15x64xf32> -> vector<15x64xf32>
      %123 = arith.addf %106, %122 : vector<15x64xf32>
      %c0_i32_131 = arith.constant 0 : i32
      %124 = arith.addi %105, %c0_i32_131 : i32
      %125 = arith.index_cast %124 : i32 to index
      %c1_132 = arith.constant 1 : index
      %c0_133 = arith.constant 0 : index
      %126 = vector.load %arg25[%125, %c1_132, %c0_133] : memref<17x17x64xf32, #tpu.memory_space<vmem>>, vector<1x15x64xf32>
      %127 = vector.shape_cast %126 : vector<1x15x64xf32> to vector<15x64xf32>
      %c1_i32_134 = arith.constant 1 : i32
      %128 = arith.addi %105, %c1_i32_134 : i32
      %129 = arith.index_cast %128 : i32 to index
      %c1_135 = arith.constant 1 : index
      %c0_136 = arith.constant 0 : index
      %130 = vector.load %arg25[%129, %c1_135, %c0_136] : memref<17x17x64xf32, #tpu.memory_space<vmem>>, vector<1x15x64xf32>
      %131 = vector.shape_cast %130 : vector<1x15x64xf32> to vector<15x64xf32>
      %c2_i32_137 = arith.constant 2 : i32
      %132 = arith.addi %105, %c2_i32_137 : i32
      %133 = arith.index_cast %132 : i32 to index
      %c1_138 = arith.constant 1 : index
      %c0_139 = arith.constant 0 : index
      %134 = vector.load %arg25[%133, %c1_138, %c0_139] : memref<17x17x64xf32, #tpu.memory_space<vmem>>, vector<1x15x64xf32>
      %135 = vector.shape_cast %134 : vector<1x15x64xf32> to vector<15x64xf32>
      %136 = tpu.concatenate %127, %131, %135 in 1 : vector<15x64xf32>, vector<15x64xf32>, vector<15x64xf32> -> vector<15x192xf32>
      %c1_140 = arith.constant 1 : index
      %c0_141 = arith.constant 0 : index
      %c0_142 = arith.constant 0 : index
      %137 = vector.load %arg12[%c1_140, %c0_141, %c0_142] : memref<3x192x64xf32, #tpu.memory_space<vmem>>, vector<1x192x64xf32>
      %138 = vector.shape_cast %137 : vector<1x192x64xf32> to vector<192x64xf32>
      %cst_143 = arith.constant dense<0.000000e+00> : vector<15x64xf32>
      %139 = tpu.matmul %136, %138, %cst_143 {dimension_numbers = #tpu.dot_dimension_numbers<[1], [0], [0], [1], [0, 0, 1, 1], [], []>} : vector<15x192xf32>, vector<192x64xf32>, vector<15x64xf32> -> vector<15x64xf32>
      %140 = arith.addf %123, %139 : vector<15x64xf32>
      %c0_i32_144 = arith.constant 0 : i32
      %141 = arith.addi %105, %c0_i32_144 : i32
      %142 = arith.index_cast %141 : i32 to index
      %c2_145 = arith.constant 2 : index
      %c0_146 = arith.constant 0 : index
      %143 = vector.load %arg25[%142, %c2_145, %c0_146] : memref<17x17x64xf32, #tpu.memory_space<vmem>>, vector<1x15x64xf32>
      %144 = vector.shape_cast %143 : vector<1x15x64xf32> to vector<15x64xf32>
      %c1_i32_147 = arith.constant 1 : i32
      %145 = arith.addi %105, %c1_i32_147 : i32
      %146 = arith.index_cast %145 : i32 to index
      %c2_148 = arith.constant 2 : index
      %c0_149 = arith.constant 0 : index
      %147 = vector.load %arg25[%146, %c2_148, %c0_149] : memref<17x17x64xf32, #tpu.memory_space<vmem>>, vector<1x15x64xf32>
      %148 = vector.shape_cast %147 : vector<1x15x64xf32> to vector<15x64xf32>
      %c2_i32_150 = arith.constant 2 : i32
      %149 = arith.addi %105, %c2_i32_150 : i32
      %150 = arith.index_cast %149 : i32 to index
      %c2_151 = arith.constant 2 : index
      %c0_152 = arith.constant 0 : index
      %151 = vector.load %arg25[%150, %c2_151, %c0_152] : memref<17x17x64xf32, #tpu.memory_space<vmem>>, vector<1x15x64xf32>
      %152 = vector.shape_cast %151 : vector<1x15x64xf32> to vector<15x64xf32>
      %153 = tpu.concatenate %144, %148, %152 in 1 : vector<15x64xf32>, vector<15x64xf32>, vector<15x64xf32> -> vector<15x192xf32>
      %c2_153 = arith.constant 2 : index
      %c0_154 = arith.constant 0 : index
      %c0_155 = arith.constant 0 : index
      %154 = vector.load %arg12[%c2_153, %c0_154, %c0_155] : memref<3x192x64xf32, #tpu.memory_space<vmem>>, vector<1x192x64xf32>
      %155 = vector.shape_cast %154 : vector<1x192x64xf32> to vector<192x64xf32>
      %cst_156 = arith.constant dense<0.000000e+00> : vector<15x64xf32>
      %156 = tpu.matmul %153, %155, %cst_156 {dimension_numbers = #tpu.dot_dimension_numbers<[1], [0], [0], [1], [0, 0, 1, 1], [], []>} : vector<15x192xf32>, vector<192x64xf32>, vector<15x64xf32> -> vector<15x64xf32>
      %157 = arith.addf %140, %156 : vector<15x64xf32>
      %158 = vector.broadcast %36 : vector<1x64xf32> to vector<15x64xf32>
      %159 = arith.addf %157, %158 : vector<15x64xf32>
      %cst_157 = arith.constant 0.000000e+00 : f32
      %160 = vector.broadcast %cst_157 : f32 to vector<15x64xf32>
      %161 = arith.cmpf ogt, %159, %160 : vector<15x64xf32>
      %cst_158 = arith.constant 2.500000e-01 : f32
      %162 = vector.broadcast %cst_158 : f32 to vector<15x64xf32>
      %163 = arith.mulf %162, %159 : vector<15x64xf32>
      %164 = arith.select %161, %159, %163 : vector<15x64xi1>, vector<15x64xf32>
      %c1_i32_159 = arith.constant 1 : i32
      %165 = arith.addi %105, %c1_i32_159 : i32
      %166 = arith.index_cast %165 : i32 to index
      %c1_160 = arith.constant 1 : index
      %c0_161 = arith.constant 0 : index
      %167 = vector.load %arg26[%166, %c1_160, %c0_161] : memref<17x17x64xf32, #tpu.memory_space<vmem>>, vector<1x15x64xf32>
      %168 = vector.shape_cast %167 : vector<1x15x64xf32> to vector<15x64xf32>
      %169 = vector.shape_cast %164 : vector<15x64xf32> to vector<1x15x64xf32>
      tpu.vector_store %arg26[%166, %c1_160, %c0_161], %169 {strides = array<i32>} : memref<17x17x64xf32, #tpu.memory_space<vmem>>, vector<1x15x64xf32>,
    }
    %c15_i32_77 = arith.constant 15 : i32
    %c0_i32_78 = arith.constant 0 : i32
    %c8_i32 = arith.constant 8 : i32
    %38 = arith.addi %c0_i32_78, %c8_i32 : i32
    %c1_i32_79 = arith.constant 1 : i32
    scf.for %arg29 = %c0_i32_78 to %38 step %c1_i32_79  : i32 {
      %c1_i32_116 = arith.constant 1 : i32
      %104 = arith.muli %arg29, %c1_i32_116 : i32
      %c0_i32_117 = arith.constant 0 : i32
      %105 = arith.addi %c0_i32_117, %104 : i32
      %c2_i32 = arith.constant 2 : i32
      %106 = arith.muli %c2_i32, %105 : i32
      %107 = arith.index_cast %106 : i32 to index
      %c0_118 = arith.constant 0 : index
      %c0_119 = arith.constant 0 : index
      %108 = vector.load %arg26[%107, %c0_118, %c0_119] : memref<17x17x64xf32, #tpu.memory_space<vmem>>, vector<1x17x64xf32>
      %109 = vector.shape_cast %108 : vector<1x17x64xf32> to vector<17x64xf32>
      %c1_i32_120 = arith.constant 1 : i32
      %110 = arith.addi %106, %c1_i32_120 : i32
      %111 = arith.index_cast %110 : i32 to index
      %c0_121 = arith.constant 0 : index
      %c0_122 = arith.constant 0 : index
      %112 = vector.load %arg26[%111, %c0_121, %c0_122] : memref<17x17x64xf32, #tpu.memory_space<vmem>>, vector<1x17x64xf32>
      %113 = vector.shape_cast %112 : vector<1x17x64xf32> to vector<17x64xf32>
      %114 = arith.maximumf %109, %113 : vector<17x64xf32>
      %c2_i32_123 = arith.constant 2 : i32
      %115 = arith.addi %106, %c2_i32_123 : i32
      %116 = arith.index_cast %115 : i32 to index
      %c0_124 = arith.constant 0 : index
      %c0_125 = arith.constant 0 : index
      %117 = vector.load %arg26[%116, %c0_124, %c0_125] : memref<17x17x64xf32, #tpu.memory_space<vmem>>, vector<1x17x64xf32>
      %118 = vector.shape_cast %117 : vector<1x17x64xf32> to vector<17x64xf32>
      %119 = arith.maximumf %114, %118 : vector<17x64xf32>
      %c0_126 = arith.constant 0 : index
      %c0_127 = arith.constant 0 : index
      %120 = vector.load %arg28[%c0_126, %c0_127] : memref<88x128xf32, #tpu.memory_space<vmem>>, vector<17x64xf32>
      tpu.vector_store %arg28[%c0_126, %c0_127], %119 {strides = array<i32>} : memref<88x128xf32, #tpu.memory_space<vmem>>, vector<17x64xf32>,
      %c0_128 = arith.constant 0 : index
      %c0_129 = arith.constant 0 : index
      %121 = tpu.strided_load %arg28[%c0_128, %c0_129] {strides = array<i32: 2, 1>} : memref<88x128xf32, #tpu.memory_space<vmem>>, vector<8x64xf32>
      %c1_130 = arith.constant 1 : index
      %c0_131 = arith.constant 0 : index
      %122 = tpu.strided_load %arg28[%c1_130, %c0_131] {strides = array<i32: 2, 1>} : memref<88x128xf32, #tpu.memory_space<vmem>>, vector<8x64xf32>
      %123 = arith.maximumf %121, %122 : vector<8x64xf32>
      %c2_132 = arith.constant 2 : index
      %c0_133 = arith.constant 0 : index
      %124 = tpu.strided_load %arg28[%c2_132, %c0_133] {strides = array<i32: 2, 1>} : memref<88x128xf32, #tpu.memory_space<vmem>>, vector<8x64xf32>
      %125 = arith.maximumf %123, %124 : vector<8x64xf32>
      %c8_i32_134 = arith.constant 8 : i32
      %126 = arith.muli %105, %c8_i32_134 : i32
      %127 = tpu.assume_multiple %126, 8 : i32
      %128 = arith.index_cast %127 : i32 to index
      %c0_135 = arith.constant 0 : index
      %129 = vector.load %arg27[%128, %c0_135] : memref<64x64xf32, #tpu.memory_space<vmem>>, vector<8x64xf32>
      tpu.vector_store %arg27[%128, %c0_135], %125 {strides = array<i32>} : memref<64x64xf32, #tpu.memory_space<vmem>>, vector<8x64xf32>,
    }
    %c8_i32_80 = arith.constant 8 : i32
    %c0_81 = arith.constant 0 : index
    %c0_82 = arith.constant 0 : index
    %39 = vector.load %arg27[%c0_81, %c0_82] : memref<64x64xf32, #tpu.memory_space<vmem>>, vector<64x64xf32>
    %c0_83 = arith.constant 0 : index
    %c0_84 = arith.constant 0 : index
    %40 = vector.load %arg14[%c0_83, %c0_84] : memref<64x16xf32, #tpu.memory_space<vmem>>, vector<64x16xf32>
    %cst_85 = arith.constant dense<0.000000e+00> : vector<64x16xf32>
    %41 = tpu.matmul %39, %40, %cst_85 {dimension_numbers = #tpu.dot_dimension_numbers<[1], [0], [0], [1], [0, 0, 1, 1], [], []>} : vector<64x64xf32>, vector<64x16xf32>, vector<64x16xf32> -> vector<64x16xf32>
    %c0_86 = arith.constant 0 : index
    %c0_87 = arith.constant 0 : index
    %42 = vector.load %arg15[%c0_86, %c0_87] : memref<1x16xf32, #tpu.memory_space<vmem>>, vector<1x16xf32>
    %43 = vector.broadcast %42 : vector<1x16xf32> to vector<64x16xf32>
    %44 = arith.addf %41, %43 : vector<64x16xf32>
    %cst_88 = arith.constant 0.000000e+00 : f32
    %45 = vector.broadcast %cst_88 : f32 to vector<64x16xf32>
    %46 = arith.cmpf ogt, %44, %45 : vector<64x16xf32>
    %cst_89 = arith.constant 2.500000e-01 : f32
    %47 = vector.broadcast %cst_89 : f32 to vector<64x16xf32>
    %48 = arith.mulf %47, %44 : vector<64x16xf32>
    %49 = arith.select %46, %44, %48 : vector<64x16xi1>, vector<64x16xf32>
    %c0_90 = arith.constant 0 : index
    %c0_91 = arith.constant 0 : index
    %c0_92 = arith.constant 0 : index
    %50 = vector.load %arg16[%c0_90, %c0_91, %c0_92] : memref<6x64x16xf32, #tpu.memory_space<vmem>>, vector<1x64x16xf32>
    %51 = vector.shape_cast %50 : vector<1x64x16xf32> to vector<64x16xf32>
    %52 = arith.mulf %49, %51 : vector<64x16xf32>
    %53 = vector.shape_cast %52 : vector<64x16xf32> to vector<1x64x16xf32>
    %cst_93 = arith.constant dense<0.000000e+00> : vector<1xf32>
    %54 = vector.multi_reduction <add>, %53, %cst_93 [1, 2] : vector<1x64x16xf32> to vector<1xf32>
    %55 = vector.shape_cast %54 : vector<1xf32> to vector<1x1x1xf32>
    %56 = vector.extract %55[0, 0, 0] : f32 from vector<1x1x1xf32>
    %57 = vector.broadcast %56 : f32 to vector<1x1xf32>
    %c1_94 = arith.constant 1 : index
    %c0_95 = arith.constant 0 : index
    %c0_96 = arith.constant 0 : index
    %58 = vector.load %arg16[%c1_94, %c0_95, %c0_96] : memref<6x64x16xf32, #tpu.memory_space<vmem>>, vector<1x64x16xf32>
    %59 = vector.shape_cast %58 : vector<1x64x16xf32> to vector<64x16xf32>
    %60 = arith.mulf %49, %59 : vector<64x16xf32>
    %61 = vector.shape_cast %60 : vector<64x16xf32> to vector<1x64x16xf32>
    %cst_97 = arith.constant dense<0.000000e+00> : vector<1xf32>
    %62 = vector.multi_reduction <add>, %61, %cst_97 [1, 2] : vector<1x64x16xf32> to vector<1xf32>
    %63 = vector.shape_cast %62 : vector<1xf32> to vector<1x1x1xf32>
    %64 = vector.extract %63[0, 0, 0] : f32 from vector<1x1x1xf32>
    %65 = vector.broadcast %64 : f32 to vector<1x1xf32>
    %c2_98 = arith.constant 2 : index
    %c0_99 = arith.constant 0 : index
    %c0_100 = arith.constant 0 : index
    %66 = vector.load %arg16[%c2_98, %c0_99, %c0_100] : memref<6x64x16xf32, #tpu.memory_space<vmem>>, vector<1x64x16xf32>
    %67 = vector.shape_cast %66 : vector<1x64x16xf32> to vector<64x16xf32>
    %68 = arith.mulf %49, %67 : vector<64x16xf32>
    %69 = vector.shape_cast %68 : vector<64x16xf32> to vector<1x64x16xf32>
    %cst_101 = arith.constant dense<0.000000e+00> : vector<1xf32>
    %70 = vector.multi_reduction <add>, %69, %cst_101 [1, 2] : vector<1x64x16xf32> to vector<1xf32>
    %71 = vector.shape_cast %70 : vector<1xf32> to vector<1x1x1xf32>
    %72 = vector.extract %71[0, 0, 0] : f32 from vector<1x1x1xf32>
    %73 = vector.broadcast %72 : f32 to vector<1x1xf32>
    %c3 = arith.constant 3 : index
    %c0_102 = arith.constant 0 : index
    %c0_103 = arith.constant 0 : index
    %74 = vector.load %arg16[%c3, %c0_102, %c0_103] : memref<6x64x16xf32, #tpu.memory_space<vmem>>, vector<1x64x16xf32>
    %75 = vector.shape_cast %74 : vector<1x64x16xf32> to vector<64x16xf32>
    %76 = arith.mulf %49, %75 : vector<64x16xf32>
    %77 = vector.shape_cast %76 : vector<64x16xf32> to vector<1x64x16xf32>
    %cst_104 = arith.constant dense<0.000000e+00> : vector<1xf32>
    %78 = vector.multi_reduction <add>, %77, %cst_104 [1, 2] : vector<1x64x16xf32> to vector<1xf32>
    %79 = vector.shape_cast %78 : vector<1xf32> to vector<1x1x1xf32>
    %80 = vector.extract %79[0, 0, 0] : f32 from vector<1x1x1xf32>
    %81 = vector.broadcast %80 : f32 to vector<1x1xf32>
    %c4 = arith.constant 4 : index
    %c0_105 = arith.constant 0 : index
    %c0_106 = arith.constant 0 : index
    %82 = vector.load %arg16[%c4, %c0_105, %c0_106] : memref<6x64x16xf32, #tpu.memory_space<vmem>>, vector<1x64x16xf32>
    %83 = vector.shape_cast %82 : vector<1x64x16xf32> to vector<64x16xf32>
    %84 = arith.mulf %49, %83 : vector<64x16xf32>
    %85 = vector.shape_cast %84 : vector<64x16xf32> to vector<1x64x16xf32>
    %cst_107 = arith.constant dense<0.000000e+00> : vector<1xf32>
    %86 = vector.multi_reduction <add>, %85, %cst_107 [1, 2] : vector<1x64x16xf32> to vector<1xf32>
    %87 = vector.shape_cast %86 : vector<1xf32> to vector<1x1x1xf32>
    %88 = vector.extract %87[0, 0, 0] : f32 from vector<1x1x1xf32>
    %89 = vector.broadcast %88 : f32 to vector<1x1xf32>
    %c5 = arith.constant 5 : index
    %c0_108 = arith.constant 0 : index
    %c0_109 = arith.constant 0 : index
    %90 = vector.load %arg16[%c5, %c0_108, %c0_109] : memref<6x64x16xf32, #tpu.memory_space<vmem>>, vector<1x64x16xf32>
    %91 = vector.shape_cast %90 : vector<1x64x16xf32> to vector<64x16xf32>
    %92 = arith.mulf %49, %91 : vector<64x16xf32>
    %93 = vector.shape_cast %92 : vector<64x16xf32> to vector<1x64x16xf32>
    %cst_110 = arith.constant dense<0.000000e+00> : vector<1xf32>
    %94 = vector.multi_reduction <add>, %93, %cst_110 [1, 2] : vector<1x64x16xf32> to vector<1xf32>
    %95 = vector.shape_cast %94 : vector<1xf32> to vector<1x1x1xf32>
    %96 = vector.extract %95[0, 0, 0] : f32 from vector<1x1x1xf32>
    %97 = vector.broadcast %96 : f32 to vector<1x1xf32>
    %98 = tpu.concatenate %57, %65, %73, %81, %89, %97 in 1 : vector<1x1xf32>, vector<1x1xf32>, vector<1x1xf32>, vector<1x1xf32>, vector<1x1xf32>, vector<1x1xf32> -> vector<1x6xf32>
    %c0_111 = arith.constant 0 : index
    %c0_112 = arith.constant 0 : index
    %99 = vector.load %arg17[%c0_111, %c0_112] : memref<1x6xf32, #tpu.memory_space<vmem>>, vector<1x6xf32>
    %100 = arith.addf %98, %99 : vector<1x6xf32>
    %c0_113 = arith.constant 0 : index
    %c0_114 = arith.constant 0 : index
    %c0_115 = arith.constant 0 : index
    %101 = vector.load %arg18[%c0_113, %c0_114, %c0_115] : memref<1x1x6xf32, #tpu.memory_space<vmem>>, vector<1x1x6xf32>
    %102 = vector.shape_cast %101 : vector<1x1x6xf32> to vector<1x6xf32>
    %103 = vector.shape_cast %100 : vector<1x6xf32> to vector<1x1x6xf32>
    tpu.vector_store %arg18[%c0_113, %c0_114, %c0_115], %103 {strides = array<i32>} : memref<1x1x6xf32, #tpu.memory_space<vmem>>, vector<1x1x6xf32>,
    return
  }
  func.func @transform_0(%arg0: i32) -> (i32, i32, i32, i32) {
    %c0_i32 = arith.constant 0 : i32
    %c0_i32_0 = arith.constant 0 : i32
    %c0_i32_1 = arith.constant 0 : i32
    %c0_i32_2 = arith.constant 0 : i32
    return %arg0, %c0_i32, %c0_i32_0, %c0_i32_1 : i32, i32, i32, i32
  }
  func.func @transform_1(%arg0: i32) -> (i32, i32, i32, i32) {
    %c0_i32 = arith.constant 0 : i32
    %c0_i32_0 = arith.constant 0 : i32
    %c0_i32_1 = arith.constant 0 : i32
    %c0_i32_2 = arith.constant 0 : i32
    %c0_i32_3 = arith.constant 0 : i32
    return %c0_i32, %c0_i32_0, %c0_i32_1, %c0_i32_2 : i32, i32, i32, i32
  }
  func.func @transform_2(%arg0: i32) -> (i32, i32) {
    %c0_i32 = arith.constant 0 : i32
    %c0_i32_0 = arith.constant 0 : i32
    %c0_i32_1 = arith.constant 0 : i32
    return %c0_i32, %c0_i32_0 : i32, i32
  }
  func.func @transform_3(%arg0: i32) -> (i32, i32, i32) {
    %c0_i32 = arith.constant 0 : i32
    %c0_i32_0 = arith.constant 0 : i32
    %c0_i32_1 = arith.constant 0 : i32
    %c0_i32_2 = arith.constant 0 : i32
    return %c0_i32, %c0_i32_0, %c0_i32_1 : i32, i32, i32
  }
  func.func @transform_4(%arg0: i32) -> (i32, i32) {
    %c0_i32 = arith.constant 0 : i32
    %c0_i32_0 = arith.constant 0 : i32
    %c0_i32_1 = arith.constant 0 : i32
    return %c0_i32, %c0_i32_0 : i32, i32
  }
  func.func @transform_5(%arg0: i32) -> (i32, i32, i32) {
    %c0_i32 = arith.constant 0 : i32
    %c0_i32_0 = arith.constant 0 : i32
    %c0_i32_1 = arith.constant 0 : i32
    %c0_i32_2 = arith.constant 0 : i32
    return %c0_i32, %c0_i32_0, %c0_i32_1 : i32, i32, i32
  }
  func.func @transform_6(%arg0: i32) -> (i32, i32) {
    %c0_i32 = arith.constant 0 : i32
    %c0_i32_0 = arith.constant 0 : i32
    %c0_i32_1 = arith.constant 0 : i32
    return %c0_i32, %c0_i32_0 : i32, i32
  }
  func.func @transform_7(%arg0: i32) -> (i32, i32, i32) {
    %c0_i32 = arith.constant 0 : i32
    %c0_i32_0 = arith.constant 0 : i32
    %c0_i32_1 = arith.constant 0 : i32
    %c0_i32_2 = arith.constant 0 : i32
    return %c0_i32, %c0_i32_0, %c0_i32_1 : i32, i32, i32
  }
  func.func @transform_8(%arg0: i32) -> (i32, i32) {
    %c0_i32 = arith.constant 0 : i32
    %c0_i32_0 = arith.constant 0 : i32
    %c0_i32_1 = arith.constant 0 : i32
    return %c0_i32, %c0_i32_0 : i32, i32
  }
  func.func @transform_9(%arg0: i32) -> (i32, i32, i32) {
    %c0_i32 = arith.constant 0 : i32
    %c0_i32_0 = arith.constant 0 : i32
    %c0_i32_1 = arith.constant 0 : i32
    %c0_i32_2 = arith.constant 0 : i32
    return %c0_i32, %c0_i32_0, %c0_i32_1 : i32, i32, i32
  }
  func.func @transform_10(%arg0: i32) -> (i32, i32) {
    %c0_i32 = arith.constant 0 : i32
    %c0_i32_0 = arith.constant 0 : i32
    %c0_i32_1 = arith.constant 0 : i32
    return %c0_i32, %c0_i32_0 : i32, i32
  }
  func.func @transform_11(%arg0: i32) -> (i32, i32, i32) {
    %c0_i32 = arith.constant 0 : i32
    %c0_i32_0 = arith.constant 0 : i32
    %c0_i32_1 = arith.constant 0 : i32
    %c0_i32_2 = arith.constant 0 : i32
    return %c0_i32, %c0_i32_0, %c0_i32_1 : i32, i32, i32
  }
  func.func @transform_12(%arg0: i32) -> (i32, i32) {
    %c0_i32 = arith.constant 0 : i32
    %c0_i32_0 = arith.constant 0 : i32
    %c0_i32_1 = arith.constant 0 : i32
    return %c0_i32, %c0_i32_0 : i32, i32
  }
  func.func @transform_13(%arg0: i32) -> (i32, i32) {
    %c0_i32 = arith.constant 0 : i32
    %c0_i32_0 = arith.constant 0 : i32
    %c0_i32_1 = arith.constant 0 : i32
    return %c0_i32, %c0_i32_0 : i32, i32
  }
  func.func @transform_14(%arg0: i32) -> (i32, i32) {
    %c0_i32 = arith.constant 0 : i32
    %c0_i32_0 = arith.constant 0 : i32
    %c0_i32_1 = arith.constant 0 : i32
    return %c0_i32, %c0_i32_0 : i32, i32
  }
  func.func @transform_15(%arg0: i32) -> (i32, i32, i32) {
    %c0_i32 = arith.constant 0 : i32
    %c0_i32_0 = arith.constant 0 : i32
    %c0_i32_1 = arith.constant 0 : i32
    %c0_i32_2 = arith.constant 0 : i32
    return %c0_i32, %c0_i32_0, %c0_i32_1 : i32, i32, i32
  }
  func.func @transform_16(%arg0: i32) -> (i32, i32) {
    %c0_i32 = arith.constant 0 : i32
    %c0_i32_0 = arith.constant 0 : i32
    %c0_i32_1 = arith.constant 0 : i32
    return %c0_i32, %c0_i32_0 : i32, i32
  }
  func.func @transform_17(%arg0: i32) -> (i32, i32, i32) {
    %c0_i32 = arith.constant 0 : i32
    %c0_i32_0 = arith.constant 0 : i32
    %c0_i32_1 = arith.constant 0 : i32
    return %arg0, %c0_i32, %c0_i32_0 : i32, i32, i32
  }
}

</mosaic_0001>

<llo_original>
// kernel: hnet_forward.1
$region0: #{hnet_forward.1}
  #allocation0 [shape = 'u32[]', space=smem, size = 0x4, offset = 0x4, fixed_abs, tag = 'smem constant byte address 0x4 - core index']
  #allocation1 [shape = 'u32[144,128]{1,0:T(1,128)}', space=vmem, size = 0x12000, scoped, tag = 'internal scratch']
  #allocation2 [shape = 'f32[86,86,16]{2,1,0:T(8,128)}', space=vmem, size = 0x3b2000, scoped, tag = 'scratch operand']
  #allocation3 [shape = 'f32[86,86,16]{2,1,0:T(8,128)}', space=vmem, size = 0x3b2000, scoped, tag = 'scratch operand']
  #allocation4 [shape = 'f32[42,42,16]{2,1,0:T(8,128)}', space=vmem, size = 0xfc000, scoped, tag = 'scratch operand']
  #allocation5 [shape = 'f32[40,40,32]{2,1,0:T(8,128)}', space=vmem, size = 0xc8000, scoped, tag = 'scratch operand']
  #allocation6 [shape = 'f32[40,40,32]{2,1,0:T(8,128)}', space=vmem, size = 0xc8000, scoped, tag = 'scratch operand']
  #allocation7 [shape = 'f32[19,19,32]{2,1,0:T(8,128)}', space=vmem, size = 0x39000, scoped, tag = 'scratch operand']
  #allocation8 [shape = 'f32[17,17,64]{2,1,0:T(8,128)}', space=vmem, size = 0x33000, scoped, tag = 'scratch operand']
  #allocation9 [shape = 'f32[17,17,64]{2,1,0:T(8,128)}', space=vmem, size = 0x33000, scoped, tag = 'scratch operand']
  #allocation10 [shape = 'f32[64,64]{1,0:T(8,128)}', space=vmem, size = 0x8000, scoped, tag = 'scratch operand']
  #allocation11 [shape = 'f32[88,128]{1,0:T(8,128)}', space=vmem, size = 0xb000, scoped, tag = 'scratch operand']
  %s0 = inlined_call_operand.vmem [shape: f32[2,88,88,1], index: 0, kind: input, shape index: {}]
  %s1 = inlined_call_operand.vmem [shape: f32[3,3,1,16], index: 1, kind: input, shape index: {}]
  %s2 = inlined_call_operand.vmem [shape: f32[1,16], index: 2, kind: input, shape index: {}]
  %s3 = inlined_call_operand.vmem [shape: f32[3,48,16], index: 3, kind: input, shape index: {}]
  %s4 = inlined_call_operand.vmem [shape: f32[1,16], index: 4, kind: input, shape index: {}]
  %s5 = inlined_call_operand.vmem [shape: f32[3,48,32], index: 5, kind: input, shape index: {}]
  %s6 = inlined_call_operand.vmem [shape: f32[1,32], index: 6, kind: input, shape index: {}]
  %s7 = inlined_call_operand.vmem [shape: f32[3,96,32], index: 7, kind: input, shape index: {}]
  %s8 = inlined_call_operand.vmem [shape: f32[1,32], index: 8, kind: input, shape index: {}]
  %s9 = inlined_call_operand.vmem [shape: f32[3,96,64], index: 9, kind: input, shape index: {}]
  %s10 = inlined_call_operand.vmem [shape: f32[1,64], index: 10, kind: input, shape index: {}]
  %s11 = inlined_call_operand.vmem [shape: f32[3,192,64], index: 11, kind: input, shape index: {}]
  %s12 = inlined_call_operand.vmem [shape: f32[1,64], index: 12, kind: input, shape index: {}]
  %s13 = inlined_call_operand.vmem [shape: f32[64,16], index: 13, kind: input, shape index: {}]
  %s14 = inlined_call_operand.vmem [shape: f32[1,16], index: 14, kind: input, shape index: {}]
  %s15 = inlined_call_operand.vmem [shape: f32[6,64,16], index: 15, kind: input, shape index: {}]
  %s16 = inlined_call_operand.vmem [shape: f32[1,6], index: 16, kind: input, shape index: {}]
  %s17 = inlined_call_operand.hbm [shape: f32[2,1,6], index: 17, kind: output, shape index: {}]
  %s18 = sld [smem:[#allocation0]]
  $region164: #{hnet_forward.1} parent=0
    _
  %s20 = ssub.s32 1, %s18
  %s21 = scalar_select 0, %s20, %s18
  $region1: #{hnet_forward.1} parent=0
    #allocation12 [shape = 'u8[1024]{0}', space=vmem, size = 0x400, scoped, tag = 'output window, operand 0']
    #allocation13 [shape = 's32[2]{0}', space=sflag, size = 0x8, scoped, tag = 'scoped memory for hnet_forward.1']
    %22 = vsyncpa [#allocation13], 0
    %s23 = scalar_lea.sflag [#allocation13], 1
    %24 = vsyncpa %s23, 0
    loop: start=0, step=1, limit=4
    $region2: #{hnet_forward.1} parent=1 // loop_pre_header
      _
    $region3: #{hnet_forward.1} parent=1 // loop_header
      %s26 = sphi 0, %s30
      %p27 = scmp.ge.s32.totalorder %s26, 4
      %s36 = sphi 0, %s38
      %s39 = sphi 0, %s36
      %s40 = sphi 0, %s39
      %s56 = sphi 0, %s40
      %s60 = sphi 0, %s60
      %s62 = sphi 0, %s60
      %s63 = sphi 0, %s62
      %s77 = sphi 0, %s63
      %s81 = sphi 0, %s81
      %s83 = sphi 0, %s81
      %s84 = sphi 0, %s83
      %s98 = sphi 0, %s84
      %s102 = sphi 0, %s102
      %s104 = sphi 0, %s102
      %s105 = sphi 0, %s104
      %s119 = sphi 0, %s105
      %s123 = sphi 0, %s123
      %s125 = sphi 0, %s123
      %s126 = sphi 0, %s125
      %s140 = sphi 0, %s126
      %s144 = sphi 0, %s144
      %s146 = sphi 0, %s144
      %s147 = sphi 0, %s146
      %s161 = sphi 0, %s147
      %s165 = sphi 0, %s165
      %s167 = sphi 0, %s165
      %s168 = sphi 0, %s167
      %s182 = sphi 0, %s168
      %s186 = sphi 0, %s186
      %s188 = sphi 0, %s186
      %s189 = sphi 0, %s188
      %s203 = sphi 0, %s189
      %s207 = sphi 0, %s207
      %s209 = sphi 0, %s207
      %s210 = sphi 0, %s209
      %s224 = sphi 0, %s210
      %s228 = sphi 0, %s228
      %s230 = sphi 0, %s228
      %s231 = sphi 0, %s230
      %s245 = sphi 0, %s231
      %s249 = sphi 0, %s249
      %s251 = sphi 0, %s249
      %s252 = sphi 0, %s251
      %s266 = sphi 0, %s252
      %s270 = sphi 0, %s270
      %s272 = sphi 0, %s270
      %s273 = sphi 0, %s272
      %s287 = sphi 0, %s273
      %s291 = sphi 0, %s291
      %s293 = sphi 0, %s291
      %s294 = sphi 0, %s293
      %s308 = sphi 0, %s294
      %s312 = sphi 0, %s312
      %s314 = sphi 0, %s312
      %s315 = sphi 0, %s314
      %s329 = sphi 0, %s315
      %s333 = sphi 0, %s333
      %s335 = sphi 0, %s333
      %s336 = sphi 0, %s335
      %s350 = sphi 0, %s336
      %s354 = sphi 0, %s354
      %s356 = sphi 0, %s354
      %s357 = sphi 0, %s356
      %s371 = sphi 0, %s357
      %s375 = sphi 0, %s375
      %s377 = sphi 0, %s375
      %s378 = sphi 0, %s377
      %s392 = sphi 0, %s378
      %s398 = sphi 0, %s400
      %s401 = sphi 0, %s398
      %s402 = sphi 0, %s401
      %s418 = sphi 0, %s402
    $region4: #{hnet_forward.1} parent=1 // loop_header_branch
      %29 = sbr.rel (%p27) target = $region8
    $region5: #{hnet_forward.1} parent=1 // loop_body
      %s31 = ssub.s32 %s26, 1
      %s32 = ssub.s32 %s26, 2
      %s33 = sadd.s32 %s26, 1
      %s34 = ssub.s32 %s26, %s33
      %p35 = scmp.eq.s32.totalorder %s34, 0
      %s37 = sadd.s32 %s36, 1
      %s38 = scalar_select %p35, %s36, %s37
      %p41 = pneg %p35
      %p42 = scmp.eq.s32.totalorder %s26, 1
      %p43 = por %p41, %p42
      %p44 = scmp.ne.s32.totalorder %s36, %s39
      %p45 = scmp.eq.s32.totalorder %s26, 0
      %p46 = por %p44, %p45
      %p47 = scmp.ne.s32.totalorder %s36, %s39
      %p48 = scmp.eq.s32.totalorder %s31, 1
      %p49 = por %p47, %p48
      %p50 = scmp.ne.s32.totalorder %s39, %s40
      %p51 = scmp.eq.s32.totalorder %s31, 0
      %p52 = por %p50, %p51
      %p53 = scmp.ne.s32.totalorder %s39, %s40
      %p54 = scmp.eq.s32.totalorder %s32, 1
      %p55 = por %p53, %p54
      %p57 = scmp.ne.s32.totalorder %s40, %s56
      %p58 = scmp.eq.s32.totalorder %s32, 0
      %p59 = por %p57, %p58
      %s61 = sadd.s32 %s60, 1
      %p64 = scmp.eq.s32.totalorder %s26, 1
      %p65 = scmp.ne.s32.totalorder %s60, %s62
      %p66 = scmp.eq.s32.totalorder %s26, 0
      %p67 = por %p65, %p66
      %p68 = scmp.ne.s32.totalorder %s60, %s62
      %p69 = scmp.eq.s32.totalorder %s31, 1
      %p70 = por %p68, %p69
      %p71 = scmp.ne.s32.totalorder %s62, %s63
      %p72 = scmp.eq.s32.totalorder %s31, 0
      %p73 = por %p71, %p72
      %p74 = scmp.ne.s32.totalorder %s62, %s63
      %p75 = scmp.eq.s32.totalorder %s32, 1
      %p76 = por %p74, %p75
      %p78 = scmp.ne.s32.totalorder %s63, %s77
      %p79 = scmp.eq.s32.totalorder %s32, 0
      %p80 = por %p78, %p79
      %s82 = sadd.s32 %s81, 1
      %p85 = scmp.eq.s32.totalorder %s26, 1
      %p86 = scmp.ne.s32.totalorder %s81, %s83
      %p87 = scmp.eq.s32.totalorder %s26, 0
      %p88 = por %p86, %p87
      %p89 = scmp.ne.s32.totalorder %s81, %s83
      %p90 = scmp.eq.s32.totalorder %s31, 1
      %p91 = por %p89, %p90
      %p92 = scmp.ne.s32.totalorder %s83, %s84
      %p93 = scmp.eq.s32.totalorder %s31, 0
      %p94 = por %p92, %p93
      %p95 = scmp.ne.s32.totalorder %s83, %s84
      %p96 = scmp.eq.s32.totalorder %s32, 1
      %p97 = por %p95, %p96
      %p99 = scmp.ne.s32.totalorder %s84, %s98
      %p100 = scmp.eq.s32.totalorder %s32, 0
      %p101 = por %p99, %p100
      %s103 = sadd.s32 %s102, 1
      %p106 = scmp.eq.s32.totalorder %s26, 1
      %p107 = scmp.ne.s32.totalorder %s102, %s104
      %p108 = scmp.eq.s32.totalorder %s26, 0
      %p109 = por %p107, %p108
      %p110 = scmp.ne.s32.totalorder %s102, %s104
      %p111 = scmp.eq.s32.totalorder %s31, 1
      %p112 = por %p110, %p111
      %p113 = scmp.ne.s32.totalorder %s104, %s105
      %p114 = scmp.eq.s32.totalorder %s31, 0
      %p115 = por %p113, %p114
      %p116 = scmp.ne.s32.totalorder %s104, %s105
      %p117 = scmp.eq.s32.totalorder %s32, 1
      %p118 = por %p116, %p117
      %p120 = scmp.ne.s32.totalorder %s105, %s119
      %p121 = scmp.eq.s32.totalorder %s32, 0
      %p122 = por %p120, %p121
      %s124 = sadd.s32 %s123, 1
      %p127 = scmp.eq.s32.totalorder %s26, 1
      %p128 = scmp.ne.s32.totalorder %s123, %s125
      %p129 = scmp.eq.s32.totalorder %s26, 0
      %p130 = por %p128, %p129
      %p131 = scmp.ne.s32.totalorder %s123, %s125
      %p132 = scmp.eq.s32.totalorder %s31, 1
      %p133 = por %p131, %p132
      %p134 = scmp.ne.s32.totalorder %s125, %s126
      %p135 = scmp.eq.s32.totalorder %s31, 0
      %p136 = por %p134, %p135
      %p137 = scmp.ne.s32.totalorder %s125, %s126
      %p138 = scmp.eq.s32.totalorder %s32, 1
      %p139 = por %p137, %p138
      %p141 = scmp.ne.s32.totalorder %s126, %s140
      %p142 = scmp.eq.s32.totalorder %s32, 0
      %p143 = por %p141, %p142
      %s145 = sadd.s32 %s144, 1
      %p148 = scmp.eq.s32.totalorder %s26, 1
      %p149 = scmp.ne.s32.totalorder %s144, %s146
      %p150 = scmp.eq.s32.totalorder %s26, 0
      %p151 = por %p149, %p150
      %p152 = scmp.ne.s32.totalorder %s144, %s146
      %p153 = scmp.eq.s32.totalorder %s31, 1
      %p154 = por %p152, %p153
      %p155 = scmp.ne.s32.totalorder %s146, %s147
      %p156 = scmp.eq.s32.totalorder %s31, 0
      %p157 = por %p155, %p156
      %p158 = scmp.ne.s32.totalorder %s146, %s147
      %p159 = scmp.eq.s32.totalorder %s32, 1
      %p160 = por %p158, %p159
      %p162 = scmp.ne.s32.totalorder %s147, %s161
      %p163 = scmp.eq.s32.totalorder %s32, 0
      %p164 = por %p162, %p163
      %s166 = sadd.s32 %s165, 1
      %p169 = scmp.eq.s32.totalorder %s26, 1
      %p170 = scmp.ne.s32.totalorder %s165, %s167
      %p171 = scmp.eq.s32.totalorder %s26, 0
      %p172 = por %p170, %p171
      %p173 = scmp.ne.s32.totalorder %s165, %s167
      %p174 = scmp.eq.s32.totalorder %s31, 1
      %p175 = por %p173, %p174
      %p176 = scmp.ne.s32.totalorder %s167, %s168
      %p177 = scmp.eq.s32.totalorder %s31, 0
      %p178 = por %p176, %p177
      %p179 = scmp.ne.s32.totalorder %s167, %s168
      %p180 = scmp.eq.s32.totalorder %s32, 1
      %p181 = por %p179, %p180
      %p183 = scmp.ne.s32.totalorder %s168, %s182
      %p184 = scmp.eq.s32.totalorder %s32, 0
      %p185 = por %p183, %p184
      %s187 = sadd.s32 %s186, 1
      %p190 = scmp.eq.s32.totalorder %s26, 1
      %p191 = scmp.ne.s32.totalorder %s186, %s188
      %p192 = scmp.eq.s32.totalorder %s26, 0
      %p193 = por %p191, %p192
      %p194 = scmp.ne.s32.totalorder %s186, %s188
      %p195 = scmp.eq.s32.totalorder %s31, 1
      %p196 = por %p194, %p195
      %p197 = scmp.ne.s32.totalorder %s188, %s189
      %p198 = scmp.eq.s32.totalorder %s31, 0
      %p199 = por %p197, %p198
      %p200 = scmp.ne.s32.totalorder %s188, %s189
      %p201 = scmp.eq.s32.totalorder %s32, 1
      %p202 = por %p200, %p201
      %p204 = scmp.ne.s32.totalorder %s189, %s203
      %p205 = scmp.eq.s32.totalorder %s32, 0
      %p206 = por %p204, %p205
      %s208 = sadd.s32 %s207, 1
      %p211 = scmp.eq.s32.totalorder %s26, 1
      %p212 = scmp.ne.s32.totalorder %s207, %s209
      %p213 = scmp.eq.s32.totalorder %s26, 0
      %p214 = por %p212, %p213
      %p215 = scmp.ne.s32.totalorder %s207, %s209
      %p216 = scmp.eq.s32.totalorder %s31, 1
      %p217 = por %p215, %p216
      %p218 = scmp.ne.s32.totalorder %s209, %s210
      %p219 = scmp.eq.s32.totalorder %s31, 0
      %p220 = por %p218, %p219
      %p221 = scmp.ne.s32.totalorder %s209, %s210
      %p222 = scmp.eq.s32.totalorder %s32, 1
      %p223 = por %p221, %p222
      %p225 = scmp.ne.s32.totalorder %s210, %s224
      %p226 = scmp.eq.s32.totalorder %s32, 0
      %p227 = por %p225, %p226
      %s229 = sadd.s32 %s228, 1
      %p232 = scmp.eq.s32.totalorder %s26, 1
      %p233 = scmp.ne.s32.totalorder %s228, %s230
      %p234 = scmp.eq.s32.totalorder %s26, 0
      %p235 = por %p233, %p234
      %p236 = scmp.ne.s32.totalorder %s228, %s230
      %p237 = scmp.eq.s32.totalorder %s31, 1
      %p238 = por %p236, %p237
      %p239 = scmp.ne.s32.totalorder %s230, %s231
      %p240 = scmp.eq.s32.totalorder %s31, 0
      %p241 = por %p239, %p240
      %p242 = scmp.ne.s32.totalorder %s230, %s231
      %p243 = scmp.eq.s32.totalorder %s32, 1
      %p244 = por %p242, %p243
      %p246 = scmp.ne.s32.totalorder %s231, %s245
      %p247 = scmp.eq.s32.totalorder %s32, 0
      %p248 = por %p246, %p247
      %s250 = sadd.s32 %s249, 1
      %p253 = scmp.eq.s32.totalorder %s26, 1
      %p254 = scmp.ne.s32.totalorder %s249, %s251
      %p255 = scmp.eq.s32.totalorder %s26, 0
      %p256 = por %p254, %p255
      %p257 = scmp.ne.s32.totalorder %s249, %s251
      %p258 = scmp.eq.s32.totalorder %s31, 1
      %p259 = por %p257, %p258
      %p260 = scmp.ne.s32.totalorder %s251, %s252
      %p261 = scmp.eq.s32.totalorder %s31, 0
      %p262 = por %p260, %p261
      %p263 = scmp.ne.s32.totalorder %s251, %s252
      %p264 = scmp.eq.s32.totalorder %s32, 1
      %p265 = por %p263, %p264
      %p267 = scmp.ne.s32.totalorder %s252, %s266
      %p268 = scmp.eq.s32.totalorder %s32, 0
      %p269 = por %p267, %p268
      %s271 = sadd.s32 %s270, 1
      %p274 = scmp.eq.s32.totalorder %s26, 1
      %p275 = scmp.ne.s32.totalorder %s270, %s272
      %p276 = scmp.eq.s32.totalorder %s26, 0
      %p277 = por %p275, %p276
      %p278 = scmp.ne.s32.totalorder %s270, %s272
      %p279 = scmp.eq.s32.totalorder %s31, 1
      %p280 = por %p278, %p279
      %p281 = scmp.ne.s32.totalorder %s272, %s273
      %p282 = scmp.eq.s32.totalorder %s31, 0
      %p283 = por %p281, %p282
      %p284 = scmp.ne.s32.totalorder %s272, %s273
      %p285 = scmp.eq.s32.totalorder %s32, 1
      %p286 = por %p284, %p285
      %p288 = scmp.ne.s32.totalorder %s273, %s287
      %p289 = scmp.eq.s32.totalorder %s32, 0
      %p290 = por %p288, %p289
      %s292 = sadd.s32 %s291, 1
      %p295 = scmp.eq.s32.totalorder %s26, 1
      %p296 = scmp.ne.s32.totalorder %s291, %s293
      %p297 = scmp.eq.s32.totalorder %s26, 0
      %p298 = por %p296, %p297
      %p299 = scmp.ne.s32.totalorder %s291, %s293
      %p300 = scmp.eq.s32.totalorder %s31, 1
      %p301 = por %p299, %p300
      %p302 = scmp.ne.s32.totalorder %s293, %s294
      %p303 = scmp.eq.s32.totalorder %s31, 0
      %p304 = por %p302, %p303
      %p305 = scmp.ne.s32.totalorder %s293, %s294
      %p306 = scmp.eq.s32.totalorder %s32, 1
      %p307 = por %p305, %p306
      %p309 = scmp.ne.s32.totalorder %s294, %s308
      %p310 = scmp.eq.s32.totalorder %s32, 0
      %p311 = por %p309, %p310
      %s313 = sadd.s32 %s312, 1
      %p316 = scmp.eq.s32.totalorder %s26, 1
      %p317 = scmp.ne.s32.totalorder %s312, %s314
      %p318 = scmp.eq.s32.totalorder %s26, 0
      %p319 = por %p317, %p318
      %p320 = scmp.ne.s32.totalorder %s312, %s314
      %p321 = scmp.eq.s32.totalorder %s31, 1
      %p322 = por %p320, %p321
      %p323 = scmp.ne.s32.totalorder %s314, %s315
      %p324 = scmp.eq.s32.totalorder %s31, 0
      %p325 = por %p323, %p324
      %p326 = scmp.ne.s32.totalorder %s314, %s315
      %p327 = scmp.eq.s32.totalorder %s32, 1
      %p328 = por %p326, %p327
      %p330 = scmp.ne.s32.totalorder %s315, %s329
      %p331 = scmp.eq.s32.totalorder %s32, 0
      %p332 = por %p330, %p331
      %s334 = sadd.s32 %s333, 1
      %p337 = scmp.eq.s32.totalorder %s26, 1
      %p338 = scmp.ne.s32.totalorder %s333, %s335
      %p339 = scmp.eq.s32.totalorder %s26, 0
      %p340 = por %p338, %p339
      %p341 = scmp.ne.s32.totalorder %s333, %s335
      %p342 = scmp.eq.s32.totalorder %s31, 1
      %p343 = por %p341, %p342
      %p344 = scmp.ne.s32.totalorder %s335, %s336
      %p345 = scmp.eq.s32.totalorder %s31, 0
      %p346 = por %p344, %p345
      %p347 = scmp.ne.s32.totalorder %s335, %s336
      %p348 = scmp.eq.s32.totalorder %s32, 1
      %p349 = por %p347, %p348
      %p351 = scmp.ne.s32.totalorder %s336, %s350
      %p352 = scmp.eq.s32.totalorder %s32, 0
      %p353 = por %p351, %p352
      %s355 = sadd.s32 %s354, 1
      %p358 = scmp.eq.s32.totalorder %s26, 1
      %p359 = scmp.ne.s32.totalorder %s354, %s356
      %p360 = scmp.eq.s32.totalorder %s26, 0
      %p361 = por %p359, %p360
      %p362 = scmp.ne.s32.totalorder %s354, %s356
      %p363 = scmp.eq.s32.totalorder %s31, 1
      %p364 = por %p362, %p363
      %p365 = scmp.ne.s32.totalorder %s356, %s357
      %p366 = scmp.eq.s32.totalorder %s31, 0
      %p367 = por %p365, %p366
      %p368 = scmp.ne.s32.totalorder %s356, %s357
      %p369 = scmp.eq.s32.totalorder %s32, 1
      %p370 = por %p368, %p369
      %p372 = scmp.ne.s32.totalorder %s357, %s371
      %p373 = scmp.eq.s32.totalorder %s32, 0
      %p374 = por %p372, %p373
      %s376 = sadd.s32 %s375, 1
      %p379 = scmp.eq.s32.totalorder %s26, 1
      %p380 = scmp.ne.s32.totalorder %s375, %s377
      %p381 = scmp.eq.s32.totalorder %s26, 0
      %p382 = por %p380, %p381
      %p383 = scmp.ne.s32.totalorder %s375, %s377
      %p384 = scmp.eq.s32.totalorder %s31, 1
      %p385 = por %p383, %p384
      %p386 = scmp.ne.s32.totalorder %s377, %s378
      %p387 = scmp.eq.s32.totalorder %s31, 0
      %p388 = por %p386, %p387
      %p389 = scmp.ne.s32.totalorder %s377, %s378
      %p390 = scmp.eq.s32.totalorder %s32, 1
      %p391 = por %p389, %p390
      %p393 = scmp.ne.s32.totalorder %s378, %s392
      %p394 = scmp.eq.s32.totalorder %s32, 0
      %p395 = por %p393, %p394
      %s396 = ssub.s32 %s26, %s33
      %p397 = scmp.eq.s32.totalorder %s396, 0
      %s399 = sadd.s32 %s398, 1
      %s400 = scalar_select %p397, %s398, %s399
      %p403 = pneg %p397
      %p404 = scmp.eq.s32.totalorder %s26, 1
      %p405 = por %p403, %p404
      %p406 = scmp.ne.s32.totalorder %s398, %s401
      %p407 = scmp.eq.s32.totalorder %s26, 0
      %p408 = por %p406, %p407
      %p409 = scmp.ne.s32.totalorder %s398, %s401
      %p410 = scmp.eq.s32.totalorder %s31, 1
      %p411 = por %p409, %p410
      %p412 = scmp.ne.s32.totalorder %s401, %s402
      %p413 = scmp.eq.s32.totalorder %s31, 0
      %p414 = por %p412, %p413
      %p415 = scmp.ne.s32.totalorder %s401, %s402
      %p416 = scmp.eq.s32.totalorder %s32, 1
      %p417 = por %p415, %p416
      %p419 = scmp.ne.s32.totalorder %s402, %s418
      %p420 = scmp.eq.s32.totalorder %s32, 0
      %p421 = por %p419, %p420
      %p422 = scmp.le.s32.totalorder 1, %s26
      %p423 = scmp.lt.s32.totalorder %s26, 3
      %p424 = pnand %p422, %p423
      %p425 = pneg %p424
      // Predicated region
      $region9: #{hnet_forward.1} parent=5 // pred_check
        _
      $region10: #{hnet_forward.1} parent=5 // pred_check_branch
        %427 = sbr.rel (%p424) target = $region12
      $region11: #{hnet_forward.1} parent=5 // pred_region
        %s428 = ssub.s32 %s26, 1
        // Predicated region
        $region13: #{hnet_forward.1} parent=11 // pred_check
          %p429 = pneg %p73
        $region14: #{hnet_forward.1} parent=11 // pred_check_branch
          %431 = sbr.rel (%p429) target = $region16
        $region15: #{hnet_forward.1} parent=11 // pred_region
          _
        $region16: #{hnet_forward.1} parent=11 // pred_fallthru
          _
        // Predicated region
        $region17: #{hnet_forward.1} parent=11 // pred_check
          %p432 = pneg %p94
        $region18: #{hnet_forward.1} parent=11 // pred_check_branch
          %434 = sbr.rel (%p432) target = $region20
        $region19: #{hnet_forward.1} parent=11 // pred_region
          _
        $region20: #{hnet_forward.1} parent=11 // pred_fallthru
          _
        // Predicated region
        $region21: #{hnet_forward.1} parent=11 // pred_check
          %p435 = pneg %p115
        $region22: #{hnet_forward.1} parent=11 // pred_check_branch
          %437 = sbr.rel (%p435) target = $region24
        $region23: #{hnet_forward.1} parent=11 // pred_region
          _
        $region24: #{hnet_forward.1} parent=11 // pred_fallthru
          _
        // Predicated region
        $region25: #{hnet_forward.1} parent=11 // pred_check
          %p438 = pneg %p136
        $region26: #{hnet_forward.1} parent=11 // pred_check_branch
          %440 = sbr.rel (%p438) target = $region28
        $region27: #{hnet_forward.1} parent=11 // pred_region
          _
        $region28: #{hnet_forward.1} parent=11 // pred_fallthru
          _
        // Predicated region
        $region29: #{hnet_forward.1} parent=11 // pred_check
          %p441 = pneg %p157
        $region30: #{hnet_forward.1} parent=11 // pred_check_branch
          %443 = sbr.rel (%p441) target = $region32
        $region31: #{hnet_forward.1} parent=11 // pred_region
          _
        $region32: #{hnet_forward.1} parent=11 // pred_fallthru
          _
        // Predicated region
        $region33: #{hnet_forward.1} parent=11 // pred_check
          %p444 = pneg %p178
        $region34: #{hnet_forward.1} parent=11 // pred_check_branch
          %446 = sbr.rel (%p444) target = $region36
        $region35: #{hnet_forward.1} parent=11 // pred_region
          _
        $region36: #{hnet_forward.1} parent=11 // pred_fallthru
          _
        // Predicated region
        $region37: #{hnet_forward.1} parent=11 // pred_check
          %p447 = pneg %p199
        $region38: #{hnet_forward.1} parent=11 // pred_check_branch
          %449 = sbr.rel (%p447) target = $region40
        $region39: #{hnet_forward.1} parent=11 // pred_region
          _
        $region40: #{hnet_forward.1} parent=11 // pred_fallthru
          _
        // Predicated region
        $region41: #{hnet_forward.1} parent=11 // pred_check
          %p450 = pneg %p220
        $region42: #{hnet_forward.1} parent=11 // pred_check_branch
          %452 = sbr.rel (%p450) target = $region44
        $region43: #{hnet_forward.1} parent=11 // pred_region
          _
        $region44: #{hnet_forward.1} parent=11 // pred_fallthru
          _
        // Predicated region
        $region45: #{hnet_forward.1} parent=11 // pred_check
          %p453 = pneg %p241
        $region46: #{hnet_forward.1} parent=11 // pred_check_branch
          %455 = sbr.rel (%p453) target = $region48
        $region47: #{hnet_forward.1} parent=11 // pred_region
          _
        $region48: #{hnet_forward.1} parent=11 // pred_fallthru
          _
        // Predicated region
        $region49: #{hnet_forward.1} parent=11 // pred_check
          %p456 = pneg %p262
        $region50: #{hnet_forward.1} parent=11 // pred_check_branch
          %458 = sbr.rel (%p456) target = $region52
        $region51: #{hnet_forward.1} parent=11 // pred_region
          _
        $region52: #{hnet_forward.1} parent=11 // pred_fallthru
          _
        // Predicated region
        $region53: #{hnet_forward.1} parent=11 // pred_check
          %p459 = pneg %p283
        $region54: #{hnet_forward.1} parent=11 // pred_check_branch
          %461 = sbr.rel (%p459) target = $region56
        $region55: #{hnet_forward.1} parent=11 // pred_region
          _
        $region56: #{hnet_forward.1} parent=11 // pred_fallthru
          _
        // Predicated region
        $region57: #{hnet_forward.1} parent=11 // pred_check
          %p462 = pneg %p304
        $region58: #{hnet_forward.1} parent=11 // pred_check_branch
          %464 = sbr.rel (%p462) target = $region60
        $region59: #{hnet_forward.1} parent=11 // pred_region
          _
        $region60: #{hnet_forward.1} parent=11 // pred_fallthru
          _
        // Predicated region
        $region61: #{hnet_forward.1} parent=11 // pred_check
          %p465 = pneg %p325
        $region62: #{hnet_forward.1} parent=11 // pred_check_branch
          %467 = sbr.rel (%p465) target = $region64
        $region63: #{hnet_forward.1} parent=11 // pred_region
          _
        $region64: #{hnet_forward.1} parent=11 // pred_fallthru
          _
        // Predicated region
        $region65: #{hnet_forward.1} parent=11 // pred_check
          %p468 = pneg %p346
        $region66: #{hnet_forward.1} parent=11 // pred_check_branch
          %470 = sbr.rel (%p468) target = $region68
        $region67: #{hnet_forward.1} parent=11 // pred_region
          _
        $region68: #{hnet_forward.1} parent=11 // pred_fallthru
          _
        // Predicated region
        $region69: #{hnet_forward.1} parent=11 // pred_check
          %p471 = pneg %p367
        $region70: #{hnet_forward.1} parent=11 // pred_check_branch
          %473 = sbr.rel (%p471) target = $region72
        $region71: #{hnet_forward.1} parent=11 // pred_region
          _
        $region72: #{hnet_forward.1} parent=11 // pred_fallthru
          _
        // Predicated region
        $region73: #{hnet_forward.1} parent=11 // pred_check
          %p474 = pneg %p388
        $region74: #{hnet_forward.1} parent=11 // pred_check_branch
          %476 = sbr.rel (%p474) target = $region76
        $region75: #{hnet_forward.1} parent=11 // pred_region
          _
        $region76: #{hnet_forward.1} parent=11 // pred_fallthru
          _
      $region12: #{hnet_forward.1} parent=5 // pred_fallthru
        _
      %p477 = scmp.lt.s32.totalorder %s26, 2
      // Predicated region
      $region77: #{hnet_forward.1} parent=5 // pred_check
        %p478 = pneg %p477
      $region78: #{hnet_forward.1} parent=5 // pred_check_branch
        %480 = sbr.rel (%p478) target = $region80
      $region79: #{hnet_forward.1} parent=5 // pred_region
        // Predicated region
        $region81: #{hnet_forward.1} parent=79 // pred_check
          %p481 = pneg %p46
        $region82: #{hnet_forward.1} parent=79 // pred_check_branch
          %483 = sbr.rel (%p481) target = $region84
        $region83: #{hnet_forward.1} parent=79 // pred_region
          %p484 = scmp.lt.s32.totalorder %s26, 1
          %s485 = scalar_select %p484, %s26, 1
          %s486 = smul.addr %s485, 968
          %s487 = smul.addr %s486, 8
          %s488 = scalar_lea.vmem %s0, %s487
        $region84: #{hnet_forward.1} parent=79 // pred_fallthru
          _
      $region80: #{hnet_forward.1} parent=5 // pred_fallthru
        _
      %p489 = scmp.le.s32.totalorder 1, %s26
      %p490 = scmp.lt.s32.totalorder %s26, 3
      %p491 = pnand %p489, %p490
      %p492 = pneg %p491
      // Predicated region
      $region85: #{hnet_forward.1} parent=5 // pred_check
        _
      $region86: #{hnet_forward.1} parent=5 // pred_check_branch
        %494 = sbr.rel (%p491) target = $region88
      $region87: #{hnet_forward.1} parent=5 // pred_region
        %s495 = ssub.s32 %s26, 1
        %p496 = scmp.lt.s32.totalorder %s31, 1
        %s497 = scalar_select %p496, %s31, 1
        %s498 = smul.addr %s497, 968
        %s499 = smul.addr %s498, 8
        %s500 = scalar_lea.vmem %s0, %s499
        %p501 = pneg %p52
        %p502 = pneg %p49
        %p503 = pneg %p73
        %p504 = pneg %p70
        %p505 = pneg %p94
        %p506 = pneg %p91
        %p507 = pneg %p115
        %p508 = pneg %p112
        %p509 = pneg %p136
        %p510 = pneg %p133
        %p511 = pneg %p157
        %p512 = pneg %p154
        %p513 = pneg %p178
        %p514 = pneg %p175
        %p515 = pneg %p199
        %p516 = pneg %p196
        %p517 = pneg %p220
        %p518 = pneg %p217
        %p519 = pneg %p241
        %p520 = pneg %p238
        %p521 = pneg %p262
        %p522 = pneg %p259
        %p523 = pneg %p283
        %p524 = pneg %p280
        %p525 = pneg %p304
        %p526 = pneg %p301
        %p527 = pneg %p325
        %p528 = pneg %p322
        %p529 = pneg %p346
        %p530 = pneg %p343
        %p531 = pneg %p367
        %p532 = pneg %p364
        %p533 = pneg %p388
        %p534 = pneg %p385
        %p535 = pneg %p414
        %p536 = pneg %p411
        %s537 = sand.u32 %s401, 1
        %s538 = scalar_lea.sflag [#allocation13], %s537
        %s539 = sand.u32 %s401, 1
        %s540 = scalar_lea.vmem [#allocation12], %s539
        %p541 = scmp.lt.s32.totalorder %s31, 1
        %s542 = scalar_select %p541, %s31, 1
        %s543 = smul.addr %s542, 968
        %s544 = smul.addr %s543, 8
        %s545 = scalar_lea.vmem %s0, %s544
        %vm546 = vcmask 130048
        %547 = vst.msk [vmem:[#allocation3] sm:$0xff] %vm546, -inf
        %548 = vst.msk [vmem:[#allocation3 + $0x8] sm:$0xff] %vm546, -inf
        %549 = vst.msk [vmem:[#allocation3 + $0x10] sm:$0xff] %vm546, -inf
        %550 = vst.msk [vmem:[#allocation3 + $0x18] sm:$0xff] %vm546, -inf
        %551 = vst.msk [vmem:[#allocation3 + $0x20] sm:$0xff] %vm546, -inf
        %552 = vst.msk [vmem:[#allocation3 + $0x28] sm:$0xff] %vm546, -inf
        %553 = vst.msk [vmem:[#allocation3 + $0x30] sm:$0xff] %vm546, -inf
        %554 = vst.msk [vmem:[#allocation3 + $0x38] sm:$0xff] %vm546, -inf
        %555 = vst.msk [vmem:[#allocation3 + $0x40] sm:$0xff] %vm546, -inf
        %556 = vst.msk [vmem:[#allocation3 + $0x48] sm:$0xff] %vm546, -inf
        %vm557 = vcmask 128000
        %558 = vst.msk [vmem:[#allocation3 + $0x50] sm:$0x3f] %vm557, -inf
        %559 = vst.msk [vmem:[#allocation3 + $0x58] sm:$0xff] %vm546, -inf
        %560 = vst.msk [vmem:[#allocation3 + $0x60] sm:$0xff] %vm546, -inf
        %561 = vst.msk [vmem:[#allocation3 + $0x68] sm:$0xff] %vm546, -inf
        %562 = vst.msk [vmem:[#allocation3 + $0x70] sm:$0xff] %vm546, -inf
        %563 = vst.msk [vmem:[#allocation3 + $0x78] sm:$0xff] %vm546, -inf
        %564 = vst.msk [vmem:[#allocation3 + $0x80] sm:$0xff] %vm546, -inf
        %565 = vst.msk [vmem:[#allocation3 + $0x88] sm:$0xff] %vm546, -inf
        %566 = vst.msk [vmem:[#allocation3 + $0x90] sm:$0xff] %vm546, -inf
        %567 = vst.msk [vmem:[#allocation3 + $0x98] sm:$0xff] %vm546, -inf
        %568 = vst.msk [vmem:[#allocation3 + $0xa0] sm:$0xff] %vm546, -inf
        %569 = vst.msk [vmem:[#allocation3 + $0xa8] sm:$0x3f] %vm557, -inf
        %570 = vst.msk [vmem:[#allocation3 + $0xb0] sm:$0xff] %vm546, -inf
        %571 = vst.msk [vmem:[#allocation3 + $0xb8] sm:$0xff] %vm546, -inf
        %572 = vst.msk [vmem:[#allocation3 + $0xc0] sm:$0xff] %vm546, -inf
        %573 = vst.msk [vmem:[#allocation3 + $0xc8] sm:$0xff] %vm546, -inf
        %574 = vst.msk [vmem:[#allocation3 + $0xd0] sm:$0xff] %vm546, -inf
        %575 = vst.msk [vmem:[#allocation3 + $0xd8] sm:$0xff] %vm546, -inf
        %576 = vst.msk [vmem:[#allocation3 + $0xe0] sm:$0xff] %vm546, -inf
        %577 = vst.msk [vmem:[#allocation3 + $0xe8] sm:$0xff] %vm546, -inf
        %578 = vst.msk [vmem:[#allocation3 + $0xf0] sm:$0xff] %vm546, -inf
        %579 = vst.msk [vmem:[#allocation3 + $0xf8] sm:$0xff] %vm546, -inf
        %580 = vst.msk [vmem:[#allocation3 + $0x100] sm:$0x3f] %vm557, -inf
        %581 = vst.msk [vmem:[#allocation3 + $0x108] sm:$0xff] %vm546, -inf
        %582 = vst.msk [vmem:[#allocation3 + $0x110] sm:$0xff] %vm546, -inf
        %583 = vst.msk [vmem:[#allocation3 + $0x118] sm:$0xff] %vm546, -inf
        %584 = vst.msk [vmem:[#allocation3 + $0x120] sm:$0xff] %vm546, -inf
        %585 = vst.msk [vmem:[#allocation3 + $0x128] sm:$0xff] %vm546, -inf
        %586 = vst.msk [vmem:[#allocation3 + $0x130] sm:$0xff] %vm546, -inf
        %587 = vst.msk [vmem:[#allocation3 + $0x138] sm:$0xff] %vm546, -inf
        %588 = vst.msk [vmem:[#allocation3 + $0x140] sm:$0xff] %vm546, -inf
        %589 = vst.msk [vmem:[#allocation3 + $0x148] sm:$0xff] %vm546, -inf
        %590 = vst.msk [vmem:[#allocation3 + $0x150] sm:$0xff] %vm546, -inf
        %591 = vst.msk [vmem:[#allocation3 + $0x158] sm:$0x3f] %vm557, -inf
        %592 = vst.msk [vmem:[#allocation3 + $0x160] sm:$0xff] %vm546, -inf
        %593 = vst.msk [vmem:[#allocation3 + $0x168] sm:$0xff] %vm546, -inf
        %594 = vst.msk [vmem:[#allocation3 + $0x170] sm:$0xff] %vm546, -inf
        %595 = vst.msk [vmem:[#allocation3 + $0x178] sm:$0xff] %vm546, -inf
        %596 = vst.msk [vmem:[#allocation3 + $0x180] sm:$0xff] %vm546, -inf
        %597 = vst.msk [vmem:[#allocation3 + $0x188] sm:$0xff] %vm546, -inf
        %598 = vst.msk [vmem:[#allocation3 + $0x190] sm:$0xff] %vm546, -inf
        %599 = vst.msk [vmem:[#allocation3 + $0x198] sm:$0xff] %vm546, -inf
        %600 = vst.msk [vmem:[#allocation3 + $0x1a0] sm:$0xff] %vm546, -inf
        %601 = vst.msk [vmem:[#allocation3 + $0x1a8] sm:$0xff] %vm546, -inf
        %602 = vst.msk [vmem:[#allocation3 + $0x1b0] sm:$0x3f] %vm557, -inf
        %603 = vst.msk [vmem:[#allocation3 + $0x1b8] sm:$0xff] %vm546, -inf
        %604 = vst.msk [vmem:[#allocation3 + $0x1c0] sm:$0xff] %vm546, -inf
        %605 = vst.msk [vmem:[#allocation3 + $0x1c8] sm:$0xff] %vm546, -inf
        %606 = vst.msk [vmem:[#allocation3 + $0x1d0] sm:$0xff] %vm546, -inf
        %607 = vst.msk [vmem:[#allocation3 + $0x1d8] sm:$0xff] %vm546, -inf
        %608 = vst.msk [vmem:[#allocation3 + $0x1e0] sm:$0xff] %vm546, -inf
        %609 = vst.msk [vmem:[#allocation3 + $0x1e8] sm:$0xff] %vm546, -inf
        %610 = vst.msk [vmem:[#allocation3 + $0x1f0] sm:$0xff] %vm546, -inf
        %611 = vst.msk [vmem:[#allocation3 + $0x1f8] sm:$0xff] %vm546, -inf
        %612 = vst.msk [vmem:[#allocation3 + $0x200] sm:$0xff] %vm546, -inf
        %613 = vst.msk [vmem:[#allocation3 + $0x208] sm:$0x3f] %vm557, -inf
        %614 = vst.msk [vmem:[#allocation3 + $0x210] sm:$0xff] %vm546, -inf
        %615 = vst.msk [vmem:[#allocation3 + $0x218] sm:$0xff] %vm546, -inf
        %616 = vst.msk [vmem:[#allocation3 + $0x220] sm:$0xff] %vm546, -inf
        %617 = vst.msk [vmem:[#allocation3 + $0x228] sm:$0xff] %vm546, -inf
        %618 = vst.msk [vmem:[#allocation3 + $0x230] sm:$0xff] %vm546, -inf
        %619 = vst.msk [vmem:[#allocation3 + $0x238] sm:$0xff] %vm546, -inf
        %620 = vst.msk [vmem:[#allocation3 + $0x240] sm:$0xff] %vm546, -inf
        %621 = vst.msk [vmem:[#allocation3 + $0x248] sm:$0xff] %vm546, -inf
        %622 = vst.msk [vmem:[#allocation3 + $0x250] sm:$0xff] %vm546, -inf
        %623 = vst.msk [vmem:[#allocation3 + $0x258] sm:$0xff] %vm546, -inf
        %624 = vst.msk [vmem:[#allocation3 + $0x260] sm:$0x3f] %vm557, -inf
        %625 = vst.msk [vmem:[#allocation3 + $0x268] sm:$0xff] %vm546, -inf
        %626 = vst.msk [vmem:[#allocation3 + $0x270] sm:$0xff] %vm546, -inf
        %627 = vst.msk [vmem:[#allocation3 + $0x278] sm:$0xff] %vm546, -inf
        %628 = vst.msk [vmem:[#allocation3 + $0x280] sm:$0xff] %vm546, -inf
        %629 = vst.msk [vmem:[#allocation3 + $0x288] sm:$0xff] %vm546, -inf
        %630 = vst.msk [vmem:[#allocation3 + $0x290] sm:$0xff] %vm546, -inf
        %631 = vst.msk [vmem:[#allocation3 + $0x298] sm:$0xff] %vm546, -inf
        %632 = vst.msk [vmem:[#allocation3 + $0x2a0] sm:$0xff] %vm546, -inf
        %633 = vst.msk [vmem:[#allocation3 + $0x2a8] sm:$0xff] %vm546, -inf
        %634 = vst.msk [vmem:[#allocation3 + $0x2b0] sm:$0xff] %vm546, -inf
        %635 = vst.msk [vmem:[#allocation3 + $0x2b8] sm:$0x3f] %vm557, -inf
        %636 = vst.msk [vmem:[#allocation3 + $0x2c0] sm:$0xff] %vm546, -inf
        %637 = vst.msk [vmem:[#allocation3 + $0x2c8] sm:$0xff] %vm546, -inf
        %638 = vst.msk [vmem:[#allocation3 + $0x2d0] sm:$0xff] %vm546, -inf
        %639 = vst.msk [vmem:[#allocation3 + $0x2d8] sm:$0xff] %vm546, -inf
        %640 = vst.msk [vmem:[#allocation3 + $0x2e0] sm:$0xff] %vm546, -inf
        %641 = vst.msk [vmem:[#allocation3 + $0x2e8] sm:$0xff] %vm546, -inf
        %642 = vst.msk [vmem:[#allocation3 + $0x2f0] sm:$0xff] %vm546, -inf
        %643 = vst.msk [vmem:[#allocation3 + $0x2f8] sm:$0xff] %vm546, -inf
        %644 = vst.msk [vmem:[#allocation3 + $0x300] sm:$0xff] %vm546, -inf
        %645 = vst.msk [vmem:[#allocation3 + $0x308] sm:$0xff] %vm546, -inf
        %646 = vst.msk [vmem:[#allocation3 + $0x310] sm:$0x3f] %vm557, -inf
        %647 = vst.msk [vmem:[#allocation3 + $0x318] sm:$0xff] %vm546, -inf
        %648 = vst.msk [vmem:[#allocation3 + $0x320] sm:$0xff] %vm546, -inf
        %649 = vst.msk [vmem:[#allocation3 + $0x328] sm:$0xff] %vm546, -inf
        %650 = vst.msk [vmem:[#allocation3 + $0x330] sm:$0xff] %vm546, -inf
        %651 = vst.msk [vmem:[#allocation3 + $0x338] sm:$0xff] %vm546, -inf
        %652 = vst.msk [vmem:[#allocation3 + $0x340] sm:$0xff] %vm546, -inf
        %653 = vst.msk [vmem:[#allocation3 + $0x348] sm:$0xff] %vm546, -inf
        %654 = vst.msk [vmem:[#allocation3 + $0x350] sm:$0xff] %vm546, -inf
        %655 = vst.msk [vmem:[#allocation3 + $0x358] sm:$0xff] %vm546, -inf
        %656 = vst.msk [vmem:[#allocation3 + $0x360] sm:$0xff] %vm546, -inf
        %657 = vst.msk [vmem:[#allocation3 + $0x368] sm:$0x3f] %vm557, -inf
        %658 = vst.msk [vmem:[#allocation3 + $0x370] sm:$0xff] %vm546, -inf
        %659 = vst.msk [vmem:[#allocation3 + $0x378] sm:$0xff] %vm546, -inf
        %660 = vst.msk [vmem:[#allocation3 + $0x380] sm:$0xff] %vm546, -inf
        %661 = vst.msk [vmem:[#allocation3 + $0x388] sm:$0xff] %vm546, -inf
        %662 = vst.msk [vmem:[#allocation3 + $0x390] sm:$0xff] %vm546, -inf
        %663 = vst.msk [vmem:[#allocation3 + $0x398] sm:$0xff] %vm546, -inf
        %664 = vst.msk [vmem:[#allocation3 + $0x3a0] sm:$0xff] %vm546, -inf
        %665 = vst.msk [vmem:[#allocation3 + $0x3a8] sm:$0xff] %vm546, -inf
        %666 = vst.msk [vmem:[#allocation3 + $0x3b0] sm:$0xff] %vm546, -inf
        %667 = vst.msk [vmem:[#allocation3 + $0x3b8] sm:$0xff] %vm546, -inf
        %668 = vst.msk [vmem:[#allocation3 + $0x3c0] sm:$0x3f] %vm557, -inf
        %669 = vst.msk [vmem:[#allocation3 + $0x3c8] sm:$0xff] %vm546, -inf
        %670 = vst.msk [vmem:[#allocation3 + $0x3d0] sm:$0xff] %vm546, -inf
        %671 = vst.msk [vmem:[#allocation3 + $0x3d8] sm:$0xff] %vm546, -inf
        %672 = vst.msk [vmem:[#allocation3 + $0x3e0] sm:$0xff] %vm546, -inf
        %673 = vst.msk [vmem:[#allocation3 + $0x3e8] sm:$0xff] %vm546, -inf
        %674 = vst.msk [vmem:[#allocation3 + $0x3f0] sm:$0xff] %vm546, -inf
        %675 = vst.msk [vmem:[#allocation3 + $0x3f8] sm:$0xff] %vm546, -inf
        %676 = vst.msk [vmem:[#allocation3 + $0x400] sm:$0xff] %vm546, -inf
        %677 = vst.msk [vmem:[#allocation3 + $0x408] sm:$0xff] %vm546, -inf
        %678 = vst.msk [vmem:[#allocation3 + $0x410] sm:$0xff] %vm546, -inf
        %679 = vst.msk [vmem:[#allocation3 + $0x418] sm:$0x3f] %vm557, -inf
        %680 = vst.msk [vmem:[#allocation3 + $0x420] sm:$0xff] %vm546, -inf
        %681 = vst.msk [vmem:[#allocation3 + $0x428] sm:$0xff] %vm546, -inf
        %682 = vst.msk [vmem:[#allocation3 + $0x430] sm:$0xff] %vm546, -inf
        %683 = vst.msk [vmem:[#allocation3 + $0x438] sm:$0xff] %vm546, -inf
        %684 = vst.msk [vmem:[#allocation3 + $0x440] sm:$0xff] %vm546, -inf
        %685 = vst.msk [vmem:[#allocation3 + $0x448] sm:$0xff] %vm546, -inf
        %686 = vst.msk [vmem:[#allocation3 + $0x450] sm:$0xff] %vm546, -inf
        %687 = vst.msk [vmem:[#allocation3 + $0x458] sm:$0xff] %vm546, -inf
        %688 = vst.msk [vmem:[#allocation3 + $0x460] sm:$0xff] %vm546, -inf
        %689 = vst.msk [vmem:[#allocation3 + $0x468] sm:$0xff] %vm546, -inf
        %690 = vst.msk [vmem:[#allocation3 + $0x470] sm:$0x3f] %vm557, -inf
        %691 = vst.msk [vmem:[#allocation3 + $0x478] sm:$0xff] %vm546, -inf
        %692 = vst.msk [vmem:[#allocation3 + $0x480] sm:$0xff] %vm546, -inf
        %693 = vst.msk [vmem:[#allocation3 + $0x488] sm:$0xff] %vm546, -inf
        %694 = vst.msk [vmem:[#allocation3 + $0x490] sm:$0xff] %vm546, -inf
        %695 = vst.msk [vmem:[#allocation3 + $0x498] sm:$0xff] %vm546, -inf
        %696 = vst.msk [vmem:[#allocation3 + $0x4a0] sm:$0xff] %vm546, -inf
        %697 = vst.msk [vmem:[#allocation3 + $0x4a8] sm:$0xff] %vm546, -inf
        %698 = vst.msk [vmem:[#allocation3 + $0x4b0] sm:$0xff] %vm546, -inf
        %699 = vst.msk [vmem:[#allocation3 + $0x4b8] sm:$0xff] %vm546, -inf
        %700 = vst.msk [vmem:[#allocation3 + $0x4c0] sm:$0xff] %vm546, -inf
        %701 = vst.msk [vmem:[#allocation3 + $0x4c8] sm:$0x3f] %vm557, -inf
        %702 = vst.msk [vmem:[#allocation3 + $0x4d0] sm:$0xff] %vm546, -inf
        %703 = vst.msk [vmem:[#allocation3 + $0x4d8] sm:$0xff] %vm546, -inf
        %704 = vst.msk [vmem:[#allocation3 + $0x4e0] sm:$0xff] %vm546, -inf
        %705 = vst.msk [vmem:[#allocation3 + $0x4e8] sm:$0xff] %vm546, -inf
        %706 = vst.msk [vmem:[#allocation3 + $0x4f0] sm:$0xff] %vm546, -inf
        %707 = vst.msk [vmem:[#allocation3 + $0x4f8] sm:$0xff] %vm546, -inf
        %708 = vst.msk [vmem:[#allocation3 + $0x500] sm:$0xff] %vm546, -inf
        %709 = vst.msk [vmem:[#allocation3 + $0x508] sm:$0xff] %vm546, -inf
        %710 = vst.msk [vmem:[#allocation3 + $0x510] sm:$0xff] %vm546, -inf
        %711 = vst.msk [vmem:[#allocation3 + $0x518] sm:$0xff] %vm546, -inf
        %712 = vst.msk [vmem:[#allocation3 + $0x520] sm:$0x3f] %vm557, -inf
        %713 = vst.msk [vmem:[#allocation3 + $0x528] sm:$0xff] %vm546, -inf
        %714 = vst.msk [vmem:[#allocation3 + $0x530] sm:$0xff] %vm546, -inf
        %715 = vst.msk [vmem:[#allocation3 + $0x538] sm:$0xff] %vm546, -inf
        %716 = vst.msk [vmem:[#allocation3 + $0x540] sm:$0xff] %vm546, -inf
        %717 = vst.msk [vmem:[#allocation3 + $0x548] sm:$0xff] %vm546, -inf
        %718 = vst.msk [vmem:[#allocation3 + $0x550] sm:$0xff] %vm546, -inf
        %719 = vst.msk [vmem:[#allocation3 + $0x558] sm:$0xff] %vm546, -inf
        %720 = vst.msk [vmem:[#allocation3 + $0x560] sm:$0xff] %vm546, -inf
        %721 = vst.msk [vmem:[#allocation3 + $0x568] sm:$0xff] %vm546, -inf
        %722 = vst.msk [vmem:[#allocation3 + $0x570] sm:$0xff] %vm546, -inf
        %723 = vst.msk [vmem:[#allocation3 + $0x578] sm:$0x3f] %vm557, -inf
        %724 = vst.msk [vmem:[#allocation3 + $0x580] sm:$0xff] %vm546, -inf
        %725 = vst.msk [vmem:[#allocation3 + $0x588] sm:$0xff] %vm546, -inf
        %726 = vst.msk [vmem:[#allocation3 + $0x590] sm:$0xff] %vm546, -inf
        %727 = vst.msk [vmem:[#allocation3 + $0x598] sm:$0xff] %vm546, -inf
        %728 = vst.msk [vmem:[#allocation3 + $0x5a0] sm:$0xff] %vm546, -inf
        %729 = vst.msk [vmem:[#allocation3 + $0x5a8] sm:$0xff] %vm546, -inf
        %730 = vst.msk [vmem:[#allocation3 + $0x5b0] sm:$0xff] %vm546, -inf
        %731 = vst.msk [vmem:[#allocation3 + $0x5b8] sm:$0xff] %vm546, -inf
        %732 = vst.msk [vmem:[#allocation3 + $0x5c0] sm:$0xff] %vm546, -inf
        %733 = vst.msk [vmem:[#allocation3 + $0x5c8] sm:$0xff] %vm546, -inf
        %734 = vst.msk [vmem:[#allocation3 + $0x5d0] sm:$0x3f] %vm557, -inf
        %735 = vst.msk [vmem:[#allocation3 + $0x5d8] sm:$0xff] %vm546, -inf
        %736 = vst.msk [vmem:[#allocation3 + $0x5e0] sm:$0xff] %vm546, -inf
        %737 = vst.msk [vmem:[#allocation3 + $0x5e8] sm:$0xff] %vm546, -inf
        %738 = vst.msk [vmem:[#allocation3 + $0x5f0] sm:$0xff] %vm546, -inf
        %739 = vst.msk [vmem:[#allocation3 + $0x5f8] sm:$0xff] %vm546, -inf
        %740 = vst.msk [vmem:[#allocation3 + $0x600] sm:$0xff] %vm546, -inf
        %741 = vst.msk [vmem:[#allocation3 + $0x608] sm:$0xff] %vm546, -inf
        %742 = vst.msk [vmem:[#allocation3 + $0x610] sm:$0xff] %vm546, -inf
        %743 = vst.msk [vmem:[#allocation3 + $0x618] sm:$0xff] %vm546, -inf
        %744 = vst.msk [vmem:[#allocation3 + $0x620] sm:$0xff] %vm546, -inf
        %745 = vst.msk [vmem:[#allocation3 + $0x628] sm:$0x3f] %vm557, -inf
        %746 = vst.msk [vmem:[#allocation3 + $0x630] sm:$0xff] %vm546, -inf
        %747 = vst.msk [vmem:[#allocation3 + $0x638] sm:$0xff] %vm546, -inf
        %748 = vst.msk [vmem:[#allocation3 + $0x640] sm:$0xff] %vm546, -inf
        %749 = vst.msk [vmem:[#allocation3 + $0x648] sm:$0xff] %vm546, -inf
        %750 = vst.msk [vmem:[#allocation3 + $0x650] sm:$0xff] %vm546, -inf
        %751 = vst.msk [vmem:[#allocation3 + $0x658] sm:$0xff] %vm546, -inf
        %752 = vst.msk [vmem:[#allocation3 + $0x660] sm:$0xff] %vm546, -inf
        %753 = vst.msk [vmem:[#allocation3 + $0x668] sm:$0xff] %vm546, -inf
        %754 = vst.msk [vmem:[#allocation3 + $0x670] sm:$0xff] %vm546, -inf
        %755 = vst.msk [vmem:[#allocation3 + $0x678] sm:$0xff] %vm546, -inf
        %756 = vst.msk [vmem:[#allocation3 + $0x680] sm:$0x3f] %vm557, -inf
        %757 = vst.msk [vmem:[#allocation3 + $0x688] sm:$0xff] %vm546, -inf
        %758 = vst.msk [vmem:[#allocation3 + $0x690] sm:$0xff] %vm546, -inf
        %759 = vst.msk [vmem:[#allocation3 + $0x698] sm:$0xff] %vm546, -inf
        %760 = vst.msk [vmem:[#allocation3 + $0x6a0] sm:$0xff] %vm546, -inf
        %761 = vst.msk [vmem:[#allocation3 + $0x6a8] sm:$0xff] %vm546, -inf
        %762 = vst.msk [vmem:[#allocation3 + $0x6b0] sm:$0xff] %vm546, -inf
        %763 = vst.msk [vmem:[#allocation3 + $0x6b8] sm:$0xff] %vm546, -inf
        %764 = vst.msk [vmem:[#allocation3 + $0x6c0] sm:$0xff] %vm546, -inf
        %765 = vst.msk [vmem:[#allocation3 + $0x6c8] sm:$0xff] %vm546, -inf
        %766 = vst.msk [vmem:[#allocation3 + $0x6d0] sm:$0xff] %vm546, -inf
        %767 = vst.msk [vmem:[#allocation3 + $0x6d8] sm:$0x3f] %vm557, -inf
        %768 = vst.msk [vmem:[#allocation3 + $0x6e0] sm:$0xff] %vm546, -inf
        %769 = vst.msk [vmem:[#allocation3 + $0x6e8] sm:$0xff] %vm546, -inf
        %770 = vst.msk [vmem:[#allocation3 + $0x6f0] sm:$0xff] %vm546, -inf
        %771 = vst.msk [vmem:[#allocation3 + $0x6f8] sm:$0xff] %vm546, -inf
        %772 = vst.msk [vmem:[#allocation3 + $0x700] sm:$0xff] %vm546, -inf
        %773 = vst.msk [vmem:[#allocation3 + $0x708] sm:$0xff] %vm546, -inf
        %774 = vst.msk [vmem:[#allocation3 + $0x710] sm:$0xff] %vm546, -inf
        %775 = vst.msk [vmem:[#allocation3 + $0x718] sm:$0xff] %vm546, -inf
        %776 = vst.msk [vmem:[#allocation3 + $0x720] sm:$0xff] %vm546, -inf
        %777 = vst.msk [vmem:[#allocation3 + $0x728] sm:$0xff] %vm546, -inf
        %778 = vst.msk [vmem:[#allocation3 + $0x730] sm:$0x3f] %vm557, -inf
        %779 = vst.msk [vmem:[#allocation3 + $0x738] sm:$0xff] %vm546, -inf
        %780 = vst.msk [vmem:[#allocation3 + $0x740] sm:$0xff] %vm546, -inf
        %781 = vst.msk [vmem:[#allocation3 + $0x748] sm:$0xff] %vm546, -inf
        %782 = vst.msk [vmem:[#allocation3 + $0x750] sm:$0xff] %vm546, -inf
        %783 = vst.msk [vmem:[#allocation3 + $0x758] sm:$0xff] %vm546, -inf
        %784 = vst.msk [vmem:[#allocation3 + $0x760] sm:$0xff] %vm546, -inf
        %785 = vst.msk [vmem:[#allocation3 + $0x768] sm:$0xff] %vm546, -inf
        %786 = vst.msk [vmem:[#allocation3 + $0x770] sm:$0xff] %vm546, -inf
        %787 = vst.msk [vmem:[#allocation3 + $0x778] sm:$0xff] %vm546, -inf
        %788 = vst.msk [vmem:[#allocation3 + $0x780] sm:$0xff] %vm546, -inf
        %789 = vst.msk [vmem:[#allocation3 + $0x788] sm:$0x3f] %vm557, -inf
        %790 = vst.msk [vmem:[#allocation3 + $0x790] sm:$0xff] %vm546, -inf
        %791 = vst.msk [vmem:[#allocation3 + $0x798] sm:$0xff] %vm546, -inf
        %792 = vst.msk [vmem:[#allocation3 + $0x7a0] sm:$0xff] %vm546, -inf
        %793 = vst.msk [vmem:[#allocation3 + $0x7a8] sm:$0xff] %vm546, -inf
        %794 = vst.msk [vmem:[#allocation3 + $0x7b0] sm:$0xff] %vm546, -inf
        %795 = vst.msk [vmem:[#allocation3 + $0x7b8] sm:$0xff] %vm546, -inf
        %796 = vst.msk [vmem:[#allocation3 + $0x7c0] sm:$0xff] %vm546, -inf
        %797 = vst.msk [vmem:[#allocation3 + $0x7c8] sm:$0xff] %vm546, -inf
        %798 = vst.msk [vmem:[#allocation3 + $0x7d0] sm:$0xff] %vm546, -inf
        %799 = vst.msk [vmem:[#allocation3 + $0x7d8] sm:$0xff] %vm546, -inf
        %800 = vst.msk [vmem:[#allocation3 + $0x7e0] sm:$0x3f] %vm557, -inf
        %801 = vst.msk [vmem:[#allocation3 + $0x7e8] sm:$0xff] %vm546, -inf
        %802 = vst.msk [vmem:[#allocation3 + $0x7f0] sm:$0xff] %vm546, -inf
        %803 = vst.msk [vmem:[#allocation3 + $0x7f8] sm:$0xff] %vm546, -inf
        %804 = vst.msk [vmem:[#allocation3 + $0x800] sm:$0xff] %vm546, -inf
        %805 = vst.msk [vmem:[#allocation3 + $0x808] sm:$0xff] %vm546, -inf
        %806 = vst.msk [vmem:[#allocation3 + $0x810] sm:$0xff] %vm546, -inf
        %807 = vst.msk [vmem:[#allocation3 + $0x818] sm:$0xff] %vm546, -inf
        %808 = vst.msk [vmem:[#allocation3 + $0x820] sm:$0xff] %vm546, -inf
        %809 = vst.msk [vmem:[#allocation3 + $0x828] sm:$0xff] %vm546, -inf
        %810 = vst.msk [vmem:[#allocation3 + $0x830] sm:$0xff] %vm546, -inf
        %811 = vst.msk [vmem:[#allocation3 + $0x838] sm:$0x3f] %vm557, -inf
        %812 = vst.msk [vmem:[#allocation3 + $0x840] sm:$0xff] %vm546, -inf
        %813 = vst.msk [vmem:[#allocation3 + $0x848] sm:$0xff] %vm546, -inf
        %814 = vst.msk [vmem:[#allocation3 + $0x850] sm:$0xff] %vm546, -inf
        %815 = vst.msk [vmem:[#allocation3 + $0x858] sm:$0xff] %vm546, -inf
        %816 = vst.msk [vmem:[#allocation3 + $0x860] sm:$0xff] %vm546, -inf
        %817 = vst.msk [vmem:[#allocation3 + $0x868] sm:$0xff] %vm546, -inf
        %818 = vst.msk [vmem:[#allocation3 + $0x870] sm:$0xff] %vm546, -inf
        %819 = vst.msk [vmem:[#allocation3 + $0x878] sm:$0xff] %vm546, -inf
        %820 = vst.msk [vmem:[#allocation3 + $0x880] sm:$0xff] %vm546, -inf
        %821 = vst.msk [vmem:[#allocation3 + $0x888] sm:$0xff] %vm546, -inf
        %822 = vst.msk [vmem:[#allocation3 + $0x890] sm:$0x3f] %vm557, -inf
        %823 = vst.msk [vmem:[#allocation3 + $0x898] sm:$0xff] %vm546, -inf
        %824 = vst.msk [vmem:[#allocation3 + $0x8a0] sm:$0xff] %vm546, -inf
        %825 = vst.msk [vmem:[#allocation3 + $0x8a8] sm:$0xff] %vm546, -inf
        %826 = vst.msk [vmem:[#allocation3 + $0x8b0] sm:$0xff] %vm546, -inf
        %827 = vst.msk [vmem:[#allocation3 + $0x8b8] sm:$0xff] %vm546, -inf
        %828 = vst.msk [vmem:[#allocation3 + $0x8c0] sm:$0xff] %vm546, -inf
        %829 = vst.msk [vmem:[#allocation3 + $0x8c8] sm:$0xff] %vm546, -inf
        %830 = vst.msk [vmem:[#allocation3 + $0x8d0] sm:$0xff] %vm546, -inf
        %831 = vst.msk [vmem:[#allocation3 + $0x8d8] sm:$0xff] %vm546, -inf
        %832 = vst.msk [vmem:[#allocation3 + $0x8e0] sm:$0xff] %vm546, -inf
        %833 = vst.msk [vmem:[#allocation3 + $0x8e8] sm:$0x3f] %vm557, -inf
        %834 = vst.msk [vmem:[#allocation3 + $0x8f0] sm:$0xff] %vm546, -inf
        %835 = vst.msk [vmem:[#allocation3 + $0x8f8] sm:$0xff] %vm546, -inf
        %836 = vst.msk [vmem:[#allocation3 + $0x900] sm:$0xff] %vm546, -inf
        %837 = vst.msk [vmem:[#allocation3 + $0x908] sm:$0xff] %vm546, -inf
        %838 = vst.msk [vmem:[#allocation3 + $0x910] sm:$0xff] %vm546, -inf
        %839 = vst.msk [vmem:[#allocation3 + $0x918] sm:$0xff] %vm546, -inf
        %840 = vst.msk [vmem:[#allocation3 + $0x920] sm:$0xff] %vm546, -inf
        %841 = vst.msk [vmem:[#allocation3 + $0x928] sm:$0xff] %vm546, -inf
        %842 = vst.msk [vmem:[#allocation3 + $0x930] sm:$0xff] %vm546, -inf
        %843 = vst.msk [vmem:[#allocation3 + $0x938] sm:$0xff] %vm546, -inf
        %844 = vst.msk [vmem:[#allocation3 + $0x940] sm:$0x3f] %vm557, -inf
        %845 = vst.msk [vmem:[#allocation3 + $0x948] sm:$0xff] %vm546, -inf
        %846 = vst.msk [vmem:[#allocation3 + $0x950] sm:$0xff] %vm546, -inf
        %847 = vst.msk [vmem:[#allocation3 + $0x958] sm:$0xff] %vm546, -inf
        %848 = vst.msk [vmem:[#allocation3 + $0x960] sm:$0xff] %vm546, -inf
        %849 = vst.msk [vmem:[#allocation3 + $0x968] sm:$0xff] %vm546, -inf
        %850 = vst.msk [vmem:[#allocation3 + $0x970] sm:$0xff] %vm546, -inf
        %851 = vst.msk [vmem:[#allocation3 + $0x978] sm:$0xff] %vm546, -inf
        %852 = vst.msk [vmem:[#allocation3 + $0x980] sm:$0xff] %vm546, -inf
        %853 = vst.msk [vmem:[#allocation3 + $0x988] sm:$0xff] %vm546, -inf
        %854 = vst.msk [vmem:[#allocation3 + $0x990] sm:$0xff] %vm546, -inf
        %855 = vst.msk [vmem:[#allocation3 + $0x998] sm:$0x3f] %vm557, -inf
        %856 = vst.msk [vmem:[#allocation3 + $0x9a0] sm:$0xff] %vm546, -inf
        %857 = vst.msk [vmem:[#allocation3 + $0x9a8] sm:$0xff] %vm546, -inf
        %858 = vst.msk [vmem:[#allocation3 + $0x9b0] sm:$0xff] %vm546, -inf
        %859 = vst.msk [vmem:[#allocation3 + $0x9b8] sm:$0xff] %vm546, -inf
        %860 = vst.msk [vmem:[#allocation3 + $0x9c0] sm:$0xff] %vm546, -inf
        %861 = vst.msk [vmem:[#allocation3 + $0x9c8] sm:$0xff] %vm546, -inf
        %862 = vst.msk [vmem:[#allocation3 + $0x9d0] sm:$0xff] %vm546, -inf
        %863 = vst.msk [vmem:[#allocation3 + $0x9d8] sm:$0xff] %vm546, -inf
        %864 = vst.msk [vmem:[#allocation3 + $0x9e0] sm:$0xff] %vm546, -inf
        %865 = vst.msk [vmem:[#allocation3 + $0x9e8] sm:$0xff] %vm546, -inf
        %866 = vst.msk [vmem:[#allocation3 + $0x9f0] sm:$0x3f] %vm557, -inf
        %867 = vst.msk [vmem:[#allocation3 + $0x9f8] sm:$0xff] %vm546, -inf
        %868 = vst.msk [vmem:[#allocation3 + $0xa00] sm:$0xff] %vm546, -inf
        %869 = vst.msk [vmem:[#allocation3 + $0xa08] sm:$0xff] %vm546, -inf
        %870 = vst.msk [vmem:[#allocation3 + $0xa10] sm:$0xff] %vm546, -inf
        %871 = vst.msk [vmem:[#allocation3 + $0xa18] sm:$0xff] %vm546, -inf
        %872 = vst.msk [vmem:[#allocation3 + $0xa20] sm:$0xff] %vm546, -inf
        %873 = vst.msk [vmem:[#allocation3 + $0xa28] sm:$0xff] %vm546, -inf
        %874 = vst.msk [vmem:[#allocation3 + $0xa30] sm:$0xff] %vm546, -inf
        %875 = vst.msk [vmem:[#allocation3 + $0xa38] sm:$0xff] %vm546, -inf
        %876 = vst.msk [vmem:[#allocation3 + $0xa40] sm:$0xff] %vm546, -inf
        %877 = vst.msk [vmem:[#allocation3 + $0xa48] sm:$0x3f] %vm557, -inf
        %878 = vst.msk [vmem:[#allocation3 + $0xa50] sm:$0xff] %vm546, -inf
        %879 = vst.msk [vmem:[#allocation3 + $0xa58] sm:$0xff] %vm546, -inf
        %880 = vst.msk [vmem:[#allocation3 + $0xa60] sm:$0xff] %vm546, -inf
        %881 = vst.msk [vmem:[#allocation3 + $0xa68] sm:$0xff] %vm546, -inf
        %882 = vst.msk [vmem:[#allocation3 + $0xa70] sm:$0xff] %vm546, -inf
        %883 = vst.msk [vmem:[#allocation3 + $0xa78] sm:$0xff] %vm546, -inf
        %884 = vst.msk [vmem:[#allocation3 + $0xa80] sm:$0xff] %vm546, -inf
        %885 = vst.msk [vmem:[#allocation3 + $0xa88] sm:$0xff] %vm546, -inf
        %886 = vst.msk [vmem:[#allocation3 + $0xa90] sm:$0xff] %vm546, -inf
        %887 = vst.msk [vmem:[#allocation3 + $0xa98] sm:$0xff] %vm546, -inf
        %888 = vst.msk [vmem:[#allocation3 + $0xaa0] sm:$0x3f] %vm557, -inf
        %889 = vst.msk [vmem:[#allocation3 + $0xaa8] sm:$0xff] %vm546, -inf
        %890 = vst.msk [vmem:[#allocation3 + $0xab0] sm:$0xff] %vm546, -inf
        %891 = vst.msk [vmem:[#allocation3 + $0xab8] sm:$0xff] %vm546, -inf
        %892 = vst.msk [vmem:[#allocation3 + $0xac0] sm:$0xff] %vm546, -inf
        %893 = vst.msk [vmem:[#allocation3 + $0xac8] sm:$0xff] %vm546, -inf
        %894 = vst.msk [vmem:[#allocation3 + $0xad0] sm:$0xff] %vm546, -inf
        %895 = vst.msk [vmem:[#allocation3 + $0xad8] sm:$0xff] %vm546, -inf
        %896 = vst.msk [vmem:[#allocation3 + $0xae0] sm:$0xff] %vm546, -inf
        %897 = vst.msk [vmem:[#allocation3 + $0xae8] sm:$0xff] %vm546, -inf
        %898 = vst.msk [vmem:[#allocation3 + $0xaf0] sm:$0xff] %vm546, -inf
        %899 = vst.msk [vmem:[#allocation3 + $0xaf8] sm:$0x3f] %vm557, -inf
        %900 = vst.msk [vmem:[#allocation3 + $0xb00] sm:$0xff] %vm546, -inf
        %901 = vst.msk [vmem:[#allocation3 + $0xb08] sm:$0xff] %vm546, -inf
        %902 = vst.msk [vmem:[#allocation3 + $0xb10] sm:$0xff] %vm546, -inf
        %903 = vst.msk [vmem:[#allocation3 + $0xb18] sm:$0xff] %vm546, -inf
        %904 = vst.msk [vmem:[#allocation3 + $0xb20] sm:$0xff] %vm546, -inf
        %905 = vst.msk [vmem:[#allocation3 + $0xb28] sm:$0xff] %vm546, -inf
        %906 = vst.msk [vmem:[#allocation3 + $0xb30] sm:$0xff] %vm546, -inf
        %907 = vst.msk [vmem:[#allocation3 + $0xb38] sm:$0xff] %vm546, -inf
        %908 = vst.msk [vmem:[#allocation3 + $0xb40] sm:$0xff] %vm546, -inf
        %909 = vst.msk [vmem:[#allocation3 + $0xb48] sm:$0xff] %vm546, -inf
        %910 = vst.msk [vmem:[#allocation3 + $0xb50] sm:$0x3f] %vm557, -inf
        %911 = vst.msk [vmem:[#allocation3 + $0xb58] sm:$0xff] %vm546, -inf
        %912 = vst.msk [vmem:[#allocation3 + $0xb60] sm:$0xff] %vm546, -inf
        %913 = vst.msk [vmem:[#allocation3 + $0xb68] sm:$0xff] %vm546, -inf
        %914 = vst.msk [vmem:[#allocation3 + $0xb70] sm:$0xff] %vm546, -inf
        %915 = vst.msk [vmem:[#allocation3 + $0xb78] sm:$0xff] %vm546, -inf
        %916 = vst.msk [vmem:[#allocation3 + $0xb80] sm:$0xff] %vm546, -inf
        %917 = vst.msk [vmem:[#allocation3 + $0xb88] sm:$0xff] %vm546, -inf
        %918 = vst.msk [vmem:[#allocation3 + $0xb90] sm:$0xff] %vm546, -inf
        %919 = vst.msk [vmem:[#allocation3 + $0xb98] sm:$0xff] %vm546, -inf
        %920 = vst.msk [vmem:[#allocation3 + $0xba0] sm:$0xff] %vm546, -inf
        %921 = vst.msk [vmem:[#allocation3 + $0xba8] sm:$0x3f] %vm557, -inf
        %922 = vst.msk [vmem:[#allocation3 + $0xbb0] sm:$0xff] %vm546, -inf
        %923 = vst.msk [vmem:[#allocation3 + $0xbb8] sm:$0xff] %vm546, -inf
        %924 = vst.msk [vmem:[#allocation3 + $0xbc0] sm:$0xff] %vm546, -inf
        %925 = vst.msk [vmem:[#allocation3 + $0xbc8] sm:$0xff] %vm546, -inf
        %926 = vst.msk [vmem:[#allocation3 + $0xbd0] sm:$0xff] %vm546, -inf
        %927 = vst.msk [vmem:[#allocation3 + $0xbd8] sm:$0xff] %vm546, -inf
        %928 = vst.msk [vmem:[#allocation3 + $0xbe0] sm:$0xff] %vm546, -inf
        %929 = vst.msk [vmem:[#allocation3 + $0xbe8] sm:$0xff] %vm546, -inf
        %930 = vst.msk [vmem:[#allocation3 + $0xbf0] sm:$0xff] %vm546, -inf
        %931 = vst.msk [vmem:[#allocation3 + $0xbf8] sm:$0xff] %vm546, -inf
        %932 = vst.msk [vmem:[#allocation3 + $0xc00] sm:$0x3f] %vm557, -inf
        %933 = vst.msk [vmem:[#allocation3 + $0xc08] sm:$0xff] %vm546, -inf
        %934 = vst.msk [vmem:[#allocation3 + $0xc10] sm:$0xff] %vm546, -inf
        %935 = vst.msk [vmem:[#allocation3 + $0xc18] sm:$0xff] %vm546, -inf
        %936 = vst.msk [vmem:[#allocation3 + $0xc20] sm:$0xff] %vm546, -inf
        %937 = vst.msk [vmem:[#allocation3 + $0xc28] sm:$0xff] %vm546, -inf
        %938 = vst.msk [vmem:[#allocation3 + $0xc30] sm:$0xff] %vm546, -inf
        %939 = vst.msk [vmem:[#allocation3 + $0xc38] sm:$0xff] %vm546, -inf
        %940 = vst.msk [vmem:[#allocation3 + $0xc40] sm:$0xff] %vm546, -inf
        %941 = vst.msk [vmem:[#allocation3 + $0xc48] sm:$0xff] %vm546, -inf
        %942 = vst.msk [vmem:[#allocation3 + $0xc50] sm:$0xff] %vm546, -inf
        %943 = vst.msk [vmem:[#allocation3 + $0xc58] sm:$0x3f] %vm557, -inf
        %944 = vst.msk [vmem:[#allocation3 + $0xc60] sm:$0xff] %vm546, -inf
        %945 = vst.msk [vmem:[#allocation3 + $0xc68] sm:$0xff] %vm546, -inf
        %946 = vst.msk [vmem:[#allocation3 + $0xc70] sm:$0xff] %vm546, -inf
        %947 = vst.msk [vmem:[#allocation3 + $0xc78] sm:$0xff] %vm546, -inf
        %948 = vst.msk [vmem:[#allocation3 + $0xc80] sm:$0xff] %vm546, -inf
        %949 = vst.msk [vmem:[#allocation3 + $0xc88] sm:$0xff] %vm546, -inf
        %950 = vst.msk [vmem:[#allocation3 + $0xc90] sm:$0xff] %vm546, -inf
        %951 = vst.msk [vmem:[#allocation3 + $0xc98] sm:$0xff] %vm546, -inf
        %952 = vst.msk [vmem:[#allocation3 + $0xca0] sm:$0xff] %vm546, -inf
        %953 = vst.msk [vmem:[#allocation3 + $0xca8] sm:$0xff] %vm546, -inf
        %954 = vst.msk [vmem:[#allocation3 + $0xcb0] sm:$0x3f] %vm557, -inf
        %955 = vst.msk [vmem:[#allocation3 + $0xcb8] sm:$0xff] %vm546, -inf
        %956 = vst.msk [vmem:[#allocation3 + $0xcc0] sm:$0xff] %vm546, -inf
        %957 = vst.msk [vmem:[#allocation3 + $0xcc8] sm:$0xff] %vm546, -inf
        %958 = vst.msk [vmem:[#allocation3 + $0xcd0] sm:$0xff] %vm546, -inf
        %959 = vst.msk [vmem:[#allocation3 + $0xcd8] sm:$0xff] %vm546, -inf
        %960 = vst.msk [vmem:[#allocation3 + $0xce0] sm:$0xff] %vm546, -inf
        %961 = vst.msk [vmem:[#allocation3 + $0xce8] sm:$0xff] %vm546, -inf
        %962 = vst.msk [vmem:[#allocation3 + $0xcf0] sm:$0xff] %vm546, -inf
        %963 = vst.msk [vmem:[#allocation3 + $0xcf8] sm:$0xff] %vm546, -inf
        %964 = vst.msk [vmem:[#allocation3 + $0xd00] sm:$0xff] %vm546, -inf
        %965 = vst.msk [vmem:[#allocation3 + $0xd08] sm:$0x3f] %vm557, -inf
        %966 = vst.msk [vmem:[#allocation3 + $0xd10] sm:$0xff] %vm546, -inf
        %967 = vst.msk [vmem:[#allocation3 + $0xd18] sm:$0xff] %vm546, -inf
        %968 = vst.msk [vmem:[#allocation3 + $0xd20] sm:$0xff] %vm546, -inf
        %969 = vst.msk [vmem:[#allocation3 + $0xd28] sm:$0xff] %vm546, -inf
        %970 = vst.msk [vmem:[#allocation3 + $0xd30] sm:$0xff] %vm546, -inf
        %971 = vst.msk [vmem:[#allocation3 + $0xd38] sm:$0xff] %vm546, -inf
        %972 = vst.msk [vmem:[#allocation3 + $0xd40] sm:$0xff] %vm546, -inf
        %973 = vst.msk [vmem:[#allocation3 + $0xd48] sm:$0xff] %vm546, -inf
        %974 = vst.msk [vmem:[#allocation3 + $0xd50] sm:$0xff] %vm546, -inf
        %975 = vst.msk [vmem:[#allocation3 + $0xd58] sm:$0xff] %vm546, -inf
        %976 = vst.msk [vmem:[#allocation3 + $0xd60] sm:$0x3f] %vm557, -inf
        %977 = vst.msk [vmem:[#allocation3 + $0xd68] sm:$0xff] %vm546, -inf
        %978 = vst.msk [vmem:[#allocation3 + $0xd70] sm:$0xff] %vm546, -inf
        %979 = vst.msk [vmem:[#allocation3 + $0xd78] sm:$0xff] %vm546, -inf
        %980 = vst.msk [vmem:[#allocation3 + $0xd80] sm:$0xff] %vm546, -inf
        %981 = vst.msk [vmem:[#allocation3 + $0xd88] sm:$0xff] %vm546, -inf
        %982 = vst.msk [vmem:[#allocation3 + $0xd90] sm:$0xff] %vm546, -inf
        %983 = vst.msk [vmem:[#allocation3 + $0xd98] sm:$0xff] %vm546, -inf
        %984 = vst.msk [vmem:[#allocation3 + $0xda0] sm:$0xff] %vm546, -inf
        %985 = vst.msk [vmem:[#allocation3 + $0xda8] sm:$0xff] %vm546, -inf
        %986 = vst.msk [vmem:[#allocation3 + $0xdb0] sm:$0xff] %vm546, -inf
        %987 = vst.msk [vmem:[#allocation3 + $0xdb8] sm:$0x3f] %vm557, -inf
        %988 = vst.msk [vmem:[#allocation3 + $0xdc0] sm:$0xff] %vm546, -inf
        %989 = vst.msk [vmem:[#allocation3 + $0xdc8] sm:$0xff] %vm546, -inf
        %990 = vst.msk [vmem:[#allocation3 + $0xdd0] sm:$0xff] %vm546, -inf
        %991 = vst.msk [vmem:[#allocation3 + $0xdd8] sm:$0xff] %vm546, -inf
        %992 = vst.msk [vmem:[#allocation3 + $0xde0] sm:$0xff] %vm546, -inf
        %993 = vst.msk [vmem:[#allocation3 + $0xde8] sm:$0xff] %vm546, -inf
        %994 = vst.msk [vmem:[#allocation3 + $0xdf0] sm:$0xff] %vm546, -inf
        %995 = vst.msk [vmem:[#allocation3 + $0xdf8] sm:$0xff] %vm546, -inf
        %996 = vst.msk [vmem:[#allocation3 + $0xe00] sm:$0xff] %vm546, -inf
        %997 = vst.msk [vmem:[#allocation3 + $0xe08] sm:$0xff] %vm546, -inf
        %998 = vst.msk [vmem:[#allocation3 + $0xe10] sm:$0x3f] %vm557, -inf
        %999 = vst.msk [vmem:[#allocation3 + $0xe18] sm:$0xff] %vm546, -inf
        %1000 = vst.msk [vmem:[#allocation3 + $0xe20] sm:$0xff] %vm546, -inf
        %1001 = vst.msk [vmem:[#allocation3 + $0xe28] sm:$0xff] %vm546, -inf
        %1002 = vst.msk [vmem:[#allocation3 + $0xe30] sm:$0xff] %vm546, -inf
        %1003 = vst.msk [vmem:[#allocation3 + $0xe38] sm:$0xff] %vm546, -inf
        %1004 = vst.msk [vmem:[#allocation3 + $0xe40] sm:$0xff] %vm546, -inf
        %1005 = vst.msk [vmem:[#allocation3 + $0xe48] sm:$0xff] %vm546, -inf
        %1006 = vst.msk [vmem:[#allocation3 + $0xe50] sm:$0xff] %vm546, -inf
        %1007 = vst.msk [vmem:[#allocation3 + $0xe58] sm:$0xff] %vm546, -inf
        %1008 = vst.msk [vmem:[#allocation3 + $0xe60] sm:$0xff] %vm546, -inf
        %1009 = vst.msk [vmem:[#allocation3 + $0xe68] sm:$0x3f] %vm557, -inf
        %1010 = vst.msk [vmem:[#allocation3 + $0xe70] sm:$0xff] %vm546, -inf
        %1011 = vst.msk [vmem:[#allocation3 + $0xe78] sm:$0xff] %vm546, -inf
        %1012 = vst.msk [vmem:[#allocation3 + $0xe80] sm:$0xff] %vm546, -inf
        %1013 = vst.msk [vmem:[#allocation3 + $0xe88] sm:$0xff] %vm546, -inf
        %1014 = vst.msk [vmem:[#allocation3 + $0xe90] sm:$0xff] %vm546, -inf
        %1015 = vst.msk [vmem:[#allocation3 + $0xe98] sm:$0xff] %vm546, -inf
        %1016 = vst.msk [vmem:[#allocation3 + $0xea0] sm:$0xff] %vm546, -inf
        %1017 = vst.msk [vmem:[#allocation3 + $0xea8] sm:$0xff] %vm546, -inf
        %1018 = vst.msk [vmem:[#allocation3 + $0xeb0] sm:$0xff] %vm546, -inf
        %1019 = vst.msk [vmem:[#allocation3 + $0xeb8] sm:$0xff] %vm546, -inf
        %1020 = vst.msk [vmem:[#allocation3 + $0xec0] sm:$0x3f] %vm557, -inf
        %1021 = vst.msk [vmem:[#allocation3 + $0xec8] sm:$0xff] %vm546, -inf
        %1022 = vst.msk [vmem:[#allocation3 + $0xed0] sm:$0xff] %vm546, -inf
        %1023 = vst.msk [vmem:[#allocation3 + $0xed8] sm:$0xff] %vm546, -inf
        %1024 = vst.msk [vmem:[#allocation3 + $0xee0] sm:$0xff] %vm546, -inf
        %1025 = vst.msk [vmem:[#allocation3 + $0xee8] sm:$0xff] %vm546, -inf
        %1026 = vst.msk [vmem:[#allocation3 + $0xef0] sm:$0xff] %vm546, -inf
        %1027 = vst.msk [vmem:[#allocation3 + $0xef8] sm:$0xff] %vm546, -inf
        %1028 = vst.msk [vmem:[#allocation3 + $0xf00] sm:$0xff] %vm546, -inf
        %1029 = vst.msk [vmem:[#allocation3 + $0xf08] sm:$0xff] %vm546, -inf
        %1030 = vst.msk [vmem:[#allocation3 + $0xf10] sm:$0xff] %vm546, -inf
        %1031 = vst.msk [vmem:[#allocation3 + $0xf18] sm:$0x3f] %vm557, -inf
        %1032 = vst.msk [vmem:[#allocation3 + $0xf20] sm:$0xff] %vm546, -inf
        %1033 = vst.msk [vmem:[#allocation3 + $0xf28] sm:$0xff] %vm546, -inf
        %1034 = vst.msk [vmem:[#allocation3 + $0xf30] sm:$0xff] %vm546, -inf
        %1035 = vst.msk [vmem:[#allocation3 + $0xf38] sm:$0xff] %vm546, -inf
        %1036 = vst.msk [vmem:[#allocation3 + $0xf40] sm:$0xff] %vm546, -inf
        %1037 = vst.msk [vmem:[#allocation3 + $0xf48] sm:$0xff] %vm546, -inf
        %1038 = vst.msk [vmem:[#allocation3 + $0xf50] sm:$0xff] %vm546, -inf
        %1039 = vst.msk [vmem:[#allocation3 + $0xf58] sm:$0xff] %vm546, -inf
        %1040 = vst.msk [vmem:[#allocation3 + $0xf60] sm:$0xff] %vm546, -inf
        %1041 = vst.msk [vmem:[#allocation3 + $0xf68] sm:$0xff] %vm546, -inf
        %1042 = vst.msk [vmem:[#allocation3 + $0xf70] sm:$0x3f] %vm557, -inf
        %1043 = vst.msk [vmem:[#allocation3 + $0xf78] sm:$0xff] %vm546, -inf
        %1044 = vst.msk [vmem:[#allocation3 + $0xf80] sm:$0xff] %vm546, -inf
        %1045 = vst.msk [vmem:[#allocation3 + $0xf88] sm:$0xff] %vm546, -inf
        %1046 = vst.msk [vmem:[#allocation3 + $0xf90] sm:$0xff] %vm546, -inf
        %1047 = vst.msk [vmem:[#allocation3 + $0xf98] sm:$0xff] %vm546, -inf
        %1048 = vst.msk [vmem:[#allocation3 + $0xfa0] sm:$0xff] %vm546, -inf
        %1049 = vst.msk [vmem:[#allocation3 + $0xfa8] sm:$0xff] %vm546, -inf
        %1050 = vst.msk [vmem:[#allocation3 + $0xfb0] sm:$0xff] %vm546, -inf
        %1051 = vst.msk [vmem:[#allocation3 + $0xfb8] sm:$0xff] %vm546, -inf
        %1052 = vst.msk [vmem:[#allocation3 + $0xfc0] sm:$0xff] %vm546, -inf
        %1053 = vst.msk [vmem:[#allocation3 + $0xfc8] sm:$0x3f] %vm557, -inf
        %1054 = vst.msk [vmem:[#allocation3 + $0xfd0] sm:$0xff] %vm546, -inf
        %1055 = vst.msk [vmem:[#allocation3 + $0xfd8] sm:$0xff] %vm546, -inf
        %1056 = vst.msk [vmem:[#allocation3 + $0xfe0] sm:$0xff] %vm546, -inf
        %1057 = vst.msk [vmem:[#allocation3 + $0xfe8] sm:$0xff] %vm546, -inf
        %1058 = vst.msk [vmem:[#allocation3 + $0xff0] sm:$0xff] %vm546, -inf
        %1059 = vst.msk [vmem:[#allocation3 + $0xff8] sm:$0xff] %vm546, -inf
        %1060 = vst.msk [vmem:[#allocation3 + $0x1000] sm:$0xff] %vm546, -inf
        %1061 = vst.msk [vmem:[#allocation3 + $0x1008] sm:$0xff] %vm546, -inf
        %1062 = vst.msk [vmem:[#allocation3 + $0x1010] sm:$0xff] %vm546, -inf
        %1063 = vst.msk [vmem:[#allocation3 + $0x1018] sm:$0xff] %vm546, -inf
        %1064 = vst.msk [vmem:[#allocation3 + $0x1020] sm:$0x3f] %vm557, -inf
        %1065 = vst.msk [vmem:[#allocation3 + $0x1028] sm:$0xff] %vm546, -inf
        %1066 = vst.msk [vmem:[#allocation3 + $0x1030] sm:$0xff] %vm546, -inf
        %1067 = vst.msk [vmem:[#allocation3 + $0x1038] sm:$0xff] %vm546, -inf
        %1068 = vst.msk [vmem:[#allocation3 + $0x1040] sm:$0xff] %vm546, -inf
        %1069 = vst.msk [vmem:[#allocation3 + $0x1048] sm:$0xff] %vm546, -inf
        %1070 = vst.msk [vmem:[#allocation3 + $0x1050] sm:$0xff] %vm546, -inf
        %1071 = vst.msk [vmem:[#allocation3 + $0x1058] sm:$0xff] %vm546, -inf
        %1072 = vst.msk [vmem:[#allocation3 + $0x1060] sm:$0xff] %vm546, -inf
        %1073 = vst.msk [vmem:[#allocation3 + $0x1068] sm:$0xff] %vm546, -inf
        %1074 = vst.msk [vmem:[#allocation3 + $0x1070] sm:$0xff] %vm546, -inf
        %1075 = vst.msk [vmem:[#allocation3 + $0x1078] sm:$0x3f] %vm557, -inf
        %1076 = vst.msk [vmem:[#allocation3 + $0x1080] sm:$0xff] %vm546, -inf
        %1077 = vst.msk [vmem:[#allocation3 + $0x1088] sm:$0xff] %vm546, -inf
        %1078 = vst.msk [vmem:[#allocation3 + $0x1090] sm:$0xff] %vm546, -inf
        %1079 = vst.msk [vmem:[#allocation3 + $0x1098] sm:$0xff] %vm546, -inf
        %1080 = vst.msk [vmem:[#allocation3 + $0x10a0] sm:$0xff] %vm546, -inf
        %1081 = vst.msk [vmem:[#allocation3 + $0x10a8] sm:$0xff] %vm546, -inf
        %1082 = vst.msk [vmem:[#allocation3 + $0x10b0] sm:$0xff] %vm546, -inf
        %1083 = vst.msk [vmem:[#allocation3 + $0x10b8] sm:$0xff] %vm546, -inf
        %1084 = vst.msk [vmem:[#allocation3 + $0x10c0] sm:$0xff] %vm546, -inf
        %1085 = vst.msk [vmem:[#allocation3 + $0x10c8] sm:$0xff] %vm546, -inf
        %1086 = vst.msk [vmem:[#allocation3 + $0x10d0] sm:$0x3f] %vm557, -inf
        %1087 = vst.msk [vmem:[#allocation3 + $0x10d8] sm:$0xff] %vm546, -inf
        %1088 = vst.msk [vmem:[#allocation3 + $0x10e0] sm:$0xff] %vm546, -inf
        %1089 = vst.msk [vmem:[#allocation3 + $0x10e8] sm:$0xff] %vm546, -inf
        %1090 = vst.msk [vmem:[#allocation3 + $0x10f0] sm:$0xff] %vm546, -inf
        %1091 = vst.msk [vmem:[#allocation3 + $0x10f8] sm:$0xff] %vm546, -inf
        %1092 = vst.msk [vmem:[#allocation3 + $0x1100] sm:$0xff] %vm546, -inf
        %1093 = vst.msk [vmem:[#allocation3 + $0x1108] sm:$0xff] %vm546, -inf
        %1094 = vst.msk [vmem:[#allocation3 + $0x1110] sm:$0xff] %vm546, -inf
        %1095 = vst.msk [vmem:[#allocation3 + $0x1118] sm:$0xff] %vm546, -inf
        %1096 = vst.msk [vmem:[#allocation3 + $0x1120] sm:$0xff] %vm546, -inf
        %1097 = vst.msk [vmem:[#allocation3 + $0x1128] sm:$0x3f] %vm557, -inf
        %1098 = vst.msk [vmem:[#allocation3 + $0x1130] sm:$0xff] %vm546, -inf
        %1099 = vst.msk [vmem:[#allocation3 + $0x1138] sm:$0xff] %vm546, -inf
        %1100 = vst.msk [vmem:[#allocation3 + $0x1140] sm:$0xff] %vm546, -inf
        %1101 = vst.msk [vmem:[#allocation3 + $0x1148] sm:$0xff] %vm546, -inf
        %1102 = vst.msk [vmem:[#allocation3 + $0x1150] sm:$0xff] %vm546, -inf
        %1103 = vst.msk [vmem:[#allocation3 + $0x1158] sm:$0xff] %vm546, -inf
        %1104 = vst.msk [vmem:[#allocation3 + $0x1160] sm:$0xff] %vm546, -inf
        %1105 = vst.msk [vmem:[#allocation3 + $0x1168] sm:$0xff] %vm546, -inf
        %1106 = vst.msk [vmem:[#allocation3 + $0x1170] sm:$0xff] %vm546, -inf
        %1107 = vst.msk [vmem:[#allocation3 + $0x1178] sm:$0xff] %vm546, -inf
        %1108 = vst.msk [vmem:[#allocation3 + $0x1180] sm:$0x3f] %vm557, -inf
        %1109 = vst.msk [vmem:[#allocation3 + $0x1188] sm:$0xff] %vm546, -inf
        %1110 = vst.msk [vmem:[#allocation3 + $0x1190] sm:$0xff] %vm546, -inf
        %1111 = vst.msk [vmem:[#allocation3 + $0x1198] sm:$0xff] %vm546, -inf
        %1112 = vst.msk [vmem:[#allocation3 + $0x11a0] sm:$0xff] %vm546, -inf
        %1113 = vst.msk [vmem:[#allocation3 + $0x11a8] sm:$0xff] %vm546, -inf
        %1114 = vst.msk [vmem:[#allocation3 + $0x11b0] sm:$0xff] %vm546, -inf
        %1115 = vst.msk [vmem:[#allocation3 + $0x11b8] sm:$0xff] %vm546, -inf
        %1116 = vst.msk [vmem:[#allocation3 + $0x11c0] sm:$0xff] %vm546, -inf
        %1117 = vst.msk [vmem:[#allocation3 + $0x11c8] sm:$0xff] %vm546, -inf
        %1118 = vst.msk [vmem:[#allocation3 + $0x11d0] sm:$0xff] %vm546, -inf
        %1119 = vst.msk [vmem:[#allocation3 + $0x11d8] sm:$0x3f] %vm557, -inf
        %1120 = vst.msk [vmem:[#allocation3 + $0x11e0] sm:$0xff] %vm546, -inf
        %1121 = vst.msk [vmem:[#allocation3 + $0x11e8] sm:$0xff] %vm546, -inf
        %1122 = vst.msk [vmem:[#allocation3 + $0x11f0] sm:$0xff] %vm546, -inf
        %1123 = vst.msk [vmem:[#allocation3 + $0x11f8] sm:$0xff] %vm546, -inf
        %1124 = vst.msk [vmem:[#allocation3 + $0x1200] sm:$0xff] %vm546, -inf
        %1125 = vst.msk [vmem:[#allocation3 + $0x1208] sm:$0xff] %vm546, -inf
        %1126 = vst.msk [vmem:[#allocation3 + $0x1210] sm:$0xff] %vm546, -inf
        %1127 = vst.msk [vmem:[#allocation3 + $0x1218] sm:$0xff] %vm546, -inf
        %1128 = vst.msk [vmem:[#allocation3 + $0x1220] sm:$0xff] %vm546, -inf
        %1129 = vst.msk [vmem:[#allocation3 + $0x1228] sm:$0xff] %vm546, -inf
        %1130 = vst.msk [vmem:[#allocation3 + $0x1230] sm:$0x3f] %vm557, -inf
        %1131 = vst.msk [vmem:[#allocation3 + $0x1238] sm:$0xff] %vm546, -inf
        %1132 = vst.msk [vmem:[#allocation3 + $0x1240] sm:$0xff] %vm546, -inf
        %1133 = vst.msk [vmem:[#allocation3 + $0x1248] sm:$0xff] %vm546, -inf
        %1134 = vst.msk [vmem:[#allocation3 + $0x1250] sm:$0xff] %vm546, -inf
        %1135 = vst.msk [vmem:[#allocation3 + $0x1258] sm:$0xff] %vm546, -inf
        %1136 = vst.msk [vmem:[#allocation3 + $0x1260] sm:$0xff] %vm546, -inf
        %1137 = vst.msk [vmem:[#allocation3 + $0x1268] sm:$0xff] %vm546, -inf
        %1138 = vst.msk [vmem:[#allocation3 + $0x1270] sm:$0xff] %vm546, -inf
        %1139 = vst.msk [vmem:[#allocation3 + $0x1278] sm:$0xff] %vm546, -inf
        %1140 = vst.msk [vmem:[#allocation3 + $0x1280] sm:$0xff] %vm546, -inf
        %1141 = vst.msk [vmem:[#allocation3 + $0x1288] sm:$0x3f] %vm557, -inf
        %1142 = vst.msk [vmem:[#allocation3 + $0x1290] sm:$0xff] %vm546, -inf
        %1143 = vst.msk [vmem:[#allocation3 + $0x1298] sm:$0xff] %vm546, -inf
        %1144 = vst.msk [vmem:[#allocation3 + $0x12a0] sm:$0xff] %vm546, -inf
        %1145 = vst.msk [vmem:[#allocation3 + $0x12a8] sm:$0xff] %vm546, -inf
        %1146 = vst.msk [vmem:[#allocation3 + $0x12b0] sm:$0xff] %vm546, -inf
        %1147 = vst.msk [vmem:[#allocation3 + $0x12b8] sm:$0xff] %vm546, -inf
        %1148 = vst.msk [vmem:[#allocation3 + $0x12c0] sm:$0xff] %vm546, -inf
        %1149 = vst.msk [vmem:[#allocation3 + $0x12c8] sm:$0xff] %vm546, -inf
        %1150 = vst.msk [vmem:[#allocation3 + $0x12d0] sm:$0xff] %vm546, -inf
        %1151 = vst.msk [vmem:[#allocation3 + $0x12d8] sm:$0xff] %vm546, -inf
        %1152 = vst.msk [vmem:[#allocation3 + $0x12e0] sm:$0x3f] %vm557, -inf
        %1153 = vst.msk [vmem:[#allocation3 + $0x12e8] sm:$0xff] %vm546, -inf
        %1154 = vst.msk [vmem:[#allocation3 + $0x12f0] sm:$0xff] %vm546, -inf
        %1155 = vst.msk [vmem:[#allocation3 + $0x12f8] sm:$0xff] %vm546, -inf
        %1156 = vst.msk [vmem:[#allocation3 + $0x1300] sm:$0xff] %vm546, -inf
        %1157 = vst.msk [vmem:[#allocation3 + $0x1308] sm:$0xff] %vm546, -inf
        %1158 = vst.msk [vmem:[#allocation3 + $0x1310] sm:$0xff] %vm546, -inf
        %1159 = vst.msk [vmem:[#allocation3 + $0x1318] sm:$0xff] %vm546, -inf
        %1160 = vst.msk [vmem:[#allocation3 + $0x1320] sm:$0xff] %vm546, -inf
        %1161 = vst.msk [vmem:[#allocation3 + $0x1328] sm:$0xff] %vm546, -inf
        %1162 = vst.msk [vmem:[#allocation3 + $0x1330] sm:$0xff] %vm546, -inf
        %1163 = vst.msk [vmem:[#allocation3 + $0x1338] sm:$0x3f] %vm557, -inf
        %1164 = vst.msk [vmem:[#allocation3 + $0x1340] sm:$0xff] %vm546, -inf
        %1165 = vst.msk [vmem:[#allocation3 + $0x1348] sm:$0xff] %vm546, -inf
        %1166 = vst.msk [vmem:[#allocation3 + $0x1350] sm:$0xff] %vm546, -inf
        %1167 = vst.msk [vmem:[#allocation3 + $0x1358] sm:$0xff] %vm546, -inf
        %1168 = vst.msk [vmem:[#allocation3 + $0x1360] sm:$0xff] %vm546, -inf
        %1169 = vst.msk [vmem:[#allocation3 + $0x1368] sm:$0xff] %vm546, -inf
        %1170 = vst.msk [vmem:[#allocation3 + $0x1370] sm:$0xff] %vm546, -inf
        %1171 = vst.msk [vmem:[#allocation3 + $0x1378] sm:$0xff] %vm546, -inf
        %1172 = vst.msk [vmem:[#allocation3 + $0x1380] sm:$0xff] %vm546, -inf
        %1173 = vst.msk [vmem:[#allocation3 + $0x1388] sm:$0xff] %vm546, -inf
        %1174 = vst.msk [vmem:[#allocation3 + $0x1390] sm:$0x3f] %vm557, -inf
        %1175 = vst.msk [vmem:[#allocation3 + $0x1398] sm:$0xff] %vm546, -inf
        %1176 = vst.msk [vmem:[#allocation3 + $0x13a0] sm:$0xff] %vm546, -inf
        %1177 = vst.msk [vmem:[#allocation3 + $0x13a8] sm:$0xff] %vm546, -inf
        %1178 = vst.msk [vmem:[#allocation3 + $0x13b0] sm:$0xff] %vm546, -inf
        %1179 = vst.msk [vmem:[#allocation3 + $0x13b8] sm:$0xff] %vm546, -inf
        %1180 = vst.msk [vmem:[#allocation3 + $0x13c0] sm:$0xff] %vm546, -inf
        %1181 = vst.msk [vmem:[#allocation3 + $0x13c8] sm:$0xff] %vm546, -inf
        %1182 = vst.msk [vmem:[#allocation3 + $0x13d0] sm:$0xff] %vm546, -inf
        %1183 = vst.msk [vmem:[#allocation3 + $0x13d8] sm:$0xff] %vm546, -inf
        %1184 = vst.msk [vmem:[#allocation3 + $0x13e0] sm:$0xff] %vm546, -inf
        %1185 = vst.msk [vmem:[#allocation3 + $0x13e8] sm:$0x3f] %vm557, -inf
        %1186 = vst.msk [vmem:[#allocation3 + $0x13f0] sm:$0xff] %vm546, -inf
        %1187 = vst.msk [vmem:[#allocation3 + $0x13f8] sm:$0xff] %vm546, -inf
        %1188 = vst.msk [vmem:[#allocation3 + $0x1400] sm:$0xff] %vm546, -inf
        %1189 = vst.msk [vmem:[#allocation3 + $0x1408] sm:$0xff] %vm546, -inf
        %1190 = vst.msk [vmem:[#allocation3 + $0x1410] sm:$0xff] %vm546, -inf
        %1191 = vst.msk [vmem:[#allocation3 + $0x1418] sm:$0xff] %vm546, -inf
        %1192 = vst.msk [vmem:[#allocation3 + $0x1420] sm:$0xff] %vm546, -inf
        %1193 = vst.msk [vmem:[#allocation3 + $0x1428] sm:$0xff] %vm546, -inf
        %1194 = vst.msk [vmem:[#allocation3 + $0x1430] sm:$0xff] %vm546, -inf
        %1195 = vst.msk [vmem:[#allocation3 + $0x1438] sm:$0xff] %vm546, -inf
        %1196 = vst.msk [vmem:[#allocation3 + $0x1440] sm:$0x3f] %vm557, -inf
        %1197 = vst.msk [vmem:[#allocation3 + $0x1448] sm:$0xff] %vm546, -inf
        %1198 = vst.msk [vmem:[#allocation3 + $0x1450] sm:$0xff] %vm546, -inf
        %1199 = vst.msk [vmem:[#allocation3 + $0x1458] sm:$0xff] %vm546, -inf
        %1200 = vst.msk [vmem:[#allocation3 + $0x1460] sm:$0xff] %vm546, -inf
        %1201 = vst.msk [vmem:[#allocation3 + $0x1468] sm:$0xff] %vm546, -inf
        %1202 = vst.msk [vmem:[#allocation3 + $0x1470] sm:$0xff] %vm546, -inf
        %1203 = vst.msk [vmem:[#allocation3 + $0x1478] sm:$0xff] %vm546, -inf
        %1204 = vst.msk [vmem:[#allocation3 + $0x1480] sm:$0xff] %vm546, -inf
        %1205 = vst.msk [vmem:[#allocation3 + $0x1488] sm:$0xff] %vm546, -inf
        %1206 = vst.msk [vmem:[#allocation3 + $0x1490] sm:$0xff] %vm546, -inf
        %1207 = vst.msk [vmem:[#allocation3 + $0x1498] sm:$0x3f] %vm557, -inf
        %1208 = vst.msk [vmem:[#allocation3 + $0x14a0] sm:$0xff] %vm546, -inf
        %1209 = vst.msk [vmem:[#allocation3 + $0x14a8] sm:$0xff] %vm546, -inf
        %1210 = vst.msk [vmem:[#allocation3 + $0x14b0] sm:$0xff] %vm546, -inf
        %1211 = vst.msk [vmem:[#allocation3 + $0x14b8] sm:$0xff] %vm546, -inf
        %1212 = vst.msk [vmem:[#allocation3 + $0x14c0] sm:$0xff] %vm546, -inf
        %1213 = vst.msk [vmem:[#allocation3 + $0x14c8] sm:$0xff] %vm546, -inf
        %1214 = vst.msk [vmem:[#allocation3 + $0x14d0] sm:$0xff] %vm546, -inf
        %1215 = vst.msk [vmem:[#allocation3 + $0x14d8] sm:$0xff] %vm546, -inf
        %1216 = vst.msk [vmem:[#allocation3 + $0x14e0] sm:$0xff] %vm546, -inf
        %1217 = vst.msk [vmem:[#allocation3 + $0x14e8] sm:$0xff] %vm546, -inf
        %1218 = vst.msk [vmem:[#allocation3 + $0x14f0] sm:$0x3f] %vm557, -inf
        %1219 = vst.msk [vmem:[#allocation3 + $0x14f8] sm:$0xff] %vm546, -inf
        %1220 = vst.msk [vmem:[#allocation3 + $0x1500] sm:$0xff] %vm546, -inf
        %1221 = vst.msk [vmem:[#allocation3 + $0x1508] sm:$0xff] %vm546, -inf
        %1222 = vst.msk [vmem:[#allocation3 + $0x1510] sm:$0xff] %vm546, -inf
        %1223 = vst.msk [vmem:[#allocation3 + $0x1518] sm:$0xff] %vm546, -inf
        %1224 = vst.msk [vmem:[#allocation3 + $0x1520] sm:$0xff] %vm546, -inf
        %1225 = vst.msk [vmem:[#allocation3 + $0x1528] sm:$0xff] %vm546, -inf
        %1226 = vst.msk [vmem:[#allocation3 + $0x1530] sm:$0xff] %vm546, -inf
        %1227 = vst.msk [vmem:[#allocation3 + $0x1538] sm:$0xff] %vm546, -inf
        %1228 = vst.msk [vmem:[#allocation3 + $0x1540] sm:$0xff] %vm546, -inf
        %1229 = vst.msk [vmem:[#allocation3 + $0x1548] sm:$0x3f] %vm557, -inf
        %1230 = vst.msk [vmem:[#allocation3 + $0x1550] sm:$0xff] %vm546, -inf
        %1231 = vst.msk [vmem:[#allocation3 + $0x1558] sm:$0xff] %vm546, -inf
        %1232 = vst.msk [vmem:[#allocation3 + $0x1560] sm:$0xff] %vm546, -inf
        %1233 = vst.msk [vmem:[#allocation3 + $0x1568] sm:$0xff] %vm546, -inf
        %1234 = vst.msk [vmem:[#allocation3 + $0x1570] sm:$0xff] %vm546, -inf
        %1235 = vst.msk [vmem:[#allocation3 + $0x1578] sm:$0xff] %vm546, -inf
        %1236 = vst.msk [vmem:[#allocation3 + $0x1580] sm:$0xff] %vm546, -inf
        %1237 = vst.msk [vmem:[#allocation3 + $0x1588] sm:$0xff] %vm546, -inf
        %1238 = vst.msk [vmem:[#allocation3 + $0x1590] sm:$0xff] %vm546, -inf
        %1239 = vst.msk [vmem:[#allocation3 + $0x1598] sm:$0xff] %vm546, -inf
        %1240 = vst.msk [vmem:[#allocation3 + $0x15a0] sm:$0x3f] %vm557, -inf
        %1241 = vst.msk [vmem:[#allocation3 + $0x15a8] sm:$0xff] %vm546, -inf
        %1242 = vst.msk [vmem:[#allocation3 + $0x15b0] sm:$0xff] %vm546, -inf
        %1243 = vst.msk [vmem:[#allocation3 + $0x15b8] sm:$0xff] %vm546, -inf
        %1244 = vst.msk [vmem:[#allocation3 + $0x15c0] sm:$0xff] %vm546, -inf
        %1245 = vst.msk [vmem:[#allocation3 + $0x15c8] sm:$0xff] %vm546, -inf
        %1246 = vst.msk [vmem:[#allocation3 + $0x15d0] sm:$0xff] %vm546, -inf
        %1247 = vst.msk [vmem:[#allocation3 + $0x15d8] sm:$0xff] %vm546, -inf
        %1248 = vst.msk [vmem:[#allocation3 + $0x15e0] sm:$0xff] %vm546, -inf
        %1249 = vst.msk [vmem:[#allocation3 + $0x15e8] sm:$0xff] %vm546, -inf
        %1250 = vst.msk [vmem:[#allocation3 + $0x15f0] sm:$0xff] %vm546, -inf
        %1251 = vst.msk [vmem:[#allocation3 + $0x15f8] sm:$0x3f] %vm557, -inf
        %1252 = vst.msk [vmem:[#allocation3 + $0x1600] sm:$0xff] %vm546, -inf
        %1253 = vst.msk [vmem:[#allocation3 + $0x1608] sm:$0xff] %vm546, -inf
        %1254 = vst.msk [vmem:[#allocation3 + $0x1610] sm:$0xff] %vm546, -inf
        %1255 = vst.msk [vmem:[#allocation3 + $0x1618] sm:$0xff] %vm546, -inf
        %1256 = vst.msk [vmem:[#allocation3 + $0x1620] sm:$0xff] %vm546, -inf
        %1257 = vst.msk [vmem:[#allocation3 + $0x1628] sm:$0xff] %vm546, -inf
        %1258 = vst.msk [vmem:[#allocation3 + $0x1630] sm:$0xff] %vm546, -inf
        %1259 = vst.msk [vmem:[#allocation3 + $0x1638] sm:$0xff] %vm546, -inf
        %1260 = vst.msk [vmem:[#allocation3 + $0x1640] sm:$0xff] %vm546, -inf
        %1261 = vst.msk [vmem:[#allocation3 + $0x1648] sm:$0xff] %vm546, -inf
        %1262 = vst.msk [vmem:[#allocation3 + $0x1650] sm:$0x3f] %vm557, -inf
        %1263 = vst.msk [vmem:[#allocation3 + $0x1658] sm:$0xff] %vm546, -inf
        %1264 = vst.msk [vmem:[#allocation3 + $0x1660] sm:$0xff] %vm546, -inf
        %1265 = vst.msk [vmem:[#allocation3 + $0x1668] sm:$0xff] %vm546, -inf
        %1266 = vst.msk [vmem:[#allocation3 + $0x1670] sm:$0xff] %vm546, -inf
        %1267 = vst.msk [vmem:[#allocation3 + $0x1678] sm:$0xff] %vm546, -inf
        %1268 = vst.msk [vmem:[#allocation3 + $0x1680] sm:$0xff] %vm546, -inf
        %1269 = vst.msk [vmem:[#allocation3 + $0x1688] sm:$0xff] %vm546, -inf
        %1270 = vst.msk [vmem:[#allocation3 + $0x1690] sm:$0xff] %vm546, -inf
        %1271 = vst.msk [vmem:[#allocation3 + $0x1698] sm:$0xff] %vm546, -inf
        %1272 = vst.msk [vmem:[#allocation3 + $0x16a0] sm:$0xff] %vm546, -inf
        %1273 = vst.msk [vmem:[#allocation3 + $0x16a8] sm:$0x3f] %vm557, -inf
        %1274 = vst.msk [vmem:[#allocation3 + $0x16b0] sm:$0xff] %vm546, -inf
        %1275 = vst.msk [vmem:[#allocation3 + $0x16b8] sm:$0xff] %vm546, -inf
        %1276 = vst.msk [vmem:[#allocation3 + $0x16c0] sm:$0xff] %vm546, -inf
        %1277 = vst.msk [vmem:[#allocation3 + $0x16c8] sm:$0xff] %vm546, -inf
        %1278 = vst.msk [vmem:[#allocation3 + $0x16d0] sm:$0xff] %vm546, -inf
        %1279 = vst.msk [vmem:[#allocation3 + $0x16d8] sm:$0xff] %vm546, -inf
        %1280 = vst.msk [vmem:[#allocation3 + $0x16e0] sm:$0xff] %vm546, -inf
        %1281 = vst.msk [vmem:[#allocation3 + $0x16e8] sm:$0xff] %vm546, -inf
        %1282 = vst.msk [vmem:[#allocation3 + $0x16f0] sm:$0xff] %vm546, -inf
        %1283 = vst.msk [vmem:[#allocation3 + $0x16f8] sm:$0xff] %vm546, -inf
        %1284 = vst.msk [vmem:[#allocation3 + $0x1700] sm:$0x3f] %vm557, -inf
        %1285 = vst.msk [vmem:[#allocation3 + $0x1708] sm:$0xff] %vm546, -inf
        %1286 = vst.msk [vmem:[#allocation3 + $0x1710] sm:$0xff] %vm546, -inf
        %1287 = vst.msk [vmem:[#allocation3 + $0x1718] sm:$0xff] %vm546, -inf
        %1288 = vst.msk [vmem:[#allocation3 + $0x1720] sm:$0xff] %vm546, -inf
        %1289 = vst.msk [vmem:[#allocation3 + $0x1728] sm:$0xff] %vm546, -inf
        %1290 = vst.msk [vmem:[#allocation3 + $0x1730] sm:$0xff] %vm546, -inf
        %1291 = vst.msk [vmem:[#allocation3 + $0x1738] sm:$0xff] %vm546, -inf
        %1292 = vst.msk [vmem:[#allocation3 + $0x1740] sm:$0xff] %vm546, -inf
        %1293 = vst.msk [vmem:[#allocation3 + $0x1748] sm:$0xff] %vm546, -inf
        %1294 = vst.msk [vmem:[#allocation3 + $0x1750] sm:$0xff] %vm546, -inf
        %1295 = vst.msk [vmem:[#allocation3 + $0x1758] sm:$0x3f] %vm557, -inf
        %1296 = vst.msk [vmem:[#allocation3 + $0x1760] sm:$0xff] %vm546, -inf
        %1297 = vst.msk [vmem:[#allocation3 + $0x1768] sm:$0xff] %vm546, -inf
        %1298 = vst.msk [vmem:[#allocation3 + $0x1770] sm:$0xff] %vm546, -inf
        %1299 = vst.msk [vmem:[#allocation3 + $0x1778] sm:$0xff] %vm546, -inf
        %1300 = vst.msk [vmem:[#allocation3 + $0x1780] sm:$0xff] %vm546, -inf
        %1301 = vst.msk [vmem:[#allocation3 + $0x1788] sm:$0xff] %vm546, -inf
        %1302 = vst.msk [vmem:[#allocation3 + $0x1790] sm:$0xff] %vm546, -inf
        %1303 = vst.msk [vmem:[#allocation3 + $0x1798] sm:$0xff] %vm546, -inf
        %1304 = vst.msk [vmem:[#allocation3 + $0x17a0] sm:$0xff] %vm546, -inf
        %1305 = vst.msk [vmem:[#allocation3 + $0x17a8] sm:$0xff] %vm546, -inf
        %1306 = vst.msk [vmem:[#allocation3 + $0x17b0] sm:$0x3f] %vm557, -inf
        %1307 = vst.msk [vmem:[#allocation3 + $0x17b8] sm:$0xff] %vm546, -inf
        %1308 = vst.msk [vmem:[#allocation3 + $0x17c0] sm:$0xff] %vm546, -inf
        %1309 = vst.msk [vmem:[#allocation3 + $0x17c8] sm:$0xff] %vm546, -inf
        %1310 = vst.msk [vmem:[#allocation3 + $0x17d0] sm:$0xff] %vm546, -inf
        %1311 = vst.msk [vmem:[#allocation3 + $0x17d8] sm:$0xff] %vm546, -inf
        %1312 = vst.msk [vmem:[#allocation3 + $0x17e0] sm:$0xff] %vm546, -inf
        %1313 = vst.msk [vmem:[#allocation3 + $0x17e8] sm:$0xff] %vm546, -inf
        %1314 = vst.msk [vmem:[#allocation3 + $0x17f0] sm:$0xff] %vm546, -inf
        %1315 = vst.msk [vmem:[#allocation3 + $0x17f8] sm:$0xff] %vm546, -inf
        %1316 = vst.msk [vmem:[#allocation3 + $0x1800] sm:$0xff] %vm546, -inf
        %1317 = vst.msk [vmem:[#allocation3 + $0x1808] sm:$0x3f] %vm557, -inf
        %1318 = vst.msk [vmem:[#allocation3 + $0x1810] sm:$0xff] %vm546, -inf
        %1319 = vst.msk [vmem:[#allocation3 + $0x1818] sm:$0xff] %vm546, -inf
        %1320 = vst.msk [vmem:[#allocation3 + $0x1820] sm:$0xff] %vm546, -inf
        %1321 = vst.msk [vmem:[#allocation3 + $0x1828] sm:$0xff] %vm546, -inf
        %1322 = vst.msk [vmem:[#allocation3 + $0x1830] sm:$0xff] %vm546, -inf
        %1323 = vst.msk [vmem:[#allocation3 + $0x1838] sm:$0xff] %vm546, -inf
        %1324 = vst.msk [vmem:[#allocation3 + $0x1840] sm:$0xff] %vm546, -inf
        %1325 = vst.msk [vmem:[#allocation3 + $0x1848] sm:$0xff] %vm546, -inf
        %1326 = vst.msk [vmem:[#allocation3 + $0x1850] sm:$0xff] %vm546, -inf
        %1327 = vst.msk [vmem:[#allocation3 + $0x1858] sm:$0xff] %vm546, -inf
        %1328 = vst.msk [vmem:[#allocation3 + $0x1860] sm:$0x3f] %vm557, -inf
        %1329 = vst.msk [vmem:[#allocation3 + $0x1868] sm:$0xff] %vm546, -inf
        %1330 = vst.msk [vmem:[#allocation3 + $0x1870] sm:$0xff] %vm546, -inf
        %1331 = vst.msk [vmem:[#allocation3 + $0x1878] sm:$0xff] %vm546, -inf
        %1332 = vst.msk [vmem:[#allocation3 + $0x1880] sm:$0xff] %vm546, -inf
        %1333 = vst.msk [vmem:[#allocation3 + $0x1888] sm:$0xff] %vm546, -inf
        %1334 = vst.msk [vmem:[#allocation3 + $0x1890] sm:$0xff] %vm546, -inf
        %1335 = vst.msk [vmem:[#allocation3 + $0x1898] sm:$0xff] %vm546, -inf
        %1336 = vst.msk [vmem:[#allocation3 + $0x18a0] sm:$0xff] %vm546, -inf
        %1337 = vst.msk [vmem:[#allocation3 + $0x18a8] sm:$0xff] %vm546, -inf
        %1338 = vst.msk [vmem:[#allocation3 + $0x18b0] sm:$0xff] %vm546, -inf
        %1339 = vst.msk [vmem:[#allocation3 + $0x18b8] sm:$0x3f] %vm557, -inf
        %1340 = vst.msk [vmem:[#allocation3 + $0x18c0] sm:$0xff] %vm546, -inf
        %1341 = vst.msk [vmem:[#allocation3 + $0x18c8] sm:$0xff] %vm546, -inf
        %1342 = vst.msk [vmem:[#allocation3 + $0x18d0] sm:$0xff] %vm546, -inf
        %1343 = vst.msk [vmem:[#allocation3 + $0x18d8] sm:$0xff] %vm546, -inf
        %1344 = vst.msk [vmem:[#allocation3 + $0x18e0] sm:$0xff] %vm546, -inf
        %1345 = vst.msk [vmem:[#allocation3 + $0x18e8] sm:$0xff] %vm546, -inf
        %1346 = vst.msk [vmem:[#allocation3 + $0x18f0] sm:$0xff] %vm546, -inf
        %1347 = vst.msk [vmem:[#allocation3 + $0x18f8] sm:$0xff] %vm546, -inf
        %1348 = vst.msk [vmem:[#allocation3 + $0x1900] sm:$0xff] %vm546, -inf
        %1349 = vst.msk [vmem:[#allocation3 + $0x1908] sm:$0xff] %vm546, -inf
        %1350 = vst.msk [vmem:[#allocation3 + $0x1910] sm:$0x3f] %vm557, -inf
        %1351 = vst.msk [vmem:[#allocation3 + $0x1918] sm:$0xff] %vm546, -inf
        %1352 = vst.msk [vmem:[#allocation3 + $0x1920] sm:$0xff] %vm546, -inf
        %1353 = vst.msk [vmem:[#allocation3 + $0x1928] sm:$0xff] %vm546, -inf
        %1354 = vst.msk [vmem:[#allocation3 + $0x1930] sm:$0xff] %vm546, -inf
        %1355 = vst.msk [vmem:[#allocation3 + $0x1938] sm:$0xff] %vm546, -inf
        %1356 = vst.msk [vmem:[#allocation3 + $0x1940] sm:$0xff] %vm546, -inf
        %1357 = vst.msk [vmem:[#allocation3 + $0x1948] sm:$0xff] %vm546, -inf
        %1358 = vst.msk [vmem:[#allocation3 + $0x1950] sm:$0xff] %vm546, -inf
        %1359 = vst.msk [vmem:[#allocation3 + $0x1958] sm:$0xff] %vm546, -inf
        %1360 = vst.msk [vmem:[#allocation3 + $0x1960] sm:$0xff] %vm546, -inf
        %1361 = vst.msk [vmem:[#allocation3 + $0x1968] sm:$0x3f] %vm557, -inf
        %1362 = vst.msk [vmem:[#allocation3 + $0x1970] sm:$0xff] %vm546, -inf
        %1363 = vst.msk [vmem:[#allocation3 + $0x1978] sm:$0xff] %vm546, -inf
        %1364 = vst.msk [vmem:[#allocation3 + $0x1980] sm:$0xff] %vm546, -inf
        %1365 = vst.msk [vmem:[#allocation3 + $0x1988] sm:$0xff] %vm546, -inf
        %1366 = vst.msk [vmem:[#allocation3 + $0x1990] sm:$0xff] %vm546, -inf
        %1367 = vst.msk [vmem:[#allocation3 + $0x1998] sm:$0xff] %vm546, -inf
        %1368 = vst.msk [vmem:[#allocation3 + $0x19a0] sm:$0xff] %vm546, -inf
        %1369 = vst.msk [vmem:[#allocation3 + $0x19a8] sm:$0xff] %vm546, -inf
        %1370 = vst.msk [vmem:[#allocation3 + $0x19b0] sm:$0xff] %vm546, -inf
        %1371 = vst.msk [vmem:[#allocation3 + $0x19b8] sm:$0xff] %vm546, -inf
        %1372 = vst.msk [vmem:[#allocation3 + $0x19c0] sm:$0x3f] %vm557, -inf
        %1373 = vst.msk [vmem:[#allocation3 + $0x19c8] sm:$0xff] %vm546, -inf
        %1374 = vst.msk [vmem:[#allocation3 + $0x19d0] sm:$0xff] %vm546, -inf
        %1375 = vst.msk [vmem:[#allocation3 + $0x19d8] sm:$0xff] %vm546, -inf
        %1376 = vst.msk [vmem:[#allocation3 + $0x19e0] sm:$0xff] %vm546, -inf
        %1377 = vst.msk [vmem:[#allocation3 + $0x19e8] sm:$0xff] %vm546, -inf
        %1378 = vst.msk [vmem:[#allocation3 + $0x19f0] sm:$0xff] %vm546, -inf
        %1379 = vst.msk [vmem:[#allocation3 + $0x19f8] sm:$0xff] %vm546, -inf
        %1380 = vst.msk [vmem:[#allocation3 + $0x1a00] sm:$0xff] %vm546, -inf
        %1381 = vst.msk [vmem:[#allocation3 + $0x1a08] sm:$0xff] %vm546, -inf
        %1382 = vst.msk [vmem:[#allocation3 + $0x1a10] sm:$0xff] %vm546, -inf
        %1383 = vst.msk [vmem:[#allocation3 + $0x1a18] sm:$0x3f] %vm557, -inf
        %1384 = vst.msk [vmem:[#allocation3 + $0x1a20] sm:$0xff] %vm546, -inf
        %1385 = vst.msk [vmem:[#allocation3 + $0x1a28] sm:$0xff] %vm546, -inf
        %1386 = vst.msk [vmem:[#allocation3 + $0x1a30] sm:$0xff] %vm546, -inf
        %1387 = vst.msk [vmem:[#allocation3 + $0x1a38] sm:$0xff] %vm546, -inf
        %1388 = vst.msk [vmem:[#allocation3 + $0x1a40] sm:$0xff] %vm546, -inf
        %1389 = vst.msk [vmem:[#allocation3 + $0x1a48] sm:$0xff] %vm546, -inf
        %1390 = vst.msk [vmem:[#allocation3 + $0x1a50] sm:$0xff] %vm546, -inf
        %1391 = vst.msk [vmem:[#allocation3 + $0x1a58] sm:$0xff] %vm546, -inf
        %1392 = vst.msk [vmem:[#allocation3 + $0x1a60] sm:$0xff] %vm546, -inf
        %1393 = vst.msk [vmem:[#allocation3 + $0x1a68] sm:$0xff] %vm546, -inf
        %1394 = vst.msk [vmem:[#allocation3 + $0x1a70] sm:$0x3f] %vm557, -inf
        %1395 = vst.msk [vmem:[#allocation3 + $0x1a78] sm:$0xff] %vm546, -inf
        %1396 = vst.msk [vmem:[#allocation3 + $0x1a80] sm:$0xff] %vm546, -inf
        %1397 = vst.msk [vmem:[#allocation3 + $0x1a88] sm:$0xff] %vm546, -inf
        %1398 = vst.msk [vmem:[#allocation3 + $0x1a90] sm:$0xff] %vm546, -inf
        %1399 = vst.msk [vmem:[#allocation3 + $0x1a98] sm:$0xff] %vm546, -inf
        %1400 = vst.msk [vmem:[#allocation3 + $0x1aa0] sm:$0xff] %vm546, -inf
        %1401 = vst.msk [vmem:[#allocation3 + $0x1aa8] sm:$0xff] %vm546, -inf
        %1402 = vst.msk [vmem:[#allocation3 + $0x1ab0] sm:$0xff] %vm546, -inf
        %1403 = vst.msk [vmem:[#allocation3 + $0x1ab8] sm:$0xff] %vm546, -inf
        %1404 = vst.msk [vmem:[#allocation3 + $0x1ac0] sm:$0xff] %vm546, -inf
        %1405 = vst.msk [vmem:[#allocation3 + $0x1ac8] sm:$0x3f] %vm557, -inf
        %1406 = vst.msk [vmem:[#allocation3 + $0x1ad0] sm:$0xff] %vm546, -inf
        %1407 = vst.msk [vmem:[#allocation3 + $0x1ad8] sm:$0xff] %vm546, -inf
        %1408 = vst.msk [vmem:[#allocation3 + $0x1ae0] sm:$0xff] %vm546, -inf
        %1409 = vst.msk [vmem:[#allocation3 + $0x1ae8] sm:$0xff] %vm546, -inf
        %1410 = vst.msk [vmem:[#allocation3 + $0x1af0] sm:$0xff] %vm546, -inf
        %1411 = vst.msk [vmem:[#allocation3 + $0x1af8] sm:$0xff] %vm546, -inf
        %1412 = vst.msk [vmem:[#allocation3 + $0x1b00] sm:$0xff] %vm546, -inf
        %1413 = vst.msk [vmem:[#allocation3 + $0x1b08] sm:$0xff] %vm546, -inf
        %1414 = vst.msk [vmem:[#allocation3 + $0x1b10] sm:$0xff] %vm546, -inf
        %1415 = vst.msk [vmem:[#allocation3 + $0x1b18] sm:$0xff] %vm546, -inf
        %1416 = vst.msk [vmem:[#allocation3 + $0x1b20] sm:$0x3f] %vm557, -inf
        %1417 = vst.msk [vmem:[#allocation3 + $0x1b28] sm:$0xff] %vm546, -inf
        %1418 = vst.msk [vmem:[#allocation3 + $0x1b30] sm:$0xff] %vm546, -inf
        %1419 = vst.msk [vmem:[#allocation3 + $0x1b38] sm:$0xff] %vm546, -inf
        %1420 = vst.msk [vmem:[#allocation3 + $0x1b40] sm:$0xff] %vm546, -inf
        %1421 = vst.msk [vmem:[#allocation3 + $0x1b48] sm:$0xff] %vm546, -inf
        %1422 = vst.msk [vmem:[#allocation3 + $0x1b50] sm:$0xff] %vm546, -inf
        %1423 = vst.msk [vmem:[#allocation3 + $0x1b58] sm:$0xff] %vm546, -inf
        %1424 = vst.msk [vmem:[#allocation3 + $0x1b60] sm:$0xff] %vm546, -inf
        %1425 = vst.msk [vmem:[#allocation3 + $0x1b68] sm:$0xff] %vm546, -inf
        %1426 = vst.msk [vmem:[#allocation3 + $0x1b70] sm:$0xff] %vm546, -inf
        %1427 = vst.msk [vmem:[#allocation3 + $0x1b78] sm:$0x3f] %vm557, -inf
        %1428 = vst.msk [vmem:[#allocation3 + $0x1b80] sm:$0xff] %vm546, -inf
        %1429 = vst.msk [vmem:[#allocation3 + $0x1b88] sm:$0xff] %vm546, -inf
        %1430 = vst.msk [vmem:[#allocation3 + $0x1b90] sm:$0xff] %vm546, -inf
        %1431 = vst.msk [vmem:[#allocation3 + $0x1b98] sm:$0xff] %vm546, -inf
        %1432 = vst.msk [vmem:[#allocation3 + $0x1ba0] sm:$0xff] %vm546, -inf
        %1433 = vst.msk [vmem:[#allocation3 + $0x1ba8] sm:$0xff] %vm546, -inf
        %1434 = vst.msk [vmem:[#allocation3 + $0x1bb0] sm:$0xff] %vm546, -inf
        %1435 = vst.msk [vmem:[#allocation3 + $0x1bb8] sm:$0xff] %vm546, -inf
        %1436 = vst.msk [vmem:[#allocation3 + $0x1bc0] sm:$0xff] %vm546, -inf
        %1437 = vst.msk [vmem:[#allocation3 + $0x1bc8] sm:$0xff] %vm546, -inf
        %1438 = vst.msk [vmem:[#allocation3 + $0x1bd0] sm:$0x3f] %vm557, -inf
        %1439 = vst.msk [vmem:[#allocation3 + $0x1bd8] sm:$0xff] %vm546, -inf
        %1440 = vst.msk [vmem:[#allocation3 + $0x1be0] sm:$0xff] %vm546, -inf
        %1441 = vst.msk [vmem:[#allocation3 + $0x1be8] sm:$0xff] %vm546, -inf
        %1442 = vst.msk [vmem:[#allocation3 + $0x1bf0] sm:$0xff] %vm546, -inf
        %1443 = vst.msk [vmem:[#allocation3 + $0x1bf8] sm:$0xff] %vm546, -inf
        %1444 = vst.msk [vmem:[#allocation3 + $0x1c00] sm:$0xff] %vm546, -inf
        %1445 = vst.msk [vmem:[#allocation3 + $0x1c08] sm:$0xff] %vm546, -inf
        %1446 = vst.msk [vmem:[#allocation3 + $0x1c10] sm:$0xff] %vm546, -inf
        %1447 = vst.msk [vmem:[#allocation3 + $0x1c18] sm:$0xff] %vm546, -inf
        %1448 = vst.msk [vmem:[#allocation3 + $0x1c20] sm:$0xff] %vm546, -inf
        %1449 = vst.msk [vmem:[#allocation3 + $0x1c28] sm:$0x3f] %vm557, -inf
        %1450 = vst.msk [vmem:[#allocation3 + $0x1c30] sm:$0xff] %vm546, -inf
        %1451 = vst.msk [vmem:[#allocation3 + $0x1c38] sm:$0xff] %vm546, -inf
        %1452 = vst.msk [vmem:[#allocation3 + $0x1c40] sm:$0xff] %vm546, -inf
        %1453 = vst.msk [vmem:[#allocation3 + $0x1c48] sm:$0xff] %vm546, -inf
        %1454 = vst.msk [vmem:[#allocation3 + $0x1c50] sm:$0xff] %vm546, -inf
        %1455 = vst.msk [vmem:[#allocation3 + $0x1c58] sm:$0xff] %vm546, -inf
        %1456 = vst.msk [vmem:[#allocation3 + $0x1c60] sm:$0xff] %vm546, -inf
        %1457 = vst.msk [vmem:[#allocation3 + $0x1c68] sm:$0xff] %vm546, -inf
        %1458 = vst.msk [vmem:[#allocation3 + $0x1c70] sm:$0xff] %vm546, -inf
        %1459 = vst.msk [vmem:[#allocation3 + $0x1c78] sm:$0xff] %vm546, -inf
        %1460 = vst.msk [vmem:[#allocation3 + $0x1c80] sm:$0x3f] %vm557, -inf
        %1461 = vst.msk [vmem:[#allocation3 + $0x1c88] sm:$0xff] %vm546, -inf
        %1462 = vst.msk [vmem:[#allocation3 + $0x1c90] sm:$0xff] %vm546, -inf
        %1463 = vst.msk [vmem:[#allocation3 + $0x1c98] sm:$0xff] %vm546, -inf
        %1464 = vst.msk [vmem:[#allocation3 + $0x1ca0] sm:$0xff] %vm546, -inf
        %1465 = vst.msk [vmem:[#allocation3 + $0x1ca8] sm:$0xff] %vm546, -inf
        %1466 = vst.msk [vmem:[#allocation3 + $0x1cb0] sm:$0xff] %vm546, -inf
        %1467 = vst.msk [vmem:[#allocation3 + $0x1cb8] sm:$0xff] %vm546, -inf
        %1468 = vst.msk [vmem:[#allocation3 + $0x1cc0] sm:$0xff] %vm546, -inf
        %1469 = vst.msk [vmem:[#allocation3 + $0x1cc8] sm:$0xff] %vm546, -inf
        %1470 = vst.msk [vmem:[#allocation3 + $0x1cd0] sm:$0xff] %vm546, -inf
        %1471 = vst.msk [vmem:[#allocation3 + $0x1cd8] sm:$0x3f] %vm557, -inf
        %1472 = vst.msk [vmem:[#allocation3 + $0x1ce0] sm:$0xff] %vm546, -inf
        %1473 = vst.msk [vmem:[#allocation3 + $0x1ce8] sm:$0xff] %vm546, -inf
        %1474 = vst.msk [vmem:[#allocation3 + $0x1cf0] sm:$0xff] %vm546, -inf
        %1475 = vst.msk [vmem:[#allocation3 + $0x1cf8] sm:$0xff] %vm546, -inf
        %1476 = vst.msk [vmem:[#allocation3 + $0x1d00] sm:$0xff] %vm546, -inf
        %1477 = vst.msk [vmem:[#allocation3 + $0x1d08] sm:$0xff] %vm546, -inf
        %1478 = vst.msk [vmem:[#allocation3 + $0x1d10] sm:$0xff] %vm546, -inf
        %1479 = vst.msk [vmem:[#allocation3 + $0x1d18] sm:$0xff] %vm546, -inf
        %1480 = vst.msk [vmem:[#allocation3 + $0x1d20] sm:$0xff] %vm546, -inf
        %1481 = vst.msk [vmem:[#allocation3 + $0x1d28] sm:$0xff] %vm546, -inf
        %1482 = vst.msk [vmem:[#allocation3 + $0x1d30] sm:$0x3f] %vm557, -inf
        %1483 = vst.msk [vmem:[#allocation3 + $0x1d38] sm:$0xff] %vm546, -inf
        %1484 = vst.msk [vmem:[#allocation3 + $0x1d40] sm:$0xff] %vm546, -inf
        %1485 = vst.msk [vmem:[#allocation3 + $0x1d48] sm:$0xff] %vm546, -inf
        %1486 = vst.msk [vmem:[#allocation3 + $0x1d50] sm:$0xff] %vm546, -inf
        %1487 = vst.msk [vmem:[#allocation3 + $0x1d58] sm:$0xff] %vm546, -inf
        %1488 = vst.msk [vmem:[#allocation3 + $0x1d60] sm:$0xff] %vm546, -inf
        %1489 = vst.msk [vmem:[#allocation3 + $0x1d68] sm:$0xff] %vm546, -inf
        %1490 = vst.msk [vmem:[#allocation3 + $0x1d70] sm:$0xff] %vm546, -inf
        %1491 = vst.msk [vmem:[#allocation3 + $0x1d78] sm:$0xff] %vm546, -inf
        %1492 = vst.msk [vmem:[#allocation3 + $0x1d80] sm:$0xff] %vm546, -inf
        %1493 = vst.msk [vmem:[#allocation3 + $0x1d88] sm:$0x3f] %vm557, -inf
        %vm1494 = vcmask 261120
        %1495 = vst.msk [vmem:[#allocation6] sm:$0xff] %vm1494, -inf
        %1496 = vst.msk [vmem:[#allocation6 + $0x8] sm:$0xff] %vm1494, -inf
        %1497 = vst.msk [vmem:[#allocation6 + $0x10] sm:$0xff] %vm1494, -inf
        %1498 = vst.msk [vmem:[#allocation6 + $0x18] sm:$0xff] %vm1494, -inf
        %1499 = vst.msk [vmem:[#allocation6 + $0x20] sm:$0xff] %vm1494, -inf
        %1500 = vst.msk [vmem:[#allocation6 + $0x28] sm:$0xff] %vm1494, -inf
        %1501 = vst.msk [vmem:[#allocation6 + $0x30] sm:$0xff] %vm1494, -inf
        %1502 = vst.msk [vmem:[#allocation6 + $0x38] sm:$0xff] %vm1494, -inf
        %1503 = vst.msk [vmem:[#allocation6 + $0x40] sm:$0xff] %vm1494, -inf
        %1504 = vst.msk [vmem:[#allocation6 + $0x48] sm:$0xff] %vm1494, -inf
        %1505 = vst.msk [vmem:[#allocation6 + $0x50] sm:$0xff] %vm1494, -inf
        %1506 = vst.msk [vmem:[#allocation6 + $0x58] sm:$0xff] %vm1494, -inf
        %1507 = vst.msk [vmem:[#allocation6 + $0x60] sm:$0xff] %vm1494, -inf
        %1508 = vst.msk [vmem:[#allocation6 + $0x68] sm:$0xff] %vm1494, -inf
        %1509 = vst.msk [vmem:[#allocation6 + $0x70] sm:$0xff] %vm1494, -inf
        %1510 = vst.msk [vmem:[#allocation6 + $0x78] sm:$0xff] %vm1494, -inf
        %1511 = vst.msk [vmem:[#allocation6 + $0x80] sm:$0xff] %vm1494, -inf
        %1512 = vst.msk [vmem:[#allocation6 + $0x88] sm:$0xff] %vm1494, -inf
        %1513 = vst.msk [vmem:[#allocation6 + $0x90] sm:$0xff] %vm1494, -inf
        %1514 = vst.msk [vmem:[#allocation6 + $0x98] sm:$0xff] %vm1494, -inf
        %1515 = vst.msk [vmem:[#allocation6 + $0xa0] sm:$0xff] %vm1494, -inf
        %1516 = vst.msk [vmem:[#allocation6 + $0xa8] sm:$0xff] %vm1494, -inf
        %1517 = vst.msk [vmem:[#allocation6 + $0xb0] sm:$0xff] %vm1494, -inf
        %1518 = vst.msk [vmem:[#allocation6 + $0xb8] sm:$0xff] %vm1494, -inf
        %1519 = vst.msk [vmem:[#allocation6 + $0xc0] sm:$0xff] %vm1494, -inf
        %1520 = vst.msk [vmem:[#allocation6 + $0xc8] sm:$0xff] %vm1494, -inf
        %1521 = vst.msk [vmem:[#allocation6 + $0xd0] sm:$0xff] %vm1494, -inf
        %1522 = vst.msk [vmem:[#allocation6 + $0xd8] sm:$0xff] %vm1494, -inf
        %1523 = vst.msk [vmem:[#allocation6 + $0xe0] sm:$0xff] %vm1494, -inf
        %1524 = vst.msk [vmem:[#allocation6 + $0xe8] sm:$0xff] %vm1494, -inf
        %1525 = vst.msk [vmem:[#allocation6 + $0xf0] sm:$0xff] %vm1494, -inf
        %1526 = vst.msk [vmem:[#allocation6 + $0xf8] sm:$0xff] %vm1494, -inf
        %1527 = vst.msk [vmem:[#allocation6 + $0x100] sm:$0xff] %vm1494, -inf
        %1528 = vst.msk [vmem:[#allocation6 + $0x108] sm:$0xff] %vm1494, -inf
        %1529 = vst.msk [vmem:[#allocation6 + $0x110] sm:$0xff] %vm1494, -inf
        %1530 = vst.msk [vmem:[#allocation6 + $0x118] sm:$0xff] %vm1494, -inf
        %1531 = vst.msk [vmem:[#allocation6 + $0x120] sm:$0xff] %vm1494, -inf
        %1532 = vst.msk [vmem:[#allocation6 + $0x128] sm:$0xff] %vm1494, -inf
        %1533 = vst.msk [vmem:[#allocation6 + $0x130] sm:$0xff] %vm1494, -inf
        %1534 = vst.msk [vmem:[#allocation6 + $0x138] sm:$0xff] %vm1494, -inf
        %1535 = vst.msk [vmem:[#allocation6 + $0x140] sm:$0xff] %vm1494, -inf
        %1536 = vst.msk [vmem:[#allocation6 + $0x148] sm:$0xff] %vm1494, -inf
        %1537 = vst.msk [vmem:[#allocation6 + $0x150] sm:$0xff] %vm1494, -inf
        %1538 = vst.msk [vmem:[#allocation6 + $0x158] sm:$0xff] %vm1494, -inf
        %1539 = vst.msk [vmem:[#allocation6 + $0x160] sm:$0xff] %vm1494, -inf
        %1540 = vst.msk [vmem:[#allocation6 + $0x168] sm:$0xff] %vm1494, -inf
        %1541 = vst.msk [vmem:[#allocation6 + $0x170] sm:$0xff] %vm1494, -inf
        %1542 = vst.msk [vmem:[#allocation6 + $0x178] sm:$0xff] %vm1494, -inf
        %1543 = vst.msk [vmem:[#allocation6 + $0x180] sm:$0xff] %vm1494, -inf
        %1544 = vst.msk [vmem:[#allocation6 + $0x188] sm:$0xff] %vm1494, -inf
        %1545 = vst.msk [vmem:[#allocation6 + $0x190] sm:$0xff] %vm1494, -inf
        %1546 = vst.msk [vmem:[#allocation6 + $0x198] sm:$0xff] %vm1494, -inf
        %1547 = vst.msk [vmem:[#allocation6 + $0x1a0] sm:$0xff] %vm1494, -inf
        %1548 = vst.msk [vmem:[#allocation6 + $0x1a8] sm:$0xff] %vm1494, -inf
        %1549 = vst.msk [vmem:[#allocation6 + $0x1b0] sm:$0xff] %vm1494, -inf
        %1550 = vst.msk [vmem:[#allocation6 + $0x1b8] sm:$0xff] %vm1494, -inf
        %1551 = vst.msk [vmem:[#allocation6 + $0x1c0] sm:$0xff] %vm1494, -inf
        %1552 = vst.msk [vmem:[#allocation6 + $0x1c8] sm:$0xff] %vm1494, -inf
        %1553 = vst.msk [vmem:[#allocation6 + $0x1d0] sm:$0xff] %vm1494, -inf
        %1554 = vst.msk [vmem:[#allocation6 + $0x1d8] sm:$0xff] %vm1494, -inf
        %1555 = vst.msk [vmem:[#allocation6 + $0x1e0] sm:$0xff] %vm1494, -inf
        %1556 = vst.msk [vmem:[#allocation6 + $0x1e8] sm:$0xff] %vm1494, -inf
        %1557 = vst.msk [vmem:[#allocation6 + $0x1f0] sm:$0xff] %vm1494, -inf
        %1558 = vst.msk [vmem:[#allocation6 + $0x1f8] sm:$0xff] %vm1494, -inf
        %1559 = vst.msk [vmem:[#allocation6 + $0x200] sm:$0xff] %vm1494, -inf
        %1560 = vst.msk [vmem:[#allocation6 + $0x208] sm:$0xff] %vm1494, -inf
        %1561 = vst.msk [vmem:[#allocation6 + $0x210] sm:$0xff] %vm1494, -inf
        %1562 = vst.msk [vmem:[#allocation6 + $0x218] sm:$0xff] %vm1494, -inf
        %1563 = vst.msk [vmem:[#allocation6 + $0x220] sm:$0xff] %vm1494, -inf
        %1564 = vst.msk [vmem:[#allocation6 + $0x228] sm:$0xff] %vm1494, -inf
        %1565 = vst.msk [vmem:[#allocation6 + $0x230] sm:$0xff] %vm1494, -inf
        %1566 = vst.msk [vmem:[#allocation6 + $0x238] sm:$0xff] %vm1494, -inf
        %1567 = vst.msk [vmem:[#allocation6 + $0x240] sm:$0xff] %vm1494, -inf
        %1568 = vst.msk [vmem:[#allocation6 + $0x248] sm:$0xff] %vm1494, -inf
        %1569 = vst.msk [vmem:[#allocation6 + $0x250] sm:$0xff] %vm1494, -inf
        %1570 = vst.msk [vmem:[#allocation6 + $0x258] sm:$0xff] %vm1494, -inf
        %1571 = vst.msk [vmem:[#allocation6 + $0x260] sm:$0xff] %vm1494, -inf
        %1572 = vst.msk [vmem:[#allocation6 + $0x268] sm:$0xff] %vm1494, -inf
        %1573 = vst.msk [vmem:[#allocation6 + $0x270] sm:$0xff] %vm1494, -inf
        %1574 = vst.msk [vmem:[#allocation6 + $0x278] sm:$0xff] %vm1494, -inf
        %1575 = vst.msk [vmem:[#allocation6 + $0x280] sm:$0xff] %vm1494, -inf
        %1576 = vst.msk [vmem:[#allocation6 + $0x288] sm:$0xff] %vm1494, -inf
        %1577 = vst.msk [vmem:[#allocation6 + $0x290] sm:$0xff] %vm1494, -inf
        %1578 = vst.msk [vmem:[#allocation6 + $0x298] sm:$0xff] %vm1494, -inf
        %1579 = vst.msk [vmem:[#allocation6 + $0x2a0] sm:$0xff] %vm1494, -inf
        %1580 = vst.msk [vmem:[#allocation6 + $0x2a8] sm:$0xff] %vm1494, -inf
        %1581 = vst.msk [vmem:[#allocation6 + $0x2b0] sm:$0xff] %vm1494, -inf
        %1582 = vst.msk [vmem:[#allocation6 + $0x2b8] sm:$0xff] %vm1494, -inf
        %1583 = vst.msk [vmem:[#allocation6 + $0x2c0] sm:$0xff] %vm1494, -inf
        %1584 = vst.msk [vmem:[#allocation6 + $0x2c8] sm:$0xff] %vm1494, -inf
        %1585 = vst.msk [vmem:[#allocation6 + $0x2d0] sm:$0xff] %vm1494, -inf
        %1586 = vst.msk [vmem:[#allocation6 + $0x2d8] sm:$0xff] %vm1494, -inf
        %1587 = vst.msk [vmem:[#allocation6 + $0x2e0] sm:$0xff] %vm1494, -inf
        %1588 = vst.msk [vmem:[#allocation6 + $0x2e8] sm:$0xff] %vm1494, -inf
        %1589 = vst.msk [vmem:[#allocation6 + $0x2f0] sm:$0xff] %vm1494, -inf
        %1590 = vst.msk [vmem:[#allocation6 + $0x2f8] sm:$0xff] %vm1494, -inf
        %1591 = vst.msk [vmem:[#allocation6 + $0x300] sm:$0xff] %vm1494, -inf
        %1592 = vst.msk [vmem:[#allocation6 + $0x308] sm:$0xff] %vm1494, -inf
        %1593 = vst.msk [vmem:[#allocation6 + $0x310] sm:$0xff] %vm1494, -inf
        %1594 = vst.msk [vmem:[#allocation6 + $0x318] sm:$0xff] %vm1494, -inf
        %1595 = vst.msk [vmem:[#allocation6 + $0x320] sm:$0xff] %vm1494, -inf
        %1596 = vst.msk [vmem:[#allocation6 + $0x328] sm:$0xff] %vm1494, -inf
        %1597 = vst.msk [vmem:[#allocation6 + $0x330] sm:$0xff] %vm1494, -inf
        %1598 = vst.msk [vmem:[#allocation6 + $0x338] sm:$0xff] %vm1494, -inf
        %1599 = vst.msk [vmem:[#allocation6 + $0x340] sm:$0xff] %vm1494, -inf
        %1600 = vst.msk [vmem:[#allocation6 + $0x348] sm:$0xff] %vm1494, -inf
        %1601 = vst.msk [vmem:[#allocation6 + $0x350] sm:$0xff] %vm1494, -inf
        %1602 = vst.msk [vmem:[#allocation6 + $0x358] sm:$0xff] %vm1494, -inf
        %1603 = vst.msk [vmem:[#allocation6 + $0x360] sm:$0xff] %vm1494, -inf
        %1604 = vst.msk [vmem:[#allocation6 + $0x368] sm:$0xff] %vm1494, -inf
        %1605 = vst.msk [vmem:[#allocation6 + $0x370] sm:$0xff] %vm1494, -inf
        %1606 = vst.msk [vmem:[#allocation6 + $0x378] sm:$0xff] %vm1494, -inf
        %1607 = vst.msk [vmem:[#allocation6 + $0x380] sm:$0xff] %vm1494, -inf
        %1608 = vst.msk [vmem:[#allocation6 + $0x388] sm:$0xff] %vm1494, -inf
        %1609 = vst.msk [vmem:[#allocation6 + $0x390] sm:$0xff] %vm1494, -inf
        %1610 = vst.msk [vmem:[#allocation6 + $0x398] sm:$0xff] %vm1494, -inf
        %1611 = vst.msk [vmem:[#allocation6 + $0x3a0] sm:$0xff] %vm1494, -inf
        %1612 = vst.msk [vmem:[#allocation6 + $0x3a8] sm:$0xff] %vm1494, -inf
        %1613 = vst.msk [vmem:[#allocation6 + $0x3b0] sm:$0xff] %vm1494, -inf
        %1614 = vst.msk [vmem:[#allocation6 + $0x3b8] sm:$0xff] %vm1494, -inf
        %1615 = vst.msk [vmem:[#allocation6 + $0x3c0] sm:$0xff] %vm1494, -inf
        %1616 = vst.msk [vmem:[#allocation6 + $0x3c8] sm:$0xff] %vm1494, -inf
        %1617 = vst.msk [vmem:[#allocation6 + $0x3d0] sm:$0xff] %vm1494, -inf
        %1618 = vst.msk [vmem:[#allocation6 + $0x3d8] sm:$0xff] %vm1494, -inf
        %1619 = vst.msk [vmem:[#allocation6 + $0x3e0] sm:$0xff] %vm1494, -inf
        %1620 = vst.msk [vmem:[#allocation6 + $0x3e8] sm:$0xff] %vm1494, -inf
        %1621 = vst.msk [vmem:[#allocation6 + $0x3f0] sm:$0xff] %vm1494, -inf
        %1622 = vst.msk [vmem:[#allocation6 + $0x3f8] sm:$0xff] %vm1494, -inf
        %1623 = vst.msk [vmem:[#allocation6 + $0x400] sm:$0xff] %vm1494, -inf
        %1624 = vst.msk [vmem:[#allocation6 + $0x408] sm:$0xff] %vm1494, -inf
        %1625 = vst.msk [vmem:[#allocation6 + $0x410] sm:$0xff] %vm1494, -inf
        %1626 = vst.msk [vmem:[#allocation6 + $0x418] sm:$0xff] %vm1494, -inf
        %1627 = vst.msk [vmem:[#allocation6 + $0x420] sm:$0xff] %vm1494, -inf
        %1628 = vst.msk [vmem:[#allocation6 + $0x428] sm:$0xff] %vm1494, -inf
        %1629 = vst.msk [vmem:[#allocation6 + $0x430] sm:$0xff] %vm1494, -inf
        %1630 = vst.msk [vmem:[#allocation6 + $0x438] sm:$0xff] %vm1494, -inf
        %1631 = vst.msk [vmem:[#allocation6 + $0x440] sm:$0xff] %vm1494, -inf
        %1632 = vst.msk [vmem:[#allocation6 + $0x448] sm:$0xff] %vm1494, -inf
        %1633 = vst.msk [vmem:[#allocation6 + $0x450] sm:$0xff] %vm1494, -inf
        %1634 = vst.msk [vmem:[#allocation6 + $0x458] sm:$0xff] %vm1494, -inf
        %1635 = vst.msk [vmem:[#allocation6 + $0x460] sm:$0xff] %vm1494, -inf
        %1636 = vst.msk [vmem:[#allocation6 + $0x468] sm:$0xff] %vm1494, -inf
        %1637 = vst.msk [vmem:[#allocation6 + $0x470] sm:$0xff] %vm1494, -inf
        %1638 = vst.msk [vmem:[#allocation6 + $0x478] sm:$0xff] %vm1494, -inf
        %1639 = vst.msk [vmem:[#allocation6 + $0x480] sm:$0xff] %vm1494, -inf
        %1640 = vst.msk [vmem:[#allocation6 + $0x488] sm:$0xff] %vm1494, -inf
        %1641 = vst.msk [vmem:[#allocation6 + $0x490] sm:$0xff] %vm1494, -inf
        %1642 = vst.msk [vmem:[#allocation6 + $0x498] sm:$0xff] %vm1494, -inf
        %1643 = vst.msk [vmem:[#allocation6 + $0x4a0] sm:$0xff] %vm1494, -inf
        %1644 = vst.msk [vmem:[#allocation6 + $0x4a8] sm:$0xff] %vm1494, -inf
        %1645 = vst.msk [vmem:[#allocation6 + $0x4b0] sm:$0xff] %vm1494, -inf
        %1646 = vst.msk [vmem:[#allocation6 + $0x4b8] sm:$0xff] %vm1494, -inf
        %1647 = vst.msk [vmem:[#allocation6 + $0x4c0] sm:$0xff] %vm1494, -inf
        %1648 = vst.msk [vmem:[#allocation6 + $0x4c8] sm:$0xff] %vm1494, -inf
        %1649 = vst.msk [vmem:[#allocation6 + $0x4d0] sm:$0xff] %vm1494, -inf
        %1650 = vst.msk [vmem:[#allocation6 + $0x4d8] sm:$0xff] %vm1494, -inf
        %1651 = vst.msk [vmem:[#allocation6 + $0x4e0] sm:$0xff] %vm1494, -inf
        %1652 = vst.msk [vmem:[#allocation6 + $0x4e8] sm:$0xff] %vm1494, -inf
        %1653 = vst.msk [vmem:[#allocation6 + $0x4f0] sm:$0xff] %vm1494, -inf
        %1654 = vst.msk [vmem:[#allocation6 + $0x4f8] sm:$0xff] %vm1494, -inf
        %1655 = vst.msk [vmem:[#allocation6 + $0x500] sm:$0xff] %vm1494, -inf
        %1656 = vst.msk [vmem:[#allocation6 + $0x508] sm:$0xff] %vm1494, -inf
        %1657 = vst.msk [vmem:[#allocation6 + $0x510] sm:$0xff] %vm1494, -inf
        %1658 = vst.msk [vmem:[#allocation6 + $0x518] sm:$0xff] %vm1494, -inf
        %1659 = vst.msk [vmem:[#allocation6 + $0x520] sm:$0xff] %vm1494, -inf
        %1660 = vst.msk [vmem:[#allocation6 + $0x528] sm:$0xff] %vm1494, -inf
        %1661 = vst.msk [vmem:[#allocation6 + $0x530] sm:$0xff] %vm1494, -inf
        %1662 = vst.msk [vmem:[#allocation6 + $0x538] sm:$0xff] %vm1494, -inf
        %1663 = vst.msk [vmem:[#allocation6 + $0x540] sm:$0xff] %vm1494, -inf
        %1664 = vst.msk [vmem:[#allocation6 + $0x548] sm:$0xff] %vm1494, -inf
        %1665 = vst.msk [vmem:[#allocation6 + $0x550] sm:$0xff] %vm1494, -inf
        %1666 = vst.msk [vmem:[#allocation6 + $0x558] sm:$0xff] %vm1494, -inf
        %1667 = vst.msk [vmem:[#allocation6 + $0x560] sm:$0xff] %vm1494, -inf
        %1668 = vst.msk [vmem:[#allocation6 + $0x568] sm:$0xff] %vm1494, -inf
        %1669 = vst.msk [vmem:[#allocation6 + $0x570] sm:$0xff] %vm1494, -inf
        %1670 = vst.msk [vmem:[#allocation6 + $0x578] sm:$0xff] %vm1494, -inf
        %1671 = vst.msk [vmem:[#allocation6 + $0x580] sm:$0xff] %vm1494, -inf
        %1672 = vst.msk [vmem:[#allocation6 + $0x588] sm:$0xff] %vm1494, -inf
        %1673 = vst.msk [vmem:[#allocation6 + $0x590] sm:$0xff] %vm1494, -inf
        %1674 = vst.msk [vmem:[#allocation6 + $0x598] sm:$0xff] %vm1494, -inf
        %1675 = vst.msk [vmem:[#allocation6 + $0x5a0] sm:$0xff] %vm1494, -inf
        %1676 = vst.msk [vmem:[#allocation6 + $0x5a8] sm:$0xff] %vm1494, -inf
        %1677 = vst.msk [vmem:[#allocation6 + $0x5b0] sm:$0xff] %vm1494, -inf
        %1678 = vst.msk [vmem:[#allocation6 + $0x5b8] sm:$0xff] %vm1494, -inf
        %1679 = vst.msk [vmem:[#allocation6 + $0x5c0] sm:$0xff] %vm1494, -inf
        %1680 = vst.msk [vmem:[#allocation6 + $0x5c8] sm:$0xff] %vm1494, -inf
        %1681 = vst.msk [vmem:[#allocation6 + $0x5d0] sm:$0xff] %vm1494, -inf
        %1682 = vst.msk [vmem:[#allocation6 + $0x5d8] sm:$0xff] %vm1494, -inf
        %1683 = vst.msk [vmem:[#allocation6 + $0x5e0] sm:$0xff] %vm1494, -inf
        %1684 = vst.msk [vmem:[#allocation6 + $0x5e8] sm:$0xff] %vm1494, -inf
        %1685 = vst.msk [vmem:[#allocation6 + $0x5f0] sm:$0xff] %vm1494, -inf
        %1686 = vst.msk [vmem:[#allocation6 + $0x5f8] sm:$0xff] %vm1494, -inf
        %1687 = vst.msk [vmem:[#allocation6 + $0x600] sm:$0xff] %vm1494, -inf
        %1688 = vst.msk [vmem:[#allocation6 + $0x608] sm:$0xff] %vm1494, -inf
        %1689 = vst.msk [vmem:[#allocation6 + $0x610] sm:$0xff] %vm1494, -inf
        %1690 = vst.msk [vmem:[#allocation6 + $0x618] sm:$0xff] %vm1494, -inf
        %1691 = vst.msk [vmem:[#allocation6 + $0x620] sm:$0xff] %vm1494, -inf
        %1692 = vst.msk [vmem:[#allocation6 + $0x628] sm:$0xff] %vm1494, -inf
        %1693 = vst.msk [vmem:[#allocation6 + $0x630] sm:$0xff] %vm1494, -inf
        %1694 = vst.msk [vmem:[#allocation6 + $0x638] sm:$0xff] %vm1494, -inf
        %vm1695 = vcmask 523264
        %1696 = vst.msk [vmem:[#allocation9] sm:$0xff] %vm1695, -inf
        %1697 = vst.msk [vmem:[#allocation9 + $0x8] sm:$0xff] %vm1695, -inf
        %vm1698 = vcmask 516096
        %1699 = vst.msk [vmem:[#allocation9 + $0x10] sm:$0x1] %vm1698, -inf
        %1700 = vst.msk [vmem:[#allocation9 + $0x18] sm:$0xff] %vm1695, -inf
        %1701 = vst.msk [vmem:[#allocation9 + $0x20] sm:$0xff] %vm1695, -inf
        %1702 = vst.msk [vmem:[#allocation9 + $0x28] sm:$0x1] %vm1698, -inf
        %1703 = vst.msk [vmem:[#allocation9 + $0x30] sm:$0xff] %vm1695, -inf
        %1704 = vst.msk [vmem:[#allocation9 + $0x38] sm:$0xff] %vm1695, -inf
        %1705 = vst.msk [vmem:[#allocation9 + $0x40] sm:$0x1] %vm1698, -inf
        %1706 = vst.msk [vmem:[#allocation9 + $0x48] sm:$0xff] %vm1695, -inf
        %1707 = vst.msk [vmem:[#allocation9 + $0x50] sm:$0xff] %vm1695, -inf
        %1708 = vst.msk [vmem:[#allocation9 + $0x58] sm:$0x1] %vm1698, -inf
        %1709 = vst.msk [vmem:[#allocation9 + $0x60] sm:$0xff] %vm1695, -inf
        %1710 = vst.msk [vmem:[#allocation9 + $0x68] sm:$0xff] %vm1695, -inf
        %1711 = vst.msk [vmem:[#allocation9 + $0x70] sm:$0x1] %vm1698, -inf
        %1712 = vst.msk [vmem:[#allocation9 + $0x78] sm:$0xff] %vm1695, -inf
        %1713 = vst.msk [vmem:[#allocation9 + $0x80] sm:$0xff] %vm1695, -inf
        %1714 = vst.msk [vmem:[#allocation9 + $0x88] sm:$0x1] %vm1698, -inf
        %1715 = vst.msk [vmem:[#allocation9 + $0x90] sm:$0xff] %vm1695, -inf
        %1716 = vst.msk [vmem:[#allocation9 + $0x98] sm:$0xff] %vm1695, -inf
        %1717 = vst.msk [vmem:[#allocation9 + $0xa0] sm:$0x1] %vm1698, -inf
        %1718 = vst.msk [vmem:[#allocation9 + $0xa8] sm:$0xff] %vm1695, -inf
        %1719 = vst.msk [vmem:[#allocation9 + $0xb0] sm:$0xff] %vm1695, -inf
        %1720 = vst.msk [vmem:[#allocation9 + $0xb8] sm:$0x1] %vm1698, -inf
        %1721 = vst.msk [vmem:[#allocation9 + $0xc0] sm:$0xff] %vm1695, -inf
        %1722 = vst.msk [vmem:[#allocation9 + $0xc8] sm:$0xff] %vm1695, -inf
        %1723 = vst.msk [vmem:[#allocation9 + $0xd0] sm:$0x1] %vm1698, -inf
        %1724 = vst.msk [vmem:[#allocation9 + $0xd8] sm:$0xff] %vm1695, -inf
        %1725 = vst.msk [vmem:[#allocation9 + $0xe0] sm:$0xff] %vm1695, -inf
        %1726 = vst.msk [vmem:[#allocation9 + $0xe8] sm:$0x1] %vm1698, -inf
        %1727 = vst.msk [vmem:[#allocation9 + $0xf0] sm:$0xff] %vm1695, -inf
        %1728 = vst.msk [vmem:[#allocation9 + $0xf8] sm:$0xff] %vm1695, -inf
        %1729 = vst.msk [vmem:[#allocation9 + $0x100] sm:$0x1] %vm1698, -inf
        %1730 = vst.msk [vmem:[#allocation9 + $0x108] sm:$0xff] %vm1695, -inf
        %1731 = vst.msk [vmem:[#allocation9 + $0x110] sm:$0xff] %vm1695, -inf
        %1732 = vst.msk [vmem:[#allocation9 + $0x118] sm:$0x1] %vm1698, -inf
        %1733 = vst.msk [vmem:[#allocation9 + $0x120] sm:$0xff] %vm1695, -inf
        %1734 = vst.msk [vmem:[#allocation9 + $0x128] sm:$0xff] %vm1695, -inf
        %1735 = vst.msk [vmem:[#allocation9 + $0x130] sm:$0x1] %vm1698, -inf
        %1736 = vst.msk [vmem:[#allocation9 + $0x138] sm:$0xff] %vm1695, -inf
        %1737 = vst.msk [vmem:[#allocation9 + $0x140] sm:$0xff] %vm1695, -inf
        %1738 = vst.msk [vmem:[#allocation9 + $0x148] sm:$0x1] %vm1698, -inf
        %1739 = vst.msk [vmem:[#allocation9 + $0x150] sm:$0xff] %vm1695, -inf
        %1740 = vst.msk [vmem:[#allocation9 + $0x158] sm:$0xff] %vm1695, -inf
        %1741 = vst.msk [vmem:[#allocation9 + $0x160] sm:$0x1] %vm1698, -inf
        %1742 = vst.msk [vmem:[#allocation9 + $0x168] sm:$0xff] %vm1695, -inf
        %1743 = vst.msk [vmem:[#allocation9 + $0x170] sm:$0xff] %vm1695, -inf
        %1744 = vst.msk [vmem:[#allocation9 + $0x178] sm:$0x1] %vm1698, -inf
        %1745 = vst.msk [vmem:[#allocation9 + $0x180] sm:$0xff] %vm1695, -inf
        %1746 = vst.msk [vmem:[#allocation9 + $0x188] sm:$0xff] %vm1695, -inf
        %1747 = vst.msk [vmem:[#allocation9 + $0x190] sm:$0x1] %vm1698, -inf
        %v1748 = vld [vmem:[%s1] sm:$0x1]
        %s1749 = scalar_lea.vmem %s1, 1
        %v1750 = vld [vmem:[%s1749] sm:$0x1]
        %s1751 = scalar_lea.vmem %s1, 2
        %v1752 = vld [vmem:[%s1751] sm:$0x1]
        %s1753 = scalar_lea.vmem %s1, 3
        %v1754 = vld [vmem:[%s1753] sm:$0x1]
        %s1755 = scalar_lea.vmem %s1, 4
        %v1756 = vld [vmem:[%s1755] sm:$0x1]
        %s1757 = scalar_lea.vmem %s1, 5
        %v1758 = vld [vmem:[%s1757] sm:$0x1]
        %s1759 = scalar_lea.vmem %s1, 6
        %v1760 = vld [vmem:[%s1759] sm:$0x1]
        %s1761 = scalar_lea.vmem %s1, 7
        %v1762 = vld [vmem:[%s1761] sm:$0x1]
        %s1763 = scalar_lea.vmem %s1, 8
        %v1764 = vld [vmem:[%s1763] sm:$0x1]
        %v1765 = vld [vmem:[%s2] sm:$0x1]
        loop: start=0, step=1, limit=86
        $region89: #{hnet_forward.1} parent=87 // loop_pre_header
          _
        $region90: #{hnet_forward.1} parent=87 // loop_header
          %s1767 = sphi 0, %s1771
          %p1768 = scmp.ge.s32.totalorder %s1767, 86
        $region91: #{hnet_forward.1} parent=87 // loop_header_branch
          %1770 = sbr.rel (%p1768) target = $region95
        $region92: #{hnet_forward.1} parent=87 // loop_body
          %s1772 = smul.u32 %s1767, 88
          %s1773 = scalar_lea.vmem %s545, %s1772
          %v1774 = vld [vmem:[%s1773] sm:$0xff]
          %v1775 = vld [vmem:[%s1773 + $0x8] sm:$0xff]
          %v1776 = vld [vmem:[%s1773 + $0x10] sm:$0xff]
          %v1777 = vld [vmem:[%s1773 + $0x18] sm:$0xff]
          %v1778 = vld [vmem:[%s1773 + $0x20] sm:$0xff]
          %v1779 = vld [vmem:[%s1773 + $0x28] sm:$0xff]
          %v1780 = vld [vmem:[%s1773 + $0x30] sm:$0xff]
          %v1781 = vld [vmem:[%s1773 + $0x38] sm:$0xff]
          %v1782 = vld [vmem:[%s1773 + $0x40] sm:$0xff]
          %v1783 = vld [vmem:[%s1773 + $0x48] sm:$0xff]
          %v1784 = vld [vmem:[%s1773 + $0x50] sm:$0x3f]
          %1786 = vset.pattern.permute.xlu0 0
          %1787 = vperm.xlu0 %1786, %v1774
          %v1788 = vpop.permute.xlu0 %1787
          %1791 = vset.pattern.permute.xlu0 0
          %1792 = vperm.xlu0 %1791, %v1775
          %v1793 = vpop.permute.xlu0 %1792
          %1796 = vset.pattern.permute.xlu0 0
          %1797 = vperm.xlu0 %1796, %v1776
          %v1798 = vpop.permute.xlu0 %1797
          %1801 = vset.pattern.permute.xlu0 0
          %1802 = vperm.xlu0 %1801, %v1777
          %v1803 = vpop.permute.xlu0 %1802
          %1806 = vset.pattern.permute.xlu0 0
          %1807 = vperm.xlu0 %1806, %v1778
          %v1808 = vpop.permute.xlu0 %1807
          %1811 = vset.pattern.permute.xlu0 0
          %1812 = vperm.xlu0 %1811, %v1779
          %v1813 = vpop.permute.xlu0 %1812
          %1816 = vset.pattern.permute.xlu0 0
          %1817 = vperm.xlu0 %1816, %v1780
          %v1818 = vpop.permute.xlu0 %1817
          %1821 = vset.pattern.permute.xlu0 0
          %1822 = vperm.xlu0 %1821, %v1781
          %v1823 = vpop.permute.xlu0 %1822
          %1826 = vset.pattern.permute.xlu0 0
          %1827 = vperm.xlu0 %1826, %v1782
          %v1828 = vpop.permute.xlu0 %1827
          %1831 = vset.pattern.permute.xlu0 0
          %1832 = vperm.xlu0 %1831, %v1783
          %v1833 = vpop.permute.xlu0 %1832
          %1836 = vset.pattern.permute.xlu0 0
          %1837 = vperm.xlu0 %1836, %v1784
          %v1838 = vpop.permute.xlu0 %1837
          %v1841 = vlaneseq
          %v1842 = vshrl.u32 %v1841, 7
          %v1843 = vsub.s32 0, %v1842
          %v1844 = vrot.slane %v1748, %v1843
          %v1846 = vmul.f32 %v1788, %v1844
          %v1847 = vmul.f32 %v1793, %v1844
          %v1848 = vmul.f32 %v1798, %v1844
          %v1849 = vmul.f32 %v1803, %v1844
          %v1850 = vmul.f32 %v1808, %v1844
          %v1851 = vmul.f32 %v1813, %v1844
          %v1852 = vmul.f32 %v1818, %v1844
          %v1853 = vmul.f32 %v1823, %v1844
          %v1854 = vmul.f32 %v1828, %v1844
          %v1855 = vmul.f32 %v1833, %v1844
          %v1856 = vmul.f32 %v1838, %v1844
          %v1857 = vadd.f32 %v1846, 0.0
          %v1858 = vadd.f32 %v1847, 0.0
          %v1859 = vadd.f32 %v1848, 0.0
          %v1860 = vadd.f32 %v1849, 0.0
          %v1861 = vadd.f32 %v1850, 0.0
          %v1862 = vadd.f32 %v1851, 0.0
          %v1863 = vadd.f32 %v1852, 0.0
          %v1864 = vadd.f32 %v1853, 0.0
          %v1865 = vadd.f32 %v1854, 0.0
          %v1866 = vadd.f32 %v1855, 0.0
          %v1867 = vadd.f32 %v1856, 0.0
          %v1868 = vld [vmem:[%s1773 + $0x1] sm:$0xff]
          %v1869 = vld [vmem:[%s1773 + $0x9] sm:$0xff]
          %v1870 = vld [vmem:[%s1773 + $0x11] sm:$0xff]
          %v1871 = vld [vmem:[%s1773 + $0x19] sm:$0xff]
          %v1872 = vld [vmem:[%s1773 + $0x21] sm:$0xff]
          %v1873 = vld [vmem:[%s1773 + $0x29] sm:$0xff]
          %v1874 = vld [vmem:[%s1773 + $0x31] sm:$0xff]
          %v1875 = vld [vmem:[%s1773 + $0x39] sm:$0xff]
          %v1876 = vld [vmem:[%s1773 + $0x41] sm:$0xff]
          %v1877 = vld [vmem:[%s1773 + $0x49] sm:$0xff]
          %v1878 = vld [vmem:[%s1773 + $0x51] sm:$0x3f]
          %1880 = vset.pattern.permute.xlu0 0
          %1881 = vperm.xlu0 %1880, %v1868
          %v1882 = vpop.permute.xlu0 %1881
          %1885 = vset.pattern.permute.xlu0 0
          %1886 = vperm.xlu0 %1885, %v1869
          %v1887 = vpop.permute.xlu0 %1886
          %1890 = vset.pattern.permute.xlu0 0
          %1891 = vperm.xlu0 %1890, %v1870
          %v1892 = vpop.permute.xlu0 %1891
          %1895 = vset.pattern.permute.xlu0 0
          %1896 = vperm.xlu0 %1895, %v1871
          %v1897 = vpop.permute.xlu0 %1896
          %1900 = vset.pattern.permute.xlu0 0
          %1901 = vperm.xlu0 %1900, %v1872
          %v1902 = vpop.permute.xlu0 %1901
          %1905 = vset.pattern.permute.xlu0 0
          %1906 = vperm.xlu0 %1905, %v1873
          %v1907 = vpop.permute.xlu0 %1906
          %1910 = vset.pattern.permute.xlu0 0
          %1911 = vperm.xlu0 %1910, %v1874
          %v1912 = vpop.permute.xlu0 %1911
          %1915 = vset.pattern.permute.xlu0 0
          %1916 = vperm.xlu0 %1915, %v1875
          %v1917 = vpop.permute.xlu0 %1916
          %1920 = vset.pattern.permute.xlu0 0
          %1921 = vperm.xlu0 %1920, %v1876
          %v1922 = vpop.permute.xlu0 %1921
          %1925 = vset.pattern.permute.xlu0 0
          %1926 = vperm.xlu0 %1925, %v1877
          %v1927 = vpop.permute.xlu0 %1926
          %1930 = vset.pattern.permute.xlu0 0
          %1931 = vperm.xlu0 %1930, %v1878
          %v1932 = vpop.permute.xlu0 %1931
          %v1935 = vlaneseq
          %v1936 = vshrl.u32 %v1935, 7
          %v1937 = vsub.s32 0, %v1936
          %v1938 = vrot.slane %v1750, %v1937
          %v1940 = vmul.f32 %v1882, %v1938
          %v1941 = vmul.f32 %v1887, %v1938
          %v1942 = vmul.f32 %v1892, %v1938
          %v1943 = vmul.f32 %v1897, %v1938
          %v1944 = vmul.f32 %v1902, %v1938
          %v1945 = vmul.f32 %v1907, %v1938
          %v1946 = vmul.f32 %v1912, %v1938
          %v1947 = vmul.f32 %v1917, %v1938
          %v1948 = vmul.f32 %v1922, %v1938
          %v1949 = vmul.f32 %v1927, %v1938
          %v1950 = vmul.f32 %v1932, %v1938
          %v1951 = vadd.f32 %v1857, %v1940
          %v1952 = vadd.f32 %v1858, %v1941
          %v1953 = vadd.f32 %v1859, %v1942
          %v1954 = vadd.f32 %v1860, %v1943
          %v1955 = vadd.f32 %v1861, %v1944
          %v1956 = vadd.f32 %v1862, %v1945
          %v1957 = vadd.f32 %v1863, %v1946
          %v1958 = vadd.f32 %v1864, %v1947
          %v1959 = vadd.f32 %v1865, %v1948
          %v1960 = vadd.f32 %v1866, %v1949
          %v1961 = vadd.f32 %v1867, %v1950
          %v1962 = vld [vmem:[%s1773 + $0x2] sm:$0xff]
          %v1963 = vld [vmem:[%s1773 + $0xa] sm:$0xff]
          %v1964 = vld [vmem:[%s1773 + $0x12] sm:$0xff]
          %v1965 = vld [vmem:[%s1773 + $0x1a] sm:$0xff]
          %v1966 = vld [vmem:[%s1773 + $0x22] sm:$0xff]
          %v1967 = vld [vmem:[%s1773 + $0x2a] sm:$0xff]
          %v1968 = vld [vmem:[%s1773 + $0x32] sm:$0xff]
          %v1969 = vld [vmem:[%s1773 + $0x3a] sm:$0xff]
          %v1970 = vld [vmem:[%s1773 + $0x42] sm:$0xff]
          %v1971 = vld [vmem:[%s1773 + $0x4a] sm:$0xff]
          %v1972 = vld [vmem:[%s1773 + $0x52] sm:$0x3f]
          %1974 = vset.pattern.permute.xlu0 0
          %1975 = vperm.xlu0 %1974, %v1962
          %v1976 = vpop.permute.xlu0 %1975
          %1979 = vset.pattern.permute.xlu0 0
          %1980 = vperm.xlu0 %1979, %v1963
          %v1981 = vpop.permute.xlu0 %1980
          %1984 = vset.pattern.permute.xlu0 0
          %1985 = vperm.xlu0 %1984, %v1964
          %v1986 = vpop.permute.xlu0 %1985
          %1989 = vset.pattern.permute.xlu0 0
          %1990 = vperm.xlu0 %1989, %v1965
          %v1991 = vpop.permute.xlu0 %1990
          %1994 = vset.pattern.permute.xlu0 0
          %1995 = vperm.xlu0 %1994, %v1966
          %v1996 = vpop.permute.xlu0 %1995
          %1999 = vset.pattern.permute.xlu0 0
          %2000 = vperm.xlu0 %1999, %v1967
          %v2001 = vpop.permute.xlu0 %2000
          %2004 = vset.pattern.permute.xlu0 0
          %2005 = vperm.xlu0 %2004, %v1968
          %v2006 = vpop.permute.xlu0 %2005
          %2009 = vset.pattern.permute.xlu0 0
          %2010 = vperm.xlu0 %2009, %v1969
          %v2011 = vpop.permute.xlu0 %2010
          %2014 = vset.pattern.permute.xlu0 0
          %2015 = vperm.xlu0 %2014, %v1970
          %v2016 = vpop.permute.xlu0 %2015
          %2019 = vset.pattern.permute.xlu0 0
          %2020 = vperm.xlu0 %2019, %v1971
          %v2021 = vpop.permute.xlu0 %2020
          %2024 = vset.pattern.permute.xlu0 0
          %2025 = vperm.xlu0 %2024, %v1972
          %v2026 = vpop.permute.xlu0 %2025
          %v2029 = vlaneseq
          %v2030 = vshrl.u32 %v2029, 7
          %v2031 = vsub.s32 0, %v2030
          %v2032 = vrot.slane %v1752, %v2031
          %v2034 = vmul.f32 %v1976, %v2032
          %v2035 = vmul.f32 %v1981, %v2032
          %v2036 = vmul.f32 %v1986, %v2032
          %v2037 = vmul.f32 %v1991, %v2032
          %v2038 = vmul.f32 %v1996, %v2032
          %v2039 = vmul.f32 %v2001, %v2032
          %v2040 = vmul.f32 %v2006, %v2032
          %v2041 = vmul.f32 %v2011, %v2032
          %v2042 = vmul.f32 %v2016, %v2032
          %v2043 = vmul.f32 %v2021, %v2032
          %v2044 = vmul.f32 %v2026, %v2032
          %v2045 = vadd.f32 %v1951, %v2034
          %v2046 = vadd.f32 %v1952, %v2035
          %v2047 = vadd.f32 %v1953, %v2036
          %v2048 = vadd.f32 %v1954, %v2037
          %v2049 = vadd.f32 %v1955, %v2038
          %v2050 = vadd.f32 %v1956, %v2039
          %v2051 = vadd.f32 %v1957, %v2040
          %v2052 = vadd.f32 %v1958, %v2041
          %v2053 = vadd.f32 %v1959, %v2042
          %v2054 = vadd.f32 %v1960, %v2043
          %v2055 = vadd.f32 %v1961, %v2044
          %s2056 = sadd.s32 %s1767, 1
          %s2057 = smul.u32 %s2056, 88
          %s2058 = scalar_lea.vmem %s545, %s2057
          %v2059 = vld [vmem:[%s2058] sm:$0xff]
          %v2060 = vld [vmem:[%s2058 + $0x8] sm:$0xff]
          %v2061 = vld [vmem:[%s2058 + $0x10] sm:$0xff]
          %v2062 = vld [vmem:[%s2058 + $0x18] sm:$0xff]
          %v2063 = vld [vmem:[%s2058 + $0x20] sm:$0xff]
          %v2064 = vld [vmem:[%s2058 + $0x28] sm:$0xff]
          %v2065 = vld [vmem:[%s2058 + $0x30] sm:$0xff]
          %v2066 = vld [vmem:[%s2058 + $0x38] sm:$0xff]
          %v2067 = vld [vmem:[%s2058 + $0x40] sm:$0xff]
          %v2068 = vld [vmem:[%s2058 + $0x48] sm:$0xff]
          %v2069 = vld [vmem:[%s2058 + $0x50] sm:$0x3f]
          %2071 = vset.pattern.permute.xlu0 0
          %2072 = vperm.xlu0 %2071, %v2059
          %v2073 = vpop.permute.xlu0 %2072
          %2076 = vset.pattern.permute.xlu0 0
          %2077 = vperm.xlu0 %2076, %v2060
          %v2078 = vpop.permute.xlu0 %2077
          %2081 = vset.pattern.permute.xlu0 0
          %2082 = vperm.xlu0 %2081, %v2061
          %v2083 = vpop.permute.xlu0 %2082
          %2086 = vset.pattern.permute.xlu0 0
          %2087 = vperm.xlu0 %2086, %v2062
          %v2088 = vpop.permute.xlu0 %2087
          %2091 = vset.pattern.permute.xlu0 0
          %2092 = vperm.xlu0 %2091, %v2063
          %v2093 = vpop.permute.xlu0 %2092
          %2096 = vset.pattern.permute.xlu0 0
          %2097 = vperm.xlu0 %2096, %v2064
          %v2098 = vpop.permute.xlu0 %2097
          %2101 = vset.pattern.permute.xlu0 0
          %2102 = vperm.xlu0 %2101, %v2065
          %v2103 = vpop.permute.xlu0 %2102
          %2106 = vset.pattern.permute.xlu0 0
          %2107 = vperm.xlu0 %2106, %v2066
          %v2108 = vpop.permute.xlu0 %2107
          %2111 = vset.pattern.permute.xlu0 0
          %2112 = vperm.xlu0 %2111, %v2067
          %v2113 = vpop.permute.xlu0 %2112
          %2116 = vset.pattern.permute.xlu0 0
          %2117 = vperm.xlu0 %2116, %v2068
          %v2118 = vpop.permute.xlu0 %2117
          %2121 = vset.pattern.permute.xlu0 0
          %2122 = vperm.xlu0 %2121, %v2069
          %v2123 = vpop.permute.xlu0 %2122
          %v2126 = vlaneseq
          %v2127 = vshrl.u32 %v2126, 7
          %v2128 = vsub.s32 0, %v2127
          %v2129 = vrot.slane %v1754, %v2128
          %v2131 = vmul.f32 %v2073, %v2129
          %v2132 = vmul.f32 %v2078, %v2129
          %v2133 = vmul.f32 %v2083, %v2129
          %v2134 = vmul.f32 %v2088, %v2129
          %v2135 = vmul.f32 %v2093, %v2129
          %v2136 = vmul.f32 %v2098, %v2129
          %v2137 = vmul.f32 %v2103, %v2129
          %v2138 = vmul.f32 %v2108, %v2129
          %v2139 = vmul.f32 %v2113, %v2129
          %v2140 = vmul.f32 %v2118, %v2129
          %v2141 = vmul.f32 %v2123, %v2129
          %v2142 = vadd.f32 %v2045, %v2131
          %v2143 = vadd.f32 %v2046, %v2132
          %v2144 = vadd.f32 %v2047, %v2133
          %v2145 = vadd.f32 %v2048, %v2134
          %v2146 = vadd.f32 %v2049, %v2135
          %v2147 = vadd.f32 %v2050, %v2136
          %v2148 = vadd.f32 %v2051, %v2137
          %v2149 = vadd.f32 %v2052, %v2138
          %v2150 = vadd.f32 %v2053, %v2139
          %v2151 = vadd.f32 %v2054, %v2140
          %v2152 = vadd.f32 %v2055, %v2141
          %v2153 = vld [vmem:[%s2058 + $0x1] sm:$0xff]
          %v2154 = vld [vmem:[%s2058 + $0x9] sm:$0xff]
          %v2155 = vld [vmem:[%s2058 + $0x11] sm:$0xff]
          %v2156 = vld [vmem:[%s2058 + $0x19] sm:$0xff]
          %v2157 = vld [vmem:[%s2058 + $0x21] sm:$0xff]
          %v2158 = vld [vmem:[%s2058 + $0x29] sm:$0xff]
          %v2159 = vld [vmem:[%s2058 + $0x31] sm:$0xff]
          %v2160 = vld [vmem:[%s2058 + $0x39] sm:$0xff]
          %v2161 = vld [vmem:[%s2058 + $0x41] sm:$0xff]
          %v2162 = vld [vmem:[%s2058 + $0x49] sm:$0xff]
          %v2163 = vld [vmem:[%s2058 + $0x51] sm:$0x3f]
          %2165 = vset.pattern.permute.xlu0 0
          %2166 = vperm.xlu0 %2165, %v2153
          %v2167 = vpop.permute.xlu0 %2166
          %2170 = vset.pattern.permute.xlu0 0
          %2171 = vperm.xlu0 %2170, %v2154
          %v2172 = vpop.permute.xlu0 %2171
          %2175 = vset.pattern.permute.xlu0 0
          %2176 = vperm.xlu0 %2175, %v2155
          %v2177 = vpop.permute.xlu0 %2176
          %2180 = vset.pattern.permute.xlu0 0
          %2181 = vperm.xlu0 %2180, %v2156
          %v2182 = vpop.permute.xlu0 %2181
          %2185 = vset.pattern.permute.xlu0 0
          %2186 = vperm.xlu0 %2185, %v2157
          %v2187 = vpop.permute.xlu0 %2186
          %2190 = vset.pattern.permute.xlu0 0
          %2191 = vperm.xlu0 %2190, %v2158
          %v2192 = vpop.permute.xlu0 %2191
          %2195 = vset.pattern.permute.xlu0 0
          %2196 = vperm.xlu0 %2195, %v2159
          %v2197 = vpop.permute.xlu0 %2196
          %2200 = vset.pattern.permute.xlu0 0
          %2201 = vperm.xlu0 %2200, %v2160
          %v2202 = vpop.permute.xlu0 %2201
          %2205 = vset.pattern.permute.xlu0 0
          %2206 = vperm.xlu0 %2205, %v2161
          %v2207 = vpop.permute.xlu0 %2206
          %2210 = vset.pattern.permute.xlu0 0
          %2211 = vperm.xlu0 %2210, %v2162
          %v2212 = vpop.permute.xlu0 %2211
          %2215 = vset.pattern.permute.xlu0 0
          %2216 = vperm.xlu0 %2215, %v2163
          %v2217 = vpop.permute.xlu0 %2216
          %v2220 = vlaneseq
          %v2221 = vshrl.u32 %v2220, 7
          %v2222 = vsub.s32 0, %v2221
          %v2223 = vrot.slane %v1756, %v2222
          %v2225 = vmul.f32 %v2167, %v2223
          %v2226 = vmul.f32 %v2172, %v2223
          %v2227 = vmul.f32 %v2177, %v2223
          %v2228 = vmul.f32 %v2182, %v2223
          %v2229 = vmul.f32 %v2187, %v2223
          %v2230 = vmul.f32 %v2192, %v2223
          %v2231 = vmul.f32 %v2197, %v2223
          %v2232 = vmul.f32 %v2202, %v2223
          %v2233 = vmul.f32 %v2207, %v2223
          %v2234 = vmul.f32 %v2212, %v2223
          %v2235 = vmul.f32 %v2217, %v2223
          %v2236 = vadd.f32 %v2142, %v2225
          %v2237 = vadd.f32 %v2143, %v2226
          %v2238 = vadd.f32 %v2144, %v2227
          %v2239 = vadd.f32 %v2145, %v2228
          %v2240 = vadd.f32 %v2146, %v2229
          %v2241 = vadd.f32 %v2147, %v2230
          %v2242 = vadd.f32 %v2148, %v2231
          %v2243 = vadd.f32 %v2149, %v2232
          %v2244 = vadd.f32 %v2150, %v2233
          %v2245 = vadd.f32 %v2151, %v2234
          %v2246 = vadd.f32 %v2152, %v2235
          %v2247 = vld [vmem:[%s2058 + $0x2] sm:$0xff]
          %v2248 = vld [vmem:[%s2058 + $0xa] sm:$0xff]
          %v2249 = vld [vmem:[%s2058 + $0x12] sm:$0xff]
          %v2250 = vld [vmem:[%s2058 + $0x1a] sm:$0xff]
          %v2251 = vld [vmem:[%s2058 + $0x22] sm:$0xff]
          %v2252 = vld [vmem:[%s2058 + $0x2a] sm:$0xff]
          %v2253 = vld [vmem:[%s2058 + $0x32] sm:$0xff]
          %v2254 = vld [vmem:[%s2058 + $0x3a] sm:$0xff]
          %v2255 = vld [vmem:[%s2058 + $0x42] sm:$0xff]
          %v2256 = vld [vmem:[%s2058 + $0x4a] sm:$0xff]
          %v2257 = vld [vmem:[%s2058 + $0x52] sm:$0x3f]
          %2259 = vset.pattern.permute.xlu0 0
          %2260 = vperm.xlu0 %2259, %v2247
          %v2261 = vpop.permute.xlu0 %2260
          %2264 = vset.pattern.permute.xlu0 0
          %2265 = vperm.xlu0 %2264, %v2248
          %v2266 = vpop.permute.xlu0 %2265
          %2269 = vset.pattern.permute.xlu0 0
          %2270 = vperm.xlu0 %2269, %v2249
          %v2271 = vpop.permute.xlu0 %2270
          %2274 = vset.pattern.permute.xlu0 0
          %2275 = vperm.xlu0 %2274, %v2250
          %v2276 = vpop.permute.xlu0 %2275
          %2279 = vset.pattern.permute.xlu0 0
          %2280 = vperm.xlu0 %2279, %v2251
          %v2281 = vpop.permute.xlu0 %2280
          %2284 = vset.pattern.permute.xlu0 0
          %2285 = vperm.xlu0 %2284, %v2252
          %v2286 = vpop.permute.xlu0 %2285
          %2289 = vset.pattern.permute.xlu0 0
          %2290 = vperm.xlu0 %2289, %v2253
          %v2291 = vpop.permute.xlu0 %2290
          %2294 = vset.pattern.permute.xlu0 0
          %2295 = vperm.xlu0 %2294, %v2254
          %v2296 = vpop.permute.xlu0 %2295
          %2299 = vset.pattern.permute.xlu0 0
          %2300 = vperm.xlu0 %2299, %v2255
          %v2301 = vpop.permute.xlu0 %2300
          %2304 = vset.pattern.permute.xlu0 0
          %2305 = vperm.xlu0 %2304, %v2256
          %v2306 = vpop.permute.xlu0 %2305
          %2309 = vset.pattern.permute.xlu0 0
          %2310 = vperm.xlu0 %2309, %v2257
          %v2311 = vpop.permute.xlu0 %2310
          %v2314 = vlaneseq
          %v2315 = vshrl.u32 %v2314, 7
          %v2316 = vsub.s32 0, %v2315
          %v2317 = vrot.slane %v1758, %v2316
          %v2319 = vmul.f32 %v2261, %v2317
          %v2320 = vmul.f32 %v2266, %v2317
          %v2321 = vmul.f32 %v2271, %v2317
          %v2322 = vmul.f32 %v2276, %v2317
          %v2323 = vmul.f32 %v2281, %v2317
          %v2324 = vmul.f32 %v2286, %v2317
          %v2325 = vmul.f32 %v2291, %v2317
          %v2326 = vmul.f32 %v2296, %v2317
          %v2327 = vmul.f32 %v2301, %v2317
          %v2328 = vmul.f32 %v2306, %v2317
          %v2329 = vmul.f32 %v2311, %v2317
          %v2330 = vadd.f32 %v2236, %v2319
          %v2331 = vadd.f32 %v2237, %v2320
          %v2332 = vadd.f32 %v2238, %v2321
          %v2333 = vadd.f32 %v2239, %v2322
          %v2334 = vadd.f32 %v2240, %v2323
          %v2335 = vadd.f32 %v2241, %v2324
          %v2336 = vadd.f32 %v2242, %v2325
          %v2337 = vadd.f32 %v2243, %v2326
          %v2338 = vadd.f32 %v2244, %v2327
          %v2339 = vadd.f32 %v2245, %v2328
          %v2340 = vadd.f32 %v2246, %v2329
          %s2341 = sadd.s32 %s1767, 2
          %s2342 = smul.u32 %s2341, 88
          %s2343 = scalar_lea.vmem %s545, %s2342
          %v2344 = vld [vmem:[%s2343] sm:$0xff]
          %v2345 = vld [vmem:[%s2343 + $0x8] sm:$0xff]
          %v2346 = vld [vmem:[%s2343 + $0x10] sm:$0xff]
          %v2347 = vld [vmem:[%s2343 + $0x18] sm:$0xff]
          %v2348 = vld [vmem:[%s2343 + $0x20] sm:$0xff]
          %v2349 = vld [vmem:[%s2343 + $0x28] sm:$0xff]
          %v2350 = vld [vmem:[%s2343 + $0x30] sm:$0xff]
          %v2351 = vld [vmem:[%s2343 + $0x38] sm:$0xff]
          %v2352 = vld [vmem:[%s2343 + $0x40] sm:$0xff]
          %v2353 = vld [vmem:[%s2343 + $0x48] sm:$0xff]
          %v2354 = vld [vmem:[%s2343 + $0x50] sm:$0x3f]
          %2356 = vset.pattern.permute.xlu0 0
          %2357 = vperm.xlu0 %2356, %v2344
          %v2358 = vpop.permute.xlu0 %2357
          %2361 = vset.pattern.permute.xlu0 0
          %2362 = vperm.xlu0 %2361, %v2345
          %v2363 = vpop.permute.xlu0 %2362
          %2366 = vset.pattern.permute.xlu0 0
          %2367 = vperm.xlu0 %2366, %v2346
          %v2368 = vpop.permute.xlu0 %2367
          %2371 = vset.pattern.permute.xlu0 0
          %2372 = vperm.xlu0 %2371, %v2347
          %v2373 = vpop.permute.xlu0 %2372
          %2376 = vset.pattern.permute.xlu0 0
          %2377 = vperm.xlu0 %2376, %v2348
          %v2378 = vpop.permute.xlu0 %2377
          %2381 = vset.pattern.permute.xlu0 0
          %2382 = vperm.xlu0 %2381, %v2349
          %v2383 = vpop.permute.xlu0 %2382
          %2386 = vset.pattern.permute.xlu0 0
          %2387 = vperm.xlu0 %2386, %v2350
          %v2388 = vpop.permute.xlu0 %2387
          %2391 = vset.pattern.permute.xlu0 0
          %2392 = vperm.xlu0 %2391, %v2351
          %v2393 = vpop.permute.xlu0 %2392
          %2396 = vset.pattern.permute.xlu0 0
          %2397 = vperm.xlu0 %2396, %v2352
          %v2398 = vpop.permute.xlu0 %2397
          %2401 = vset.pattern.permute.xlu0 0
          %2402 = vperm.xlu0 %2401, %v2353
          %v2403 = vpop.permute.xlu0 %2402
          %2406 = vset.pattern.permute.xlu0 0
          %2407 = vperm.xlu0 %2406, %v2354
          %v2408 = vpop.permute.xlu0 %2407
          %v2411 = vlaneseq
          %v2412 = vshrl.u32 %v2411, 7
          %v2413 = vsub.s32 0, %v2412
          %v2414 = vrot.slane %v1760, %v2413
          %v2416 = vmul.f32 %v2358, %v2414
          %v2417 = vmul.f32 %v2363, %v2414
          %v2418 = vmul.f32 %v2368, %v2414
          %v2419 = vmul.f32 %v2373, %v2414
          %v2420 = vmul.f32 %v2378, %v2414
          %v2421 = vmul.f32 %v2383, %v2414
          %v2422 = vmul.f32 %v2388, %v2414
          %v2423 = vmul.f32 %v2393, %v2414
          %v2424 = vmul.f32 %v2398, %v2414
          %v2425 = vmul.f32 %v2403, %v2414
          %v2426 = vmul.f32 %v2408, %v2414
          %v2427 = vadd.f32 %v2330, %v2416
          %v2428 = vadd.f32 %v2331, %v2417
          %v2429 = vadd.f32 %v2332, %v2418
          %v2430 = vadd.f32 %v2333, %v2419
          %v2431 = vadd.f32 %v2334, %v2420
          %v2432 = vadd.f32 %v2335, %v2421
          %v2433 = vadd.f32 %v2336, %v2422
          %v2434 = vadd.f32 %v2337, %v2423
          %v2435 = vadd.f32 %v2338, %v2424
          %v2436 = vadd.f32 %v2339, %v2425
          %v2437 = vadd.f32 %v2340, %v2426
          %v2438 = vld [vmem:[%s2343 + $0x1] sm:$0xff]
          %v2439 = vld [vmem:[%s2343 + $0x9] sm:$0xff]
          %v2440 = vld [vmem:[%s2343 + $0x11] sm:$0xff]
          %v2441 = vld [vmem:[%s2343 + $0x19] sm:$0xff]
          %v2442 = vld [vmem:[%s2343 + $0x21] sm:$0xff]
          %v2443 = vld [vmem:[%s2343 + $0x29] sm:$0xff]
          %v2444 = vld [vmem:[%s2343 + $0x31] sm:$0xff]
          %v2445 = vld [vmem:[%s2343 + $0x39] sm:$0xff]
          %v2446 = vld [vmem:[%s2343 + $0x41] sm:$0xff]
          %v2447 = vld [vmem:[%s2343 + $0x49] sm:$0xff]
          %v2448 = vld [vmem:[%s2343 + $0x51] sm:$0x3f]
          %2450 = vset.pattern.permute.xlu0 0
          %2451 = vperm.xlu0 %2450, %v2438
          %v2452 = vpop.permute.xlu0 %2451
          %2455 = vset.pattern.permute.xlu0 0
          %2456 = vperm.xlu0 %2455, %v2439
          %v2457 = vpop.permute.xlu0 %2456
          %2460 = vset.pattern.permute.xlu0 0
          %2461 = vperm.xlu0 %2460, %v2440
          %v2462 = vpop.permute.xlu0 %2461
          %2465 = vset.pattern.permute.xlu0 0
          %2466 = vperm.xlu0 %2465, %v2441
          %v2467 = vpop.permute.xlu0 %2466
          %2470 = vset.pattern.permute.xlu0 0
          %2471 = vperm.xlu0 %2470, %v2442
          %v2472 = vpop.permute.xlu0 %2471
          %2475 = vset.pattern.permute.xlu0 0
          %2476 = vperm.xlu0 %2475, %v2443
          %v2477 = vpop.permute.xlu0 %2476
          %2480 = vset.pattern.permute.xlu0 0
          %2481 = vperm.xlu0 %2480, %v2444
          %v2482 = vpop.permute.xlu0 %2481
          %2485 = vset.pattern.permute.xlu0 0
          %2486 = vperm.xlu0 %2485, %v2445
          %v2487 = vpop.permute.xlu0 %2486
          %2490 = vset.pattern.permute.xlu0 0
          %2491 = vperm.xlu0 %2490, %v2446
          %v2492 = vpop.permute.xlu0 %2491
          %2495 = vset.pattern.permute.xlu0 0
          %2496 = vperm.xlu0 %2495, %v2447
          %v2497 = vpop.permute.xlu0 %2496
          %2500 = vset.pattern.permute.xlu0 0
          %2501 = vperm.xlu0 %2500, %v2448
          %v2502 = vpop.permute.xlu0 %2501
          %v2505 = vlaneseq
          %v2506 = vshrl.u32 %v2505, 7
          %v2507 = vsub.s32 0, %v2506
          %v2508 = vrot.slane %v1762, %v2507
          %v2510 = vmul.f32 %v2452, %v2508
          %v2511 = vmul.f32 %v2457, %v2508
          %v2512 = vmul.f32 %v2462, %v2508
          %v2513 = vmul.f32 %v2467, %v2508
          %v2514 = vmul.f32 %v2472, %v2508
          %v2515 = vmul.f32 %v2477, %v2508
          %v2516 = vmul.f32 %v2482, %v2508
          %v2517 = vmul.f32 %v2487, %v2508
          %v2518 = vmul.f32 %v2492, %v2508
          %v2519 = vmul.f32 %v2497, %v2508
          %v2520 = vmul.f32 %v2502, %v2508
          %v2521 = vadd.f32 %v2427, %v2510
          %v2522 = vadd.f32 %v2428, %v2511
          %v2523 = vadd.f32 %v2429, %v2512
          %v2524 = vadd.f32 %v2430, %v2513
          %v2525 = vadd.f32 %v2431, %v2514
          %v2526 = vadd.f32 %v2432, %v2515
          %v2527 = vadd.f32 %v2433, %v2516
          %v2528 = vadd.f32 %v2434, %v2517
          %v2529 = vadd.f32 %v2435, %v2518
          %v2530 = vadd.f32 %v2436, %v2519
          %v2531 = vadd.f32 %v2437, %v2520
          %v2532 = vld [vmem:[%s2343 + $0x2] sm:$0xff]
          %v2533 = vld [vmem:[%s2343 + $0xa] sm:$0xff]
          %v2534 = vld [vmem:[%s2343 + $0x12] sm:$0xff]
          %v2535 = vld [vmem:[%s2343 + $0x1a] sm:$0xff]
          %v2536 = vld [vmem:[%s2343 + $0x22] sm:$0xff]
          %v2537 = vld [vmem:[%s2343 + $0x2a] sm:$0xff]
          %v2538 = vld [vmem:[%s2343 + $0x32] sm:$0xff]
          %v2539 = vld [vmem:[%s2343 + $0x3a] sm:$0xff]
          %v2540 = vld [vmem:[%s2343 + $0x42] sm:$0xff]
          %v2541 = vld [vmem:[%s2343 + $0x4a] sm:$0xff]
          %v2542 = vld [vmem:[%s2343 + $0x52] sm:$0x3f]
          %2544 = vset.pattern.permute.xlu0 0
          %2545 = vperm.xlu0 %2544, %v2532
          %v2546 = vpop.permute.xlu0 %2545
          %2549 = vset.pattern.permute.xlu0 0
          %2550 = vperm.xlu0 %2549, %v2533
          %v2551 = vpop.permute.xlu0 %2550
          %2554 = vset.pattern.permute.xlu0 0
          %2555 = vperm.xlu0 %2554, %v2534
          %v2556 = vpop.permute.xlu0 %2555
          %2559 = vset.pattern.permute.xlu0 0
          %2560 = vperm.xlu0 %2559, %v2535
          %v2561 = vpop.permute.xlu0 %2560
          %2564 = vset.pattern.permute.xlu0 0
          %2565 = vperm.xlu0 %2564, %v2536
          %v2566 = vpop.permute.xlu0 %2565
          %2569 = vset.pattern.permute.xlu0 0
          %2570 = vperm.xlu0 %2569, %v2537
          %v2571 = vpop.permute.xlu0 %2570
          %2574 = vset.pattern.permute.xlu0 0
          %2575 = vperm.xlu0 %2574, %v2538
          %v2576 = vpop.permute.xlu0 %2575
          %2579 = vset.pattern.permute.xlu0 0
          %2580 = vperm.xlu0 %2579, %v2539
          %v2581 = vpop.permute.xlu0 %2580
          %2584 = vset.pattern.permute.xlu0 0
          %2585 = vperm.xlu0 %2584, %v2540
          %v2586 = vpop.permute.xlu0 %2585
          %2589 = vset.pattern.permute.xlu0 0
          %2590 = vperm.xlu0 %2589, %v2541
          %v2591 = vpop.permute.xlu0 %2590
          %2594 = vset.pattern.permute.xlu0 0
          %2595 = vperm.xlu0 %2594, %v2542
          %v2596 = vpop.permute.xlu0 %2595
          %v2599 = vlaneseq
          %v2600 = vshrl.u32 %v2599, 7
          %v2601 = vsub.s32 0, %v2600
          %v2602 = vrot.slane %v1764, %v2601
          %v2604 = vmul.f32 %v2546, %v2602
          %v2605 = vmul.f32 %v2551, %v2602
          %v2606 = vmul.f32 %v2556, %v2602
          %v2607 = vmul.f32 %v2561, %v2602
          %v2608 = vmul.f32 %v2566, %v2602
          %v2609 = vmul.f32 %v2571, %v2602
          %v2610 = vmul.f32 %v2576, %v2602
          %v2611 = vmul.f32 %v2581, %v2602
          %v2612 = vmul.f32 %v2586, %v2602
          %v2613 = vmul.f32 %v2591, %v2602
          %v2614 = vmul.f32 %v2596, %v2602
          %v2615 = vadd.f32 %v2521, %v2604
          %v2616 = vadd.f32 %v2522, %v2605
          %v2617 = vadd.f32 %v2523, %v2606
          %v2618 = vadd.f32 %v2524, %v2607
          %v2619 = vadd.f32 %v2525, %v2608
          %v2620 = vadd.f32 %v2526, %v2609
          %v2621 = vadd.f32 %v2527, %v2610
          %v2622 = vadd.f32 %v2528, %v2611
          %v2623 = vadd.f32 %v2529, %v2612
          %v2624 = vadd.f32 %v2530, %v2613
          %v2625 = vadd.f32 %v2531, %v2614
          %v2627 = vlaneseq
          %v2628 = vshrl.u32 %v2627, 7
          %v2629 = vsub.s32 0, %v2628
          %v2630 = vrot.slane %v1765, %v2629
          %v2632 = vadd.f32 %v2615, %v2630
          %v2633 = vadd.f32 %v2616, %v2630
          %v2634 = vadd.f32 %v2617, %v2630
          %v2635 = vadd.f32 %v2618, %v2630
          %v2636 = vadd.f32 %v2619, %v2630
          %v2637 = vadd.f32 %v2620, %v2630
          %v2638 = vadd.f32 %v2621, %v2630
          %v2639 = vadd.f32 %v2622, %v2630
          %v2640 = vadd.f32 %v2623, %v2630
          %v2641 = vadd.f32 %v2624, %v2630
          %v2642 = vadd.f32 %v2625, %v2630
          %vm2643 = vcmp.gt.f32.partialorder %v2632, 0.0
          %vm2644 = vcmp.gt.f32.partialorder %v2633, 0.0
          %vm2645 = vcmp.gt.f32.partialorder %v2634, 0.0
          %vm2646 = vcmp.gt.f32.partialorder %v2635, 0.0
          %vm2647 = vcmp.gt.f32.partialorder %v2636, 0.0
          %vm2648 = vcmp.gt.f32.partialorder %v2637, 0.0
          %vm2649 = vcmp.gt.f32.partialorder %v2638, 0.0
          %vm2650 = vcmp.gt.f32.partialorder %v2639, 0.0
          %vm2651 = vcmp.gt.f32.partialorder %v2640, 0.0
          %vm2652 = vcmp.gt.f32.partialorder %v2641, 0.0
          %vm2653 = vcmp.gt.f32.partialorder %v2642, 0.0
          %v2654 = vmul.f32 %v2632, 0.25
          %v2655 = vmul.f32 %v2633, 0.25
          %v2656 = vmul.f32 %v2634, 0.25
          %v2657 = vmul.f32 %v2635, 0.25
          %v2658 = vmul.f32 %v2636, 0.25
          %v2659 = vmul.f32 %v2637, 0.25
          %v2660 = vmul.f32 %v2638, 0.25
          %v2661 = vmul.f32 %v2639, 0.25
          %v2662 = vmul.f32 %v2640, 0.25
          %v2663 = vmul.f32 %v2641, 0.25
          %v2664 = vmul.f32 %v2642, 0.25
          %v2665 = vsel %vm2643, %v2632, %v2654
          %v2666 = vsel %vm2644, %v2633, %v2655
          %v2667 = vsel %vm2645, %v2634, %v2656
          %v2668 = vsel %vm2646, %v2635, %v2657
          %v2669 = vsel %vm2647, %v2636, %v2658
          %v2670 = vsel %vm2648, %v2637, %v2659
          %v2671 = vsel %vm2649, %v2638, %v2660
          %v2672 = vsel %vm2650, %v2639, %v2661
          %v2673 = vsel %vm2651, %v2640, %v2662
          %v2674 = vsel %vm2652, %v2641, %v2663
          %v2675 = vsel %vm2653, %v2642, %v2664
          %s2676 = scalar_lea.vmem [#allocation2], %s1772
          %2677 = vst.msk [vmem:[%s2676] sm:$0xff] %vm546, %v2665
          %2678 = vst.msk [vmem:[%s2676 + $0x8] sm:$0xff] %vm546, %v2666
          %2679 = vst.msk [vmem:[%s2676 + $0x10] sm:$0xff] %vm546, %v2667
          %2680 = vst.msk [vmem:[%s2676 + $0x18] sm:$0xff] %vm546, %v2668
          %2681 = vst.msk [vmem:[%s2676 + $0x20] sm:$0xff] %vm546, %v2669
          %2682 = vst.msk [vmem:[%s2676 + $0x28] sm:$0xff] %vm546, %v2670
          %2683 = vst.msk [vmem:[%s2676 + $0x30] sm:$0xff] %vm546, %v2671
          %2684 = vst.msk [vmem:[%s2676 + $0x38] sm:$0xff] %vm546, %v2672
          %2685 = vst.msk [vmem:[%s2676 + $0x40] sm:$0xff] %vm546, %v2673
          %2686 = vst.msk [vmem:[%s2676 + $0x48] sm:$0xff] %vm546, %v2674
          %2687 = vst.msk [vmem:[%s2676 + $0x50] sm:$0x3f] %vm557, %v2675
        $region93: #{hnet_forward.1} parent=87 // loop_footer
          %s1771 = sadd.s32 1, %s1767
        $region94: #{hnet_forward.1} parent=87 // loop_footer_branch
          %1766 = sbr.rel target = $region90
        $region95: #{hnet_forward.1} parent=87 // loop_exit
          _
        %v2688 = vld [vmem:[%s4] sm:$0x1]
        loop: start=0, step=1, limit=84
        $region96: #{hnet_forward.1} parent=87 // loop_pre_header
          _
        $region97: #{hnet_forward.1} parent=87 // loop_header
          %s2690 = sphi 0, %s2694
          %p2691 = scmp.ge.s32.totalorder %s2690, 84
        $region98: #{hnet_forward.1} parent=87 // loop_header_branch
          %2693 = sbr.rel (%p2691) target = $region102
        $region99: #{hnet_forward.1} parent=87 // loop_body
          %s2695 = smul.u32 %s2690, 88
          %s2696 = scalar_lea.vmem [#allocation2], %s2695
          %v2697 = vld [vmem:[%s2696] sm:$0xff]
          %v2698 = vld [vmem:[%s2696 + $0x8] sm:$0xff]
          %v2699 = vld [vmem:[%s2696 + $0x10] sm:$0xff]
          %v2700 = vld [vmem:[%s2696 + $0x18] sm:$0xff]
          %v2701 = vld [vmem:[%s2696 + $0x20] sm:$0xff]
          %v2702 = vld [vmem:[%s2696 + $0x28] sm:$0xff]
          %v2703 = vld [vmem:[%s2696 + $0x30] sm:$0xff]
          %v2704 = vld [vmem:[%s2696 + $0x38] sm:$0xff]
          %v2705 = vld [vmem:[%s2696 + $0x40] sm:$0xff]
          %v2706 = vld [vmem:[%s2696 + $0x48] sm:$0xff]
          %v2707 = vld [vmem:[%s2696 + $0x50] sm:$0xf]
          %s2708 = sadd.s32 %s2690, 1
          %s2709 = smul.u32 %s2708, 88
          %s2710 = scalar_lea.vmem [#allocation2], %s2709
          %v2711 = vld [vmem:[%s2710] sm:$0xff]
          %v2712 = vld [vmem:[%s2710 + $0x8] sm:$0xff]
          %v2713 = vld [vmem:[%s2710 + $0x10] sm:$0xff]
          %v2714 = vld [vmem:[%s2710 + $0x18] sm:$0xff]
          %v2715 = vld [vmem:[%s2710 + $0x20] sm:$0xff]
          %v2716 = vld [vmem:[%s2710 + $0x28] sm:$0xff]
          %v2717 = vld [vmem:[%s2710 + $0x30] sm:$0xff]
          %v2718 = vld [vmem:[%s2710 + $0x38] sm:$0xff]
          %v2719 = vld [vmem:[%s2710 + $0x40] sm:$0xff]
          %v2720 = vld [vmem:[%s2710 + $0x48] sm:$0xff]
          %v2721 = vld [vmem:[%s2710 + $0x50] sm:$0xf]
          %s2722 = sadd.s32 %s2690, 2
          %s2723 = smul.u32 %s2722, 88
          %s2724 = scalar_lea.vmem [#allocation2], %s2723
          %v2725 = vld [vmem:[%s2724] sm:$0xff]
          %v2726 = vld [vmem:[%s2724 + $0x8] sm:$0xff]
          %v2727 = vld [vmem:[%s2724 + $0x10] sm:$0xff]
          %v2728 = vld [vmem:[%s2724 + $0x18] sm:$0xff]
          %v2729 = vld [vmem:[%s2724 + $0x20] sm:$0xff]
          %v2730 = vld [vmem:[%s2724 + $0x28] sm:$0xff]
          %v2731 = vld [vmem:[%s2724 + $0x30] sm:$0xff]
          %v2732 = vld [vmem:[%s2724 + $0x38] sm:$0xff]
          %v2733 = vld [vmem:[%s2724 + $0x40] sm:$0xff]
          %v2734 = vld [vmem:[%s2724 + $0x48] sm:$0xff]
          %v2735 = vld [vmem:[%s2724 + $0x50] sm:$0xf]
          %2747 = vrot.lane.b32.xlu0 %v2711, 16
          %v2748 = vpop.permute.xlu0 %2747
          %2749 = vrot.lane.b32.xlu0 %v2712, 16
          %v2750 = vpop.permute.xlu0 %2749
          %2751 = vrot.lane.b32.xlu0 %v2713, 16
          %v2752 = vpop.permute.xlu0 %2751
          %2753 = vrot.lane.b32.xlu0 %v2714, 16
          %v2754 = vpop.permute.xlu0 %2753
          %2755 = vrot.lane.b32.xlu0 %v2715, 16
          %v2756 = vpop.permute.xlu0 %2755
          %2757 = vrot.lane.b32.xlu0 %v2716, 16
          %v2758 = vpop.permute.xlu0 %2757
          %2759 = vrot.lane.b32.xlu0 %v2717, 16
          %v2760 = vpop.permute.xlu0 %2759
          %2761 = vrot.lane.b32.xlu0 %v2718, 16
          %v2762 = vpop.permute.xlu0 %2761
          %2763 = vrot.lane.b32.xlu0 %v2719, 16
          %v2764 = vpop.permute.xlu0 %2763
          %2765 = vrot.lane.b32.xlu0 %v2720, 16
          %v2766 = vpop.permute.xlu0 %2765
          %2767 = vrot.lane.b32.xlu0 %v2721, 16
          %v2768 = vpop.permute.xlu0 %2767
          %2791 = vrot.lane.b32.xlu0 %v2725, 32
          %v2792 = vpop.permute.xlu0 %2791
          %2793 = vrot.lane.b32.xlu0 %v2726, 32
          %v2794 = vpop.permute.xlu0 %2793
          %2795 = vrot.lane.b32.xlu0 %v2727, 32
          %v2796 = vpop.permute.xlu0 %2795
          %2797 = vrot.lane.b32.xlu0 %v2728, 32
          %v2798 = vpop.permute.xlu0 %2797
          %2799 = vrot.lane.b32.xlu0 %v2729, 32
          %v2800 = vpop.permute.xlu0 %2799
          %2801 = vrot.lane.b32.xlu0 %v2730, 32
          %v2802 = vpop.permute.xlu0 %2801
          %2803 = vrot.lane.b32.xlu0 %v2731, 32
          %v2804 = vpop.permute.xlu0 %2803
          %2805 = vrot.lane.b32.xlu0 %v2732, 32
          %v2806 = vpop.permute.xlu0 %2805
          %2807 = vrot.lane.b32.xlu0 %v2733, 32
          %v2808 = vpop.permute.xlu0 %2807
          %2809 = vrot.lane.b32.xlu0 %v2734, 32
          %v2810 = vpop.permute.xlu0 %2809
          %2811 = vrot.lane.b32.xlu0 %v2735, 32
          %v2812 = vpop.permute.xlu0 %2811
          %v2824 = vsel %vm546, %v2697, %v2748
          %v2825 = vsel %vm546, %v2698, %v2750
          %v2826 = vsel %vm546, %v2699, %v2752
          %v2827 = vsel %vm546, %v2700, %v2754
          %v2828 = vsel %vm546, %v2701, %v2756
          %v2829 = vsel %vm546, %v2702, %v2758
          %v2830 = vsel %vm546, %v2703, %v2760
          %v2831 = vsel %vm546, %v2704, %v2762
          %v2832 = vsel %vm546, %v2705, %v2764
          %v2833 = vsel %vm546, %v2706, %v2766
          %v2834 = vsel %vm546, %v2707, %v2768
          %v2835 = vsel %vm1494, %v2824, %v2792
          %v2836 = vsel %vm1494, %v2825, %v2794
          %v2837 = vsel %vm1494, %v2826, %v2796
          %v2838 = vsel %vm1494, %v2827, %v2798
          %v2839 = vsel %vm1494, %v2828, %v2800
          %v2840 = vsel %vm1494, %v2829, %v2802
          %v2841 = vsel %vm1494, %v2830, %v2804
          %v2842 = vsel %vm1494, %v2831, %v2806
          %v2843 = vsel %vm1494, %v2832, %v2808
          %v2844 = vsel %vm1494, %v2833, %v2810
          %v2845 = vsel %vm1494, %v2834, %v2812
          %v2846 = vld [vmem:[%s3] sm:$0xff]
          %v2847 = vld [vmem:[%s3 + $0x8] sm:$0xff]
          %v2848 = vld [vmem:[%s3 + $0x10] sm:$0xff]
          %v2849 = vld [vmem:[%s3 + $0x18] sm:$0xff]
          %v2850 = vld [vmem:[%s3 + $0x20] sm:$0xff]
          %v2851 = vld [vmem:[%s3 + $0x28] sm:$0xff]
          %v2852 = vld [vmem:[%s2696 + $0x1] sm:$0xff]
          %v2853 = vld [vmem:[%s2696 + $0x9] sm:$0xff]
          %v2854 = vld [vmem:[%s2696 + $0x11] sm:$0xff]
          %v2855 = vld [vmem:[%s2696 + $0x19] sm:$0xff]
          %v2856 = vld [vmem:[%s2696 + $0x21] sm:$0xff]
          %v2857 = vld [vmem:[%s2696 + $0x29] sm:$0xff]
          %v2858 = vld [vmem:[%s2696 + $0x31] sm:$0xff]
          %v2859 = vld [vmem:[%s2696 + $0x39] sm:$0xff]
          %v2860 = vld [vmem:[%s2696 + $0x41] sm:$0xff]
          %v2861 = vld [vmem:[%s2696 + $0x49] sm:$0xff]
          %v2862 = vld [vmem:[%s2696 + $0x51] sm:$0xf]
          %v2863 = vld [vmem:[%s2710 + $0x1] sm:$0xff]
          %v2864 = vld [vmem:[%s2710 + $0x9] sm:$0xff]
          %v2865 = vld [vmem:[%s2710 + $0x11] sm:$0xff]
          %v2866 = vld [vmem:[%s2710 + $0x19] sm:$0xff]
          %v2867 = vld [vmem:[%s2710 + $0x21] sm:$0xff]
          %v2868 = vld [vmem:[%s2710 + $0x29] sm:$0xff]
          %v2869 = vld [vmem:[%s2710 + $0x31] sm:$0xff]
          %v2870 = vld [vmem:[%s2710 + $0x39] sm:$0xff]
          %v2871 = vld [vmem:[%s2710 + $0x41] sm:$0xff]
          %v2872 = vld [vmem:[%s2710 + $0x49] sm:$0xff]
          %v2873 = vld [vmem:[%s2710 + $0x51] sm:$0xf]
          %v2874 = vld [vmem:[%s2724 + $0x1] sm:$0xff]
          %v2875 = vld [vmem:[%s2724 + $0x9] sm:$0xff]
          %v2876 = vld [vmem:[%s2724 + $0x11] sm:$0xff]
          %v2877 = vld [vmem:[%s2724 + $0x19] sm:$0xff]
          %v2878 = vld [vmem:[%s2724 + $0x21] sm:$0xff]
          %v2879 = vld [vmem:[%s2724 + $0x29] sm:$0xff]
          %v2880 = vld [vmem:[%s2724 + $0x31] sm:$0xff]
          %v2881 = vld [vmem:[%s2724 + $0x39] sm:$0xff]
          %v2882 = vld [vmem:[%s2724 + $0x41] sm:$0xff]
          %v2883 = vld [vmem:[%s2724 + $0x49] sm:$0xff]
          %v2884 = vld [vmem:[%s2724 + $0x51] sm:$0xf]
          %2896 = vrot.lane.b32.xlu0 %v2863, 16
          %v2897 = vpop.permute.xlu0 %2896
          %2898 = vrot.lane.b32.xlu0 %v2864, 16
          %v2899 = vpop.permute.xlu0 %2898
          %2900 = vrot.lane.b32.xlu0 %v2865, 16
          %v2901 = vpop.permute.xlu0 %2900
          %2902 = vrot.lane.b32.xlu0 %v2866, 16
          %v2903 = vpop.permute.xlu0 %2902
          %2904 = vrot.lane.b32.xlu0 %v2867, 16
          %v2905 = vpop.permute.xlu0 %2904
          %2906 = vrot.lane.b32.xlu0 %v2868, 16
          %v2907 = vpop.permute.xlu0 %2906
          %2908 = vrot.lane.b32.xlu0 %v2869, 16
          %v2909 = vpop.permute.xlu0 %2908
          %2910 = vrot.lane.b32.xlu0 %v2870, 16
          %v2911 = vpop.permute.xlu0 %2910
          %2912 = vrot.lane.b32.xlu0 %v2871, 16
          %v2913 = vpop.permute.xlu0 %2912
          %2914 = vrot.lane.b32.xlu0 %v2872, 16
          %v2915 = vpop.permute.xlu0 %2914
          %2916 = vrot.lane.b32.xlu0 %v2873, 16
          %v2917 = vpop.permute.xlu0 %2916
          %2940 = vrot.lane.b32.xlu0 %v2874, 32
          %v2941 = vpop.permute.xlu0 %2940
          %2942 = vrot.lane.b32.xlu0 %v2875, 32
          %v2943 = vpop.permute.xlu0 %2942
          %2944 = vrot.lane.b32.xlu0 %v2876, 32
          %v2945 = vpop.permute.xlu0 %2944
          %2946 = vrot.lane.b32.xlu0 %v2877, 32
          %v2947 = vpop.permute.xlu0 %2946
          %2948 = vrot.lane.b32.xlu0 %v2878, 32
          %v2949 = vpop.permute.xlu0 %2948
          %2950 = vrot.lane.b32.xlu0 %v2879, 32
          %v2951 = vpop.permute.xlu0 %2950
          %2952 = vrot.lane.b32.xlu0 %v2880, 32
          %v2953 = vpop.permute.xlu0 %2952
          %2954 = vrot.lane.b32.xlu0 %v2881, 32
          %v2955 = vpop.permute.xlu0 %2954
          %2956 = vrot.lane.b32.xlu0 %v2882, 32
          %v2957 = vpop.permute.xlu0 %2956
          %2958 = vrot.lane.b32.xlu0 %v2883, 32
          %v2959 = vpop.permute.xlu0 %2958
          %2960 = vrot.lane.b32.xlu0 %v2884, 32
          %v2961 = vpop.permute.xlu0 %2960
          %v2973 = vsel %vm546, %v2852, %v2897
          %v2974 = vsel %vm546, %v2853, %v2899
          %v2975 = vsel %vm546, %v2854, %v2901
          %v2976 = vsel %vm546, %v2855, %v2903
          %v2977 = vsel %vm546, %v2856, %v2905
          %v2978 = vsel %vm546, %v2857, %v2907
          %v2979 = vsel %vm546, %v2858, %v2909
          %v2980 = vsel %vm546, %v2859, %v2911
          %v2981 = vsel %vm546, %v2860, %v2913
          %v2982 = vsel %vm546, %v2861, %v2915
          %v2983 = vsel %vm546, %v2862, %v2917
          %v2984 = vsel %vm1494, %v2973, %v2941
          %v2985 = vsel %vm1494, %v2974, %v2943
          %v2986 = vsel %vm1494, %v2975, %v2945
          %v2987 = vsel %vm1494, %v2976, %v2947
          %v2988 = vsel %vm1494, %v2977, %v2949
          %v2989 = vsel %vm1494, %v2978, %v2951
          %v2990 = vsel %vm1494, %v2979, %v2953
          %v2991 = vsel %vm1494, %v2980, %v2955
          %v2992 = vsel %vm1494, %v2981, %v2957
          %v2993 = vsel %vm1494, %v2982, %v2959
          %v2994 = vsel %vm1494, %v2983, %v2961
          %s2995 = scalar_lea.vmem %s3, 48
          %v2996 = vld [vmem:[%s2995] sm:$0xff]
          %v2997 = vld [vmem:[%s2995 + $0x8] sm:$0xff]
          %v2998 = vld [vmem:[%s2995 + $0x10] sm:$0xff]
          %v2999 = vld [vmem:[%s2995 + $0x18] sm:$0xff]
          %v3000 = vld [vmem:[%s2995 + $0x20] sm:$0xff]
          %v3001 = vld [vmem:[%s2995 + $0x28] sm:$0xff]
          %vm3002 = vcmask 392192
          %v3004 = vsel %vm3002, %v2984, 0
          %v3007 = vsel %vm3002, %v2985, 0
          %v3010 = vsel %vm3002, %v2986, 0
          %v3013 = vsel %vm3002, %v2987, 0
          %v3016 = vsel %vm3002, %v2988, 0
          %v3019 = vsel %vm3002, %v2989, 0
          %v3022 = vsel %vm3002, %v2990, 0
          %v3025 = vsel %vm3002, %v2991, 0
          %v3028 = vsel %vm3002, %v2992, 0
          %v3031 = vsel %vm3002, %v2993, 0
          %v3034 = vsel %vm3002, %v2994, 0
          %3036 = vmatprep.subr.mxu0 0.0
          %3037 = vmatpush1.msra.mxu0 %v2996
          %3038 = vmatprep.subr.mxu0 0.0
          %3039 = vmatpush1.msra.mxu0 %v2997
          %3040 = vmatprep.subr.mxu0 0.0
          %3041 = vmatpush1.msra.mxu0 %v2998
          %3042 = vmatprep.subr.mxu0 0.0
          %3043 = vmatpush1.msra.mxu0 %v2999
          %3044 = vmatprep.subr.mxu0 0.0
          %3045 = vmatpush1.msra.mxu0 %v3000
          %3046 = vmatprep.subr.mxu0 0.0
          %3047 = vmatpush1.msra.mxu0 %v3001
          %3048 = vmatprep.subr.mxu0 0.0
          %3049 = vmatpush1.msra.mxu0 0.0
          %3050 = vmatprep.subr.mxu0 0.0
          %3051 = vmatpush1.msra.mxu0 0.0
          %3052 = vmatprep.subr.mxu0 0.0
          %3053 = vmatpush1.msra.mxu0 0.0
          %3054 = vmatprep.subr.mxu0 0.0
          %3055 = vmatpush1.msra.mxu0 0.0
          %3056 = vmatprep.subr.mxu0 0.0
          %3057 = vmatpush1.msra.mxu0 0.0
          %3058 = vmatprep.subr.mxu0 0.0
          %3059 = vmatpush1.msra.mxu0 0.0
          %3060 = vmatprep.subr.mxu0 0.0
          %3061 = vmatpush1.msra.mxu0 0.0
          %3062 = vmatprep.subr.mxu0 0.0
          %3063 = vmatpush1.msra.mxu0 0.0
          %3064 = vmatprep.subr.mxu0 0.0
          %3065 = vmatpush1.msra.mxu0 0.0
          %3066 = vmatprep.subr.mxu0 0.0
          %3067 = vmatpush1.msra.mxu0 0.0
          %3068 = vmatprep.subr.mxu0 0.0
          %3069 = vmatpush1.msra.mxu0 0.0
          %3070 = vmatprep.subr.mxu0 0.0
          %3071 = vmatpush1.msra.mxu0 0.0
          %3072 = vmatprep.subr.mxu0 0.0
          %3073 = vmatpush1.msra.mxu0 0.0
          %3074 = vmatprep.subr.mxu0 0.0
          %3075 = vmatpush1.msra.mxu0 0.0
          %3076 = vmatprep.subr.mxu0 0.0
          %3077 = vmatpush1.msra.mxu0 0.0
          %3078 = vmatprep.subr.mxu0 0.0
          %3079 = vmatpush1.msra.mxu0 0.0
          %3080 = vmatprep.subr.mxu0 0.0
          %3081 = vmatpush1.msra.mxu0 0.0
          %3082 = vmatprep.subr.mxu0 0.0
          %3083 = vmatpush1.msra.mxu0 0.0
          %3084 = vmatprep.subr.mxu0 0.0
          %3085 = vmatpush1.msra.mxu0 0.0
          %3086 = vmatprep.subr.mxu0 0.0
          %3087 = vmatpush1.msra.mxu0 0.0
          %3088 = vmatprep.subr.mxu0 0.0
          %3089 = vmatpush1.msra.mxu0 0.0
          %3090 = vmatprep.subr.mxu0 0.0
          %3091 = vmatpush1.msra.mxu0 0.0
          %3092 = vmatprep.subr.mxu0 0.0
          %3093 = vmatpush1.msra.mxu0 0.0
          %3094 = vmatprep.subr.mxu0 0.0
          %3095 = vmatpush1.msra.mxu0 0.0
          %3096 = vmatprep.subr.mxu0 0.0
          %3097 = vmatpush1.msra.mxu0 0.0
          %3098 = vmatprep.subr.mxu0 0.0
          %3099 = vmatpush1.msra.mxu0 0.0
          %3100 = vmatprep.mubr.f32.mxu0 0.0
          %3101 = vmatmul.mubr.f32.gmra.mrb[0].mxu0 %v3004
          %v3102 = vpop.f32.mrb[0].mxu0
          %v3103 = vadd.f32 0.0, %v3102
          %v3104 = vpop.f32.mrb[0].mxu0
          %3105 = vmatprep.mubr.f32.mxu0 0.0
          %3106 = vmatmul.mubr.f32.gmra.mrb[0].mxu0 %v3007
          %v3107 = vpop.f32.mrb[0].mxu0
          %v3108 = vadd.f32 0.0, %v3107
          %v3109 = vpop.f32.mrb[0].mxu0
          %3110 = vmatprep.mubr.f32.mxu0 0.0
          %3111 = vmatmul.mubr.f32.gmra.mrb[0].mxu0 %v3010
          %v3112 = vpop.f32.mrb[0].mxu0
          %v3113 = vadd.f32 0.0, %v3112
          %v3114 = vpop.f32.mrb[0].mxu0
          %3115 = vmatprep.mubr.f32.mxu0 0.0
          %3116 = vmatmul.mubr.f32.gmra.mrb[0].mxu0 %v3013
          %v3117 = vpop.f32.mrb[0].mxu0
          %v3118 = vadd.f32 0.0, %v3117
          %v3119 = vpop.f32.mrb[0].mxu0
          %3120 = vmatprep.mubr.f32.mxu0 0.0
          %3121 = vmatmul.mubr.f32.gmra.mrb[0].mxu0 %v3016
          %v3122 = vpop.f32.mrb[0].mxu0
          %v3123 = vadd.f32 0.0, %v3122
          %v3124 = vpop.f32.mrb[0].mxu0
          %3125 = vmatprep.mubr.f32.mxu0 0.0
          %3126 = vmatmul.mubr.f32.gmra.mrb[0].mxu0 %v3019
          %v3127 = vpop.f32.mrb[0].mxu0
          %v3128 = vadd.f32 0.0, %v3127
          %v3129 = vpop.f32.mrb[0].mxu0
          %3130 = vmatprep.mubr.f32.mxu0 0.0
          %3131 = vmatmul.mubr.f32.gmra.mrb[0].mxu0 %v3022
          %v3132 = vpop.f32.mrb[0].mxu0
          %v3133 = vadd.f32 0.0, %v3132
          %v3134 = vpop.f32.mrb[0].mxu0
          %3135 = vmatprep.mubr.f32.mxu0 0.0
          %3136 = vmatmul.mubr.f32.gmra.mrb[0].mxu0 %v3025
          %v3137 = vpop.f32.mrb[0].mxu0
          %v3138 = vadd.f32 0.0, %v3137
          %v3139 = vpop.f32.mrb[0].mxu0
          %3140 = vmatprep.mubr.f32.mxu0 0.0
          %3141 = vmatmul.mubr.f32.gmra.mrb[0].mxu0 %v3028
          %v3142 = vpop.f32.mrb[0].mxu0
          %v3143 = vadd.f32 0.0, %v3142
          %v3144 = vpop.f32.mrb[0].mxu0
          %3145 = vmatprep.mubr.f32.mxu0 0.0
          %3146 = vmatmul.mubr.f32.gmra.mrb[0].mxu0 %v3031
          %v3147 = vpop.f32.mrb[0].mxu0
          %v3148 = vadd.f32 0.0, %v3147
          %v3149 = vpop.f32.mrb[0].mxu0
          %3150 = vmatprep.mubr.f32.mxu0 0.0
          %3151 = vmatmul.mubr.f32.gmra.mrb[0].mxu0 %v3034
          %v3152 = vpop.f32.mrb[0].mxu0
          %v3153 = vadd.f32 0.0, %v3152
          %v3154 = vpop.f32.mrb[0].mxu0
          %3155 = vdwg.mxu0
          %v3157 = vsel %vm3002, %v2835, 0
          %v3160 = vsel %vm3002, %v2836, 0
          %v3163 = vsel %vm3002, %v2837, 0
          %v3166 = vsel %vm3002, %v2838, 0
          %v3169 = vsel %vm3002, %v2839, 0
          %v3172 = vsel %vm3002, %v2840, 0
          %v3175 = vsel %vm3002, %v2841, 0
          %v3178 = vsel %vm3002, %v2842, 0
          %v3181 = vsel %vm3002, %v2843, 0
          %v3184 = vsel %vm3002, %v2844, 0
          %v3187 = vsel %vm3002, %v2845, 0
          %3189 = vmatprep.subr.mxu0 0.0
          %3190 = vmatpush1.msra.mxu0 %v2846
          %3191 = vmatprep.subr.mxu0 0.0
          %3192 = vmatpush1.msra.mxu0 %v2847
          %3193 = vmatprep.subr.mxu0 0.0
          %3194 = vmatpush1.msra.mxu0 %v2848
          %3195 = vmatprep.subr.mxu0 0.0
          %3196 = vmatpush1.msra.mxu0 %v2849
          %3197 = vmatprep.subr.mxu0 0.0
          %3198 = vmatpush1.msra.mxu0 %v2850
          %3199 = vmatprep.subr.mxu0 0.0
          %3200 = vmatpush1.msra.mxu0 %v2851
          %3201 = vmatprep.subr.mxu0 0.0
          %3202 = vmatpush1.msra.mxu0 0.0
          %3203 = vmatprep.subr.mxu0 0.0
          %3204 = vmatpush1.msra.mxu0 0.0
          %3205 = vmatprep.subr.mxu0 0.0
          %3206 = vmatpush1.msra.mxu0 0.0
          %3207 = vmatprep.subr.mxu0 0.0
          %3208 = vmatpush1.msra.mxu0 0.0
          %3209 = vmatprep.subr.mxu0 0.0
          %3210 = vmatpush1.msra.mxu0 0.0
          %3211 = vmatprep.subr.mxu0 0.0
          %3212 = vmatpush1.msra.mxu0 0.0
          %3213 = vmatprep.subr.mxu0 0.0
          %3214 = vmatpush1.msra.mxu0 0.0
          %3215 = vmatprep.subr.mxu0 0.0
          %3216 = vmatpush1.msra.mxu0 0.0
          %3217 = vmatprep.subr.mxu0 0.0
          %3218 = vmatpush1.msra.mxu0 0.0
          %3219 = vmatprep.subr.mxu0 0.0
          %3220 = vmatpush1.msra.mxu0 0.0
          %3221 = vmatprep.subr.mxu0 0.0
          %3222 = vmatpush1.msra.mxu0 0.0
          %3223 = vmatprep.subr.mxu0 0.0
          %3224 = vmatpush1.msra.mxu0 0.0
          %3225 = vmatprep.subr.mxu0 0.0
          %3226 = vmatpush1.msra.mxu0 0.0
          %3227 = vmatprep.subr.mxu0 0.0
          %3228 = vmatpush1.msra.mxu0 0.0
          %3229 = vmatprep.subr.mxu0 0.0
          %3230 = vmatpush1.msra.mxu0 0.0
          %3231 = vmatprep.subr.mxu0 0.0
          %3232 = vmatpush1.msra.mxu0 0.0
          %3233 = vmatprep.subr.mxu0 0.0
          %3234 = vmatpush1.msra.mxu0 0.0
          %3235 = vmatprep.subr.mxu0 0.0
          %3236 = vmatpush1.msra.mxu0 0.0
          %3237 = vmatprep.subr.mxu0 0.0
          %3238 = vmatpush1.msra.mxu0 0.0
          %3239 = vmatprep.subr.mxu0 0.0
          %3240 = vmatpush1.msra.mxu0 0.0
          %3241 = vmatprep.subr.mxu0 0.0
          %3242 = vmatpush1.msra.mxu0 0.0
          %3243 = vmatprep.subr.mxu0 0.0
          %3244 = vmatpush1.msra.mxu0 0.0
          %3245 = vmatprep.subr.mxu0 0.0
          %3246 = vmatpush1.msra.mxu0 0.0
          %3247 = vmatprep.subr.mxu0 0.0
          %3248 = vmatpush1.msra.mxu0 0.0
          %3249 = vmatprep.subr.mxu0 0.0
          %3250 = vmatpush1.msra.mxu0 0.0
          %3251 = vmatprep.subr.mxu0 0.0
          %3252 = vmatpush1.msra.mxu0 0.0
          %3253 = vmatprep.mubr.f32.mxu0 0.0
          %3254 = vmatmul.mubr.f32.gmra.mrb[0].mxu0 %v3157
          %v3255 = vpop.f32.mrb[0].mxu0
          %v3256 = vadd.f32 %v3103, %v3255
          %v3257 = vpop.f32.mrb[0].mxu0
          %3258 = vmatprep.mubr.f32.mxu0 0.0
          %3259 = vmatmul.mubr.f32.gmra.mrb[0].mxu0 %v3160
          %v3260 = vpop.f32.mrb[0].mxu0
          %v3261 = vadd.f32 %v3108, %v3260
          %v3262 = vpop.f32.mrb[0].mxu0
          %3263 = vmatprep.mubr.f32.mxu0 0.0
          %3264 = vmatmul.mubr.f32.gmra.mrb[0].mxu0 %v3163
          %v3265 = vpop.f32.mrb[0].mxu0
          %v3266 = vadd.f32 %v3113, %v3265
          %v3267 = vpop.f32.mrb[0].mxu0
          %3268 = vmatprep.mubr.f32.mxu0 0.0
          %3269 = vmatmul.mubr.f32.gmra.mrb[0].mxu0 %v3166
          %v3270 = vpop.f32.mrb[0].mxu0
          %v3271 = vadd.f32 %v3118, %v3270
          %v3272 = vpop.f32.mrb[0].mxu0
          %3273 = vmatprep.mubr.f32.mxu0 0.0
          %3274 = vmatmul.mubr.f32.gmra.mrb[0].mxu0 %v3169
          %v3275 = vpop.f32.mrb[0].mxu0
          %v3276 = vadd.f32 %v3123, %v3275
          %v3277 = vpop.f32.mrb[0].mxu0
          %3278 = vmatprep.mubr.f32.mxu0 0.0
          %3279 = vmatmul.mubr.f32.gmra.mrb[0].mxu0 %v3172
          %v3280 = vpop.f32.mrb[0].mxu0
          %v3281 = vadd.f32 %v3128, %v3280
          %v3282 = vpop.f32.mrb[0].mxu0
          %3283 = vmatprep.mubr.f32.mxu0 0.0
          %3284 = vmatmul.mubr.f32.gmra.mrb[0].mxu0 %v3175
          %v3285 = vpop.f32.mrb[0].mxu0
          %v3286 = vadd.f32 %v3133, %v3285
          %v3287 = vpop.f32.mrb[0].mxu0
          %3288 = vmatprep.mubr.f32.mxu0 0.0
          %3289 = vmatmul.mubr.f32.gmra.mrb[0].mxu0 %v3178
          %v3290 = vpop.f32.mrb[0].mxu0
          %v3291 = vadd.f32 %v3138, %v3290
          %v3292 = vpop.f32.mrb[0].mxu0
          %3293 = vmatprep.mubr.f32.mxu0 0.0
          %3294 = vmatmul.mubr.f32.gmra.mrb[0].mxu0 %v3181
          %v3295 = vpop.f32.mrb[0].mxu0
          %v3296 = vadd.f32 %v3143, %v3295
          %v3297 = vpop.f32.mrb[0].mxu0
          %3298 = vmatprep.mubr.f32.mxu0 0.0
          %3299 = vmatmul.mubr.f32.gmra.mrb[0].mxu0 %v3184
          %v3300 = vpop.f32.mrb[0].mxu0
          %v3301 = vadd.f32 %v3148, %v3300
          %v3302 = vpop.f32.mrb[0].mxu0
          %3303 = vmatprep.mubr.f32.mxu0 0.0
          %3304 = vmatmul.mubr.f32.gmra.mrb[0].mxu0 %v3187
          %v3305 = vpop.f32.mrb[0].mxu0
          %v3306 = vadd.f32 %v3153, %v3305
          %v3307 = vpop.f32.mrb[0].mxu0
          %3308 = vdwg.mxu0
          %v3309 = vld [vmem:[%s2696 + $0x2] sm:$0xff]
          %v3310 = vld [vmem:[%s2696 + $0xa] sm:$0xff]
          %v3311 = vld [vmem:[%s2696 + $0x12] sm:$0xff]
          %v3312 = vld [vmem:[%s2696 + $0x1a] sm:$0xff]
          %v3313 = vld [vmem:[%s2696 + $0x22] sm:$0xff]
          %v3314 = vld [vmem:[%s2696 + $0x2a] sm:$0xff]
          %v3315 = vld [vmem:[%s2696 + $0x32] sm:$0xff]
          %v3316 = vld [vmem:[%s2696 + $0x3a] sm:$0xff]
          %v3317 = vld [vmem:[%s2696 + $0x42] sm:$0xff]
          %v3318 = vld [vmem:[%s2696 + $0x4a] sm:$0xff]
          %v3319 = vld [vmem:[%s2696 + $0x52] sm:$0xf]
          %v3320 = vld [vmem:[%s2710 + $0x2] sm:$0xff]
          %v3321 = vld [vmem:[%s2710 + $0xa] sm:$0xff]
          %v3322 = vld [vmem:[%s2710 + $0x12] sm:$0xff]
          %v3323 = vld [vmem:[%s2710 + $0x1a] sm:$0xff]
          %v3324 = vld [vmem:[%s2710 + $0x22] sm:$0xff]
          %v3325 = vld [vmem:[%s2710 + $0x2a] sm:$0xff]
          %v3326 = vld [vmem:[%s2710 + $0x32] sm:$0xff]
          %v3327 = vld [vmem:[%s2710 + $0x3a] sm:$0xff]
          %v3328 = vld [vmem:[%s2710 + $0x42] sm:$0xff]
          %v3329 = vld [vmem:[%s2710 + $0x4a] sm:$0xff]
          %v3330 = vld [vmem:[%s2710 + $0x52] sm:$0xf]
          %v3331 = vld [vmem:[%s2724 + $0x2] sm:$0xff]
          %v3332 = vld [vmem:[%s2724 + $0xa] sm:$0xff]
          %v3333 = vld [vmem:[%s2724 + $0x12] sm:$0xff]
          %v3334 = vld [vmem:[%s2724 + $0x1a] sm:$0xff]
          %v3335 = vld [vmem:[%s2724 + $0x22] sm:$0xff]
          %v3336 = vld [vmem:[%s2724 + $0x2a] sm:$0xff]
          %v3337 = vld [vmem:[%s2724 + $0x32] sm:$0xff]
          %v3338 = vld [vmem:[%s2724 + $0x3a] sm:$0xff]
          %v3339 = vld [vmem:[%s2724 + $0x42] sm:$0xff]
          %v3340 = vld [vmem:[%s2724 + $0x4a] sm:$0xff]
          %v3341 = vld [vmem:[%s2724 + $0x52] sm:$0xf]
          %3353 = vrot.lane.b32.xlu0 %v3320, 16
          %v3354 = vpop.permute.xlu0 %3353
          %3355 = vrot.lane.b32.xlu0 %v3321, 16
          %v3356 = vpop.permute.xlu0 %3355
          %3357 = vrot.lane.b32.xlu0 %v3322, 16
          %v3358 = vpop.permute.xlu0 %3357
          %3359 = vrot.lane.b32.xlu0 %v3323, 16
          %v3360 = vpop.permute.xlu0 %3359
          %3361 = vrot.lane.b32.xlu0 %v3324, 16
          %v3362 = vpop.permute.xlu0 %3361
          %3363 = vrot.lane.b32.xlu0 %v3325, 16
          %v3364 = vpop.permute.xlu0 %3363
          %3365 = vrot.lane.b32.xlu0 %v3326, 16
          %v3366 = vpop.permute.xlu0 %3365
          %3367 = vrot.lane.b32.xlu0 %v3327, 16
          %v3368 = vpop.permute.xlu0 %3367
          %3369 = vrot.lane.b32.xlu0 %v3328, 16
          %v3370 = vpop.permute.xlu0 %3369
          %3371 = vrot.lane.b32.xlu0 %v3329, 16
          %v3372 = vpop.permute.xlu0 %3371
          %3373 = vrot.lane.b32.xlu0 %v3330, 16
          %v3374 = vpop.permute.xlu0 %3373
          %3397 = vrot.lane.b32.xlu0 %v3331, 32
          %v3398 = vpop.permute.xlu0 %3397
          %3399 = vrot.lane.b32.xlu0 %v3332, 32
          %v3400 = vpop.permute.xlu0 %3399
          %3401 = vrot.lane.b32.xlu0 %v3333, 32
          %v3402 = vpop.permute.xlu0 %3401
          %3403 = vrot.lane.b32.xlu0 %v3334, 32
          %v3404 = vpop.permute.xlu0 %3403
          %3405 = vrot.lane.b32.xlu0 %v3335, 32
          %v3406 = vpop.permute.xlu0 %3405
          %3407 = vrot.lane.b32.xlu0 %v3336, 32
          %v3408 = vpop.permute.xlu0 %3407
          %3409 = vrot.lane.b32.xlu0 %v3337, 32
          %v3410 = vpop.permute.xlu0 %3409
          %3411 = vrot.lane.b32.xlu0 %v3338, 32
          %v3412 = vpop.permute.xlu0 %3411
          %3413 = vrot.lane.b32.xlu0 %v3339, 32
          %v3414 = vpop.permute.xlu0 %3413
          %3415 = vrot.lane.b32.xlu0 %v3340, 32
          %v3416 = vpop.permute.xlu0 %3415
          %3417 = vrot.lane.b32.xlu0 %v3341, 32
          %v3418 = vpop.permute.xlu0 %3417
          %v3430 = vsel %vm546, %v3309, %v3354
          %v3431 = vsel %vm546, %v3310, %v3356
          %v3432 = vsel %vm546, %v3311, %v3358
          %v3433 = vsel %vm546, %v3312, %v3360
          %v3434 = vsel %vm546, %v3313, %v3362
          %v3435 = vsel %vm546, %v3314, %v3364
          %v3436 = vsel %vm546, %v3315, %v3366
          %v3437 = vsel %vm546, %v3316, %v3368
          %v3438 = vsel %vm546, %v3317, %v3370
          %v3439 = vsel %vm546, %v3318, %v3372
          %v3440 = vsel %vm546, %v3319, %v3374
          %v3441 = vsel %vm1494, %v3430, %v3398
          %v3442 = vsel %vm1494, %v3431, %v3400
          %v3443 = vsel %vm1494, %v3432, %v3402
          %v3444 = vsel %vm1494, %v3433, %v3404
          %v3445 = vsel %vm1494, %v3434, %v3406
          %v3446 = vsel %vm1494, %v3435, %v3408
          %v3447 = vsel %vm1494, %v3436, %v3410
          %v3448 = vsel %vm1494, %v3437, %v3412
          %v3449 = vsel %vm1494, %v3438, %v3414
          %v3450 = vsel %vm1494, %v3439, %v3416
          %v3451 = vsel %vm1494, %v3440, %v3418
          %s3452 = scalar_lea.vmem %s3, 96
          %v3453 = vld [vmem:[%s3452] sm:$0xff]
          %v3454 = vld [vmem:[%s3452 + $0x8] sm:$0xff]
          %v3455 = vld [vmem:[%s3452 + $0x10] sm:$0xff]
          %v3456 = vld [vmem:[%s3452 + $0x18] sm:$0xff]
          %v3457 = vld [vmem:[%s3452 + $0x20] sm:$0xff]
          %v3458 = vld [vmem:[%s3452 + $0x28] sm:$0xff]
          %v3460 = vsel %vm3002, %v3441, 0
          %v3463 = vsel %vm3002, %v3442, 0
          %v3466 = vsel %vm3002, %v3443, 0
          %v3469 = vsel %vm3002, %v3444, 0
          %v3472 = vsel %vm3002, %v3445, 0
          %v3475 = vsel %vm3002, %v3446, 0
          %v3478 = vsel %vm3002, %v3447, 0
          %v3481 = vsel %vm3002, %v3448, 0
          %v3484 = vsel %vm3002, %v3449, 0
          %v3487 = vsel %vm3002, %v3450, 0
          %v3490 = vsel %vm3002, %v3451, 0
          %3492 = vmatprep.subr.mxu0 0.0
          %3493 = vmatpush1.msra.mxu0 %v3453
          %3494 = vmatprep.subr.mxu0 0.0
          %3495 = vmatpush1.msra.mxu0 %v3454
          %3496 = vmatprep.subr.mxu0 0.0
          %3497 = vmatpush1.msra.mxu0 %v3455
          %3498 = vmatprep.subr.mxu0 0.0
          %3499 = vmatpush1.msra.mxu0 %v3456
          %3500 = vmatprep.subr.mxu0 0.0
          %3501 = vmatpush1.msra.mxu0 %v3457
          %3502 = vmatprep.subr.mxu0 0.0
          %3503 = vmatpush1.msra.mxu0 %v3458
          %3504 = vmatprep.subr.mxu0 0.0
          %3505 = vmatpush1.msra.mxu0 0.0
          %3506 = vmatprep.subr.mxu0 0.0
          %3507 = vmatpush1.msra.mxu0 0.0
          %3508 = vmatprep.subr.mxu0 0.0
          %3509 = vmatpush1.msra.mxu0 0.0
          %3510 = vmatprep.subr.mxu0 0.0
          %3511 = vmatpush1.msra.mxu0 0.0
          %3512 = vmatprep.subr.mxu0 0.0
          %3513 = vmatpush1.msra.mxu0 0.0
          %3514 = vmatprep.subr.mxu0 0.0
          %3515 = vmatpush1.msra.mxu0 0.0
          %3516 = vmatprep.subr.mxu0 0.0
          %3517 = vmatpush1.msra.mxu0 0.0
          %3518 = vmatprep.subr.mxu0 0.0
          %3519 = vmatpush1.msra.mxu0 0.0
          %3520 = vmatprep.subr.mxu0 0.0
          %3521 = vmatpush1.msra.mxu0 0.0
          %3522 = vmatprep.subr.mxu0 0.0
          %3523 = vmatpush1.msra.mxu0 0.0
          %3524 = vmatprep.subr.mxu0 0.0
          %3525 = vmatpush1.msra.mxu0 0.0
          %3526 = vmatprep.subr.mxu0 0.0
          %3527 = vmatpush1.msra.mxu0 0.0
          %3528 = vmatprep.subr.mxu0 0.0
          %3529 = vmatpush1.msra.mxu0 0.0
          %3530 = vmatprep.subr.mxu0 0.0
          %3531 = vmatpush1.msra.mxu0 0.0
          %3532 = vmatprep.subr.mxu0 0.0
          %3533 = vmatpush1.msra.mxu0 0.0
          %3534 = vmatprep.subr.mxu0 0.0
          %3535 = vmatpush1.msra.mxu0 0.0
          %3536 = vmatprep.subr.mxu0 0.0
          %3537 = vmatpush1.msra.mxu0 0.0
          %3538 = vmatprep.subr.mxu0 0.0
          %3539 = vmatpush1.msra.mxu0 0.0
          %3540 = vmatprep.subr.mxu0 0.0
          %3541 = vmatpush1.msra.mxu0 0.0
          %3542 = vmatprep.subr.mxu0 0.0
          %3543 = vmatpush1.msra.mxu0 0.0
          %3544 = vmatprep.subr.mxu0 0.0
          %3545 = vmatpush1.msra.mxu0 0.0
          %3546 = vmatprep.subr.mxu0 0.0
          %3547 = vmatpush1.msra.mxu0 0.0
          %3548 = vmatprep.subr.mxu0 0.0
          %3549 = vmatpush1.msra.mxu0 0.0
          %3550 = vmatprep.subr.mxu0 0.0
          %3551 = vmatpush1.msra.mxu0 0.0
          %3552 = vmatprep.subr.mxu0 0.0
          %3553 = vmatpush1.msra.mxu0 0.0
          %3554 = vmatprep.subr.mxu0 0.0
          %3555 = vmatpush1.msra.mxu0 0.0
          %3556 = vmatprep.mubr.f32.mxu0 0.0
          %3557 = vmatmul.mubr.f32.gmra.mrb[0].mxu0 %v3460
          %v3558 = vpop.f32.mrb[0].mxu0
          %v3559 = vadd.f32 0.0, %v3558
          %v3560 = vpop.f32.mrb[0].mxu0
          %3561 = vmatprep.mubr.f32.mxu0 0.0
          %3562 = vmatmul.mubr.f32.gmra.mrb[0].mxu0 %v3463
          %v3563 = vpop.f32.mrb[0].mxu0
          %v3564 = vadd.f32 0.0, %v3563
          %v3565 = vpop.f32.mrb[0].mxu0
          %3566 = vmatprep.mubr.f32.mxu0 0.0
          %3567 = vmatmul.mubr.f32.gmra.mrb[0].mxu0 %v3466
          %v3568 = vpop.f32.mrb[0].mxu0
          %v3569 = vadd.f32 0.0, %v3568
          %v3570 = vpop.f32.mrb[0].mxu0
          %3571 = vmatprep.mubr.f32.mxu0 0.0
          %3572 = vmatmul.mubr.f32.gmra.mrb[0].mxu0 %v3469
          %v3573 = vpop.f32.mrb[0].mxu0
          %v3574 = vadd.f32 0.0, %v3573
          %v3575 = vpop.f32.mrb[0].mxu0
          %3576 = vmatprep.mubr.f32.mxu0 0.0
          %3577 = vmatmul.mubr.f32.gmra.mrb[0].mxu0 %v3472
          %v3578 = vpop.f32.mrb[0].mxu0
          %v3579 = vadd.f32 0.0, %v3578
          %v3580 = vpop.f32.mrb[0].mxu0
          %3581 = vmatprep.mubr.f32.mxu0 0.0
          %3582 = vmatmul.mubr.f32.gmra.mrb[0].mxu0 %v3475
          %v3583 = vpop.f32.mrb[0].mxu0
          %v3584 = vadd.f32 0.0, %v3583
          %v3585 = vpop.f32.mrb[0].mxu0
          %3586 = vmatprep.mubr.f32.mxu0 0.0
          %3587 = vmatmul.mubr.f32.gmra.mrb[0].mxu0 %v3478
          %v3588 = vpop.f32.mrb[0].mxu0
          %v3589 = vadd.f32 0.0, %v3588
          %v3590 = vpop.f32.mrb[0].mxu0
          %3591 = vmatprep.mubr.f32.mxu0 0.0
          %3592 = vmatmul.mubr.f32.gmra.mrb[0].mxu0 %v3481
          %v3593 = vpop.f32.mrb[0].mxu0
          %v3594 = vadd.f32 0.0, %v3593
          %v3595 = vpop.f32.mrb[0].mxu0
          %3596 = vmatprep.mubr.f32.mxu0 0.0
          %3597 = vmatmul.mubr.f32.gmra.mrb[0].mxu0 %v3484
          %v3598 = vpop.f32.mrb[0].mxu0
          %v3599 = vadd.f32 0.0, %v3598
          %v3600 = vpop.f32.mrb[0].mxu0
          %3601 = vmatprep.mubr.f32.mxu0 0.0
          %3602 = vmatmul.mubr.f32.gmra.mrb[0].mxu0 %v3487
          %v3603 = vpop.f32.mrb[0].mxu0
          %v3604 = vadd.f32 0.0, %v3603
          %v3605 = vpop.f32.mrb[0].mxu0
          %3606 = vmatprep.mubr.f32.mxu0 0.0
          %3607 = vmatmul.mubr.f32.gmra.mrb[0].mxu0 %v3490
          %v3608 = vpop.f32.mrb[0].mxu0
          %v3609 = vadd.f32 0.0, %v3608
          %v3610 = vpop.f32.mrb[0].mxu0
          %3611 = vdwg.mxu0
          %v3612 = vadd.f32 %v3256, %v3559
          %v3613 = vadd.f32 %v3261, %v3564
          %v3614 = vadd.f32 %v3266, %v3569
          %v3615 = vadd.f32 %v3271, %v3574
          %v3616 = vadd.f32 %v3276, %v3579
          %v3617 = vadd.f32 %v3281, %v3584
          %v3618 = vadd.f32 %v3286, %v3589
          %v3619 = vadd.f32 %v3291, %v3594
          %v3620 = vadd.f32 %v3296, %v3599
          %v3621 = vadd.f32 %v3301, %v3604
          %v3622 = vadd.f32 %v3306, %v3609
          %v3624 = vlaneseq
          %v3625 = vshrl.u32 %v3624, 7
          %v3626 = vsub.s32 0, %v3625
          %v3627 = vrot.slane %v2688, %v3626
          %v3629 = vadd.f32 %v3612, %v3627
          %v3630 = vadd.f32 %v3613, %v3627
          %v3631 = vadd.f32 %v3614, %v3627
          %v3632 = vadd.f32 %v3615, %v3627
          %v3633 = vadd.f32 %v3616, %v3627
          %v3634 = vadd.f32 %v3617, %v3627
          %v3635 = vadd.f32 %v3618, %v3627
          %v3636 = vadd.f32 %v3619, %v3627
          %v3637 = vadd.f32 %v3620, %v3627
          %v3638 = vadd.f32 %v3621, %v3627
          %v3639 = vadd.f32 %v3622, %v3627
          %vm3640 = vcmp.gt.f32.partialorder %v3629, 0.0
          %vm3641 = vcmp.gt.f32.partialorder %v3630, 0.0
          %vm3642 = vcmp.gt.f32.partialorder %v3631, 0.0
          %vm3643 = vcmp.gt.f32.partialorder %v3632, 0.0
          %vm3644 = vcmp.gt.f32.partialorder %v3633, 0.0
          %vm3645 = vcmp.gt.f32.partialorder %v3634, 0.0
          %vm3646 = vcmp.gt.f32.partialorder %v3635, 0.0
          %vm3647 = vcmp.gt.f32.partialorder %v3636, 0.0
          %vm3648 = vcmp.gt.f32.partialorder %v3637, 0.0
          %vm3649 = vcmp.gt.f32.partialorder %v3638, 0.0
          %vm3650 = vcmp.gt.f32.partialorder %v3639, 0.0
          %v3651 = vmul.f32 %v3629, 0.25
          %v3652 = vmul.f32 %v3630, 0.25
          %v3653 = vmul.f32 %v3631, 0.25
          %v3654 = vmul.f32 %v3632, 0.25
          %v3655 = vmul.f32 %v3633, 0.25
          %v3656 = vmul.f32 %v3634, 0.25
          %v3657 = vmul.f32 %v3635, 0.25
          %v3658 = vmul.f32 %v3636, 0.25
          %v3659 = vmul.f32 %v3637, 0.25
          %v3660 = vmul.f32 %v3638, 0.25
          %v3661 = vmul.f32 %v3639, 0.25
          %v3662 = vsel %vm3640, %v3629, %v3651
          %v3663 = vsel %vm3641, %v3630, %v3652
          %v3664 = vsel %vm3642, %v3631, %v3653
          %v3665 = vsel %vm3643, %v3632, %v3654
          %v3666 = vsel %vm3644, %v3633, %v3655
          %v3667 = vsel %vm3645, %v3634, %v3656
          %v3668 = vsel %vm3646, %v3635, %v3657
          %v3669 = vsel %vm3647, %v3636, %v3658
          %v3670 = vsel %vm3648, %v3637, %v3659
          %v3671 = vsel %vm3649, %v3638, %v3660
          %v3672 = vsel %vm3650, %v3639, %v3661
          %s3673 = scalar_lea.vmem [#allocation3], %s2709
          %3674 = vst.msk [vmem:[%s3673 + $0x1] sm:$0xff] %vm546, %v3662
          %3675 = vst.msk [vmem:[%s3673 + $0x9] sm:$0xff] %vm546, %v3663
          %3676 = vst.msk [vmem:[%s3673 + $0x11] sm:$0xff] %vm546, %v3664
          %3677 = vst.msk [vmem:[%s3673 + $0x19] sm:$0xff] %vm546, %v3665
          %3678 = vst.msk [vmem:[%s3673 + $0x21] sm:$0xff] %vm546, %v3666
          %3679 = vst.msk [vmem:[%s3673 + $0x29] sm:$0xff] %vm546, %v3667
          %3680 = vst.msk [vmem:[%s3673 + $0x31] sm:$0xff] %vm546, %v3668
          %3681 = vst.msk [vmem:[%s3673 + $0x39] sm:$0xff] %vm546, %v3669
          %3682 = vst.msk [vmem:[%s3673 + $0x41] sm:$0xff] %vm546, %v3670
          %3683 = vst.msk [vmem:[%s3673 + $0x49] sm:$0xff] %vm546, %v3671
          %vm3684 = vcmask 125952
          %3685 = vst.msk [vmem:[%s3673 + $0x51] sm:$0xf] %vm3684, %v3672
        $region100: #{hnet_forward.1} parent=87 // loop_footer
          %s2694 = sadd.s32 1, %s2690
        $region101: #{hnet_forward.1} parent=87 // loop_footer_branch
          %2689 = sbr.rel target = $region97
        $region102: #{hnet_forward.1} parent=87 // loop_exit
          _
        loop: start=0, step=1, limit=42
        $region103: #{hnet_forward.1} parent=87 // loop_pre_header
          _
        $region104: #{hnet_forward.1} parent=87 // loop_header
          %s3687 = sphi 0, %s3691
          %p3688 = scmp.ge.s32.totalorder %s3687, 42
        $region105: #{hnet_forward.1} parent=87 // loop_header_branch
          %3690 = sbr.rel (%p3688) target = $region109
        $region106: #{hnet_forward.1} parent=87 // loop_body
          %s3692 = smul.u32 %s3687, 2
          %s3693 = smul.u32 %s3692, 88
          %s3694 = scalar_lea.vmem [#allocation3], %s3693
          %v3695 = vld [vmem:[%s3694] sm:$0xff]
          %v3696 = vld [vmem:[%s3694 + $0x8] sm:$0xff]
          %v3697 = vld [vmem:[%s3694 + $0x10] sm:$0xff]
          %v3698 = vld [vmem:[%s3694 + $0x18] sm:$0xff]
          %v3699 = vld [vmem:[%s3694 + $0x20] sm:$0xff]
          %v3700 = vld [vmem:[%s3694 + $0x28] sm:$0xff]
          %v3701 = vld [vmem:[%s3694 + $0x30] sm:$0xff]
          %v3702 = vld [vmem:[%s3694 + $0x38] sm:$0xff]
          %v3703 = vld [vmem:[%s3694 + $0x40] sm:$0xff]
          %v3704 = vld [vmem:[%s3694 + $0x48] sm:$0xff]
          %v3705 = vld [vmem:[%s3694 + $0x50] sm:$0x3f]
          %s3706 = sadd.s32 %s3692, 1
          %s3707 = smul.u32 %s3706, 88
          %s3708 = scalar_lea.vmem [#allocation3], %s3707
          %v3709 = vld [vmem:[%s3708] sm:$0xff]
          %v3710 = vld [vmem:[%s3708 + $0x8] sm:$0xff]
          %v3711 = vld [vmem:[%s3708 + $0x10] sm:$0xff]
          %v3712 = vld [vmem:[%s3708 + $0x18] sm:$0xff]
          %v3713 = vld [vmem:[%s3708 + $0x20] sm:$0xff]
          %v3714 = vld [vmem:[%s3708 + $0x28] sm:$0xff]
          %v3715 = vld [vmem:[%s3708 + $0x30] sm:$0xff]
          %v3716 = vld [vmem:[%s3708 + $0x38] sm:$0xff]
          %v3717 = vld [vmem:[%s3708 + $0x40] sm:$0xff]
          %v3718 = vld [vmem:[%s3708 + $0x48] sm:$0xff]
          %v3719 = vld [vmem:[%s3708 + $0x50] sm:$0x3f]
          %v3720 = vmax.f32 %v3695, %v3709
          %v3721 = vmax.f32 %v3696, %v3710
          %v3722 = vmax.f32 %v3697, %v3711
          %v3723 = vmax.f32 %v3698, %v3712
          %v3724 = vmax.f32 %v3699, %v3713
          %v3725 = vmax.f32 %v3700, %v3714
          %v3726 = vmax.f32 %v3701, %v3715
          %v3727 = vmax.f32 %v3702, %v3716
          %v3728 = vmax.f32 %v3703, %v3717
          %v3729 = vmax.f32 %v3704, %v3718
          %v3730 = vmax.f32 %v3705, %v3719
          %s3731 = sadd.s32 %s3692, 2
          %s3732 = smul.u32 %s3731, 88
          %s3733 = scalar_lea.vmem [#allocation3], %s3732
          %v3734 = vld [vmem:[%s3733] sm:$0xff]
          %v3735 = vld [vmem:[%s3733 + $0x8] sm:$0xff]
          %v3736 = vld [vmem:[%s3733 + $0x10] sm:$0xff]
          %v3737 = vld [vmem:[%s3733 + $0x18] sm:$0xff]
          %v3738 = vld [vmem:[%s3733 + $0x20] sm:$0xff]
          %v3739 = vld [vmem:[%s3733 + $0x28] sm:$0xff]
          %v3740 = vld [vmem:[%s3733 + $0x30] sm:$0xff]
          %v3741 = vld [vmem:[%s3733 + $0x38] sm:$0xff]
          %v3742 = vld [vmem:[%s3733 + $0x40] sm:$0xff]
          %v3743 = vld [vmem:[%s3733 + $0x48] sm:$0xff]
          %v3744 = vld [vmem:[%s3733 + $0x50] sm:$0x3f]
          %v3745 = vmax.f32 %v3720, %v3734
          %v3746 = vmax.f32 %v3721, %v3735
          %v3747 = vmax.f32 %v3722, %v3736
          %v3748 = vmax.f32 %v3723, %v3737
          %v3749 = vmax.f32 %v3724, %v3738
          %v3750 = vmax.f32 %v3725, %v3739
          %v3751 = vmax.f32 %v3726, %v3740
          %v3752 = vmax.f32 %v3727, %v3741
          %v3753 = vmax.f32 %v3728, %v3742
          %v3754 = vmax.f32 %v3729, %v3743
          %v3755 = vmax.f32 %v3730, %v3744
          %3756 = vst.msk [vmem:[#allocation11] sm:$0xff] %vm546, %v3745
          %3757 = vst.msk [vmem:[#allocation11 + $0x8] sm:$0xff] %vm546, %v3746
          %3758 = vst.msk [vmem:[#allocation11 + $0x10] sm:$0xff] %vm546, %v3747
          %3759 = vst.msk [vmem:[#allocation11 + $0x18] sm:$0xff] %vm546, %v3748
          %3760 = vst.msk [vmem:[#allocation11 + $0x20] sm:$0xff] %vm546, %v3749
          %3761 = vst.msk [vmem:[#allocation11 + $0x28] sm:$0xff] %vm546, %v3750
          %3762 = vst.msk [vmem:[#allocation11 + $0x30] sm:$0xff] %vm546, %v3751
          %3763 = vst.msk [vmem:[#allocation11 + $0x38] sm:$0xff] %vm546, %v3752
          %3764 = vst.msk [vmem:[#allocation11 + $0x40] sm:$0xff] %vm546, %v3753
          %3765 = vst.msk [vmem:[#allocation11 + $0x48] sm:$0xff] %vm546, %v3754
          %3766 = vst.msk [vmem:[#allocation11 + $0x50] sm:$0x3f] %vm557, %v3755
          %v3767 = vld [vmem:[#allocation11] ss:$2 sm:$0xff]
          %s3768 = scalar_lea.vmem [#allocation11], 16
          %v3769 = vld [vmem:[%s3768] ss:$2 sm:$0xff]
          %s3770 = scalar_lea.vmem [#allocation11], 32
          %v3771 = vld [vmem:[%s3770] ss:$2 sm:$0xff]
          %s3772 = scalar_lea.vmem [#allocation11], 48
          %v3773 = vld [vmem:[%s3772] ss:$2 sm:$0xff]
          %s3774 = scalar_lea.vmem [#allocation11], 64
          %v3775 = vld [vmem:[%s3774] ss:$2 sm:$0xff]
          %s3776 = scalar_lea.vmem [#allocation11], 80
          %v3777 = vld [vmem:[%s3776] ss:$2 sm:$0x3]
          %s3778 = scalar_lea.vmem [#allocation11], 1
          %v3779 = vld [vmem:[%s3778] ss:$2 sm:$0xff]
          %s3780 = scalar_lea.vmem [#allocation11], 17
          %v3781 = vld [vmem:[%s3780] ss:$2 sm:$0xff]
          %s3782 = scalar_lea.vmem [#allocation11], 33
          %v3783 = vld [vmem:[%s3782] ss:$2 sm:$0xff]
          %s3784 = scalar_lea.vmem [#allocation11], 49
          %v3785 = vld [vmem:[%s3784] ss:$2 sm:$0xff]
          %s3786 = scalar_lea.vmem [#allocation11], 65
          %v3787 = vld [vmem:[%s3786] ss:$2 sm:$0xff]
          %s3788 = scalar_lea.vmem [#allocation11], 81
          %v3789 = vld [vmem:[%s3788] ss:$2 sm:$0x3]
          %v3790 = vmax.f32 %v3767, %v3779
          %v3791 = vmax.f32 %v3769, %v3781
          %v3792 = vmax.f32 %v3771, %v3783
          %v3793 = vmax.f32 %v3773, %v3785
          %v3794 = vmax.f32 %v3775, %v3787
          %v3795 = vmax.f32 %v3777, %v3789
          %s3796 = scalar_lea.vmem [#allocation11], 2
          %v3797 = vld [vmem:[%s3796] ss:$2 sm:$0xff]
          %s3798 = scalar_lea.vmem [#allocation11], 18
          %v3799 = vld [vmem:[%s3798] ss:$2 sm:$0xff]
          %s3800 = scalar_lea.vmem [#allocation11], 34
          %v3801 = vld [vmem:[%s3800] ss:$2 sm:$0xff]
          %s3802 = scalar_lea.vmem [#allocation11], 50
          %v3803 = vld [vmem:[%s3802] ss:$2 sm:$0xff]
          %s3804 = scalar_lea.vmem [#allocation11], 66
          %v3805 = vld [vmem:[%s3804] ss:$2 sm:$0xff]
          %s3806 = scalar_lea.vmem [#allocation11], 82
          %v3807 = vld [vmem:[%s3806] ss:$2 sm:$0x3]
          %v3808 = vmax.f32 %v3790, %v3797
          %v3809 = vmax.f32 %v3791, %v3799
          %v3810 = vmax.f32 %v3792, %v3801
          %v3811 = vmax.f32 %v3793, %v3803
          %v3812 = vmax.f32 %v3794, %v3805
          %v3813 = vmax.f32 %v3795, %v3807
          %s3814 = smul.u32 %s3687, 48
          %s3815 = scalar_lea.vmem [#allocation4], %s3814
          %3816 = vst.msk [vmem:[%s3815] sm:$0xff] %vm546, %v3808
          %3817 = vst.msk [vmem:[%s3815 + $0x8] sm:$0xff] %vm546, %v3809
          %3818 = vst.msk [vmem:[%s3815 + $0x10] sm:$0xff] %vm546, %v3810
          %3819 = vst.msk [vmem:[%s3815 + $0x18] sm:$0xff] %vm546, %v3811
          %3820 = vst.msk [vmem:[%s3815 + $0x20] sm:$0xff] %vm546, %v3812
          %vm3821 = vcmask 123904
          %3822 = vst.msk [vmem:[%s3815 + $0x28] sm:$0x3] %vm3821, %v3813
        $region107: #{hnet_forward.1} parent=87 // loop_footer
          %s3691 = sadd.s32 1, %s3687
        $region108: #{hnet_forward.1} parent=87 // loop_footer_branch
          %3686 = sbr.rel target = $region104
        $region109: #{hnet_forward.1} parent=87 // loop_exit
          _
        %v3823 = vld [vmem:[%s6] sm:$0x1]
        loop: start=0, step=1, limit=40
        $region110: #{hnet_forward.1} parent=87 // loop_pre_header
          _
        $region111: #{hnet_forward.1} parent=87 // loop_header
          %s3825 = sphi 0, %s3829
          %p3826 = scmp.ge.s32.totalorder %s3825, 40
        $region112: #{hnet_forward.1} parent=87 // loop_header_branch
          %3828 = sbr.rel (%p3826) target = $region116
        $region113: #{hnet_forward.1} parent=87 // loop_body
          %s3830 = smul.u32 %s3825, 48
          %s3831 = scalar_lea.vmem [#allocation4], %s3830
          %v3832 = vld [vmem:[%s3831] sm:$0xff]
          %v3833 = vld [vmem:[%s3831 + $0x8] sm:$0xff]
          %v3834 = vld [vmem:[%s3831 + $0x10] sm:$0xff]
          %v3835 = vld [vmem:[%s3831 + $0x18] sm:$0xff]
          %v3836 = vld [vmem:[%s3831 + $0x20] sm:$0xff]
          %s3837 = sadd.s32 %s3825, 1
          %s3838 = smul.u32 %s3837, 48
          %s3839 = scalar_lea.vmem [#allocation4], %s3838
          %v3840 = vld [vmem:[%s3839] sm:$0xff]
          %v3841 = vld [vmem:[%s3839 + $0x8] sm:$0xff]
          %v3842 = vld [vmem:[%s3839 + $0x10] sm:$0xff]
          %v3843 = vld [vmem:[%s3839 + $0x18] sm:$0xff]
          %v3844 = vld [vmem:[%s3839 + $0x20] sm:$0xff]
          %s3845 = sadd.s32 %s3825, 2
          %s3846 = smul.u32 %s3845, 48
          %s3847 = scalar_lea.vmem [#allocation4], %s3846
          %v3848 = vld [vmem:[%s3847] sm:$0xff]
          %v3849 = vld [vmem:[%s3847 + $0x8] sm:$0xff]
          %v3850 = vld [vmem:[%s3847 + $0x10] sm:$0xff]
          %v3851 = vld [vmem:[%s3847 + $0x18] sm:$0xff]
          %v3852 = vld [vmem:[%s3847 + $0x20] sm:$0xff]
          %3858 = vrot.lane.b32.xlu0 %v3840, 16
          %v3859 = vpop.permute.xlu0 %3858
          %3860 = vrot.lane.b32.xlu0 %v3841, 16
          %v3861 = vpop.permute.xlu0 %3860
          %3862 = vrot.lane.b32.xlu0 %v3842, 16
          %v3863 = vpop.permute.xlu0 %3862
          %3864 = vrot.lane.b32.xlu0 %v3843, 16
          %v3865 = vpop.permute.xlu0 %3864
          %3866 = vrot.lane.b32.xlu0 %v3844, 16
          %v3867 = vpop.permute.xlu0 %3866
          %3878 = vrot.lane.b32.xlu0 %v3848, 32
          %v3879 = vpop.permute.xlu0 %3878
          %3880 = vrot.lane.b32.xlu0 %v3849, 32
          %v3881 = vpop.permute.xlu0 %3880
          %3882 = vrot.lane.b32.xlu0 %v3850, 32
          %v3883 = vpop.permute.xlu0 %3882
          %3884 = vrot.lane.b32.xlu0 %v3851, 32
          %v3885 = vpop.permute.xlu0 %3884
          %3886 = vrot.lane.b32.xlu0 %v3852, 32
          %v3887 = vpop.permute.xlu0 %3886
          %v3893 = vsel %vm546, %v3832, %v3859
          %v3894 = vsel %vm546, %v3833, %v3861
          %v3895 = vsel %vm546, %v3834, %v3863
          %v3896 = vsel %vm546, %v3835, %v3865
          %v3897 = vsel %vm546, %v3836, %v3867
          %v3898 = vsel %vm1494, %v3893, %v3879
          %v3899 = vsel %vm1494, %v3894, %v3881
          %v3900 = vsel %vm1494, %v3895, %v3883
          %v3901 = vsel %vm1494, %v3896, %v3885
          %v3902 = vsel %vm1494, %v3897, %v3887
          %v3903 = vld [vmem:[%s5] sm:$0xff]
          %v3904 = vld [vmem:[%s5 + $0x8] sm:$0xff]
          %v3905 = vld [vmem:[%s5 + $0x10] sm:$0xff]
          %v3906 = vld [vmem:[%s5 + $0x18] sm:$0xff]
          %v3907 = vld [vmem:[%s5 + $0x20] sm:$0xff]
          %v3908 = vld [vmem:[%s5 + $0x28] sm:$0xff]
          %v3909 = vld [vmem:[%s3831 + $0x1] sm:$0xff]
          %v3910 = vld [vmem:[%s3831 + $0x9] sm:$0xff]
          %v3911 = vld [vmem:[%s3831 + $0x11] sm:$0xff]
          %v3912 = vld [vmem:[%s3831 + $0x19] sm:$0xff]
          %v3913 = vld [vmem:[%s3831 + $0x21] sm:$0xff]
          %v3914 = vld [vmem:[%s3839 + $0x1] sm:$0xff]
          %v3915 = vld [vmem:[%s3839 + $0x9] sm:$0xff]
          %v3916 = vld [vmem:[%s3839 + $0x11] sm:$0xff]
          %v3917 = vld [vmem:[%s3839 + $0x19] sm:$0xff]
          %v3918 = vld [vmem:[%s3839 + $0x21] sm:$0xff]
          %v3919 = vld [vmem:[%s3847 + $0x1] sm:$0xff]
          %v3920 = vld [vmem:[%s3847 + $0x9] sm:$0xff]
          %v3921 = vld [vmem:[%s3847 + $0x11] sm:$0xff]
          %v3922 = vld [vmem:[%s3847 + $0x19] sm:$0xff]
          %v3923 = vld [vmem:[%s3847 + $0x21] sm:$0xff]
          %3929 = vrot.lane.b32.xlu0 %v3914, 16
          %v3930 = vpop.permute.xlu0 %3929
          %3931 = vrot.lane.b32.xlu0 %v3915, 16
          %v3932 = vpop.permute.xlu0 %3931
          %3933 = vrot.lane.b32.xlu0 %v3916, 16
          %v3934 = vpop.permute.xlu0 %3933
          %3935 = vrot.lane.b32.xlu0 %v3917, 16
          %v3936 = vpop.permute.xlu0 %3935
          %3937 = vrot.lane.b32.xlu0 %v3918, 16
          %v3938 = vpop.permute.xlu0 %3937
          %3949 = vrot.lane.b32.xlu0 %v3919, 32
          %v3950 = vpop.permute.xlu0 %3949
          %3951 = vrot.lane.b32.xlu0 %v3920, 32
          %v3952 = vpop.permute.xlu0 %3951
          %3953 = vrot.lane.b32.xlu0 %v3921, 32
          %v3954 = vpop.permute.xlu0 %3953
          %3955 = vrot.lane.b32.xlu0 %v3922, 32
          %v3956 = vpop.permute.xlu0 %3955
          %3957 = vrot.lane.b32.xlu0 %v3923, 32
          %v3958 = vpop.permute.xlu0 %3957
          %v3964 = vsel %vm546, %v3909, %v3930
          %v3965 = vsel %vm546, %v3910, %v3932
          %v3966 = vsel %vm546, %v3911, %v3934
          %v3967 = vsel %vm546, %v3912, %v3936
          %v3968 = vsel %vm546, %v3913, %v3938
          %v3969 = vsel %vm1494, %v3964, %v3950
          %v3970 = vsel %vm1494, %v3965, %v3952
          %v3971 = vsel %vm1494, %v3966, %v3954
          %v3972 = vsel %vm1494, %v3967, %v3956
          %v3973 = vsel %vm1494, %v3968, %v3958
          %s3974 = scalar_lea.vmem %s5, 48
          %v3975 = vld [vmem:[%s3974] sm:$0xff]
          %v3976 = vld [vmem:[%s3974 + $0x8] sm:$0xff]
          %v3977 = vld [vmem:[%s3974 + $0x10] sm:$0xff]
          %v3978 = vld [vmem:[%s3974 + $0x18] sm:$0xff]
          %v3979 = vld [vmem:[%s3974 + $0x20] sm:$0xff]
          %v3980 = vld [vmem:[%s3974 + $0x28] sm:$0xff]
          %vm3981 = vcmask 392192
          %v3983 = vsel %vm3981, %v3969, 0
          %v3986 = vsel %vm3981, %v3970, 0
          %v3989 = vsel %vm3981, %v3971, 0
          %v3992 = vsel %vm3981, %v3972, 0
          %v3995 = vsel %vm3981, %v3973, 0
          %3997 = vmatprep.subr.mxu0 0.0
          %3998 = vmatpush1.msra.mxu0 %v3975
          %3999 = vmatprep.subr.mxu0 0.0
          %4000 = vmatpush1.msra.mxu0 %v3976
          %4001 = vmatprep.subr.mxu0 0.0
          %4002 = vmatpush1.msra.mxu0 %v3977
          %4003 = vmatprep.subr.mxu0 0.0
          %4004 = vmatpush1.msra.mxu0 %v3978
          %4005 = vmatprep.subr.mxu0 0.0
          %4006 = vmatpush1.msra.mxu0 %v3979
          %4007 = vmatprep.subr.mxu0 0.0
          %4008 = vmatpush1.msra.mxu0 %v3980
          %4009 = vmatprep.subr.mxu0 0.0
          %4010 = vmatpush1.msra.mxu0 0.0
          %4011 = vmatprep.subr.mxu0 0.0
          %4012 = vmatpush1.msra.mxu0 0.0
          %4013 = vmatprep.subr.mxu0 0.0
          %4014 = vmatpush1.msra.mxu0 0.0
          %4015 = vmatprep.subr.mxu0 0.0
          %4016 = vmatpush1.msra.mxu0 0.0
          %4017 = vmatprep.subr.mxu0 0.0
          %4018 = vmatpush1.msra.mxu0 0.0
          %4019 = vmatprep.subr.mxu0 0.0
          %4020 = vmatpush1.msra.mxu0 0.0
          %4021 = vmatprep.subr.mxu0 0.0
          %4022 = vmatpush1.msra.mxu0 0.0
          %4023 = vmatprep.subr.mxu0 0.0
          %4024 = vmatpush1.msra.mxu0 0.0
          %4025 = vmatprep.subr.mxu0 0.0
          %4026 = vmatpush1.msra.mxu0 0.0
          %4027 = vmatprep.subr.mxu0 0.0
          %4028 = vmatpush1.msra.mxu0 0.0
          %4029 = vmatprep.subr.mxu0 0.0
          %4030 = vmatpush1.msra.mxu0 0.0
          %4031 = vmatprep.subr.mxu0 0.0
          %4032 = vmatpush1.msra.mxu0 0.0
          %4033 = vmatprep.subr.mxu0 0.0
          %4034 = vmatpush1.msra.mxu0 0.0
          %4035 = vmatprep.subr.mxu0 0.0
          %4036 = vmatpush1.msra.mxu0 0.0
          %4037 = vmatprep.subr.mxu0 0.0
          %4038 = vmatpush1.msra.mxu0 0.0
          %4039 = vmatprep.subr.mxu0 0.0
          %4040 = vmatpush1.msra.mxu0 0.0
          %4041 = vmatprep.subr.mxu0 0.0
          %4042 = vmatpush1.msra.mxu0 0.0
          %4043 = vmatprep.subr.mxu0 0.0
          %4044 = vmatpush1.msra.mxu0 0.0
          %4045 = vmatprep.subr.mxu0 0.0
          %4046 = vmatpush1.msra.mxu0 0.0
          %4047 = vmatprep.subr.mxu0 0.0
          %4048 = vmatpush1.msra.mxu0 0.0
          %4049 = vmatprep.subr.mxu0 0.0
          %4050 = vmatpush1.msra.mxu0 0.0
          %4051 = vmatprep.subr.mxu0 0.0
          %4052 = vmatpush1.msra.mxu0 0.0
          %4053 = vmatprep.subr.mxu0 0.0
          %4054 = vmatpush1.msra.mxu0 0.0
          %4055 = vmatprep.subr.mxu0 0.0
          %4056 = vmatpush1.msra.mxu0 0.0
          %4057 = vmatprep.subr.mxu0 0.0
          %4058 = vmatpush1.msra.mxu0 0.0
          %4059 = vmatprep.subr.mxu0 0.0
          %4060 = vmatpush1.msra.mxu0 0.0
          %4061 = vmatprep.mubr.f32.mxu0 0.0
          %4062 = vmatmul.mubr.f32.gmra.mrb[0].mxu0 %v3983
          %v4063 = vpop.f32.mrb[0].mxu0
          %v4064 = vadd.f32 0.0, %v4063
          %v4065 = vpop.f32.mrb[0].mxu0
          %4066 = vmatprep.mubr.f32.mxu0 0.0
          %4067 = vmatmul.mubr.f32.gmra.mrb[0].mxu0 %v3986
          %v4068 = vpop.f32.mrb[0].mxu0
          %v4069 = vadd.f32 0.0, %v4068
          %v4070 = vpop.f32.mrb[0].mxu0
          %4071 = vmatprep.mubr.f32.mxu0 0.0
          %4072 = vmatmul.mubr.f32.gmra.mrb[0].mxu0 %v3989
          %v4073 = vpop.f32.mrb[0].mxu0
          %v4074 = vadd.f32 0.0, %v4073
          %v4075 = vpop.f32.mrb[0].mxu0
          %4076 = vmatprep.mubr.f32.mxu0 0.0
          %4077 = vmatmul.mubr.f32.gmra.mrb[0].mxu0 %v3992
          %v4078 = vpop.f32.mrb[0].mxu0
          %v4079 = vadd.f32 0.0, %v4078
          %v4080 = vpop.f32.mrb[0].mxu0
          %4081 = vmatprep.mubr.f32.mxu0 0.0
          %4082 = vmatmul.mubr.f32.gmra.mrb[0].mxu0 %v3995
          %v4083 = vpop.f32.mrb[0].mxu0
          %v4084 = vadd.f32 0.0, %v4083
          %v4085 = vpop.f32.mrb[0].mxu0
          %4086 = vdwg.mxu0
          %v4088 = vsel %vm3981, %v3898, 0
          %v4091 = vsel %vm3981, %v3899, 0
          %v4094 = vsel %vm3981, %v3900, 0
          %v4097 = vsel %vm3981, %v3901, 0
          %v4100 = vsel %vm3981, %v3902, 0
          %4102 = vmatprep.subr.mxu0 0.0
          %4103 = vmatpush1.msra.mxu0 %v3903
          %4104 = vmatprep.subr.mxu0 0.0
          %4105 = vmatpush1.msra.mxu0 %v3904
          %4106 = vmatprep.subr.mxu0 0.0
          %4107 = vmatpush1.msra.mxu0 %v3905
          %4108 = vmatprep.subr.mxu0 0.0
          %4109 = vmatpush1.msra.mxu0 %v3906
          %4110 = vmatprep.subr.mxu0 0.0
          %4111 = vmatpush1.msra.mxu0 %v3907
          %4112 = vmatprep.subr.mxu0 0.0
          %4113 = vmatpush1.msra.mxu0 %v3908
          %4114 = vmatprep.subr.mxu0 0.0
          %4115 = vmatpush1.msra.mxu0 0.0
          %4116 = vmatprep.subr.mxu0 0.0
          %4117 = vmatpush1.msra.mxu0 0.0
          %4118 = vmatprep.subr.mxu0 0.0
          %4119 = vmatpush1.msra.mxu0 0.0
          %4120 = vmatprep.subr.mxu0 0.0
          %4121 = vmatpush1.msra.mxu0 0.0
          %4122 = vmatprep.subr.mxu0 0.0
          %4123 = vmatpush1.msra.mxu0 0.0
          %4124 = vmatprep.subr.mxu0 0.0
          %4125 = vmatpush1.msra.mxu0 0.0
          %4126 = vmatprep.subr.mxu0 0.0
          %4127 = vmatpush1.msra.mxu0 0.0
          %4128 = vmatprep.subr.mxu0 0.0
          %4129 = vmatpush1.msra.mxu0 0.0
          %4130 = vmatprep.subr.mxu0 0.0
          %4131 = vmatpush1.msra.mxu0 0.0
          %4132 = vmatprep.subr.mxu0 0.0
          %4133 = vmatpush1.msra.mxu0 0.0
          %4134 = vmatprep.subr.mxu0 0.0
          %4135 = vmatpush1.msra.mxu0 0.0
          %4136 = vmatprep.subr.mxu0 0.0
          %4137 = vmatpush1.msra.mxu0 0.0
          %4138 = vmatprep.subr.mxu0 0.0
          %4139 = vmatpush1.msra.mxu0 0.0
          %4140 = vmatprep.subr.mxu0 0.0
          %4141 = vmatpush1.msra.mxu0 0.0
          %4142 = vmatprep.subr.mxu0 0.0
          %4143 = vmatpush1.msra.mxu0 0.0
          %4144 = vmatprep.subr.mxu0 0.0
          %4145 = vmatpush1.msra.mxu0 0.0
          %4146 = vmatprep.subr.mxu0 0.0
          %4147 = vmatpush1.msra.mxu0 0.0
          %4148 = vmatprep.subr.mxu0 0.0
          %4149 = vmatpush1.msra.mxu0 0.0
          %4150 = vmatprep.subr.mxu0 0.0
          %4151 = vmatpush1.msra.mxu0 0.0
          %4152 = vmatprep.subr.mxu0 0.0
          %4153 = vmatpush1.msra.mxu0 0.0
          %4154 = vmatprep.subr.mxu0 0.0
          %4155 = vmatpush1.msra.mxu0 0.0
          %4156 = vmatprep.subr.mxu0 0.0
          %4157 = vmatpush1.msra.mxu0 0.0
          %4158 = vmatprep.subr.mxu0 0.0
          %4159 = vmatpush1.msra.mxu0 0.0
          %4160 = vmatprep.subr.mxu0 0.0
          %4161 = vmatpush1.msra.mxu0 0.0
          %4162 = vmatprep.subr.mxu0 0.0
          %4163 = vmatpush1.msra.mxu0 0.0
          %4164 = vmatprep.subr.mxu0 0.0
          %4165 = vmatpush1.msra.mxu0 0.0
          %4166 = vmatprep.mubr.f32.mxu0 0.0
          %4167 = vmatmul.mubr.f32.gmra.mrb[0].mxu0 %v4088
          %v4168 = vpop.f32.mrb[0].mxu0
          %v4169 = vadd.f32 %v4064, %v4168
          %v4170 = vpop.f32.mrb[0].mxu0
          %4171 = vmatprep.mubr.f32.mxu0 0.0
          %4172 = vmatmul.mubr.f32.gmra.mrb[0].mxu0 %v4091
          %v4173 = vpop.f32.mrb[0].mxu0
          %v4174 = vadd.f32 %v4069, %v4173
          %v4175 = vpop.f32.mrb[0].mxu0
          %4176 = vmatprep.mubr.f32.mxu0 0.0
          %4177 = vmatmul.mubr.f32.gmra.mrb[0].mxu0 %v4094
          %v4178 = vpop.f32.mrb[0].mxu0
          %v4179 = vadd.f32 %v4074, %v4178
          %v4180 = vpop.f32.mrb[0].mxu0
          %4181 = vmatprep.mubr.f32.mxu0 0.0
          %4182 = vmatmul.mubr.f32.gmra.mrb[0].mxu0 %v4097
          %v4183 = vpop.f32.mrb[0].mxu0
          %v4184 = vadd.f32 %v4079, %v4183
          %v4185 = vpop.f32.mrb[0].mxu0
          %4186 = vmatprep.mubr.f32.mxu0 0.0
          %4187 = vmatmul.mubr.f32.gmra.mrb[0].mxu0 %v4100
          %v4188 = vpop.f32.mrb[0].mxu0
          %v4189 = vadd.f32 %v4084, %v4188
          %v4190 = vpop.f32.mrb[0].mxu0
          %4191 = vdwg.mxu0
          %v4192 = vld [vmem:[%s3831 + $0x2] sm:$0xff]
          %v4193 = vld [vmem:[%s3831 + $0xa] sm:$0xff]
          %v4194 = vld [vmem:[%s3831 + $0x12] sm:$0xff]
          %v4195 = vld [vmem:[%s3831 + $0x1a] sm:$0xff]
          %v4196 = vld [vmem:[%s3831 + $0x22] sm:$0xff]
          %v4197 = vld [vmem:[%s3839 + $0x2] sm:$0xff]
          %v4198 = vld [vmem:[%s3839 + $0xa] sm:$0xff]
          %v4199 = vld [vmem:[%s3839 + $0x12] sm:$0xff]
          %v4200 = vld [vmem:[%s3839 + $0x1a] sm:$0xff]
          %v4201 = vld [vmem:[%s3839 + $0x22] sm:$0xff]
          %v4202 = vld [vmem:[%s3847 + $0x2] sm:$0xff]
          %v4203 = vld [vmem:[%s3847 + $0xa] sm:$0xff]
          %v4204 = vld [vmem:[%s3847 + $0x12] sm:$0xff]
          %v4205 = vld [vmem:[%s3847 + $0x1a] sm:$0xff]
          %v4206 = vld [vmem:[%s3847 + $0x22] sm:$0xff]
          %4212 = vrot.lane.b32.xlu0 %v4197, 16
          %v4213 = vpop.permute.xlu0 %4212
          %4214 = vrot.lane.b32.xlu0 %v4198, 16
          %v4215 = vpop.permute.xlu0 %4214
          %4216 = vrot.lane.b32.xlu0 %v4199, 16
          %v4217 = vpop.permute.xlu0 %4216
          %4218 = vrot.lane.b32.xlu0 %v4200, 16
          %v4219 = vpop.permute.xlu0 %4218
          %4220 = vrot.lane.b32.xlu0 %v4201, 16
          %v4221 = vpop.permute.xlu0 %4220
          %4232 = vrot.lane.b32.xlu0 %v4202, 32
          %v4233 = vpop.permute.xlu0 %4232
          %4234 = vrot.lane.b32.xlu0 %v4203, 32
          %v4235 = vpop.permute.xlu0 %4234
          %4236 = vrot.lane.b32.xlu0 %v4204, 32
          %v4237 = vpop.permute.xlu0 %4236
          %4238 = vrot.lane.b32.xlu0 %v4205, 32
          %v4239 = vpop.permute.xlu0 %4238
          %4240 = vrot.lane.b32.xlu0 %v4206, 32
          %v4241 = vpop.permute.xlu0 %4240
          %v4247 = vsel %vm546, %v4192, %v4213
          %v4248 = vsel %vm546, %v4193, %v4215
          %v4249 = vsel %vm546, %v4194, %v4217
          %v4250 = vsel %vm546, %v4195, %v4219
          %v4251 = vsel %vm546, %v4196, %v4221
          %v4252 = vsel %vm1494, %v4247, %v4233
          %v4253 = vsel %vm1494, %v4248, %v4235
          %v4254 = vsel %vm1494, %v4249, %v4237
          %v4255 = vsel %vm1494, %v4250, %v4239
          %v4256 = vsel %vm1494, %v4251, %v4241
          %s4257 = scalar_lea.vmem %s5, 96
          %v4258 = vld [vmem:[%s4257] sm:$0xff]
          %v4259 = vld [vmem:[%s4257 + $0x8] sm:$0xff]
          %v4260 = vld [vmem:[%s4257 + $0x10] sm:$0xff]
          %v4261 = vld [vmem:[%s4257 + $0x18] sm:$0xff]
          %v4262 = vld [vmem:[%s4257 + $0x20] sm:$0xff]
          %v4263 = vld [vmem:[%s4257 + $0x28] sm:$0xff]
          %v4265 = vsel %vm3981, %v4252, 0
          %v4268 = vsel %vm3981, %v4253, 0
          %v4271 = vsel %vm3981, %v4254, 0
          %v4274 = vsel %vm3981, %v4255, 0
          %v4277 = vsel %vm3981, %v4256, 0
          %4279 = vmatprep.subr.mxu0 0.0
          %4280 = vmatpush1.msra.mxu0 %v4258
          %4281 = vmatprep.subr.mxu0 0.0
          %4282 = vmatpush1.msra.mxu0 %v4259
          %4283 = vmatprep.subr.mxu0 0.0
          %4284 = vmatpush1.msra.mxu0 %v4260
          %4285 = vmatprep.subr.mxu0 0.0
          %4286 = vmatpush1.msra.mxu0 %v4261
          %4287 = vmatprep.subr.mxu0 0.0
          %4288 = vmatpush1.msra.mxu0 %v4262
          %4289 = vmatprep.subr.mxu0 0.0
          %4290 = vmatpush1.msra.mxu0 %v4263
          %4291 = vmatprep.subr.mxu0 0.0
          %4292 = vmatpush1.msra.mxu0 0.0
          %4293 = vmatprep.subr.mxu0 0.0
          %4294 = vmatpush1.msra.mxu0 0.0
          %4295 = vmatprep.subr.mxu0 0.0
          %4296 = vmatpush1.msra.mxu0 0.0
          %4297 = vmatprep.subr.mxu0 0.0
          %4298 = vmatpush1.msra.mxu0 0.0
          %4299 = vmatprep.subr.mxu0 0.0
          %4300 = vmatpush1.msra.mxu0 0.0
          %4301 = vmatprep.subr.mxu0 0.0
          %4302 = vmatpush1.msra.mxu0 0.0
          %4303 = vmatprep.subr.mxu0 0.0
          %4304 = vmatpush1.msra.mxu0 0.0
          %4305 = vmatprep.subr.mxu0 0.0
          %4306 = vmatpush1.msra.mxu0 0.0
          %4307 = vmatprep.subr.mxu0 0.0
          %4308 = vmatpush1.msra.mxu0 0.0
          %4309 = vmatprep.subr.mxu0 0.0
          %4310 = vmatpush1.msra.mxu0 0.0
          %4311 = vmatprep.subr.mxu0 0.0
          %4312 = vmatpush1.msra.mxu0 0.0
          %4313 = vmatprep.subr.mxu0 0.0
          %4314 = vmatpush1.msra.mxu0 0.0
          %4315 = vmatprep.subr.mxu0 0.0
          %4316 = vmatpush1.msra.mxu0 0.0
          %4317 = vmatprep.subr.mxu0 0.0
          %4318 = vmatpush1.msra.mxu0 0.0
          %4319 = vmatprep.subr.mxu0 0.0
          %4320 = vmatpush1.msra.mxu0 0.0
          %4321 = vmatprep.subr.mxu0 0.0
          %4322 = vmatpush1.msra.mxu0 0.0
          %4323 = vmatprep.subr.mxu0 0.0
          %4324 = vmatpush1.msra.mxu0 0.0
          %4325 = vmatprep.subr.mxu0 0.0
          %4326 = vmatpush1.msra.mxu0 0.0
          %4327 = vmatprep.subr.mxu0 0.0
          %4328 = vmatpush1.msra.mxu0 0.0
          %4329 = vmatprep.subr.mxu0 0.0
          %4330 = vmatpush1.msra.mxu0 0.0
          %4331 = vmatprep.subr.mxu0 0.0
          %4332 = vmatpush1.msra.mxu0 0.0
          %4333 = vmatprep.subr.mxu0 0.0
          %4334 = vmatpush1.msra.mxu0 0.0
          %4335 = vmatprep.subr.mxu0 0.0
          %4336 = vmatpush1.msra.mxu0 0.0
          %4337 = vmatprep.subr.mxu0 0.0
          %4338 = vmatpush1.msra.mxu0 0.0
          %4339 = vmatprep.subr.mxu0 0.0
          %4340 = vmatpush1.msra.mxu0 0.0
          %4341 = vmatprep.subr.mxu0 0.0
          %4342 = vmatpush1.msra.mxu0 0.0
          %4343 = vmatprep.mubr.f32.mxu0 0.0
          %4344 = vmatmul.mubr.f32.gmra.mrb[0].mxu0 %v4265
          %v4345 = vpop.f32.mrb[0].mxu0
          %v4346 = vadd.f32 0.0, %v4345
          %v4347 = vpop.f32.mrb[0].mxu0
          %4348 = vmatprep.mubr.f32.mxu0 0.0
          %4349 = vmatmul.mubr.f32.gmra.mrb[0].mxu0 %v4268
          %v4350 = vpop.f32.mrb[0].mxu0
          %v4351 = vadd.f32 0.0, %v4350
          %v4352 = vpop.f32.mrb[0].mxu0
          %4353 = vmatprep.mubr.f32.mxu0 0.0
          %4354 = vmatmul.mubr.f32.gmra.mrb[0].mxu0 %v4271
          %v4355 = vpop.f32.mrb[0].mxu0
          %v4356 = vadd.f32 0.0, %v4355
          %v4357 = vpop.f32.mrb[0].mxu0
          %4358 = vmatprep.mubr.f32.mxu0 0.0
          %4359 = vmatmul.mubr.f32.gmra.mrb[0].mxu0 %v4274
          %v4360 = vpop.f32.mrb[0].mxu0
          %v4361 = vadd.f32 0.0, %v4360
          %v4362 = vpop.f32.mrb[0].mxu0
          %4363 = vmatprep.mubr.f32.mxu0 0.0
          %4364 = vmatmul.mubr.f32.gmra.mrb[0].mxu0 %v4277
          %v4365 = vpop.f32.mrb[0].mxu0
          %v4366 = vadd.f32 0.0, %v4365
          %v4367 = vpop.f32.mrb[0].mxu0
          %4368 = vdwg.mxu0
          %v4369 = vadd.f32 %v4169, %v4346
          %v4370 = vadd.f32 %v4174, %v4351
          %v4371 = vadd.f32 %v4179, %v4356
          %v4372 = vadd.f32 %v4184, %v4361
          %v4373 = vadd.f32 %v4189, %v4366
          %v4375 = vlaneseq
          %v4376 = vshrl.u32 %v4375, 7
          %v4377 = vsub.s32 0, %v4376
          %v4378 = vrot.slane %v3823, %v4377
          %v4380 = vadd.f32 %v4369, %v4378
          %v4381 = vadd.f32 %v4370, %v4378
          %v4382 = vadd.f32 %v4371, %v4378
          %v4383 = vadd.f32 %v4372, %v4378
          %v4384 = vadd.f32 %v4373, %v4378
          %vm4385 = vcmp.gt.f32.partialorder %v4380, 0.0
          %vm4386 = vcmp.gt.f32.partialorder %v4381, 0.0
          %vm4387 = vcmp.gt.f32.partialorder %v4382, 0.0
          %vm4388 = vcmp.gt.f32.partialorder %v4383, 0.0
          %vm4389 = vcmp.gt.f32.partialorder %v4384, 0.0
          %v4390 = vmul.f32 %v4380, 0.25
          %v4391 = vmul.f32 %v4381, 0.25
          %v4392 = vmul.f32 %v4382, 0.25
          %v4393 = vmul.f32 %v4383, 0.25
          %v4394 = vmul.f32 %v4384, 0.25
          %v4395 = vsel %vm4385, %v4380, %v4390
          %v4396 = vsel %vm4386, %v4381, %v4391
          %v4397 = vsel %vm4387, %v4382, %v4392
          %v4398 = vsel %vm4388, %v4383, %v4393
          %v4399 = vsel %vm4389, %v4384, %v4394
          %s4400 = smul.u32 %s3825, 40
          %s4401 = scalar_lea.vmem [#allocation5], %s4400
          %4402 = vst.msk [vmem:[%s4401] sm:$0xff] %vm1494, %v4395
          %4403 = vst.msk [vmem:[%s4401 + $0x8] sm:$0xff] %vm1494, %v4396
          %4404 = vst.msk [vmem:[%s4401 + $0x10] sm:$0xff] %vm1494, %v4397
          %4405 = vst.msk [vmem:[%s4401 + $0x18] sm:$0xff] %vm1494, %v4398
          %4406 = vst.msk [vmem:[%s4401 + $0x20] sm:$0xff] %vm1494, %v4399
        $region114: #{hnet_forward.1} parent=87 // loop_footer
          %s3829 = sadd.s32 1, %s3825
        $region115: #{hnet_forward.1} parent=87 // loop_footer_branch
          %3824 = sbr.rel target = $region111
        $region116: #{hnet_forward.1} parent=87 // loop_exit
          _
        %v4407 = vld [vmem:[%s8] sm:$0x1]
        loop: start=0, step=1, limit=38
        $region117: #{hnet_forward.1} parent=87 // loop_pre_header
          _
        $region118: #{hnet_forward.1} parent=87 // loop_header
          %s4409 = sphi 0, %s4413
          %p4410 = scmp.ge.s32.totalorder %s4409, 38
        $region119: #{hnet_forward.1} parent=87 // loop_header_branch
          %4412 = sbr.rel (%p4410) target = $region123
        $region120: #{hnet_forward.1} parent=87 // loop_body
          %s4414 = smul.u32 %s4409, 40
          %s4415 = scalar_lea.vmem [#allocation5], %s4414
          %v4416 = vld [vmem:[%s4415] sm:$0xff]
          %v4417 = vld [vmem:[%s4415 + $0x8] sm:$0xff]
          %v4418 = vld [vmem:[%s4415 + $0x10] sm:$0xff]
          %v4419 = vld [vmem:[%s4415 + $0x18] sm:$0xff]
          %v4420 = vld [vmem:[%s4415 + $0x20] sm:$0x3f]
          %s4421 = sadd.s32 %s4409, 1
          %s4422 = smul.u32 %s4421, 40
          %s4423 = scalar_lea.vmem [#allocation5], %s4422
          %v4424 = vld [vmem:[%s4423] sm:$0xff]
          %v4425 = vld [vmem:[%s4423 + $0x8] sm:$0xff]
          %v4426 = vld [vmem:[%s4423 + $0x10] sm:$0xff]
          %v4427 = vld [vmem:[%s4423 + $0x18] sm:$0xff]
          %v4428 = vld [vmem:[%s4423 + $0x20] sm:$0x3f]
          %s4429 = sadd.s32 %s4409, 2
          %s4430 = smul.u32 %s4429, 40
          %s4431 = scalar_lea.vmem [#allocation5], %s4430
          %v4432 = vld [vmem:[%s4431] sm:$0xff]
          %v4433 = vld [vmem:[%s4431 + $0x8] sm:$0xff]
          %v4434 = vld [vmem:[%s4431 + $0x10] sm:$0xff]
          %v4435 = vld [vmem:[%s4431 + $0x18] sm:$0xff]
          %v4436 = vld [vmem:[%s4431 + $0x20] sm:$0x3f]
          %4442 = vrot.lane.b32.xlu0 %v4424, 32
          %v4443 = vpop.permute.xlu0 %4442
          %4444 = vrot.lane.b32.xlu0 %v4425, 32
          %v4445 = vpop.permute.xlu0 %4444
          %4446 = vrot.lane.b32.xlu0 %v4426, 32
          %v4447 = vpop.permute.xlu0 %4446
          %4448 = vrot.lane.b32.xlu0 %v4427, 32
          %v4449 = vpop.permute.xlu0 %4448
          %4450 = vrot.lane.b32.xlu0 %v4428, 32
          %v4451 = vpop.permute.xlu0 %4450
          %4462 = vrot.lane.b32.xlu0 %v4432, 64
          %v4463 = vpop.permute.xlu0 %4462
          %4464 = vrot.lane.b32.xlu0 %v4433, 64
          %v4465 = vpop.permute.xlu0 %4464
          %4466 = vrot.lane.b32.xlu0 %v4434, 64
          %v4467 = vpop.permute.xlu0 %4466
          %4468 = vrot.lane.b32.xlu0 %v4435, 64
          %v4469 = vpop.permute.xlu0 %4468
          %4470 = vrot.lane.b32.xlu0 %v4436, 64
          %v4471 = vpop.permute.xlu0 %4470
          %v4477 = vsel %vm1494, %v4416, %v4443
          %v4478 = vsel %vm1494, %v4417, %v4445
          %v4479 = vsel %vm1494, %v4418, %v4447
          %v4480 = vsel %vm1494, %v4419, %v4449
          %v4481 = vsel %vm1494, %v4420, %v4451
          %v4482 = vsel %vm1695, %v4477, %v4463
          %v4483 = vsel %vm1695, %v4478, %v4465
          %v4484 = vsel %vm1695, %v4479, %v4467
          %v4485 = vsel %vm1695, %v4480, %v4469
          %v4486 = vsel %vm1695, %v4481, %v4471
          %v4487 = vld [vmem:[%s7] sm:$0xff]
          %v4488 = vld [vmem:[%s7 + $0x8] sm:$0xff]
          %v4489 = vld [vmem:[%s7 + $0x10] sm:$0xff]
          %v4490 = vld [vmem:[%s7 + $0x18] sm:$0xff]
          %v4491 = vld [vmem:[%s7 + $0x20] sm:$0xff]
          %v4492 = vld [vmem:[%s7 + $0x28] sm:$0xff]
          %v4493 = vld [vmem:[%s7 + $0x30] sm:$0xff]
          %v4494 = vld [vmem:[%s7 + $0x38] sm:$0xff]
          %v4495 = vld [vmem:[%s7 + $0x40] sm:$0xff]
          %v4496 = vld [vmem:[%s7 + $0x48] sm:$0xff]
          %v4497 = vld [vmem:[%s7 + $0x50] sm:$0xff]
          %v4498 = vld [vmem:[%s7 + $0x58] sm:$0xff]
          %v4499 = vld [vmem:[%s4415 + $0x1] sm:$0xff]
          %v4500 = vld [vmem:[%s4415 + $0x9] sm:$0xff]
          %v4501 = vld [vmem:[%s4415 + $0x11] sm:$0xff]
          %v4502 = vld [vmem:[%s4415 + $0x19] sm:$0xff]
          %v4503 = vld [vmem:[%s4415 + $0x21] sm:$0x3f]
          %v4504 = vld [vmem:[%s4423 + $0x1] sm:$0xff]
          %v4505 = vld [vmem:[%s4423 + $0x9] sm:$0xff]
          %v4506 = vld [vmem:[%s4423 + $0x11] sm:$0xff]
          %v4507 = vld [vmem:[%s4423 + $0x19] sm:$0xff]
          %v4508 = vld [vmem:[%s4423 + $0x21] sm:$0x3f]
          %v4509 = vld [vmem:[%s4431 + $0x1] sm:$0xff]
          %v4510 = vld [vmem:[%s4431 + $0x9] sm:$0xff]
          %v4511 = vld [vmem:[%s4431 + $0x11] sm:$0xff]
          %v4512 = vld [vmem:[%s4431 + $0x19] sm:$0xff]
          %v4513 = vld [vmem:[%s4431 + $0x21] sm:$0x3f]
          %4519 = vrot.lane.b32.xlu0 %v4504, 32
          %v4520 = vpop.permute.xlu0 %4519
          %4521 = vrot.lane.b32.xlu0 %v4505, 32
          %v4522 = vpop.permute.xlu0 %4521
          %4523 = vrot.lane.b32.xlu0 %v4506, 32
          %v4524 = vpop.permute.xlu0 %4523
          %4525 = vrot.lane.b32.xlu0 %v4507, 32
          %v4526 = vpop.permute.xlu0 %4525
          %4527 = vrot.lane.b32.xlu0 %v4508, 32
          %v4528 = vpop.permute.xlu0 %4527
          %4539 = vrot.lane.b32.xlu0 %v4509, 64
          %v4540 = vpop.permute.xlu0 %4539
          %4541 = vrot.lane.b32.xlu0 %v4510, 64
          %v4542 = vpop.permute.xlu0 %4541
          %4543 = vrot.lane.b32.xlu0 %v4511, 64
          %v4544 = vpop.permute.xlu0 %4543
          %4545 = vrot.lane.b32.xlu0 %v4512, 64
          %v4546 = vpop.permute.xlu0 %4545
          %4547 = vrot.lane.b32.xlu0 %v4513, 64
          %v4548 = vpop.permute.xlu0 %4547
          %v4554 = vsel %vm1494, %v4499, %v4520
          %v4555 = vsel %vm1494, %v4500, %v4522
          %v4556 = vsel %vm1494, %v4501, %v4524
          %v4557 = vsel %vm1494, %v4502, %v4526
          %v4558 = vsel %vm1494, %v4503, %v4528
          %v4559 = vsel %vm1695, %v4554, %v4540
          %v4560 = vsel %vm1695, %v4555, %v4542
          %v4561 = vsel %vm1695, %v4556, %v4544
          %v4562 = vsel %vm1695, %v4557, %v4546
          %v4563 = vsel %vm1695, %v4558, %v4548
          %s4564 = scalar_lea.vmem %s7, 96
          %v4565 = vld [vmem:[%s4564] sm:$0xff]
          %v4566 = vld [vmem:[%s4564 + $0x8] sm:$0xff]
          %v4567 = vld [vmem:[%s4564 + $0x10] sm:$0xff]
          %v4568 = vld [vmem:[%s4564 + $0x18] sm:$0xff]
          %v4569 = vld [vmem:[%s4564 + $0x20] sm:$0xff]
          %v4570 = vld [vmem:[%s4564 + $0x28] sm:$0xff]
          %v4571 = vld [vmem:[%s4564 + $0x30] sm:$0xff]
          %v4572 = vld [vmem:[%s4564 + $0x38] sm:$0xff]
          %v4573 = vld [vmem:[%s4564 + $0x40] sm:$0xff]
          %v4574 = vld [vmem:[%s4564 + $0x48] sm:$0xff]
          %v4575 = vld [vmem:[%s4564 + $0x50] sm:$0xff]
          %v4576 = vld [vmem:[%s4564 + $0x58] sm:$0xff]
          %vm4577 = vcmask 785408
          %v4579 = vsel %vm4577, %v4559, 0
          %v4582 = vsel %vm4577, %v4560, 0
          %v4585 = vsel %vm4577, %v4561, 0
          %v4588 = vsel %vm4577, %v4562, 0
          %v4591 = vsel %vm4577, %v4563, 0
          %4593 = vmatprep.subr.mxu0 0.0
          %4594 = vmatpush1.msra.mxu0 %v4565
          %4595 = vmatprep.subr.mxu0 0.0
          %4596 = vmatpush1.msra.mxu0 %v4566
          %4597 = vmatprep.subr.mxu0 0.0
          %4598 = vmatpush1.msra.mxu0 %v4567
          %4599 = vmatprep.subr.mxu0 0.0
          %4600 = vmatpush1.msra.mxu0 %v4568
          %4601 = vmatprep.subr.mxu0 0.0
          %4602 = vmatpush1.msra.mxu0 %v4569
          %4603 = vmatprep.subr.mxu0 0.0
          %4604 = vmatpush1.msra.mxu0 %v4570
          %4605 = vmatprep.subr.mxu0 0.0
          %4606 = vmatpush1.msra.mxu0 %v4571
          %4607 = vmatprep.subr.mxu0 0.0
          %4608 = vmatpush1.msra.mxu0 %v4572
          %4609 = vmatprep.subr.mxu0 0.0
          %4610 = vmatpush1.msra.mxu0 %v4573
          %4611 = vmatprep.subr.mxu0 0.0
          %4612 = vmatpush1.msra.mxu0 %v4574
          %4613 = vmatprep.subr.mxu0 0.0
          %4614 = vmatpush1.msra.mxu0 %v4575
          %4615 = vmatprep.subr.mxu0 0.0
          %4616 = vmatpush1.msra.mxu0 %v4576
          %4617 = vmatprep.subr.mxu0 0.0
          %4618 = vmatpush1.msra.mxu0 0.0
          %4619 = vmatprep.subr.mxu0 0.0
          %4620 = vmatpush1.msra.mxu0 0.0
          %4621 = vmatprep.subr.mxu0 0.0
          %4622 = vmatpush1.msra.mxu0 0.0
          %4623 = vmatprep.subr.mxu0 0.0
          %4624 = vmatpush1.msra.mxu0 0.0
          %4625 = vmatprep.subr.mxu0 0.0
          %4626 = vmatpush1.msra.mxu0 0.0
          %4627 = vmatprep.subr.mxu0 0.0
          %4628 = vmatpush1.msra.mxu0 0.0
          %4629 = vmatprep.subr.mxu0 0.0
          %4630 = vmatpush1.msra.mxu0 0.0
          %4631 = vmatprep.subr.mxu0 0.0
          %4632 = vmatpush1.msra.mxu0 0.0
          %4633 = vmatprep.subr.mxu0 0.0
          %4634 = vmatpush1.msra.mxu0 0.0
          %4635 = vmatprep.subr.mxu0 0.0
          %4636 = vmatpush1.msra.mxu0 0.0
          %4637 = vmatprep.subr.mxu0 0.0
          %4638 = vmatpush1.msra.mxu0 0.0
          %4639 = vmatprep.subr.mxu0 0.0
          %4640 = vmatpush1.msra.mxu0 0.0
          %4641 = vmatprep.subr.mxu0 0.0
          %4642 = vmatpush1.msra.mxu0 0.0
          %4643 = vmatprep.subr.mxu0 0.0
          %4644 = vmatpush1.msra.mxu0 0.0
          %4645 = vmatprep.subr.mxu0 0.0
          %4646 = vmatpush1.msra.mxu0 0.0
          %4647 = vmatprep.subr.mxu0 0.0
          %4648 = vmatpush1.msra.mxu0 0.0
          %4649 = vmatprep.subr.mxu0 0.0
          %4650 = vmatpush1.msra.mxu0 0.0
          %4651 = vmatprep.subr.mxu0 0.0
          %4652 = vmatpush1.msra.mxu0 0.0
          %4653 = vmatprep.subr.mxu0 0.0
          %4654 = vmatpush1.msra.mxu0 0.0
          %4655 = vmatprep.subr.mxu0 0.0
          %4656 = vmatpush1.msra.mxu0 0.0
          %4657 = vmatprep.mubr.f32.mxu0 0.0
          %4658 = vmatmul.mubr.f32.gmra.mrb[0].mxu0 %v4579
          %v4659 = vpop.f32.mrb[0].mxu0
          %v4660 = vadd.f32 0.0, %v4659
          %v4661 = vpop.f32.mrb[0].mxu0
          %4662 = vmatprep.mubr.f32.mxu0 0.0
          %4663 = vmatmul.mubr.f32.gmra.mrb[0].mxu0 %v4582
          %v4664 = vpop.f32.mrb[0].mxu0
          %v4665 = vadd.f32 0.0, %v4664
          %v4666 = vpop.f32.mrb[0].mxu0
          %4667 = vmatprep.mubr.f32.mxu0 0.0
          %4668 = vmatmul.mubr.f32.gmra.mrb[0].mxu0 %v4585
          %v4669 = vpop.f32.mrb[0].mxu0
          %v4670 = vadd.f32 0.0, %v4669
          %v4671 = vpop.f32.mrb[0].mxu0
          %4672 = vmatprep.mubr.f32.mxu0 0.0
          %4673 = vmatmul.mubr.f32.gmra.mrb[0].mxu0 %v4588
          %v4674 = vpop.f32.mrb[0].mxu0
          %v4675 = vadd.f32 0.0, %v4674
          %v4676 = vpop.f32.mrb[0].mxu0
          %4677 = vmatprep.mubr.f32.mxu0 0.0
          %4678 = vmatmul.mubr.f32.gmra.mrb[0].mxu0 %v4591
          %v4679 = vpop.f32.mrb[0].mxu0
          %v4680 = vadd.f32 0.0, %v4679
          %v4681 = vpop.f32.mrb[0].mxu0
          %4682 = vdwg.mxu0
          %v4684 = vsel %vm4577, %v4482, 0
          %v4687 = vsel %vm4577, %v4483, 0
          %v4690 = vsel %vm4577, %v4484, 0
          %v4693 = vsel %vm4577, %v4485, 0
          %v4696 = vsel %vm4577, %v4486, 0
          %4698 = vmatprep.subr.mxu0 0.0
          %4699 = vmatpush1.msra.mxu0 %v4487
          %4700 = vmatprep.subr.mxu0 0.0
          %4701 = vmatpush1.msra.mxu0 %v4488
          %4702 = vmatprep.subr.mxu0 0.0
          %4703 = vmatpush1.msra.mxu0 %v4489
          %4704 = vmatprep.subr.mxu0 0.0
          %4705 = vmatpush1.msra.mxu0 %v4490
          %4706 = vmatprep.subr.mxu0 0.0
          %4707 = vmatpush1.msra.mxu0 %v4491
          %4708 = vmatprep.subr.mxu0 0.0
          %4709 = vmatpush1.msra.mxu0 %v4492
          %4710 = vmatprep.subr.mxu0 0.0
          %4711 = vmatpush1.msra.mxu0 %v4493
          %4712 = vmatprep.subr.mxu0 0.0
          %4713 = vmatpush1.msra.mxu0 %v4494
          %4714 = vmatprep.subr.mxu0 0.0
          %4715 = vmatpush1.msra.mxu0 %v4495
          %4716 = vmatprep.subr.mxu0 0.0
          %4717 = vmatpush1.msra.mxu0 %v4496
          %4718 = vmatprep.subr.mxu0 0.0
          %4719 = vmatpush1.msra.mxu0 %v4497
          %4720 = vmatprep.subr.mxu0 0.0
          %4721 = vmatpush1.msra.mxu0 %v4498
          %4722 = vmatprep.subr.mxu0 0.0
          %4723 = vmatpush1.msra.mxu0 0.0
          %4724 = vmatprep.subr.mxu0 0.0
          %4725 = vmatpush1.msra.mxu0 0.0
          %4726 = vmatprep.subr.mxu0 0.0
          %4727 = vmatpush1.msra.mxu0 0.0
          %4728 = vmatprep.subr.mxu0 0.0
          %4729 = vmatpush1.msra.mxu0 0.0
          %4730 = vmatprep.subr.mxu0 0.0
          %4731 = vmatpush1.msra.mxu0 0.0
          %4732 = vmatprep.subr.mxu0 0.0
          %4733 = vmatpush1.msra.mxu0 0.0
          %4734 = vmatprep.subr.mxu0 0.0
          %4735 = vmatpush1.msra.mxu0 0.0
          %4736 = vmatprep.subr.mxu0 0.0
          %4737 = vmatpush1.msra.mxu0 0.0
          %4738 = vmatprep.subr.mxu0 0.0
          %4739 = vmatpush1.msra.mxu0 0.0
          %4740 = vmatprep.subr.mxu0 0.0
          %4741 = vmatpush1.msra.mxu0 0.0
          %4742 = vmatprep.subr.mxu0 0.0
          %4743 = vmatpush1.msra.mxu0 0.0
          %4744 = vmatprep.subr.mxu0 0.0
          %4745 = vmatpush1.msra.mxu0 0.0
          %4746 = vmatprep.subr.mxu0 0.0
          %4747 = vmatpush1.msra.mxu0 0.0
          %4748 = vmatprep.subr.mxu0 0.0
          %4749 = vmatpush1.msra.mxu0 0.0
          %4750 = vmatprep.subr.mxu0 0.0
          %4751 = vmatpush1.msra.mxu0 0.0
          %4752 = vmatprep.subr.mxu0 0.0
          %4753 = vmatpush1.msra.mxu0 0.0
          %4754 = vmatprep.subr.mxu0 0.0
          %4755 = vmatpush1.msra.mxu0 0.0
          %4756 = vmatprep.subr.mxu0 0.0
          %4757 = vmatpush1.msra.mxu0 0.0
          %4758 = vmatprep.subr.mxu0 0.0
          %4759 = vmatpush1.msra.mxu0 0.0
          %4760 = vmatprep.subr.mxu0 0.0
          %4761 = vmatpush1.msra.mxu0 0.0
          %4762 = vmatprep.mubr.f32.mxu0 0.0
          %4763 = vmatmul.mubr.f32.gmra.mrb[0].mxu0 %v4684
          %v4764 = vpop.f32.mrb[0].mxu0
          %v4765 = vadd.f32 %v4660, %v4764
          %v4766 = vpop.f32.mrb[0].mxu0
          %4767 = vmatprep.mubr.f32.mxu0 0.0
          %4768 = vmatmul.mubr.f32.gmra.mrb[0].mxu0 %v4687
          %v4769 = vpop.f32.mrb[0].mxu0
          %v4770 = vadd.f32 %v4665, %v4769
          %v4771 = vpop.f32.mrb[0].mxu0
          %4772 = vmatprep.mubr.f32.mxu0 0.0
          %4773 = vmatmul.mubr.f32.gmra.mrb[0].mxu0 %v4690
          %v4774 = vpop.f32.mrb[0].mxu0
          %v4775 = vadd.f32 %v4670, %v4774
          %v4776 = vpop.f32.mrb[0].mxu0
          %4777 = vmatprep.mubr.f32.mxu0 0.0
          %4778 = vmatmul.mubr.f32.gmra.mrb[0].mxu0 %v4693
          %v4779 = vpop.f32.mrb[0].mxu0
          %v4780 = vadd.f32 %v4675, %v4779
          %v4781 = vpop.f32.mrb[0].mxu0
          %4782 = vmatprep.mubr.f32.mxu0 0.0
          %4783 = vmatmul.mubr.f32.gmra.mrb[0].mxu0 %v4696
          %v4784 = vpop.f32.mrb[0].mxu0
          %v4785 = vadd.f32 %v4680, %v4784
          %v4786 = vpop.f32.mrb[0].mxu0
          %4787 = vdwg.mxu0
          %v4788 = vld [vmem:[%s4415 + $0x2] sm:$0xff]
          %v4789 = vld [vmem:[%s4415 + $0xa] sm:$0xff]
          %v4790 = vld [vmem:[%s4415 + $0x12] sm:$0xff]
          %v4791 = vld [vmem:[%s4415 + $0x1a] sm:$0xff]
          %v4792 = vld [vmem:[%s4415 + $0x22] sm:$0x3f]
          %v4793 = vld [vmem:[%s4423 + $0x2] sm:$0xff]
          %v4794 = vld [vmem:[%s4423 + $0xa] sm:$0xff]
          %v4795 = vld [vmem:[%s4423 + $0x12] sm:$0xff]
          %v4796 = vld [vmem:[%s4423 + $0x1a] sm:$0xff]
          %v4797 = vld [vmem:[%s4423 + $0x22] sm:$0x3f]
          %v4798 = vld [vmem:[%s4431 + $0x2] sm:$0xff]
          %v4799 = vld [vmem:[%s4431 + $0xa] sm:$0xff]
          %v4800 = vld [vmem:[%s4431 + $0x12] sm:$0xff]
          %v4801 = vld [vmem:[%s4431 + $0x1a] sm:$0xff]
          %v4802 = vld [vmem:[%s4431 + $0x22] sm:$0x3f]
          %4808 = vrot.lane.b32.xlu0 %v4793, 32
          %v4809 = vpop.permute.xlu0 %4808
          %4810 = vrot.lane.b32.xlu0 %v4794, 32
          %v4811 = vpop.permute.xlu0 %4810
          %4812 = vrot.lane.b32.xlu0 %v4795, 32
          %v4813 = vpop.permute.xlu0 %4812
          %4814 = vrot.lane.b32.xlu0 %v4796, 32
          %v4815 = vpop.permute.xlu0 %4814
          %4816 = vrot.lane.b32.xlu0 %v4797, 32
          %v4817 = vpop.permute.xlu0 %4816
          %4828 = vrot.lane.b32.xlu0 %v4798, 64
          %v4829 = vpop.permute.xlu0 %4828
          %4830 = vrot.lane.b32.xlu0 %v4799, 64
          %v4831 = vpop.permute.xlu0 %4830
          %4832 = vrot.lane.b32.xlu0 %v4800, 64
          %v4833 = vpop.permute.xlu0 %4832
          %4834 = vrot.lane.b32.xlu0 %v4801, 64
          %v4835 = vpop.permute.xlu0 %4834
          %4836 = vrot.lane.b32.xlu0 %v4802, 64
          %v4837 = vpop.permute.xlu0 %4836
          %v4843 = vsel %vm1494, %v4788, %v4809
          %v4844 = vsel %vm1494, %v4789, %v4811
          %v4845 = vsel %vm1494, %v4790, %v4813
          %v4846 = vsel %vm1494, %v4791, %v4815
          %v4847 = vsel %vm1494, %v4792, %v4817
          %v4848 = vsel %vm1695, %v4843, %v4829
          %v4849 = vsel %vm1695, %v4844, %v4831
          %v4850 = vsel %vm1695, %v4845, %v4833
          %v4851 = vsel %vm1695, %v4846, %v4835
          %v4852 = vsel %vm1695, %v4847, %v4837
          %s4853 = scalar_lea.vmem %s7, 192
          %v4854 = vld [vmem:[%s4853] sm:$0xff]
          %v4855 = vld [vmem:[%s4853 + $0x8] sm:$0xff]
          %v4856 = vld [vmem:[%s4853 + $0x10] sm:$0xff]
          %v4857 = vld [vmem:[%s4853 + $0x18] sm:$0xff]
          %v4858 = vld [vmem:[%s4853 + $0x20] sm:$0xff]
          %v4859 = vld [vmem:[%s4853 + $0x28] sm:$0xff]
          %v4860 = vld [vmem:[%s4853 + $0x30] sm:$0xff]
          %v4861 = vld [vmem:[%s4853 + $0x38] sm:$0xff]
          %v4862 = vld [vmem:[%s4853 + $0x40] sm:$0xff]
          %v4863 = vld [vmem:[%s4853 + $0x48] sm:$0xff]
          %v4864 = vld [vmem:[%s4853 + $0x50] sm:$0xff]
          %v4865 = vld [vmem:[%s4853 + $0x58] sm:$0xff]
          %v4867 = vsel %vm4577, %v4848, 0
          %v4870 = vsel %vm4577, %v4849, 0
          %v4873 = vsel %vm4577, %v4850, 0
          %v4876 = vsel %vm4577, %v4851, 0
          %v4879 = vsel %vm4577, %v4852, 0
          %4881 = vmatprep.subr.mxu0 0.0
          %4882 = vmatpush1.msra.mxu0 %v4854
          %4883 = vmatprep.subr.mxu0 0.0
          %4884 = vmatpush1.msra.mxu0 %v4855
          %4885 = vmatprep.subr.mxu0 0.0
          %4886 = vmatpush1.msra.mxu0 %v4856
          %4887 = vmatprep.subr.mxu0 0.0
          %4888 = vmatpush1.msra.mxu0 %v4857
          %4889 = vmatprep.subr.mxu0 0.0
          %4890 = vmatpush1.msra.mxu0 %v4858
          %4891 = vmatprep.subr.mxu0 0.0
          %4892 = vmatpush1.msra.mxu0 %v4859
          %4893 = vmatprep.subr.mxu0 0.0
          %4894 = vmatpush1.msra.mxu0 %v4860
          %4895 = vmatprep.subr.mxu0 0.0
          %4896 = vmatpush1.msra.mxu0 %v4861
          %4897 = vmatprep.subr.mxu0 0.0
          %4898 = vmatpush1.msra.mxu0 %v4862
          %4899 = vmatprep.subr.mxu0 0.0
          %4900 = vmatpush1.msra.mxu0 %v4863
          %4901 = vmatprep.subr.mxu0 0.0
          %4902 = vmatpush1.msra.mxu0 %v4864
          %4903 = vmatprep.subr.mxu0 0.0
          %4904 = vmatpush1.msra.mxu0 %v4865
          %4905 = vmatprep.subr.mxu0 0.0
          %4906 = vmatpush1.msra.mxu0 0.0
          %4907 = vmatprep.subr.mxu0 0.0
          %4908 = vmatpush1.msra.mxu0 0.0
          %4909 = vmatprep.subr.mxu0 0.0
          %4910 = vmatpush1.msra.mxu0 0.0
          %4911 = vmatprep.subr.mxu0 0.0
          %4912 = vmatpush1.msra.mxu0 0.0
          %4913 = vmatprep.subr.mxu0 0.0
          %4914 = vmatpush1.msra.mxu0 0.0
          %4915 = vmatprep.subr.mxu0 0.0
          %4916 = vmatpush1.msra.mxu0 0.0
          %4917 = vmatprep.subr.mxu0 0.0
          %4918 = vmatpush1.msra.mxu0 0.0
          %4919 = vmatprep.subr.mxu0 0.0
          %4920 = vmatpush1.msra.mxu0 0.0
          %4921 = vmatprep.subr.mxu0 0.0
          %4922 = vmatpush1.msra.mxu0 0.0
          %4923 = vmatprep.subr.mxu0 0.0
          %4924 = vmatpush1.msra.mxu0 0.0
          %4925 = vmatprep.subr.mxu0 0.0
          %4926 = vmatpush1.msra.mxu0 0.0
          %4927 = vmatprep.subr.mxu0 0.0
          %4928 = vmatpush1.msra.mxu0 0.0
          %4929 = vmatprep.subr.mxu0 0.0
          %4930 = vmatpush1.msra.mxu0 0.0
          %4931 = vmatprep.subr.mxu0 0.0
          %4932 = vmatpush1.msra.mxu0 0.0
          %4933 = vmatprep.subr.mxu0 0.0
          %4934 = vmatpush1.msra.mxu0 0.0
          %4935 = vmatprep.subr.mxu0 0.0
          %4936 = vmatpush1.msra.mxu0 0.0
          %4937 = vmatprep.subr.mxu0 0.0
          %4938 = vmatpush1.msra.mxu0 0.0
          %4939 = vmatprep.subr.mxu0 0.0
          %4940 = vmatpush1.msra.mxu0 0.0
          %4941 = vmatprep.subr.mxu0 0.0
          %4942 = vmatpush1.msra.mxu0 0.0
          %4943 = vmatprep.subr.mxu0 0.0
          %4944 = vmatpush1.msra.mxu0 0.0
          %4945 = vmatprep.mubr.f32.mxu0 0.0
          %4946 = vmatmul.mubr.f32.gmra.mrb[0].mxu0 %v4867
          %v4947 = vpop.f32.mrb[0].mxu0
          %v4948 = vadd.f32 0.0, %v4947
          %v4949 = vpop.f32.mrb[0].mxu0
          %4950 = vmatprep.mubr.f32.mxu0 0.0
          %4951 = vmatmul.mubr.f32.gmra.mrb[0].mxu0 %v4870
          %v4952 = vpop.f32.mrb[0].mxu0
          %v4953 = vadd.f32 0.0, %v4952
          %v4954 = vpop.f32.mrb[0].mxu0
          %4955 = vmatprep.mubr.f32.mxu0 0.0
          %4956 = vmatmul.mubr.f32.gmra.mrb[0].mxu0 %v4873
          %v4957 = vpop.f32.mrb[0].mxu0
          %v4958 = vadd.f32 0.0, %v4957
          %v4959 = vpop.f32.mrb[0].mxu0
          %4960 = vmatprep.mubr.f32.mxu0 0.0
          %4961 = vmatmul.mubr.f32.gmra.mrb[0].mxu0 %v4876
          %v4962 = vpop.f32.mrb[0].mxu0
          %v4963 = vadd.f32 0.0, %v4962
          %v4964 = vpop.f32.mrb[0].mxu0
          %4965 = vmatprep.mubr.f32.mxu0 0.0
          %4966 = vmatmul.mubr.f32.gmra.mrb[0].mxu0 %v4879
          %v4967 = vpop.f32.mrb[0].mxu0
          %v4968 = vadd.f32 0.0, %v4967
          %v4969 = vpop.f32.mrb[0].mxu0
          %4970 = vdwg.mxu0
          %v4971 = vadd.f32 %v4765, %v4948
          %v4972 = vadd.f32 %v4770, %v4953
          %v4973 = vadd.f32 %v4775, %v4958
          %v4974 = vadd.f32 %v4780, %v4963
          %v4975 = vadd.f32 %v4785, %v4968
          %v4977 = vlaneseq
          %v4978 = vshrl.u32 %v4977, 7
          %v4979 = vsub.s32 0, %v4978
          %v4980 = vrot.slane %v4407, %v4979
          %v4982 = vadd.f32 %v4971, %v4980
          %v4983 = vadd.f32 %v4972, %v4980
          %v4984 = vadd.f32 %v4973, %v4980
          %v4985 = vadd.f32 %v4974, %v4980
          %v4986 = vadd.f32 %v4975, %v4980
          %vm4987 = vcmp.gt.f32.partialorder %v4982, 0.0
          %vm4988 = vcmp.gt.f32.partialorder %v4983, 0.0
          %vm4989 = vcmp.gt.f32.partialorder %v4984, 0.0
          %vm4990 = vcmp.gt.f32.partialorder %v4985, 0.0
          %vm4991 = vcmp.gt.f32.partialorder %v4986, 0.0
          %v4992 = vmul.f32 %v4982, 0.25
          %v4993 = vmul.f32 %v4983, 0.25
          %v4994 = vmul.f32 %v4984, 0.25
          %v4995 = vmul.f32 %v4985, 0.25
          %v4996 = vmul.f32 %v4986, 0.25
          %v4997 = vsel %vm4987, %v4982, %v4992
          %v4998 = vsel %vm4988, %v4983, %v4993
          %v4999 = vsel %vm4989, %v4984, %v4994
          %v5000 = vsel %vm4990, %v4985, %v4995
          %v5001 = vsel %vm4991, %v4986, %v4996
          %s5002 = scalar_lea.vmem [#allocation6], %s4422
          %5003 = vst.msk [vmem:[%s5002 + $0x1] sm:$0xff] %vm1494, %v4997
          %5004 = vst.msk [vmem:[%s5002 + $0x9] sm:$0xff] %vm1494, %v4998
          %5005 = vst.msk [vmem:[%s5002 + $0x11] sm:$0xff] %vm1494, %v4999
          %5006 = vst.msk [vmem:[%s5002 + $0x19] sm:$0xff] %vm1494, %v5000
          %vm5007 = vcmask 259072
          %5008 = vst.msk [vmem:[%s5002 + $0x21] sm:$0x3f] %vm5007, %v5001
        $region121: #{hnet_forward.1} parent=87 // loop_footer
          %s4413 = sadd.s32 1, %s4409
        $region122: #{hnet_forward.1} parent=87 // loop_footer_branch
          %4408 = sbr.rel target = $region118
        $region123: #{hnet_forward.1} parent=87 // loop_exit
          _
        loop: start=0, step=1, limit=19
        $region124: #{hnet_forward.1} parent=87 // loop_pre_header
          _
        $region125: #{hnet_forward.1} parent=87 // loop_header
          %s5010 = sphi 0, %s5014
          %p5011 = scmp.ge.s32.totalorder %s5010, 19
        $region126: #{hnet_forward.1} parent=87 // loop_header_branch
          %5013 = sbr.rel (%p5011) target = $region130
        $region127: #{hnet_forward.1} parent=87 // loop_body
          %s5015 = smul.u32 %s5010, 2
          %s5016 = smul.u32 %s5015, 40
          %s5017 = scalar_lea.vmem [#allocation6], %s5016
          %v5018 = vld [vmem:[%s5017] sm:$0xff]
          %v5019 = vld [vmem:[%s5017 + $0x8] sm:$0xff]
          %v5020 = vld [vmem:[%s5017 + $0x10] sm:$0xff]
          %v5021 = vld [vmem:[%s5017 + $0x18] sm:$0xff]
          %v5022 = vld [vmem:[%s5017 + $0x20] sm:$0xff]
          %s5023 = sadd.s32 %s5015, 1
          %s5024 = smul.u32 %s5023, 40
          %s5025 = scalar_lea.vmem [#allocation6], %s5024
          %v5026 = vld [vmem:[%s5025] sm:$0xff]
          %v5027 = vld [vmem:[%s5025 + $0x8] sm:$0xff]
          %v5028 = vld [vmem:[%s5025 + $0x10] sm:$0xff]
          %v5029 = vld [vmem:[%s5025 + $0x18] sm:$0xff]
          %v5030 = vld [vmem:[%s5025 + $0x20] sm:$0xff]
          %v5031 = vmax.f32 %v5018, %v5026
          %v5032 = vmax.f32 %v5019, %v5027
          %v5033 = vmax.f32 %v5020, %v5028
          %v5034 = vmax.f32 %v5021, %v5029
          %v5035 = vmax.f32 %v5022, %v5030
          %s5036 = sadd.s32 %s5015, 2
          %s5037 = smul.u32 %s5036, 40
          %s5038 = scalar_lea.vmem [#allocation6], %s5037
          %v5039 = vld [vmem:[%s5038] sm:$0xff]
          %v5040 = vld [vmem:[%s5038 + $0x8] sm:$0xff]
          %v5041 = vld [vmem:[%s5038 + $0x10] sm:$0xff]
          %v5042 = vld [vmem:[%s5038 + $0x18] sm:$0xff]
          %v5043 = vld [vmem:[%s5038 + $0x20] sm:$0xff]
          %v5044 = vmax.f32 %v5031, %v5039
          %v5045 = vmax.f32 %v5032, %v5040
          %v5046 = vmax.f32 %v5033, %v5041
          %v5047 = vmax.f32 %v5034, %v5042
          %v5048 = vmax.f32 %v5035, %v5043
          %5049 = vst.msk [vmem:[#allocation11] sm:$0xff] %vm1494, %v5044
          %5050 = vst.msk [vmem:[#allocation11 + $0x8] sm:$0xff] %vm1494, %v5045
          %5051 = vst.msk [vmem:[#allocation11 + $0x10] sm:$0xff] %vm1494, %v5046
          %5052 = vst.msk [vmem:[#allocation11 + $0x18] sm:$0xff] %vm1494, %v5047
          %5053 = vst.msk [vmem:[#allocation11 + $0x20] sm:$0xff] %vm1494, %v5048
          %v5054 = vld [vmem:[#allocation11] ss:$2 sm:$0xff]
          %s5055 = scalar_lea.vmem [#allocation11], 16
          %v5056 = vld [vmem:[%s5055] ss:$2 sm:$0xff]
          %s5057 = scalar_lea.vmem [#allocation11], 32
          %v5058 = vld [vmem:[%s5057] ss:$2 sm:$0x7]
          %s5059 = scalar_lea.vmem [#allocation11], 1
          %v5060 = vld [vmem:[%s5059] ss:$2 sm:$0xff]
          %s5061 = scalar_lea.vmem [#allocation11], 17
          %v5062 = vld [vmem:[%s5061] ss:$2 sm:$0xff]
          %s5063 = scalar_lea.vmem [#allocation11], 33
          %v5064 = vld [vmem:[%s5063] ss:$2 sm:$0x7]
          %v5065 = vmax.f32 %v5054, %v5060
          %v5066 = vmax.f32 %v5056, %v5062
          %v5067 = vmax.f32 %v5058, %v5064
          %s5068 = scalar_lea.vmem [#allocation11], 2
          %v5069 = vld [vmem:[%s5068] ss:$2 sm:$0xff]
          %s5070 = scalar_lea.vmem [#allocation11], 18
          %v5071 = vld [vmem:[%s5070] ss:$2 sm:$0xff]
          %s5072 = scalar_lea.vmem [#allocation11], 34
          %v5073 = vld [vmem:[%s5072] ss:$2 sm:$0x7]
          %v5074 = vmax.f32 %v5065, %v5069
          %v5075 = vmax.f32 %v5066, %v5071
          %v5076 = vmax.f32 %v5067, %v5073
          %s5077 = smul.u32 %s5010, 24
          %s5078 = scalar_lea.vmem [#allocation7], %s5077
          %5079 = vst.msk [vmem:[%s5078] sm:$0xff] %vm1494, %v5074
          %5080 = vst.msk [vmem:[%s5078 + $0x8] sm:$0xff] %vm1494, %v5075
          %vm5081 = vcmask 256000
          %5082 = vst.msk [vmem:[%s5078 + $0x10] sm:$0x7] %vm5081, %v5076
        $region128: #{hnet_forward.1} parent=87 // loop_footer
          %s5014 = sadd.s32 1, %s5010
        $region129: #{hnet_forward.1} parent=87 // loop_footer_branch
          %5009 = sbr.rel target = $region125
        $region130: #{hnet_forward.1} parent=87 // loop_exit
          _
        %v5083 = vld [vmem:[%s10] sm:$0x1]
        loop: start=0, step=1, limit=17
        $region131: #{hnet_forward.1} parent=87 // loop_pre_header
          _
        $region132: #{hnet_forward.1} parent=87 // loop_header
          %s5085 = sphi 0, %s5089
          %p5086 = scmp.ge.s32.totalorder %s5085, 17
        $region133: #{hnet_forward.1} parent=87 // loop_header_branch
          %5088 = sbr.rel (%p5086) target = $region137
        $region134: #{hnet_forward.1} parent=87 // loop_body
          %s5090 = smul.u32 %s5085, 24
          %s5091 = scalar_lea.vmem [#allocation7], %s5090
          %v5092 = vld [vmem:[%s5091] sm:$0xff]
          %v5093 = vld [vmem:[%s5091 + $0x8] sm:$0xff]
          %v5094 = vld [vmem:[%s5091 + $0x10] sm:$0x1]
          %s5095 = sadd.s32 %s5085, 1
          %s5096 = smul.u32 %s5095, 24
          %s5097 = scalar_lea.vmem [#allocation7], %s5096
          %v5098 = vld [vmem:[%s5097] sm:$0xff]
          %v5099 = vld [vmem:[%s5097 + $0x8] sm:$0xff]
          %v5100 = vld [vmem:[%s5097 + $0x10] sm:$0x1]
          %s5101 = sadd.s32 %s5085, 2
          %s5102 = smul.u32 %s5101, 24
          %s5103 = scalar_lea.vmem [#allocation7], %s5102
          %v5104 = vld [vmem:[%s5103] sm:$0xff]
          %v5105 = vld [vmem:[%s5103 + $0x8] sm:$0xff]
          %v5106 = vld [vmem:[%s5103 + $0x10] sm:$0x1]
          %5110 = vrot.lane.b32.xlu0 %v5098, 32
          %v5111 = vpop.permute.xlu0 %5110
          %5112 = vrot.lane.b32.xlu0 %v5099, 32
          %v5113 = vpop.permute.xlu0 %5112
          %5114 = vrot.lane.b32.xlu0 %v5100, 32
          %v5115 = vpop.permute.xlu0 %5114
          %5122 = vrot.lane.b32.xlu0 %v5104, 64
          %v5123 = vpop.permute.xlu0 %5122
          %5124 = vrot.lane.b32.xlu0 %v5105, 64
          %v5125 = vpop.permute.xlu0 %5124
          %5126 = vrot.lane.b32.xlu0 %v5106, 64
          %v5127 = vpop.permute.xlu0 %5126
          %v5131 = vsel %vm1494, %v5092, %v5111
          %v5132 = vsel %vm1494, %v5093, %v5113
          %v5133 = vsel %vm1494, %v5094, %v5115
          %v5134 = vsel %vm1695, %v5131, %v5123
          %v5135 = vsel %vm1695, %v5132, %v5125
          %v5136 = vsel %vm1695, %v5133, %v5127
          %v5137 = vld [vmem:[%s9] sm:$0xff]
          %v5138 = vld [vmem:[%s9 + $0x8] sm:$0xff]
          %v5139 = vld [vmem:[%s9 + $0x10] sm:$0xff]
          %v5140 = vld [vmem:[%s9 + $0x18] sm:$0xff]
          %v5141 = vld [vmem:[%s9 + $0x20] sm:$0xff]
          %v5142 = vld [vmem:[%s9 + $0x28] sm:$0xff]
          %v5143 = vld [vmem:[%s9 + $0x30] sm:$0xff]
          %v5144 = vld [vmem:[%s9 + $0x38] sm:$0xff]
          %v5145 = vld [vmem:[%s9 + $0x40] sm:$0xff]
          %v5146 = vld [vmem:[%s9 + $0x48] sm:$0xff]
          %v5147 = vld [vmem:[%s9 + $0x50] sm:$0xff]
          %v5148 = vld [vmem:[%s9 + $0x58] sm:$0xff]
          %v5149 = vld [vmem:[%s5091 + $0x1] sm:$0xff]
          %v5150 = vld [vmem:[%s5091 + $0x9] sm:$0xff]
          %v5151 = vld [vmem:[%s5091 + $0x11] sm:$0x1]
          %v5152 = vld [vmem:[%s5097 + $0x1] sm:$0xff]
          %v5153 = vld [vmem:[%s5097 + $0x9] sm:$0xff]
          %v5154 = vld [vmem:[%s5097 + $0x11] sm:$0x1]
          %v5155 = vld [vmem:[%s5103 + $0x1] sm:$0xff]
          %v5156 = vld [vmem:[%s5103 + $0x9] sm:$0xff]
          %v5157 = vld [vmem:[%s5103 + $0x11] sm:$0x1]
          %5161 = vrot.lane.b32.xlu0 %v5152, 32
          %v5162 = vpop.permute.xlu0 %5161
          %5163 = vrot.lane.b32.xlu0 %v5153, 32
          %v5164 = vpop.permute.xlu0 %5163
          %5165 = vrot.lane.b32.xlu0 %v5154, 32
          %v5166 = vpop.permute.xlu0 %5165
          %5173 = vrot.lane.b32.xlu0 %v5155, 64
          %v5174 = vpop.permute.xlu0 %5173
          %5175 = vrot.lane.b32.xlu0 %v5156, 64
          %v5176 = vpop.permute.xlu0 %5175
          %5177 = vrot.lane.b32.xlu0 %v5157, 64
          %v5178 = vpop.permute.xlu0 %5177
          %v5182 = vsel %vm1494, %v5149, %v5162
          %v5183 = vsel %vm1494, %v5150, %v5164
          %v5184 = vsel %vm1494, %v5151, %v5166
          %v5185 = vsel %vm1695, %v5182, %v5174
          %v5186 = vsel %vm1695, %v5183, %v5176
          %v5187 = vsel %vm1695, %v5184, %v5178
          %s5188 = scalar_lea.vmem %s9, 96
          %v5189 = vld [vmem:[%s5188] sm:$0xff]
          %v5190 = vld [vmem:[%s5188 + $0x8] sm:$0xff]
          %v5191 = vld [vmem:[%s5188 + $0x10] sm:$0xff]
          %v5192 = vld [vmem:[%s5188 + $0x18] sm:$0xff]
          %v5193 = vld [vmem:[%s5188 + $0x20] sm:$0xff]
          %v5194 = vld [vmem:[%s5188 + $0x28] sm:$0xff]
          %v5195 = vld [vmem:[%s5188 + $0x30] sm:$0xff]
          %v5196 = vld [vmem:[%s5188 + $0x38] sm:$0xff]
          %v5197 = vld [vmem:[%s5188 + $0x40] sm:$0xff]
          %v5198 = vld [vmem:[%s5188 + $0x48] sm:$0xff]
          %v5199 = vld [vmem:[%s5188 + $0x50] sm:$0xff]
          %v5200 = vld [vmem:[%s5188 + $0x58] sm:$0xff]
          %vm5201 = vcmask 785408
          %v5203 = vsel %vm5201, %v5185, 0
          %v5206 = vsel %vm5201, %v5186, 0
          %v5209 = vsel %vm5201, %v5187, 0
          %5211 = vmatprep.subr.mxu0 0.0
          %5212 = vmatpush1.msra.mxu0 %v5189
          %5213 = vmatprep.subr.mxu0 0.0
          %5214 = vmatpush1.msra.mxu0 %v5190
          %5215 = vmatprep.subr.mxu0 0.0
          %5216 = vmatpush1.msra.mxu0 %v5191
          %5217 = vmatprep.subr.mxu0 0.0
          %5218 = vmatpush1.msra.mxu0 %v5192
          %5219 = vmatprep.subr.mxu0 0.0
          %5220 = vmatpush1.msra.mxu0 %v5193
          %5221 = vmatprep.subr.mxu0 0.0
          %5222 = vmatpush1.msra.mxu0 %v5194
          %5223 = vmatprep.subr.mxu0 0.0
          %5224 = vmatpush1.msra.mxu0 %v5195
          %5225 = vmatprep.subr.mxu0 0.0
          %5226 = vmatpush1.msra.mxu0 %v5196
          %5227 = vmatprep.subr.mxu0 0.0
          %5228 = vmatpush1.msra.mxu0 %v5197
          %5229 = vmatprep.subr.mxu0 0.0
          %5230 = vmatpush1.msra.mxu0 %v5198
          %5231 = vmatprep.subr.mxu0 0.0
          %5232 = vmatpush1.msra.mxu0 %v5199
          %5233 = vmatprep.subr.mxu0 0.0
          %5234 = vmatpush1.msra.mxu0 %v5200
          %5235 = vmatprep.subr.mxu0 0.0
          %5236 = vmatpush1.msra.mxu0 0.0
          %5237 = vmatprep.subr.mxu0 0.0
          %5238 = vmatpush1.msra.mxu0 0.0
          %5239 = vmatprep.subr.mxu0 0.0
          %5240 = vmatpush1.msra.mxu0 0.0
          %5241 = vmatprep.subr.mxu0 0.0
          %5242 = vmatpush1.msra.mxu0 0.0
          %5243 = vmatprep.subr.mxu0 0.0
          %5244 = vmatpush1.msra.mxu0 0.0
          %5245 = vmatprep.subr.mxu0 0.0
          %5246 = vmatpush1.msra.mxu0 0.0
          %5247 = vmatprep.subr.mxu0 0.0
          %5248 = vmatpush1.msra.mxu0 0.0
          %5249 = vmatprep.subr.mxu0 0.0
          %5250 = vmatpush1.msra.mxu0 0.0
          %5251 = vmatprep.subr.mxu0 0.0
          %5252 = vmatpush1.msra.mxu0 0.0
          %5253 = vmatprep.subr.mxu0 0.0
          %5254 = vmatpush1.msra.mxu0 0.0
          %5255 = vmatprep.subr.mxu0 0.0
          %5256 = vmatpush1.msra.mxu0 0.0
          %5257 = vmatprep.subr.mxu0 0.0
          %5258 = vmatpush1.msra.mxu0 0.0
          %5259 = vmatprep.subr.mxu0 0.0
          %5260 = vmatpush1.msra.mxu0 0.0
          %5261 = vmatprep.subr.mxu0 0.0
          %5262 = vmatpush1.msra.mxu0 0.0
          %5263 = vmatprep.subr.mxu0 0.0
          %5264 = vmatpush1.msra.mxu0 0.0
          %5265 = vmatprep.subr.mxu0 0.0
          %5266 = vmatpush1.msra.mxu0 0.0
          %5267 = vmatprep.subr.mxu0 0.0
          %5268 = vmatpush1.msra.mxu0 0.0
          %5269 = vmatprep.subr.mxu0 0.0
          %5270 = vmatpush1.msra.mxu0 0.0
          %5271 = vmatprep.subr.mxu0 0.0
          %5272 = vmatpush1.msra.mxu0 0.0
          %5273 = vmatprep.subr.mxu0 0.0
          %5274 = vmatpush1.msra.mxu0 0.0
          %5275 = vmatprep.mubr.f32.mxu0 0.0
          %5276 = vmatmul.mubr.f32.gmra.mrb[0].mxu0 %v5203
          %v5277 = vpop.f32.mrb[0].mxu0
          %v5278 = vadd.f32 0.0, %v5277
          %v5279 = vpop.f32.mrb[0].mxu0
          %5280 = vmatprep.mubr.f32.mxu0 0.0
          %5281 = vmatmul.mubr.f32.gmra.mrb[0].mxu0 %v5206
          %v5282 = vpop.f32.mrb[0].mxu0
          %v5283 = vadd.f32 0.0, %v5282
          %v5284 = vpop.f32.mrb[0].mxu0
          %5285 = vmatprep.mubr.f32.mxu0 0.0
          %5286 = vmatmul.mubr.f32.gmra.mrb[0].mxu0 %v5209
          %v5287 = vpop.f32.mrb[0].mxu0
          %v5288 = vadd.f32 0.0, %v5287
          %v5289 = vpop.f32.mrb[0].mxu0
          %5290 = vdwg.mxu0
          %v5292 = vsel %vm5201, %v5134, 0
          %v5295 = vsel %vm5201, %v5135, 0
          %v5298 = vsel %vm5201, %v5136, 0
          %5300 = vmatprep.subr.mxu0 0.0
          %5301 = vmatpush1.msra.mxu0 %v5137
          %5302 = vmatprep.subr.mxu0 0.0
          %5303 = vmatpush1.msra.mxu0 %v5138
          %5304 = vmatprep.subr.mxu0 0.0
          %5305 = vmatpush1.msra.mxu0 %v5139
          %5306 = vmatprep.subr.mxu0 0.0
          %5307 = vmatpush1.msra.mxu0 %v5140
          %5308 = vmatprep.subr.mxu0 0.0
          %5309 = vmatpush1.msra.mxu0 %v5141
          %5310 = vmatprep.subr.mxu0 0.0
          %5311 = vmatpush1.msra.mxu0 %v5142
          %5312 = vmatprep.subr.mxu0 0.0
          %5313 = vmatpush1.msra.mxu0 %v5143
          %5314 = vmatprep.subr.mxu0 0.0
          %5315 = vmatpush1.msra.mxu0 %v5144
          %5316 = vmatprep.subr.mxu0 0.0
          %5317 = vmatpush1.msra.mxu0 %v5145
          %5318 = vmatprep.subr.mxu0 0.0
          %5319 = vmatpush1.msra.mxu0 %v5146
          %5320 = vmatprep.subr.mxu0 0.0
          %5321 = vmatpush1.msra.mxu0 %v5147
          %5322 = vmatprep.subr.mxu0 0.0
          %5323 = vmatpush1.msra.mxu0 %v5148
          %5324 = vmatprep.subr.mxu0 0.0
          %5325 = vmatpush1.msra.mxu0 0.0
          %5326 = vmatprep.subr.mxu0 0.0
          %5327 = vmatpush1.msra.mxu0 0.0
          %5328 = vmatprep.subr.mxu0 0.0
          %5329 = vmatpush1.msra.mxu0 0.0
          %5330 = vmatprep.subr.mxu0 0.0
          %5331 = vmatpush1.msra.mxu0 0.0
          %5332 = vmatprep.subr.mxu0 0.0
          %5333 = vmatpush1.msra.mxu0 0.0
          %5334 = vmatprep.subr.mxu0 0.0
          %5335 = vmatpush1.msra.mxu0 0.0
          %5336 = vmatprep.subr.mxu0 0.0
          %5337 = vmatpush1.msra.mxu0 0.0
          %5338 = vmatprep.subr.mxu0 0.0
          %5339 = vmatpush1.msra.mxu0 0.0
          %5340 = vmatprep.subr.mxu0 0.0
          %5341 = vmatpush1.msra.mxu0 0.0
          %5342 = vmatprep.subr.mxu0 0.0
          %5343 = vmatpush1.msra.mxu0 0.0
          %5344 = vmatprep.subr.mxu0 0.0
          %5345 = vmatpush1.msra.mxu0 0.0
          %5346 = vmatprep.subr.mxu0 0.0
          %5347 = vmatpush1.msra.mxu0 0.0
          %5348 = vmatprep.subr.mxu0 0.0
          %5349 = vmatpush1.msra.mxu0 0.0
          %5350 = vmatprep.subr.mxu0 0.0
          %5351 = vmatpush1.msra.mxu0 0.0
          %5352 = vmatprep.subr.mxu0 0.0
          %5353 = vmatpush1.msra.mxu0 0.0
          %5354 = vmatprep.subr.mxu0 0.0
          %5355 = vmatpush1.msra.mxu0 0.0
          %5356 = vmatprep.subr.mxu0 0.0
          %5357 = vmatpush1.msra.mxu0 0.0
          %5358 = vmatprep.subr.mxu0 0.0
          %5359 = vmatpush1.msra.mxu0 0.0
          %5360 = vmatprep.subr.mxu0 0.0
          %5361 = vmatpush1.msra.mxu0 0.0
          %5362 = vmatprep.subr.mxu0 0.0
          %5363 = vmatpush1.msra.mxu0 0.0
          %5364 = vmatprep.mubr.f32.mxu0 0.0
          %5365 = vmatmul.mubr.f32.gmra.mrb[0].mxu0 %v5292
          %v5366 = vpop.f32.mrb[0].mxu0
          %v5367 = vadd.f32 %v5278, %v5366
          %v5368 = vpop.f32.mrb[0].mxu0
          %5369 = vmatprep.mubr.f32.mxu0 0.0
          %5370 = vmatmul.mubr.f32.gmra.mrb[0].mxu0 %v5295
          %v5371 = vpop.f32.mrb[0].mxu0
          %v5372 = vadd.f32 %v5283, %v5371
          %v5373 = vpop.f32.mrb[0].mxu0
          %5374 = vmatprep.mubr.f32.mxu0 0.0
          %5375 = vmatmul.mubr.f32.gmra.mrb[0].mxu0 %v5298
          %v5376 = vpop.f32.mrb[0].mxu0
          %v5377 = vadd.f32 %v5288, %v5376
          %v5378 = vpop.f32.mrb[0].mxu0
          %5379 = vdwg.mxu0
          %v5380 = vld [vmem:[%s5091 + $0x2] sm:$0xff]
          %v5381 = vld [vmem:[%s5091 + $0xa] sm:$0xff]
          %v5382 = vld [vmem:[%s5091 + $0x12] sm:$0x1]
          %v5383 = vld [vmem:[%s5097 + $0x2] sm:$0xff]
          %v5384 = vld [vmem:[%s5097 + $0xa] sm:$0xff]
          %v5385 = vld [vmem:[%s5097 + $0x12] sm:$0x1]
          %v5386 = vld [vmem:[%s5103 + $0x2] sm:$0xff]
          %v5387 = vld [vmem:[%s5103 + $0xa] sm:$0xff]
          %v5388 = vld [vmem:[%s5103 + $0x12] sm:$0x1]
          %5392 = vrot.lane.b32.xlu0 %v5383, 32
          %v5393 = vpop.permute.xlu0 %5392
          %5394 = vrot.lane.b32.xlu0 %v5384, 32
          %v5395 = vpop.permute.xlu0 %5394
          %5396 = vrot.lane.b32.xlu0 %v5385, 32
          %v5397 = vpop.permute.xlu0 %5396
          %5404 = vrot.lane.b32.xlu0 %v5386, 64
          %v5405 = vpop.permute.xlu0 %5404
          %5406 = vrot.lane.b32.xlu0 %v5387, 64
          %v5407 = vpop.permute.xlu0 %5406
          %5408 = vrot.lane.b32.xlu0 %v5388, 64
          %v5409 = vpop.permute.xlu0 %5408
          %v5413 = vsel %vm1494, %v5380, %v5393
          %v5414 = vsel %vm1494, %v5381, %v5395
          %v5415 = vsel %vm1494, %v5382, %v5397
          %v5416 = vsel %vm1695, %v5413, %v5405
          %v5417 = vsel %vm1695, %v5414, %v5407
          %v5418 = vsel %vm1695, %v5415, %v5409
          %s5419 = scalar_lea.vmem %s9, 192
          %v5420 = vld [vmem:[%s5419] sm:$0xff]
          %v5421 = vld [vmem:[%s5419 + $0x8] sm:$0xff]
          %v5422 = vld [vmem:[%s5419 + $0x10] sm:$0xff]
          %v5423 = vld [vmem:[%s5419 + $0x18] sm:$0xff]
          %v5424 = vld [vmem:[%s5419 + $0x20] sm:$0xff]
          %v5425 = vld [vmem:[%s5419 + $0x28] sm:$0xff]
          %v5426 = vld [vmem:[%s5419 + $0x30] sm:$0xff]
          %v5427 = vld [vmem:[%s5419 + $0x38] sm:$0xff]
          %v5428 = vld [vmem:[%s5419 + $0x40] sm:$0xff]
          %v5429 = vld [vmem:[%s5419 + $0x48] sm:$0xff]
          %v5430 = vld [vmem:[%s5419 + $0x50] sm:$0xff]
          %v5431 = vld [vmem:[%s5419 + $0x58] sm:$0xff]
          %v5433 = vsel %vm5201, %v5416, 0
          %v5436 = vsel %vm5201, %v5417, 0
          %v5439 = vsel %vm5201, %v5418, 0
          %5441 = vmatprep.subr.mxu0 0.0
          %5442 = vmatpush1.msra.mxu0 %v5420
          %5443 = vmatprep.subr.mxu0 0.0
          %5444 = vmatpush1.msra.mxu0 %v5421
          %5445 = vmatprep.subr.mxu0 0.0
          %5446 = vmatpush1.msra.mxu0 %v5422
          %5447 = vmatprep.subr.mxu0 0.0
          %5448 = vmatpush1.msra.mxu0 %v5423
          %5449 = vmatprep.subr.mxu0 0.0
          %5450 = vmatpush1.msra.mxu0 %v5424
          %5451 = vmatprep.subr.mxu0 0.0
          %5452 = vmatpush1.msra.mxu0 %v5425
          %5453 = vmatprep.subr.mxu0 0.0
          %5454 = vmatpush1.msra.mxu0 %v5426
          %5455 = vmatprep.subr.mxu0 0.0
          %5456 = vmatpush1.msra.mxu0 %v5427
          %5457 = vmatprep.subr.mxu0 0.0
          %5458 = vmatpush1.msra.mxu0 %v5428
          %5459 = vmatprep.subr.mxu0 0.0
          %5460 = vmatpush1.msra.mxu0 %v5429
          %5461 = vmatprep.subr.mxu0 0.0
          %5462 = vmatpush1.msra.mxu0 %v5430
          %5463 = vmatprep.subr.mxu0 0.0
          %5464 = vmatpush1.msra.mxu0 %v5431
          %5465 = vmatprep.subr.mxu0 0.0
          %5466 = vmatpush1.msra.mxu0 0.0
          %5467 = vmatprep.subr.mxu0 0.0
          %5468 = vmatpush1.msra.mxu0 0.0
          %5469 = vmatprep.subr.mxu0 0.0
          %5470 = vmatpush1.msra.mxu0 0.0
          %5471 = vmatprep.subr.mxu0 0.0
          %5472 = vmatpush1.msra.mxu0 0.0
          %5473 = vmatprep.subr.mxu0 0.0
          %5474 = vmatpush1.msra.mxu0 0.0
          %5475 = vmatprep.subr.mxu0 0.0
          %5476 = vmatpush1.msra.mxu0 0.0
          %5477 = vmatprep.subr.mxu0 0.0
          %5478 = vmatpush1.msra.mxu0 0.0
          %5479 = vmatprep.subr.mxu0 0.0
          %5480 = vmatpush1.msra.mxu0 0.0
          %5481 = vmatprep.subr.mxu0 0.0
          %5482 = vmatpush1.msra.mxu0 0.0
          %5483 = vmatprep.subr.mxu0 0.0
          %5484 = vmatpush1.msra.mxu0 0.0
          %5485 = vmatprep.subr.mxu0 0.0
          %5486 = vmatpush1.msra.mxu0 0.0
          %5487 = vmatprep.subr.mxu0 0.0
          %5488 = vmatpush1.msra.mxu0 0.0
          %5489 = vmatprep.subr.mxu0 0.0
          %5490 = vmatpush1.msra.mxu0 0.0
          %5491 = vmatprep.subr.mxu0 0.0
          %5492 = vmatpush1.msra.mxu0 0.0
          %5493 = vmatprep.subr.mxu0 0.0
          %5494 = vmatpush1.msra.mxu0 0.0
          %5495 = vmatprep.subr.mxu0 0.0
          %5496 = vmatpush1.msra.mxu0 0.0
          %5497 = vmatprep.subr.mxu0 0.0
          %5498 = vmatpush1.msra.mxu0 0.0
          %5499 = vmatprep.subr.mxu0 0.0
          %5500 = vmatpush1.msra.mxu0 0.0
          %5501 = vmatprep.subr.mxu0 0.0
          %5502 = vmatpush1.msra.mxu0 0.0
          %5503 = vmatprep.subr.mxu0 0.0
          %5504 = vmatpush1.msra.mxu0 0.0
          %5505 = vmatprep.mubr.f32.mxu0 0.0
          %5506 = vmatmul.mubr.f32.gmra.mrb[0].mxu0 %v5433
          %v5507 = vpop.f32.mrb[0].mxu0
          %v5508 = vadd.f32 0.0, %v5507
          %v5509 = vpop.f32.mrb[0].mxu0
          %5510 = vmatprep.mubr.f32.mxu0 0.0
          %5511 = vmatmul.mubr.f32.gmra.mrb[0].mxu0 %v5436
          %v5512 = vpop.f32.mrb[0].mxu0
          %v5513 = vadd.f32 0.0, %v5512
          %v5514 = vpop.f32.mrb[0].mxu0
          %5515 = vmatprep.mubr.f32.mxu0 0.0
          %5516 = vmatmul.mubr.f32.gmra.mrb[0].mxu0 %v5439
          %v5517 = vpop.f32.mrb[0].mxu0
          %v5518 = vadd.f32 0.0, %v5517
          %v5519 = vpop.f32.mrb[0].mxu0
          %5520 = vdwg.mxu0
          %v5521 = vadd.f32 %v5367, %v5508
          %v5522 = vadd.f32 %v5372, %v5513
          %v5523 = vadd.f32 %v5377, %v5518
          %v5525 = vlaneseq
          %v5526 = vshrl.u32 %v5525, 7
          %v5527 = vsub.s32 0, %v5526
          %v5528 = vrot.slane %v5083, %v5527
          %v5530 = vadd.f32 %v5521, %v5528
          %v5531 = vadd.f32 %v5522, %v5528
          %v5532 = vadd.f32 %v5523, %v5528
          %vm5533 = vcmp.gt.f32.partialorder %v5530, 0.0
          %vm5534 = vcmp.gt.f32.partialorder %v5531, 0.0
          %vm5535 = vcmp.gt.f32.partialorder %v5532, 0.0
          %v5536 = vmul.f32 %v5530, 0.25
          %v5537 = vmul.f32 %v5531, 0.25
          %v5538 = vmul.f32 %v5532, 0.25
          %v5539 = vsel %vm5533, %v5530, %v5536
          %v5540 = vsel %vm5534, %v5531, %v5537
          %v5541 = vsel %vm5535, %v5532, %v5538
          %s5542 = scalar_lea.vmem [#allocation8], %s5090
          %5543 = vst.msk [vmem:[%s5542] sm:$0xff] %vm1695, %v5539
          %5544 = vst.msk [vmem:[%s5542 + $0x8] sm:$0xff] %vm1695, %v5540
          %5545 = vst.msk [vmem:[%s5542 + $0x10] sm:$0x1] %vm1698, %v5541
        $region135: #{hnet_forward.1} parent=87 // loop_footer
          %s5089 = sadd.s32 1, %s5085
        $region136: #{hnet_forward.1} parent=87 // loop_footer_branch
          %5084 = sbr.rel target = $region132
        $region137: #{hnet_forward.1} parent=87 // loop_exit
          _
        %v5546 = vld [vmem:[%s12] sm:$0x1]
        loop: start=0, step=1, limit=15
        $region138: #{hnet_forward.1} parent=87 // loop_pre_header
          _
        $region139: #{hnet_forward.1} parent=87 // loop_header
          %s5548 = sphi 0, %s5552
          %p5549 = scmp.ge.s32.totalorder %s5548, 15
        $region140: #{hnet_forward.1} parent=87 // loop_header_branch
          %5551 = sbr.rel (%p5549) target = $region144
        $region141: #{hnet_forward.1} parent=87 // loop_body
          %s5553 = smul.u32 %s5548, 24
          %s5554 = scalar_lea.vmem [#allocation8], %s5553
          %v5555 = vld [vmem:[%s5554] sm:$0xff]
          %v5556 = vld [vmem:[%s5554 + $0x8] sm:$0x7f]
          %s5557 = sadd.s32 %s5548, 1
          %s5558 = smul.u32 %s5557, 24
          %s5559 = scalar_lea.vmem [#allocation8], %s5558
          %v5560 = vld [vmem:[%s5559] sm:$0xff]
          %v5561 = vld [vmem:[%s5559 + $0x8] sm:$0x7f]
          %s5562 = sadd.s32 %s5548, 2
          %s5563 = smul.u32 %s5562, 24
          %s5564 = scalar_lea.vmem [#allocation8], %s5563
          %v5565 = vld [vmem:[%s5564] sm:$0xff]
          %v5566 = vld [vmem:[%s5564 + $0x8] sm:$0x7f]
          %5569 = vrot.lane.b32.xlu0 %v5560, 64
          %v5570 = vpop.permute.xlu0 %5569
          %5571 = vrot.lane.b32.xlu0 %v5561, 64
          %v5572 = vpop.permute.xlu0 %5571
          %v5575 = vsel %vm1695, %v5555, %v5570
          %v5576 = vsel %vm1695, %v5556, %v5572
          %v5577 = vld [vmem:[%s11] sm:$0xff]
          %v5578 = vld [vmem:[%s11 + $0x8] sm:$0xff]
          %v5579 = vld [vmem:[%s11 + $0x10] sm:$0xff]
          %v5580 = vld [vmem:[%s11 + $0x18] sm:$0xff]
          %v5581 = vld [vmem:[%s11 + $0x20] sm:$0xff]
          %v5582 = vld [vmem:[%s11 + $0x28] sm:$0xff]
          %v5583 = vld [vmem:[%s11 + $0x30] sm:$0xff]
          %v5584 = vld [vmem:[%s11 + $0x38] sm:$0xff]
          %v5585 = vld [vmem:[%s11 + $0x40] sm:$0xff]
          %v5586 = vld [vmem:[%s11 + $0x48] sm:$0xff]
          %v5587 = vld [vmem:[%s11 + $0x50] sm:$0xff]
          %v5588 = vld [vmem:[%s11 + $0x58] sm:$0xff]
          %v5589 = vld [vmem:[%s11 + $0x60] sm:$0xff]
          %v5590 = vld [vmem:[%s11 + $0x68] sm:$0xff]
          %v5591 = vld [vmem:[%s11 + $0x70] sm:$0xff]
          %v5592 = vld [vmem:[%s11 + $0x78] sm:$0xff]
          %v5593 = vld [vmem:[%s11 + $0x80] sm:$0xff]
          %v5594 = vld [vmem:[%s11 + $0x88] sm:$0xff]
          %v5595 = vld [vmem:[%s11 + $0x90] sm:$0xff]
          %v5596 = vld [vmem:[%s11 + $0x98] sm:$0xff]
          %v5597 = vld [vmem:[%s11 + $0xa0] sm:$0xff]
          %v5598 = vld [vmem:[%s11 + $0xa8] sm:$0xff]
          %v5599 = vld [vmem:[%s11 + $0xb0] sm:$0xff]
          %v5600 = vld [vmem:[%s11 + $0xb8] sm:$0xff]
          %v5601 = vld [vmem:[%s5554 + $0x1] sm:$0xff]
          %v5602 = vld [vmem:[%s5554 + $0x9] sm:$0x7f]
          %v5603 = vld [vmem:[%s5559 + $0x1] sm:$0xff]
          %v5604 = vld [vmem:[%s5559 + $0x9] sm:$0x7f]
          %v5605 = vld [vmem:[%s5564 + $0x1] sm:$0xff]
          %v5606 = vld [vmem:[%s5564 + $0x9] sm:$0x7f]
          %5609 = vrot.lane.b32.xlu0 %v5603, 64
          %v5610 = vpop.permute.xlu0 %5609
          %5611 = vrot.lane.b32.xlu0 %v5604, 64
          %v5612 = vpop.permute.xlu0 %5611
          %v5615 = vsel %vm1695, %v5601, %v5610
          %v5616 = vsel %vm1695, %v5602, %v5612
          %s5617 = scalar_lea.vmem %s11, 192
          %v5618 = vld [vmem:[%s5617] sm:$0xff]
          %v5619 = vld [vmem:[%s5617 + $0x8] sm:$0xff]
          %v5620 = vld [vmem:[%s5617 + $0x10] sm:$0xff]
          %v5621 = vld [vmem:[%s5617 + $0x18] sm:$0xff]
          %v5622 = vld [vmem:[%s5617 + $0x20] sm:$0xff]
          %v5623 = vld [vmem:[%s5617 + $0x28] sm:$0xff]
          %v5624 = vld [vmem:[%s5617 + $0x30] sm:$0xff]
          %v5625 = vld [vmem:[%s5617 + $0x38] sm:$0xff]
          %v5626 = vld [vmem:[%s5617 + $0x40] sm:$0xff]
          %v5627 = vld [vmem:[%s5617 + $0x48] sm:$0xff]
          %v5628 = vld [vmem:[%s5617 + $0x50] sm:$0xff]
          %v5629 = vld [vmem:[%s5617 + $0x58] sm:$0xff]
          %v5630 = vld [vmem:[%s5617 + $0x60] sm:$0xff]
          %v5631 = vld [vmem:[%s5617 + $0x68] sm:$0xff]
          %v5632 = vld [vmem:[%s5617 + $0x70] sm:$0xff]
          %v5633 = vld [vmem:[%s5617 + $0x78] sm:$0xff]
          %v5634 = vld [vmem:[%s5617 + $0x80] sm:$0xff]
          %v5635 = vld [vmem:[%s5617 + $0x88] sm:$0xff]
          %v5636 = vld [vmem:[%s5617 + $0x90] sm:$0xff]
          %v5637 = vld [vmem:[%s5617 + $0x98] sm:$0xff]
          %v5638 = vld [vmem:[%s5617 + $0xa0] sm:$0xff]
          %v5639 = vld [vmem:[%s5617 + $0xa8] sm:$0xff]
          %v5640 = vld [vmem:[%s5617 + $0xb0] sm:$0xff]
          %v5641 = vld [vmem:[%s5617 + $0xb8] sm:$0xff]
          %v5643 = vsel %vm1695, %v5605, 0
          %v5646 = vsel %vm1695, %v5606, 0
          %5648 = vmatprep.subr.mxu0 0.0
          %5649 = vmatpush1.msra.mxu0 %v5618
          %5650 = vmatprep.subr.mxu0 0.0
          %5651 = vmatpush1.msra.mxu0 %v5619
          %5652 = vmatprep.subr.mxu0 0.0
          %5653 = vmatpush1.msra.mxu0 %v5620
          %5654 = vmatprep.subr.mxu0 0.0
          %5655 = vmatpush1.msra.mxu0 %v5621
          %5656 = vmatprep.subr.mxu0 0.0
          %5657 = vmatpush1.msra.mxu0 %v5622
          %5658 = vmatprep.subr.mxu0 0.0
          %5659 = vmatpush1.msra.mxu0 %v5623
          %5660 = vmatprep.subr.mxu0 0.0
          %5661 = vmatpush1.msra.mxu0 %v5624
          %5662 = vmatprep.subr.mxu0 0.0
          %5663 = vmatpush1.msra.mxu0 %v5625
          %5664 = vmatprep.subr.mxu0 0.0
          %5665 = vmatpush1.msra.mxu0 %v5626
          %5666 = vmatprep.subr.mxu0 0.0
          %5667 = vmatpush1.msra.mxu0 %v5627
          %5668 = vmatprep.subr.mxu0 0.0
          %5669 = vmatpush1.msra.mxu0 %v5628
          %5670 = vmatprep.subr.mxu0 0.0
          %5671 = vmatpush1.msra.mxu0 %v5629
          %5672 = vmatprep.subr.mxu0 0.0
          %5673 = vmatpush1.msra.mxu0 %v5630
          %5674 = vmatprep.subr.mxu0 0.0
          %5675 = vmatpush1.msra.mxu0 %v5631
          %5676 = vmatprep.subr.mxu0 0.0
          %5677 = vmatpush1.msra.mxu0 %v5632
          %5678 = vmatprep.subr.mxu0 0.0
          %5679 = vmatpush1.msra.mxu0 %v5633
          %5680 = vmatprep.subr.mxu0 0.0
          %5681 = vmatpush1.msra.mxu0 %v5634
          %5682 = vmatprep.subr.mxu0 0.0
          %5683 = vmatpush1.msra.mxu0 %v5635
          %5684 = vmatprep.subr.mxu0 0.0
          %5685 = vmatpush1.msra.mxu0 %v5636
          %5686 = vmatprep.subr.mxu0 0.0
          %5687 = vmatpush1.msra.mxu0 %v5637
          %5688 = vmatprep.subr.mxu0 0.0
          %5689 = vmatpush1.msra.mxu0 %v5638
          %5690 = vmatprep.subr.mxu0 0.0
          %5691 = vmatpush1.msra.mxu0 %v5639
          %5692 = vmatprep.subr.mxu0 0.0
          %5693 = vmatpush1.msra.mxu0 %v5640
          %5694 = vmatprep.subr.mxu0 0.0
          %5695 = vmatpush1.msra.mxu0 %v5641
          %5696 = vmatprep.subr.mxu0 0.0
          %5697 = vmatpush1.msra.mxu0 0.0
          %5698 = vmatprep.subr.mxu0 0.0
          %5699 = vmatpush1.msra.mxu0 0.0
          %5700 = vmatprep.subr.mxu0 0.0
          %5701 = vmatpush1.msra.mxu0 0.0
          %5702 = vmatprep.subr.mxu0 0.0
          %5703 = vmatpush1.msra.mxu0 0.0
          %5704 = vmatprep.subr.mxu0 0.0
          %5705 = vmatpush1.msra.mxu0 0.0
          %5706 = vmatprep.subr.mxu0 0.0
          %5707 = vmatpush1.msra.mxu0 0.0
          %5708 = vmatprep.subr.mxu0 0.0
          %5709 = vmatpush1.msra.mxu0 0.0
          %5710 = vmatprep.subr.mxu0 0.0
          %5711 = vmatpush1.msra.mxu0 0.0
          %5712 = vmatprep.mubr.f32.mxu0 %v5643
          %5713 = vmatmul.mubr.f32.gmra.mrb[0].mxu0 %v5615
          %v5714 = vpop.f32.mrb[0].mxu0
          %v5715 = vadd.f32 0.0, %v5714
          %v5716 = vpop.f32.mrb[0].mxu0
          %5717 = vmatprep.mubr.f32.mxu0 %v5646
          %5718 = vmatmul.mubr.f32.gmra.mrb[0].mxu0 %v5616
          %v5719 = vpop.f32.mrb[0].mxu0
          %v5720 = vadd.f32 0.0, %v5719
          %v5721 = vpop.f32.mrb[0].mxu0
          %5722 = vdwg.mxu0
          %v5724 = vsel %vm1695, %v5565, 0
          %v5727 = vsel %vm1695, %v5566, 0
          %5729 = vmatprep.subr.mxu0 0.0
          %5730 = vmatpush1.msra.mxu0 %v5577
          %5731 = vmatprep.subr.mxu0 0.0
          %5732 = vmatpush1.msra.mxu0 %v5578
          %5733 = vmatprep.subr.mxu0 0.0
          %5734 = vmatpush1.msra.mxu0 %v5579
          %5735 = vmatprep.subr.mxu0 0.0
          %5736 = vmatpush1.msra.mxu0 %v5580
          %5737 = vmatprep.subr.mxu0 0.0
          %5738 = vmatpush1.msra.mxu0 %v5581
          %5739 = vmatprep.subr.mxu0 0.0
          %5740 = vmatpush1.msra.mxu0 %v5582
          %5741 = vmatprep.subr.mxu0 0.0
          %5742 = vmatpush1.msra.mxu0 %v5583
          %5743 = vmatprep.subr.mxu0 0.0
          %5744 = vmatpush1.msra.mxu0 %v5584
          %5745 = vmatprep.subr.mxu0 0.0
          %5746 = vmatpush1.msra.mxu0 %v5585
          %5747 = vmatprep.subr.mxu0 0.0
          %5748 = vmatpush1.msra.mxu0 %v5586
          %5749 = vmatprep.subr.mxu0 0.0
          %5750 = vmatpush1.msra.mxu0 %v5587
          %5751 = vmatprep.subr.mxu0 0.0
          %5752 = vmatpush1.msra.mxu0 %v5588
          %5753 = vmatprep.subr.mxu0 0.0
          %5754 = vmatpush1.msra.mxu0 %v5589
          %5755 = vmatprep.subr.mxu0 0.0
          %5756 = vmatpush1.msra.mxu0 %v5590
          %5757 = vmatprep.subr.mxu0 0.0
          %5758 = vmatpush1.msra.mxu0 %v5591
          %5759 = vmatprep.subr.mxu0 0.0
          %5760 = vmatpush1.msra.mxu0 %v5592
          %5761 = vmatprep.subr.mxu0 0.0
          %5762 = vmatpush1.msra.mxu0 %v5593
          %5763 = vmatprep.subr.mxu0 0.0
          %5764 = vmatpush1.msra.mxu0 %v5594
          %5765 = vmatprep.subr.mxu0 0.0
          %5766 = vmatpush1.msra.mxu0 %v5595
          %5767 = vmatprep.subr.mxu0 0.0
          %5768 = vmatpush1.msra.mxu0 %v5596
          %5769 = vmatprep.subr.mxu0 0.0
          %5770 = vmatpush1.msra.mxu0 %v5597
          %5771 = vmatprep.subr.mxu0 0.0
          %5772 = vmatpush1.msra.mxu0 %v5598
          %5773 = vmatprep.subr.mxu0 0.0
          %5774 = vmatpush1.msra.mxu0 %v5599
          %5775 = vmatprep.subr.mxu0 0.0
          %5776 = vmatpush1.msra.mxu0 %v5600
          %5777 = vmatprep.subr.mxu0 0.0
          %5778 = vmatpush1.msra.mxu0 0.0
          %5779 = vmatprep.subr.mxu0 0.0
          %5780 = vmatpush1.msra.mxu0 0.0
          %5781 = vmatprep.subr.mxu0 0.0
          %5782 = vmatpush1.msra.mxu0 0.0
          %5783 = vmatprep.subr.mxu0 0.0
          %5784 = vmatpush1.msra.mxu0 0.0
          %5785 = vmatprep.subr.mxu0 0.0
          %5786 = vmatpush1.msra.mxu0 0.0
          %5787 = vmatprep.subr.mxu0 0.0
          %5788 = vmatpush1.msra.mxu0 0.0
          %5789 = vmatprep.subr.mxu0 0.0
          %5790 = vmatpush1.msra.mxu0 0.0
          %5791 = vmatprep.subr.mxu0 0.0
          %5792 = vmatpush1.msra.mxu0 0.0
          %5793 = vmatprep.mubr.f32.mxu0 %v5724
          %5794 = vmatmul.mubr.f32.gmra.mrb[0].mxu0 %v5575
          %v5795 = vpop.f32.mrb[0].mxu0
          %v5796 = vadd.f32 %v5715, %v5795
          %v5797 = vpop.f32.mrb[0].mxu0
          %5798 = vmatprep.mubr.f32.mxu0 %v5727
          %5799 = vmatmul.mubr.f32.gmra.mrb[0].mxu0 %v5576
          %v5800 = vpop.f32.mrb[0].mxu0
          %v5801 = vadd.f32 %v5720, %v5800
          %v5802 = vpop.f32.mrb[0].mxu0
          %5803 = vdwg.mxu0
          %v5804 = vld [vmem:[%s5554 + $0x2] sm:$0xff]
          %v5805 = vld [vmem:[%s5554 + $0xa] sm:$0x7f]
          %v5806 = vld [vmem:[%s5559 + $0x2] sm:$0xff]
          %v5807 = vld [vmem:[%s5559 + $0xa] sm:$0x7f]
          %v5808 = vld [vmem:[%s5564 + $0x2] sm:$0xff]
          %v5809 = vld [vmem:[%s5564 + $0xa] sm:$0x7f]
          %5812 = vrot.lane.b32.xlu0 %v5806, 64
          %v5813 = vpop.permute.xlu0 %5812
          %5814 = vrot.lane.b32.xlu0 %v5807, 64
          %v5815 = vpop.permute.xlu0 %5814
          %v5818 = vsel %vm1695, %v5804, %v5813
          %v5819 = vsel %vm1695, %v5805, %v5815
          %s5820 = scalar_lea.vmem %s11, 384
          %v5821 = vld [vmem:[%s5820] sm:$0xff]
          %v5822 = vld [vmem:[%s5820 + $0x8] sm:$0xff]
          %v5823 = vld [vmem:[%s5820 + $0x10] sm:$0xff]
          %v5824 = vld [vmem:[%s5820 + $0x18] sm:$0xff]
          %v5825 = vld [vmem:[%s5820 + $0x20] sm:$0xff]
          %v5826 = vld [vmem:[%s5820 + $0x28] sm:$0xff]
          %v5827 = vld [vmem:[%s5820 + $0x30] sm:$0xff]
          %v5828 = vld [vmem:[%s5820 + $0x38] sm:$0xff]
          %v5829 = vld [vmem:[%s5820 + $0x40] sm:$0xff]
          %v5830 = vld [vmem:[%s5820 + $0x48] sm:$0xff]
          %v5831 = vld [vmem:[%s5820 + $0x50] sm:$0xff]
          %v5832 = vld [vmem:[%s5820 + $0x58] sm:$0xff]
          %v5833 = vld [vmem:[%s5820 + $0x60] sm:$0xff]
          %v5834 = vld [vmem:[%s5820 + $0x68] sm:$0xff]
          %v5835 = vld [vmem:[%s5820 + $0x70] sm:$0xff]
          %v5836 = vld [vmem:[%s5820 + $0x78] sm:$0xff]
          %v5837 = vld [vmem:[%s5820 + $0x80] sm:$0xff]
          %v5838 = vld [vmem:[%s5820 + $0x88] sm:$0xff]
          %v5839 = vld [vmem:[%s5820 + $0x90] sm:$0xff]
          %v5840 = vld [vmem:[%s5820 + $0x98] sm:$0xff]
          %v5841 = vld [vmem:[%s5820 + $0xa0] sm:$0xff]
          %v5842 = vld [vmem:[%s5820 + $0xa8] sm:$0xff]
          %v5843 = vld [vmem:[%s5820 + $0xb0] sm:$0xff]
          %v5844 = vld [vmem:[%s5820 + $0xb8] sm:$0xff]
          %v5846 = vsel %vm1695, %v5808, 0
          %v5849 = vsel %vm1695, %v5809, 0
          %5851 = vmatprep.subr.mxu0 0.0
          %5852 = vmatpush1.msra.mxu0 %v5821
          %5853 = vmatprep.subr.mxu0 0.0
          %5854 = vmatpush1.msra.mxu0 %v5822
          %5855 = vmatprep.subr.mxu0 0.0
          %5856 = vmatpush1.msra.mxu0 %v5823
          %5857 = vmatprep.subr.mxu0 0.0
          %5858 = vmatpush1.msra.mxu0 %v5824
          %5859 = vmatprep.subr.mxu0 0.0
          %5860 = vmatpush1.msra.mxu0 %v5825
          %5861 = vmatprep.subr.mxu0 0.0
          %5862 = vmatpush1.msra.mxu0 %v5826
          %5863 = vmatprep.subr.mxu0 0.0
          %5864 = vmatpush1.msra.mxu0 %v5827
          %5865 = vmatprep.subr.mxu0 0.0
          %5866 = vmatpush1.msra.mxu0 %v5828
          %5867 = vmatprep.subr.mxu0 0.0
          %5868 = vmatpush1.msra.mxu0 %v5829
          %5869 = vmatprep.subr.mxu0 0.0
          %5870 = vmatpush1.msra.mxu0 %v5830
          %5871 = vmatprep.subr.mxu0 0.0
          %5872 = vmatpush1.msra.mxu0 %v5831
          %5873 = vmatprep.subr.mxu0 0.0
          %5874 = vmatpush1.msra.mxu0 %v5832
          %5875 = vmatprep.subr.mxu0 0.0
          %5876 = vmatpush1.msra.mxu0 %v5833
          %5877 = vmatprep.subr.mxu0 0.0
          %5878 = vmatpush1.msra.mxu0 %v5834
          %5879 = vmatprep.subr.mxu0 0.0
          %5880 = vmatpush1.msra.mxu0 %v5835
          %5881 = vmatprep.subr.mxu0 0.0
          %5882 = vmatpush1.msra.mxu0 %v5836
          %5883 = vmatprep.subr.mxu0 0.0
          %5884 = vmatpush1.msra.mxu0 %v5837
          %5885 = vmatprep.subr.mxu0 0.0
          %5886 = vmatpush1.msra.mxu0 %v5838
          %5887 = vmatprep.subr.mxu0 0.0
          %5888 = vmatpush1.msra.mxu0 %v5839
          %5889 = vmatprep.subr.mxu0 0.0
          %5890 = vmatpush1.msra.mxu0 %v5840
          %5891 = vmatprep.subr.mxu0 0.0
          %5892 = vmatpush1.msra.mxu0 %v5841
          %5893 = vmatprep.subr.mxu0 0.0
          %5894 = vmatpush1.msra.mxu0 %v5842
          %5895 = vmatprep.subr.mxu0 0.0
          %5896 = vmatpush1.msra.mxu0 %v5843
          %5897 = vmatprep.subr.mxu0 0.0
          %5898 = vmatpush1.msra.mxu0 %v5844
          %5899 = vmatprep.subr.mxu0 0.0
          %5900 = vmatpush1.msra.mxu0 0.0
          %5901 = vmatprep.subr.mxu0 0.0
          %5902 = vmatpush1.msra.mxu0 0.0
          %5903 = vmatprep.subr.mxu0 0.0
          %5904 = vmatpush1.msra.mxu0 0.0
          %5905 = vmatprep.subr.mxu0 0.0
          %5906 = vmatpush1.msra.mxu0 0.0
          %5907 = vmatprep.subr.mxu0 0.0
          %5908 = vmatpush1.msra.mxu0 0.0
          %5909 = vmatprep.subr.mxu0 0.0
          %5910 = vmatpush1.msra.mxu0 0.0
          %5911 = vmatprep.subr.mxu0 0.0
          %5912 = vmatpush1.msra.mxu0 0.0
          %5913 = vmatprep.subr.mxu0 0.0
          %5914 = vmatpush1.msra.mxu0 0.0
          %5915 = vmatprep.mubr.f32.mxu0 %v5846
          %5916 = vmatmul.mubr.f32.gmra.mrb[0].mxu0 %v5818
          %v5917 = vpop.f32.mrb[0].mxu0
          %v5918 = vadd.f32 0.0, %v5917
          %v5919 = vpop.f32.mrb[0].mxu0
          %5920 = vmatprep.mubr.f32.mxu0 %v5849
          %5921 = vmatmul.mubr.f32.gmra.mrb[0].mxu0 %v5819
          %v5922 = vpop.f32.mrb[0].mxu0
          %v5923 = vadd.f32 0.0, %v5922
          %v5924 = vpop.f32.mrb[0].mxu0
          %5925 = vdwg.mxu0
          %v5926 = vadd.f32 %v5796, %v5918
          %v5927 = vadd.f32 %v5801, %v5923
          %v5929 = vlaneseq
          %v5930 = vshrl.u32 %v5929, 7
          %v5931 = vsub.s32 0, %v5930
          %v5932 = vrot.slane %v5546, %v5931
          %v5934 = vadd.f32 %v5926, %v5932
          %v5935 = vadd.f32 %v5927, %v5932
          %vm5936 = vcmp.gt.f32.partialorder %v5934, 0.0
          %vm5937 = vcmp.gt.f32.partialorder %v5935, 0.0
          %v5938 = vmul.f32 %v5934, 0.25
          %v5939 = vmul.f32 %v5935, 0.25
          %v5940 = vsel %vm5936, %v5934, %v5938
          %v5941 = vsel %vm5937, %v5935, %v5939
          %s5942 = scalar_lea.vmem [#allocation9], %s5558
          %5943 = vst.msk [vmem:[%s5942 + $0x1] sm:$0xff] %vm1695, %v5940
          %vm5944 = vcmask 522240
          %5945 = vst.msk [vmem:[%s5942 + $0x9] sm:$0x7f] %vm5944, %v5941
        $region142: #{hnet_forward.1} parent=87 // loop_footer
          %s5552 = sadd.s32 1, %s5548
        $region143: #{hnet_forward.1} parent=87 // loop_footer_branch
          %5547 = sbr.rel target = $region139
        $region144: #{hnet_forward.1} parent=87 // loop_exit
          _
        loop: start=0, step=1, limit=8
        $region145: #{hnet_forward.1} parent=87 // loop_pre_header
          _
        $region146: #{hnet_forward.1} parent=87 // loop_header
          %s5947 = sphi 0, %s5951
          %p5948 = scmp.ge.s32.totalorder %s5947, 8
        $region147: #{hnet_forward.1} parent=87 // loop_header_branch
          %5950 = sbr.rel (%p5948) target = $region151
        $region148: #{hnet_forward.1} parent=87 // loop_body
          %s5952 = smul.u32 %s5947, 2
          %s5953 = smul.u32 %s5952, 24
          %s5954 = scalar_lea.vmem [#allocation9], %s5953
          %v5955 = vld [vmem:[%s5954] sm:$0xff]
          %v5956 = vld [vmem:[%s5954 + $0x8] sm:$0xff]
          %v5957 = vld [vmem:[%s5954 + $0x10] sm:$0x1]
          %s5958 = sadd.s32 %s5952, 1
          %s5959 = smul.u32 %s5958, 24
          %s5960 = scalar_lea.vmem [#allocation9], %s5959
          %v5961 = vld [vmem:[%s5960] sm:$0xff]
          %v5962 = vld [vmem:[%s5960 + $0x8] sm:$0xff]
          %v5963 = vld [vmem:[%s5960 + $0x10] sm:$0x1]
          %v5964 = vmax.f32 %v5955, %v5961
          %v5965 = vmax.f32 %v5956, %v5962
          %v5966 = vmax.f32 %v5957, %v5963
          %s5967 = sadd.s32 %s5952, 2
          %s5968 = smul.u32 %s5967, 24
          %s5969 = scalar_lea.vmem [#allocation9], %s5968
          %v5970 = vld [vmem:[%s5969] sm:$0xff]
          %v5971 = vld [vmem:[%s5969 + $0x8] sm:$0xff]
          %v5972 = vld [vmem:[%s5969 + $0x10] sm:$0x1]
          %v5973 = vmax.f32 %v5964, %v5970
          %v5974 = vmax.f32 %v5965, %v5971
          %v5975 = vmax.f32 %v5966, %v5972
          %5976 = vst.msk [vmem:[#allocation11] sm:$0xff] %vm1695, %v5973
          %5977 = vst.msk [vmem:[#allocation11 + $0x8] sm:$0xff] %vm1695, %v5974
          %5978 = vst.msk [vmem:[#allocation11 + $0x10] sm:$0x1] %vm1698, %v5975
          %v5979 = vld [vmem:[#allocation11] ss:$2 sm:$0xff]
          %s5980 = scalar_lea.vmem [#allocation11], 1
          %v5981 = vld [vmem:[%s5980] ss:$2 sm:$0xff]
          %v5982 = vmax.f32 %v5979, %v5981
          %s5983 = scalar_lea.vmem [#allocation11], 2
          %v5984 = vld [vmem:[%s5983] ss:$2 sm:$0xff]
          %v5985 = vmax.f32 %v5982, %v5984
          %s5986 = smul.u32 %s5947, 8
          %s5987 = scalar_lea.vmem [#allocation10], %s5986
          %5988 = vst.msk [vmem:[%s5987] sm:$0xff] %vm1695, %v5985
        $region149: #{hnet_forward.1} parent=87 // loop_footer
          %s5951 = sadd.s32 1, %s5947
        $region150: #{hnet_forward.1} parent=87 // loop_footer_branch
          %5946 = sbr.rel target = $region146
        $region151: #{hnet_forward.1} parent=87 // loop_exit
          _
        %v5989 = vld [vmem:[#allocation10] sm:$0xff]
        %v5990 = vld [vmem:[#allocation10 + $0x8] sm:$0xff]
        %v5991 = vld [vmem:[#allocation10 + $0x10] sm:$0xff]
        %v5992 = vld [vmem:[#allocation10 + $0x18] sm:$0xff]
        %v5993 = vld [vmem:[#allocation10 + $0x20] sm:$0xff]
        %v5994 = vld [vmem:[#allocation10 + $0x28] sm:$0xff]
        %v5995 = vld [vmem:[#allocation10 + $0x30] sm:$0xff]
        %v5996 = vld [vmem:[#allocation10 + $0x38] sm:$0xff]
        %v5997 = vld [vmem:[%s13] sm:$0xff]
        %v5998 = vld [vmem:[%s13 + $0x8] sm:$0xff]
        %v5999 = vld [vmem:[%s13 + $0x10] sm:$0xff]
        %v6000 = vld [vmem:[%s13 + $0x18] sm:$0xff]
        %v6001 = vld [vmem:[%s13 + $0x20] sm:$0xff]
        %v6002 = vld [vmem:[%s13 + $0x28] sm:$0xff]
        %v6003 = vld [vmem:[%s13 + $0x30] sm:$0xff]
        %v6004 = vld [vmem:[%s13 + $0x38] sm:$0xff]
        %v6005 = vld [vmem:[%s14] sm:$0x1]
        %v6007 = vlaneseq
        %v6008 = vshrl.u32 %v6007, 7
        %v6009 = vsub.s32 0, %v6008
        %v6010 = vrot.slane %v6005, %v6009
        %v6013 = vsel %vm1695, %v5989, 0
        %v6016 = vsel %vm1695, %v5990, 0
        %v6019 = vsel %vm1695, %v5991, 0
        %v6022 = vsel %vm1695, %v5992, 0
        %v6025 = vsel %vm1695, %v5993, 0
        %v6028 = vsel %vm1695, %v5994, 0
        %v6031 = vsel %vm1695, %v5995, 0
        %v6034 = vsel %vm1695, %v5996, 0
        %6036 = vmatprep.subr.mxu0 0.0
        %6037 = vmatpush1.msra.mxu0 %v5997
        %6038 = vmatprep.subr.mxu0 0.0
        %6039 = vmatpush1.msra.mxu0 %v5998
        %6040 = vmatprep.subr.mxu0 0.0
        %6041 = vmatpush1.msra.mxu0 %v5999
        %6042 = vmatprep.subr.mxu0 0.0
        %6043 = vmatpush1.msra.mxu0 %v6000
        %6044 = vmatprep.subr.mxu0 0.0
        %6045 = vmatpush1.msra.mxu0 %v6001
        %6046 = vmatprep.subr.mxu0 0.0
        %6047 = vmatpush1.msra.mxu0 %v6002
        %6048 = vmatprep.subr.mxu0 0.0
        %6049 = vmatpush1.msra.mxu0 %v6003
        %6050 = vmatprep.subr.mxu0 0.0
        %6051 = vmatpush1.msra.mxu0 %v6004
        %6052 = vmatprep.subr.mxu0 0.0
        %6053 = vmatpush1.msra.mxu0 0.0
        %6054 = vmatprep.subr.mxu0 0.0
        %6055 = vmatpush1.msra.mxu0 0.0
        %6056 = vmatprep.subr.mxu0 0.0
        %6057 = vmatpush1.msra.mxu0 0.0
        %6058 = vmatprep.subr.mxu0 0.0
        %6059 = vmatpush1.msra.mxu0 0.0
        %6060 = vmatprep.subr.mxu0 0.0
        %6061 = vmatpush1.msra.mxu0 0.0
        %6062 = vmatprep.subr.mxu0 0.0
        %6063 = vmatpush1.msra.mxu0 0.0
        %6064 = vmatprep.subr.mxu0 0.0
        %6065 = vmatpush1.msra.mxu0 0.0
        %6066 = vmatprep.subr.mxu0 0.0
        %6067 = vmatpush1.msra.mxu0 0.0
        %6068 = vmatprep.subr.mxu0 0.0
        %6069 = vmatpush1.msra.mxu0 0.0
        %6070 = vmatprep.subr.mxu0 0.0
        %6071 = vmatpush1.msra.mxu0 0.0
        %6072 = vmatprep.subr.mxu0 0.0
        %6073 = vmatpush1.msra.mxu0 0.0
        %6074 = vmatprep.subr.mxu0 0.0
        %6075 = vmatpush1.msra.mxu0 0.0
        %6076 = vmatprep.subr.mxu0 0.0
        %6077 = vmatpush1.msra.mxu0 0.0
        %6078 = vmatprep.subr.mxu0 0.0
        %6079 = vmatpush1.msra.mxu0 0.0
        %6080 = vmatprep.subr.mxu0 0.0
        %6081 = vmatpush1.msra.mxu0 0.0
        %6082 = vmatprep.subr.mxu0 0.0
        %6083 = vmatpush1.msra.mxu0 0.0
        %6084 = vmatprep.subr.mxu0 0.0
        %6085 = vmatpush1.msra.mxu0 0.0
        %6086 = vmatprep.subr.mxu0 0.0
        %6087 = vmatpush1.msra.mxu0 0.0
        %6088 = vmatprep.subr.mxu0 0.0
        %6089 = vmatpush1.msra.mxu0 0.0
        %6090 = vmatprep.subr.mxu0 0.0
        %6091 = vmatpush1.msra.mxu0 0.0
        %6092 = vmatprep.subr.mxu0 0.0
        %6093 = vmatpush1.msra.mxu0 0.0
        %6094 = vmatprep.subr.mxu0 0.0
        %6095 = vmatpush1.msra.mxu0 0.0
        %6096 = vmatprep.subr.mxu0 0.0
        %6097 = vmatpush1.msra.mxu0 0.0
        %6098 = vmatprep.subr.mxu0 0.0
        %6099 = vmatpush1.msra.mxu0 0.0
        %6100 = vmatprep.mubr.f32.mxu0 0.0
        %6101 = vmatmul.mubr.f32.gmra.mrb[0].mxu0 %v6013
        %v6102 = vpop.f32.mrb[0].mxu0
        %v6103 = vadd.f32 %v6010, %v6102
        %v6104 = vpop.f32.mrb[0].mxu0
        %6105 = vmatprep.mubr.f32.mxu0 0.0
        %6106 = vmatmul.mubr.f32.gmra.mrb[0].mxu0 %v6016
        %v6107 = vpop.f32.mrb[0].mxu0
        %v6108 = vadd.f32 %v6010, %v6107
        %v6109 = vpop.f32.mrb[0].mxu0
        %6110 = vmatprep.mubr.f32.mxu0 0.0
        %6111 = vmatmul.mubr.f32.gmra.mrb[0].mxu0 %v6019
        %v6112 = vpop.f32.mrb[0].mxu0
        %v6113 = vadd.f32 %v6010, %v6112
        %v6114 = vpop.f32.mrb[0].mxu0
        %6115 = vmatprep.mubr.f32.mxu0 0.0
        %6116 = vmatmul.mubr.f32.gmra.mrb[0].mxu0 %v6022
        %v6117 = vpop.f32.mrb[0].mxu0
        %v6118 = vadd.f32 %v6010, %v6117
        %v6119 = vpop.f32.mrb[0].mxu0
        %6120 = vmatprep.mubr.f32.mxu0 0.0
        %6121 = vmatmul.mubr.f32.gmra.mrb[0].mxu0 %v6025
        %v6122 = vpop.f32.mrb[0].mxu0
        %v6123 = vadd.f32 %v6010, %v6122
        %v6124 = vpop.f32.mrb[0].mxu0
        %6125 = vmatprep.mubr.f32.mxu0 0.0
        %6126 = vmatmul.mubr.f32.gmra.mrb[0].mxu0 %v6028
        %v6127 = vpop.f32.mrb[0].mxu0
        %v6128 = vadd.f32 %v6010, %v6127
        %v6129 = vpop.f32.mrb[0].mxu0
        %6130 = vmatprep.mubr.f32.mxu0 0.0
        %6131 = vmatmul.mubr.f32.gmra.mrb[0].mxu0 %v6031
        %v6132 = vpop.f32.mrb[0].mxu0
        %v6133 = vadd.f32 %v6010, %v6132
        %v6134 = vpop.f32.mrb[0].mxu0
        %6135 = vmatprep.mubr.f32.mxu0 0.0
        %6136 = vmatmul.mubr.f32.gmra.mrb[0].mxu0 %v6034
        %v6137 = vpop.f32.mrb[0].mxu0
        %v6138 = vadd.f32 %v6010, %v6137
        %v6139 = vpop.f32.mrb[0].mxu0
        %6140 = vdwg.mxu0
        %vm6141 = vcmp.gt.f32.partialorder %v6103, 0.0
        %vm6142 = vcmp.gt.f32.partialorder %v6108, 0.0
        %vm6143 = vcmp.gt.f32.partialorder %v6113, 0.0
        %vm6144 = vcmp.gt.f32.partialorder %v6118, 0.0
        %vm6145 = vcmp.gt.f32.partialorder %v6123, 0.0
        %vm6146 = vcmp.gt.f32.partialorder %v6128, 0.0
        %vm6147 = vcmp.gt.f32.partialorder %v6133, 0.0
        %vm6148 = vcmp.gt.f32.partialorder %v6138, 0.0
        %v6149 = vmul.f32 %v6103, 0.25
        %v6150 = vmul.f32 %v6108, 0.25
        %v6151 = vmul.f32 %v6113, 0.25
        %v6152 = vmul.f32 %v6118, 0.25
        %v6153 = vmul.f32 %v6123, 0.25
        %v6154 = vmul.f32 %v6128, 0.25
        %v6155 = vmul.f32 %v6133, 0.25
        %v6156 = vmul.f32 %v6138, 0.25
        %v6157 = vsel %vm6141, %v6103, %v6149
        %v6158 = vsel %vm6142, %v6108, %v6150
        %v6159 = vsel %vm6143, %v6113, %v6151
        %v6160 = vsel %vm6144, %v6118, %v6152
        %v6161 = vsel %vm6145, %v6123, %v6153
        %v6162 = vsel %vm6146, %v6128, %v6154
        %v6163 = vsel %vm6147, %v6133, %v6155
        %v6164 = vsel %vm6148, %v6138, %v6156
        %v6165 = vld [vmem:[%s15] sm:$0xff]
        %v6166 = vld [vmem:[%s15 + $0x8] sm:$0xff]
        %v6167 = vld [vmem:[%s15 + $0x10] sm:$0xff]
        %v6168 = vld [vmem:[%s15 + $0x18] sm:$0xff]
        %v6169 = vld [vmem:[%s15 + $0x20] sm:$0xff]
        %v6170 = vld [vmem:[%s15 + $0x28] sm:$0xff]
        %v6171 = vld [vmem:[%s15 + $0x30] sm:$0xff]
        %v6172 = vld [vmem:[%s15 + $0x38] sm:$0xff]
        %v6173 = vmul.f32 %v6157, %v6165
        %v6174 = vmul.f32 %v6158, %v6166
        %v6175 = vmul.f32 %v6159, %v6167
        %v6176 = vmul.f32 %v6160, %v6168
        %v6177 = vmul.f32 %v6161, %v6169
        %v6178 = vmul.f32 %v6162, %v6170
        %v6179 = vmul.f32 %v6163, %v6171
        %v6180 = vmul.f32 %v6164, %v6172
        %v6181 = vsel %vm546, %v6173, 0.0
        %v6182 = vsel %vm546, %v6174, 0.0
        %v6183 = vadd.f32 %v6181, %v6182
        %v6184 = vsel %vm546, %v6175, 0.0
        %v6185 = vadd.f32 %v6183, %v6184
        %v6186 = vsel %vm546, %v6176, 0.0
        %v6187 = vadd.f32 %v6185, %v6186
        %v6188 = vsel %vm546, %v6177, 0.0
        %v6189 = vadd.f32 %v6187, %v6188
        %v6190 = vsel %vm546, %v6178, 0.0
        %v6191 = vadd.f32 %v6189, %v6190
        %v6192 = vsel %vm546, %v6179, 0.0
        %v6193 = vadd.f32 %v6191, %v6192
        %v6194 = vsel %vm546, %v6180, 0.0
        %v6195 = vadd.f32 %v6193, %v6194
        %6196 = vadd.xlane.f32.xlu0 %v6195
        %v6197 = vpop.xlane.xlu0 %6196
        %v6198 = vrot.slane %v6197, 4
        %v6199 = vadd.f32 %v6197, %v6198
        %v6200 = vrot.slane %v6199, 2
        %v6201 = vadd.f32 %v6199, %v6200
        %v6202 = vrot.slane %v6201, 1
        %v6203 = vadd.f32 %v6201, %v6202
        %s6204 = vtos %v6203
        %v6205 = vstv %s6204
        %s6206 = scalar_lea.vmem %s15, 64
        %v6207 = vld [vmem:[%s6206] sm:$0xff]
        %v6208 = vld [vmem:[%s6206 + $0x8] sm:$0xff]
        %v6209 = vld [vmem:[%s6206 + $0x10] sm:$0xff]
        %v6210 = vld [vmem:[%s6206 + $0x18] sm:$0xff]
        %v6211 = vld [vmem:[%s6206 + $0x20] sm:$0xff]
        %v6212 = vld [vmem:[%s6206 + $0x28] sm:$0xff]
        %v6213 = vld [vmem:[%s6206 + $0x30] sm:$0xff]
        %v6214 = vld [vmem:[%s6206 + $0x38] sm:$0xff]
        %v6215 = vmul.f32 %v6157, %v6207
        %v6216 = vmul.f32 %v6158, %v6208
        %v6217 = vmul.f32 %v6159, %v6209
        %v6218 = vmul.f32 %v6160, %v6210
        %v6219 = vmul.f32 %v6161, %v6211
        %v6220 = vmul.f32 %v6162, %v6212
        %v6221 = vmul.f32 %v6163, %v6213
        %v6222 = vmul.f32 %v6164, %v6214
        %v6223 = vsel %vm546, %v6215, 0.0
        %v6224 = vsel %vm546, %v6216, 0.0
        %v6225 = vadd.f32 %v6223, %v6224
        %v6226 = vsel %vm546, %v6217, 0.0
        %v6227 = vadd.f32 %v6225, %v6226
        %v6228 = vsel %vm546, %v6218, 0.0
        %v6229 = vadd.f32 %v6227, %v6228
        %v6230 = vsel %vm546, %v6219, 0.0
        %v6231 = vadd.f32 %v6229, %v6230
        %v6232 = vsel %vm546, %v6220, 0.0
        %v6233 = vadd.f32 %v6231, %v6232
        %v6234 = vsel %vm546, %v6221, 0.0
        %v6235 = vadd.f32 %v6233, %v6234
        %v6236 = vsel %vm546, %v6222, 0.0
        %v6237 = vadd.f32 %v6235, %v6236
        %6238 = vadd.xlane.f32.xlu0 %v6237
        %v6239 = vpop.xlane.xlu0 %6238
        %v6240 = vrot.slane %v6239, 4
        %v6241 = vadd.f32 %v6239, %v6240
        %v6242 = vrot.slane %v6241, 2
        %v6243 = vadd.f32 %v6241, %v6242
        %v6244 = vrot.slane %v6243, 1
        %v6245 = vadd.f32 %v6243, %v6244
        %s6246 = vtos %v6245
        %v6247 = vstv %s6246
        %s6248 = scalar_lea.vmem %s15, 128
        %v6249 = vld [vmem:[%s6248] sm:$0xff]
        %v6250 = vld [vmem:[%s6248 + $0x8] sm:$0xff]
        %v6251 = vld [vmem:[%s6248 + $0x10] sm:$0xff]
        %v6252 = vld [vmem:[%s6248 + $0x18] sm:$0xff]
        %v6253 = vld [vmem:[%s6248 + $0x20] sm:$0xff]
        %v6254 = vld [vmem:[%s6248 + $0x28] sm:$0xff]
        %v6255 = vld [vmem:[%s6248 + $0x30] sm:$0xff]
        %v6256 = vld [vmem:[%s6248 + $0x38] sm:$0xff]
        %v6257 = vmul.f32 %v6157, %v6249
        %v6258 = vmul.f32 %v6158, %v6250
        %v6259 = vmul.f32 %v6159, %v6251
        %v6260 = vmul.f32 %v6160, %v6252
        %v6261 = vmul.f32 %v6161, %v6253
        %v6262 = vmul.f32 %v6162, %v6254
        %v6263 = vmul.f32 %v6163, %v6255
        %v6264 = vmul.f32 %v6164, %v6256
        %v6265 = vsel %vm546, %v6257, 0.0
        %v6266 = vsel %vm546, %v6258, 0.0
        %v6267 = vadd.f32 %v6265, %v6266
        %v6268 = vsel %vm546, %v6259, 0.0
        %v6269 = vadd.f32 %v6267, %v6268
        %v6270 = vsel %vm546, %v6260, 0.0
        %v6271 = vadd.f32 %v6269, %v6270
        %v6272 = vsel %vm546, %v6261, 0.0
        %v6273 = vadd.f32 %v6271, %v6272
        %v6274 = vsel %vm546, %v6262, 0.0
        %v6275 = vadd.f32 %v6273, %v6274
        %v6276 = vsel %vm546, %v6263, 0.0
        %v6277 = vadd.f32 %v6275, %v6276
        %v6278 = vsel %vm546, %v6264, 0.0
        %v6279 = vadd.f32 %v6277, %v6278
        %6280 = vadd.xlane.f32.xlu0 %v6279
        %v6281 = vpop.xlane.xlu0 %6280
        %v6282 = vrot.slane %v6281, 4
        %v6283 = vadd.f32 %v6281, %v6282
        %v6284 = vrot.slane %v6283, 2
        %v6285 = vadd.f32 %v6283, %v6284
        %v6286 = vrot.slane %v6285, 1
        %v6287 = vadd.f32 %v6285, %v6286
        %s6288 = vtos %v6287
        %v6289 = vstv %s6288
        %s6290 = scalar_lea.vmem %s15, 192
        %v6291 = vld [vmem:[%s6290] sm:$0xff]
        %v6292 = vld [vmem:[%s6290 + $0x8] sm:$0xff]
        %v6293 = vld [vmem:[%s6290 + $0x10] sm:$0xff]
        %v6294 = vld [vmem:[%s6290 + $0x18] sm:$0xff]
        %v6295 = vld [vmem:[%s6290 + $0x20] sm:$0xff]
        %v6296 = vld [vmem:[%s6290 + $0x28] sm:$0xff]
        %v6297 = vld [vmem:[%s6290 + $0x30] sm:$0xff]
        %v6298 = vld [vmem:[%s6290 + $0x38] sm:$0xff]
        %v6299 = vmul.f32 %v6157, %v6291
        %v6300 = vmul.f32 %v6158, %v6292
        %v6301 = vmul.f32 %v6159, %v6293
        %v6302 = vmul.f32 %v6160, %v6294
        %v6303 = vmul.f32 %v6161, %v6295
        %v6304 = vmul.f32 %v6162, %v6296
        %v6305 = vmul.f32 %v6163, %v6297
        %v6306 = vmul.f32 %v6164, %v6298
        %v6307 = vsel %vm546, %v6299, 0.0
        %v6308 = vsel %vm546, %v6300, 0.0
        %v6309 = vadd.f32 %v6307, %v6308
        %v6310 = vsel %vm546, %v6301, 0.0
        %v6311 = vadd.f32 %v6309, %v6310
        %v6312 = vsel %vm546, %v6302, 0.0
        %v6313 = vadd.f32 %v6311, %v6312
        %v6314 = vsel %vm546, %v6303, 0.0
        %v6315 = vadd.f32 %v6313, %v6314
        %v6316 = vsel %vm546, %v6304, 0.0
        %v6317 = vadd.f32 %v6315, %v6316
        %v6318 = vsel %vm546, %v6305, 0.0
        %v6319 = vadd.f32 %v6317, %v6318
        %v6320 = vsel %vm546, %v6306, 0.0
        %v6321 = vadd.f32 %v6319, %v6320
        %6322 = vadd.xlane.f32.xlu0 %v6321
        %v6323 = vpop.xlane.xlu0 %6322
        %v6324 = vrot.slane %v6323, 4
        %v6325 = vadd.f32 %v6323, %v6324
        %v6326 = vrot.slane %v6325, 2
        %v6327 = vadd.f32 %v6325, %v6326
        %v6328 = vrot.slane %v6327, 1
        %v6329 = vadd.f32 %v6327, %v6328
        %s6330 = vtos %v6329
        %v6331 = vstv %s6330
        %s6332 = scalar_lea.vmem %s15, 256
        %v6333 = vld [vmem:[%s6332] sm:$0xff]
        %v6334 = vld [vmem:[%s6332 + $0x8] sm:$0xff]
        %v6335 = vld [vmem:[%s6332 + $0x10] sm:$0xff]
        %v6336 = vld [vmem:[%s6332 + $0x18] sm:$0xff]
        %v6337 = vld [vmem:[%s6332 + $0x20] sm:$0xff]
        %v6338 = vld [vmem:[%s6332 + $0x28] sm:$0xff]
        %v6339 = vld [vmem:[%s6332 + $0x30] sm:$0xff]
        %v6340 = vld [vmem:[%s6332 + $0x38] sm:$0xff]
        %v6341 = vmul.f32 %v6157, %v6333
        %v6342 = vmul.f32 %v6158, %v6334
        %v6343 = vmul.f32 %v6159, %v6335
        %v6344 = vmul.f32 %v6160, %v6336
        %v6345 = vmul.f32 %v6161, %v6337
        %v6346 = vmul.f32 %v6162, %v6338
        %v6347 = vmul.f32 %v6163, %v6339
        %v6348 = vmul.f32 %v6164, %v6340
        %v6349 = vsel %vm546, %v6341, 0.0
        %v6350 = vsel %vm546, %v6342, 0.0
        %v6351 = vadd.f32 %v6349, %v6350
        %v6352 = vsel %vm546, %v6343, 0.0
        %v6353 = vadd.f32 %v6351, %v6352
        %v6354 = vsel %vm546, %v6344, 0.0
        %v6355 = vadd.f32 %v6353, %v6354
        %v6356 = vsel %vm546, %v6345, 0.0
        %v6357 = vadd.f32 %v6355, %v6356
        %v6358 = vsel %vm546, %v6346, 0.0
        %v6359 = vadd.f32 %v6357, %v6358
        %v6360 = vsel %vm546, %v6347, 0.0
        %v6361 = vadd.f32 %v6359, %v6360
        %v6362 = vsel %vm546, %v6348, 0.0
        %v6363 = vadd.f32 %v6361, %v6362
        %6364 = vadd.xlane.f32.xlu0 %v6363
        %v6365 = vpop.xlane.xlu0 %6364
        %v6366 = vrot.slane %v6365, 4
        %v6367 = vadd.f32 %v6365, %v6366
        %v6368 = vrot.slane %v6367, 2
        %v6369 = vadd.f32 %v6367, %v6368
        %v6370 = vrot.slane %v6369, 1
        %v6371 = vadd.f32 %v6369, %v6370
        %s6372 = vtos %v6371
        %v6373 = vstv %s6372
        %s6374 = scalar_lea.vmem %s15, 320
        %v6375 = vld [vmem:[%s6374] sm:$0xff]
        %v6376 = vld [vmem:[%s6374 + $0x8] sm:$0xff]
        %v6377 = vld [vmem:[%s6374 + $0x10] sm:$0xff]
        %v6378 = vld [vmem:[%s6374 + $0x18] sm:$0xff]
        %v6379 = vld [vmem:[%s6374 + $0x20] sm:$0xff]
        %v6380 = vld [vmem:[%s6374 + $0x28] sm:$0xff]
        %v6381 = vld [vmem:[%s6374 + $0x30] sm:$0xff]
        %v6382 = vld [vmem:[%s6374 + $0x38] sm:$0xff]
        %v6383 = vmul.f32 %v6157, %v6375
        %v6384 = vmul.f32 %v6158, %v6376
        %v6385 = vmul.f32 %v6159, %v6377
        %v6386 = vmul.f32 %v6160, %v6378
        %v6387 = vmul.f32 %v6161, %v6379
        %v6388 = vmul.f32 %v6162, %v6380
        %v6389 = vmul.f32 %v6163, %v6381
        %v6390 = vmul.f32 %v6164, %v6382
        %v6391 = vsel %vm546, %v6383, 0.0
        %v6392 = vsel %vm546, %v6384, 0.0
        %v6393 = vadd.f32 %v6391, %v6392
        %v6394 = vsel %vm546, %v6385, 0.0
        %v6395 = vadd.f32 %v6393, %v6394
        %v6396 = vsel %vm546, %v6386, 0.0
        %v6397 = vadd.f32 %v6395, %v6396
        %v6398 = vsel %vm546, %v6387, 0.0
        %v6399 = vadd.f32 %v6397, %v6398
        %v6400 = vsel %vm546, %v6388, 0.0
        %v6401 = vadd.f32 %v6399, %v6400
        %v6402 = vsel %vm546, %v6389, 0.0
        %v6403 = vadd.f32 %v6401, %v6402
        %v6404 = vsel %vm546, %v6390, 0.0
        %v6405 = vadd.f32 %v6403, %v6404
        %6406 = vadd.xlane.f32.xlu0 %v6405
        %v6407 = vpop.xlane.xlu0 %6406
        %v6408 = vrot.slane %v6407, 4
        %v6409 = vadd.f32 %v6407, %v6408
        %v6410 = vrot.slane %v6409, 2
        %v6411 = vadd.f32 %v6409, %v6410
        %v6412 = vrot.slane %v6411, 1
        %v6413 = vadd.f32 %v6411, %v6412
        %s6414 = vtos %v6413
        %v6415 = vstv %s6414
        %vm6416 = vcmask 7168
        %v6417 = vsel %vm6416, %v6205, %v6247
        %vm6418 = vcmask 15360
        %v6419 = vsel %vm6418, %v6417, %v6289
        %vm6420 = vcmask 23552
        %v6421 = vsel %vm6420, %v6419, %v6331
        %vm6422 = vcmask 31744
        %v6423 = vsel %vm6422, %v6421, %v6373
        %vm6424 = vcmask 39936
        %v6425 = vsel %vm6424, %v6423, %v6415
        %v6426 = vld [vmem:[%s16] sm:$0x1]
        %v6427 = vadd.f32 %v6425, %v6426
        %vm6428 = vcmask 40960
        %6429 = vst.msk [vmem:[%s540] sm:$0x1] %vm6428, %v6427
        %s6430 = sand.u32 %s401, 1
        %s6431 = scalar_lea.sflag [#allocation13], %s6430
        %s6432 = sand.u32 %s401, 1
        %s6433 = scalar_lea.vmem [#allocation12], %s6432
        // Predicated region
        $region152: #{hnet_forward.1} parent=87 // pred_check
          %p6434 = pneg %p411
        $region153: #{hnet_forward.1} parent=87 // pred_check_branch
          %6436 = sbr.rel (%p6434) target = $region155
        $region154: #{hnet_forward.1} parent=87 // pred_region
          %s6438 = ssub.s32 16, 16
          %6439 = vsyncadd %s6431, %s6438
          %s6440 = smul.addr %s31, 16
          %s6441 = scalar_lea.hbm %s17, %s6440
          %s6443 = sshll.u32 %s6433, 4
          %s6444 = int_to_ptr.vmem [resolvable:$true] %s6443
          %6446 = dma.vmem_to_hbm [thread:$0]  %s6444, 16, %s6441, %s6431
        $region155: #{hnet_forward.1} parent=87 // pred_fallthru
          _
      $region88: #{hnet_forward.1} parent=5 // pred_fallthru
        _
      %p6447 = scmp.le.s32.totalorder 2, %s26
      // Predicated region
      $region156: #{hnet_forward.1} parent=5 // pred_check
        %p6448 = pneg %p6447
      $region157: #{hnet_forward.1} parent=5 // pred_check_branch
        %6450 = sbr.rel (%p6448) target = $region159
      $region158: #{hnet_forward.1} parent=5 // pred_region
        %s6451 = ssub.s32 %s26, 2
        // Predicated region
        $region160: #{hnet_forward.1} parent=158 // pred_check
          %p6452 = pneg %p417
        $region161: #{hnet_forward.1} parent=158 // pred_check_branch
          %6454 = sbr.rel (%p6452) target = $region163
        $region162: #{hnet_forward.1} parent=158 // pred_region
          %s6455 = sand.u32 %s402, 1
          %s6456 = scalar_lea.sflag [#allocation13], %s6455
          %s6457 = sand.u32 %s402, 1
          %s6458 = scalar_lea.vmem [#allocation12], %s6457
          %6459 = dma.done %s6456, 16
        $region163: #{hnet_forward.1} parent=158 // pred_fallthru
          _
      $region159: #{hnet_forward.1} parent=5 // pred_fallthru
        _
    $region6: #{hnet_forward.1} parent=1 // loop_footer
      %s30 = sadd.s32 1, %s26
    $region7: #{hnet_forward.1} parent=1 // loop_footer_branch
      %25 = sbr.rel target = $region3
    $region8: #{hnet_forward.1} parent=1 // loop_exit
      _
    %6460 = vsyncpa [#allocation13], 1
    %s6461 = scalar_lea.sflag [#allocation13], 1
    %6462 = vsyncpa %s6461, 1

</llo_original>
